<compile_context>
chip_gen: v7x
topology: tpu7x:2x2x1
jax: 0.10.0
libtpu: 0.0.40
codegen_flags: <defaults>
</compile_context>

<pallas_src>
import functools
import math

import jax
import jax.numpy as jnp
from jax import lax
from jax.experimental import pallas as pl
from jax.experimental.pallas import tpu as pltpu

LN_EPS = 1e-5                      # torch.nn.LayerNorm default
COMPUTE_DTYPE = jnp.bfloat16       # MXU operand dtype; accumulation is f32
STREAM_DTYPE = jnp.bfloat16        # residual-stream dtype between layer kernels


# ----------------------------- compiler params -----------------------------

def _vmem_limit_bytes():
    # Generation-aware VMEM budget: ~3/4 of physical VMEM, capped at 100 MiB.
    # v7x (64 MiB phys) -> 48 MiB (headroom for compiler scratch);
    # v5e/v6e (128 MiB) -> 96 MiB.
    cap = 64 * 1024 * 1024
    try:
        cap = int(getattr(pltpu.get_tpu_info(), "vmem_capacity_bytes", cap))
    except Exception:
        pass
    return min((cap * 3) // 4, 100 * 1024 * 1024)


def _compiler_params():
    return pltpu.CompilerParams(
        dimension_semantics=("parallel",),      # batch-block axis -> megacore
        vmem_limit_bytes=_vmem_limit_bytes(),
    )


# ----------------------------- in-kernel helpers -----------------------------

def _layer_norm_f32(x, g, b):
    # x: [R, D] f32; g/b: [1, D] f32 (biased variance, like torch.nn.LayerNorm)
    mu = jnp.mean(x, axis=-1, keepdims=True)
    var = jnp.mean((x - mu) ** 2, axis=-1, keepdims=True)
    return (x - mu) * lax.rsqrt(var + LN_EPS) * g + b


# ----------------------------- fused layer kernel -----------------------------

def _decoder_layer_kernel(
    x_ref, mem_ref, tmask_ref, smask_ref,
    # self-attention params
    sa_g, sa_b, sa_wqkv, sa_bqkv, sa_wo, sa_bo,
    # cross-attention params
    ca_g, ca_b, ca_wq, ca_bq, ca_wkv, ca_bkv, ca_wo, ca_bo,
    # feed-forward params
    ff_g, ff_b, ff_w1, ff_b1, ff_w2, ff_b2,
    # final LayerNorm params (applied only on the last layer)
    fn_g, fn_b,
    # output
    o_ref,
    # scratch
    ctx_ref,
    *, heads, apply_final_ln,
):
    bn, sq, d = x_ref.shape
    sk = mem_ref.shape[1]
    dh = d // heads
    scale = 1.0 / math.sqrt(dh)            # reference scales by sqrt(d_head)
    cd = COMPUTE_DTYPE

    # Flatten (BN, S, D) -> (BN*S, D) so every projection/FFN matmul has a
    # full MXU M dimension.
    x = x_ref[...].astype(jnp.float32).reshape(bn * sq, d)      # residual, f32
    mem_c = mem_ref[...].astype(cd).reshape(bn * sk, d)          # bf16 operand

    tgt_keep = tmask_ref[...] != 0          # (bn, sq, sq) bool
    src_keep = smask_ref[...] != 0          # (bn, sq, sk) bool

    def attend(q, k, v, keep, kv_len):
        # q: (bn*sq, d) f32, already scaled; k/v: (bn*kv_len, d) f32;
        # keep: (bn, sq, kv_len) bool.  Writes contexts into ctx_ref (f32).
        qc = q.astype(cd)
        kc = k.astype(cd)
        vc = v.astype(cd)
        for b in range(bn):                 # short static unroll over samples
            q_b = qc[b * sq:(b + 1) * sq]
            k_b = kc[b * kv_len:(b + 1) * kv_len]
            v_b = vc[b * kv_len:(b + 1) * kv_len]
            keep_b = keep[b]
            for h in range(heads):          # static unroll over heads
                lo = h * dh
                # q @ k^T without materializing a transpose: contract last dims.
                s = lax.dot_general(
                    q_b[:, lo:lo + dh], k_b[:, lo:lo + dh],
                    (((1,), (1,)), ((), ())),
                    preferred_element_type=jnp.float32)          # (sq, kv_len)
                # Reference masked_fill value is 1e-9 (NOT -inf); replicated.
                s = jnp.where(keep_b, s, jnp.float32(1e-9))
                s = s - jnp.max(s, axis=-1, keepdims=True)
                p = jnp.exp(s)
                p = p / jnp.sum(p, axis=-1, keepdims=True)       # exact softmax
                ctx_ref[b * sq:(b + 1) * sq, lo:lo + dh] = jnp.dot(
                    p.astype(cd), v_b[:, lo:lo + dh],
                    preferred_element_type=jnp.float32)
        return ctx_ref[...]                 # (bn*sq, d) f32, lane-dense

    # ---- self-attention sublayer: pre-LN -> fused [D,3D] QKV -> MHA -> out ----
    xn = _layer_norm_f32(x, sa_g[...], sa_b[...])
    qkv = jnp.dot(xn.astype(cd), sa_wqkv[...],
                  preferred_element_type=jnp.float32) + sa_bqkv[...]   # (R, 3D)
    q = qkv[:, :d] * scale                   # scale once on Q, not per head
    ctx = attend(q, qkv[:, d:2 * d], qkv[:, 2 * d:], tgt_keep, sq)
    x = x + jnp.dot(ctx.astype(cd), sa_wo[...],
                    preferred_element_type=jnp.float32) + sa_bo[...]

    # ---- cross-attention sublayer: pre-LN(x) -> Q; raw memory -> fused KV ----
    xn = _layer_norm_f32(x, ca_g[...], ca_b[...])
    q = (jnp.dot(xn.astype(cd), ca_wq[...],
                 preferred_element_type=jnp.float32) + ca_bq[...]) * scale
    kv = jnp.dot(mem_c, ca_wkv[...],
                 preferred_element_type=jnp.float32) + ca_bkv[...]     # (Rk, 2D)
    ctx = attend(q, kv[:, :d], kv[:, d:], src_keep, sk)
    x = x + jnp.dot(ctx.astype(cd), ca_wo[...],
                    preferred_element_type=jnp.float32) + ca_bo[...]

    # ---- feed-forward sublayer: pre-LN -> W1 -> ReLU -> W2 -> +residual ----
    xn = _layer_norm_f32(x, ff_g[...], ff_b[...])
    h = jnp.maximum(
        jnp.dot(xn.astype(cd), ff_w1[...],
                preferred_element_type=jnp.float32) + ff_b1[...], 0.0)
    x = x + jnp.dot(h.astype(cd), ff_w2[...],
                    preferred_element_type=jnp.float32) + ff_b2[...]

    if apply_final_ln:                       # static flag: fused final LayerNorm
        x = _layer_norm_f32(x, fn_g[...], fn_b[...])

    o_ref[...] = x.reshape(bn, sq, d).astype(o_ref.dtype)


# ----------------------------- kernel wrapper -----------------------------

def _pick_block_batch(n, s, target_rows):
    # Largest BN dividing N with BN*S <= ~target_rows (MXU M tile), >= 1.
    bn = max(1, min(n, -(-target_rows // s)))
    while n % bn:
        bn -= 1
    return bn


def decoder_layer_call(x, memory, tgt_mask, src_mask, p, fn_g, fn_b, *,
                       heads, block_batch, apply_final_ln, out_dtype):
    n, s, d = x.shape
    sk = memory.shape[1]
    bn = block_batch

    def dspec(block_shape):
        nd = len(block_shape)
        return pl.BlockSpec(block_shape,
                            lambda b, _nd=nd: (b,) + (0,) * (_nd - 1))

    def wspec(arr):
        # Grid-invariant weights/biases: same block every step, single-buffered.
        nd = arr.ndim
        return pl.BlockSpec(arr.shape, lambda b, _nd=nd: (0,) * _nd,
                            pipeline_mode=pl.Buffered(1))

    weights = (
        p["sa"]["ln_g"], p["sa"]["ln_b"], p["sa"]["wqkv"], p["sa"]["bqkv"],
        p["sa"]["wo"], p["sa"]["bo"],
        p["ca"]["ln_g"], p["ca"]["ln_b"], p["ca"]["wq"], p["ca"]["bq"],
        p["ca"]["wkv"], p["ca"]["bkv"], p["ca"]["wo"], p["ca"]["bo"],
        p["ff"]["ln_g"], p["ff"]["ln_b"], p["ff"]["w1"], p["ff"]["b1"],
        p["ff"]["w2"], p["ff"]["b2"],
        fn_g, fn_b,
    )

    return pl.pallas_call(
        functools.partial(_decoder_layer_kernel, heads=heads,
                          apply_final_ln=apply_final_ln),
        out_shape=jax.ShapeDtypeStruct((n, s, d), out_dtype),
        grid=(n // bn,),
        in_specs=[dspec((bn, s, d)),        # x (residual stream block)
                  dspec((bn, sk, d)),       # encoder memory block
                  dspec((bn, s, s)),        # target mask (int8)
                  dspec((bn, s, sk))]       # source mask (int8)
                 + [wspec(w) for w in weights],
        out_specs=dspec((bn, s, d)),
        scratch_shapes=[pltpu.VMEM((bn * s, d), jnp.float32)],  # attn contexts
        compiler_params=_compiler_params(),
    )(x, memory, tgt_mask, src_mask, *weights)


# ----------------------------- model forward -----------------------------

def decoder_forward(params, x, memory, source_mask, target_mask, heads,
                    target_rows=256):
    n, s, d = x.shape
    in_dtype = x.dtype
    bn = _pick_block_batch(n, s, target_rows)

    # Masks passed once per layer as int8 (no float32 / per-head broadcast).
    tgt_m = target_mask.astype(jnp.int8)
    src_m = source_mask.astype(jnp.int8)
    # Residual stream and encoder memory carried in bf16 across HBM.
    mem = memory.astype(COMPUTE_DTYPE)
    x = x.astype(STREAM_DTYPE)

    num_layers = len(params["layers"])
    for i, p in enumerate(params["layers"]):
        last = i == num_layers - 1
        x = decoder_layer_call(
            x, mem, tgt_m, src_m, p, params["norm_g"], params["norm_b"],
            heads=heads, block_batch=bn, apply_final_ln=last,
            out_dtype=in_dtype if last else STREAM_DTYPE)
    return x


# ----------------------------- parameter init -----------------------------

def _init_linear(key, d_in, d_out):
    kw, kb = jax.random.split(key)
    bound = 1.0 / math.sqrt(d_in)  # torch.nn.Linear default init range
    w = jax.random.uniform(kw, (d_in, d_out), jnp.float32, -bound, bound)
    b = jax.random.uniform(kb, (1, d_out), jnp.float32, -bound, bound)
    return w.astype(COMPUTE_DTYPE), b   # weights stored bf16, bias f32


def _init_self_attn(key, d):
    kq, kk, kv, ko = jax.random.split(key, 4)
    wq, bq = _init_linear(kq, d, d)
    wk, bk = _init_linear(kk, d, d)
    wv, bv = _init_linear(kv, d, d)
    wo, bo = _init_linear(ko, d, d)
    return {"wqkv": jnp.concatenate([wq, wk, wv], axis=1),   # fused [D, 3D]
            "bqkv": jnp.concatenate([bq, bk, bv], axis=1),
            "wo": wo, "bo": bo}


def _init_cross_attn(key, d):
    kq, kk, kv, ko = jax.random.split(key, 4)
    wq, bq = _init_linear(kq, d, d)
    wk, bk = _init_linear(kk, d, d)
    wv, bv = _init_linear(kv, d, d)
    wo, bo = _init_linear(ko, d, d)
    return {"wq": wq, "bq": bq,
            "wkv": jnp.concatenate([wk, wv], axis=1),        # fused [D, 2D]
            "bkv": jnp.concatenate([bk, bv], axis=1),
            "wo": wo, "bo": bo}


def init_decoder_params(key, d_model, d_hidden, num_layers):
    ones = jnp.ones((1, d_model), jnp.float32)
    zeros = jnp.zeros((1, d_model), jnp.float32)
    layers = []
    for _ in range(num_layers):
        key, k_sa, k_ca, k_f1, k_f2 = jax.random.split(key, 5)
        w1, b1 = _init_linear(k_f1, d_model, d_hidden)
        w2, b2 = _init_linear(k_f2, d_hidden, d_model)
        sa = _init_self_attn(k_sa, d_model)
        sa.update({"ln_g": ones, "ln_b": zeros})
        ca = _init_cross_attn(k_ca, d_model)
        ca.update({"ln_g": ones, "ln_b": zeros})
        layers.append({
            "sa": sa,
            "ca": ca,
            "ff": {"w1": w1, "b1": b1, "w2": w2, "b2": b2,
                   "ln_g": ones, "ln_b": zeros},
        })
    return {"layers": layers, "norm_g": ones, "norm_b": zeros}


# ----------------------------- main -----------------------------

if __name__ == "__main__":
    N, S_TGT, S_MEM = 2, 8, 16
    # d_model chosen lane-dense (=128) so activation / output blocks use full lanes.
    D_MODEL, HEADS, D_HIDDEN, NUM_LAYERS = 128, 4, 256, 2

    key = jax.random.PRNGKey(0)
    k_p, k_x, k_m = jax.random.split(key, 3)
    params = init_decoder_params(k_p, D_MODEL, D_HIDDEN, NUM_LAYERS)

    x = jax.random.normal(k_x, (N, S_TGT, D_MODEL), jnp.float32)
    memory = jax.random.normal(k_m, (N, S_MEM, D_MODEL), jnp.float32)

    # target_mask: causal over decoder tokens; source_mask: all memory visible.
    target_mask = jnp.broadcast_to(
        jnp.tril(jnp.ones((S_TGT, S_TGT), jnp.bool_)), (N, S_TGT, S_TGT))
    source_mask = jnp.ones((N, S_TGT, S_MEM), jnp.bool_)

    fwd = jax.jit(functools.partial(decoder_forward, heads=HEADS))
    out = fwd(params, x, memory, source_mask, target_mask)
    jax.block_until_ready(out)

    assert out.shape == (N, S_TGT, D_MODEL)
    assert out.dtype == x.dtype
    assert bool(jnp.all(jnp.isfinite(out.astype(jnp.float32))))
    print("KERNEL_OK")
</pallas_src>

<mosaic_0001>
module attributes {stable_mosaic.version = 11 : i64} {
  func.func @_decoder_layer_kernel(%arg0: i32, %arg1: memref<2x8x128xbf16, #tpu.memory_space<vmem>>, %arg2: memref<2x16x128xbf16, #tpu.memory_space<vmem>>, %arg3: memref<2x8x8xi8, #tpu.memory_space<vmem>>, %arg4: memref<2x8x16xi8, #tpu.memory_space<vmem>>, %arg5: memref<1x128xf32, #tpu.memory_space<vmem>>, %arg6: memref<1x128xf32, #tpu.memory_space<vmem>>, %arg7: memref<128x384xbf16, #tpu.memory_space<vmem>>, %arg8: memref<1x384xf32, #tpu.memory_space<vmem>>, %arg9: memref<128x128xbf16, #tpu.memory_space<vmem>>, %arg10: memref<1x128xf32, #tpu.memory_space<vmem>>, %arg11: memref<1x128xf32, #tpu.memory_space<vmem>>, %arg12: memref<1x128xf32, #tpu.memory_space<vmem>>, %arg13: memref<128x128xbf16, #tpu.memory_space<vmem>>, %arg14: memref<1x128xf32, #tpu.memory_space<vmem>>, %arg15: memref<128x256xbf16, #tpu.memory_space<vmem>>, %arg16: memref<1x256xf32, #tpu.memory_space<vmem>>, %arg17: memref<128x128xbf16, #tpu.memory_space<vmem>>, %arg18: memref<1x128xf32, #tpu.memory_space<vmem>>, %arg19: memref<1x128xf32, #tpu.memory_space<vmem>>, %arg20: memref<1x128xf32, #tpu.memory_space<vmem>>, %arg21: memref<128x256xbf16, #tpu.memory_space<vmem>>, %arg22: memref<1x256xf32, #tpu.memory_space<vmem>>, %arg23: memref<256x128xbf16, #tpu.memory_space<vmem>>, %arg24: memref<1x128xf32, #tpu.memory_space<vmem>>, %arg25: memref<1x128xf32, #tpu.memory_space<vmem>>, %arg26: memref<1x128xf32, #tpu.memory_space<vmem>>, %arg27: memref<2x8x128xf32, #tpu.memory_space<vmem>>, %arg28: memref<16x128xf32, #tpu.memory_space<vmem>>) attributes {dimension_semantics = [#tpu.dimension_semantics<parallel>], iteration_bounds = array<i64: 1>, scalar_prefetch = 0 : i64, scratch_operands = 1 : i64, tpu.core_type = #tpu.core_type<tc>, window_params = [{transform_indices = @transform_0, window_bounds = array<i64: 2, 8, 128>}, {transform_indices = @transform_1, window_bounds = array<i64: 2, 16, 128>}, {transform_indices = @transform_2, window_bounds = array<i64: 2, 8, 8>}, {transform_indices = @transform_3, window_bounds = array<i64: 2, 8, 16>}, {pipeline_mode = #tpu.pipeline_mode<synchronous>, transform_indices = @transform_4, window_bounds = array<i64: 1, 128>}, {pipeline_mode = #tpu.pipeline_mode<synchronous>, transform_indices = @transform_5, window_bounds = array<i64: 1, 128>}, {pipeline_mode = #tpu.pipeline_mode<synchronous>, transform_indices = @transform_6, window_bounds = array<i64: 128, 384>}, {pipeline_mode = #tpu.pipeline_mode<synchronous>, transform_indices = @transform_7, window_bounds = array<i64: 1, 384>}, {pipeline_mode = #tpu.pipeline_mode<synchronous>, transform_indices = @transform_8, window_bounds = array<i64: 128, 128>}, {pipeline_mode = #tpu.pipeline_mode<synchronous>, transform_indices = @transform_9, window_bounds = array<i64: 1, 128>}, {pipeline_mode = #tpu.pipeline_mode<synchronous>, transform_indices = @transform_10, window_bounds = array<i64: 1, 128>}, {pipeline_mode = #tpu.pipeline_mode<synchronous>, transform_indices = @transform_11, window_bounds = array<i64: 1, 128>}, {pipeline_mode = #tpu.pipeline_mode<synchronous>, transform_indices = @transform_12, window_bounds = array<i64: 128, 128>}, {pipeline_mode = #tpu.pipeline_mode<synchronous>, transform_indices = @transform_13, window_bounds = array<i64: 1, 128>}, {pipeline_mode = #tpu.pipeline_mode<synchronous>, transform_indices = @transform_14, window_bounds = array<i64: 128, 256>}, {pipeline_mode = #tpu.pipeline_mode<synchronous>, transform_indices = @transform_15, window_bounds = array<i64: 1, 256>}, {pipeline_mode = #tpu.pipeline_mode<synchronous>, transform_indices = @transform_16, window_bounds = array<i64: 128, 128>}, {pipeline_mode = #tpu.pipeline_mode<synchronous>, transform_indices = @transform_17, window_bounds = array<i64: 1, 128>}, {pipeline_mode = #tpu.pipeline_mode<synchronous>, transform_indices = @transform_18, window_bounds = array<i64: 1, 128>}, {pipeline_mode = #tpu.pipeline_mode<synchronous>, transform_indices = @transform_19, window_bounds = array<i64: 1, 128>}, {pipeline_mode = #tpu.pipeline_mode<synchronous>, transform_indices = @transform_20, window_bounds = array<i64: 128, 256>}, {pipeline_mode = #tpu.pipeline_mode<synchronous>, transform_indices = @transform_21, window_bounds = array<i64: 1, 256>}, {pipeline_mode = #tpu.pipeline_mode<synchronous>, transform_indices = @transform_22, window_bounds = array<i64: 256, 128>}, {pipeline_mode = #tpu.pipeline_mode<synchronous>, transform_indices = @transform_23, window_bounds = array<i64: 1, 128>}, {pipeline_mode = #tpu.pipeline_mode<synchronous>, transform_indices = @transform_24, window_bounds = array<i64: 1, 128>}, {pipeline_mode = #tpu.pipeline_mode<synchronous>, transform_indices = @transform_25, window_bounds = array<i64: 1, 128>}, {transform_indices = @transform_26, window_bounds = array<i64: 2, 8, 128>}]} {
    %c0 = arith.constant 0 : index
    %c0_0 = arith.constant 0 : index
    %c0_1 = arith.constant 0 : index
    %0 = vector.load %arg1[%c0, %c0_0, %c0_1] : memref<2x8x128xbf16, #tpu.memory_space<vmem>>, vector<2x8x128xbf16>
    %1 = arith.extf %0 : vector<2x8x128xbf16> to vector<2x8x128xf32>
    %2 = vector.shape_cast %1 : vector<2x8x128xf32> to vector<16x128xf32>
    %c0_2 = arith.constant 0 : index
    %c0_3 = arith.constant 0 : index
    %c0_4 = arith.constant 0 : index
    %3 = vector.load %arg2[%c0_2, %c0_3, %c0_4] : memref<2x16x128xbf16, #tpu.memory_space<vmem>>, vector<2x16x128xbf16>
    %4 = vector.shape_cast %3 : vector<2x16x128xbf16> to vector<32x128xbf16>
    %c0_5 = arith.constant 0 : index
    %c0_6 = arith.constant 0 : index
    %c0_7 = arith.constant 0 : index
    %5 = vector.load %arg3[%c0_5, %c0_6, %c0_7] : memref<2x8x8xi8, #tpu.memory_space<vmem>>, vector<2x8x8xi8>
    %c0_i8 = arith.constant 0 : i8
    %6 = vector.broadcast %c0_i8 : i8 to vector<2x8x8xi8>
    %7 = arith.cmpi ne, %5, %6 : vector<2x8x8xi8>
    %c0_8 = arith.constant 0 : index
    %c0_9 = arith.constant 0 : index
    %c0_10 = arith.constant 0 : index
    %8 = vector.load %arg4[%c0_8, %c0_9, %c0_10] : memref<2x8x16xi8, #tpu.memory_space<vmem>>, vector<2x8x16xi8>
    %c0_i8_11 = arith.constant 0 : i8
    %9 = vector.broadcast %c0_i8_11 : i8 to vector<2x8x16xi8>
    %10 = arith.cmpi ne, %8, %9 : vector<2x8x16xi8>
    %c0_12 = arith.constant 0 : index
    %c0_13 = arith.constant 0 : index
    %11 = vector.load %arg5[%c0_12, %c0_13] : memref<1x128xf32, #tpu.memory_space<vmem>>, vector<1x128xf32>
    %c0_14 = arith.constant 0 : index
    %c0_15 = arith.constant 0 : index
    %12 = vector.load %arg6[%c0_14, %c0_15] : memref<1x128xf32, #tpu.memory_space<vmem>>, vector<1x128xf32>
    %cst = arith.constant dense<0.000000e+00> : vector<16xf32>
    %13 = vector.multi_reduction <add>, %2, %cst [1] : vector<16x128xf32> to vector<16xf32>
    %14 = vector.shape_cast %13 : vector<16xf32> to vector<16x1xf32>
    %cst_16 = arith.constant 1.280000e+02 : f32
    %15 = vector.broadcast %cst_16 : f32 to vector<16x1xf32>
    %16 = arith.divf %14, %15 : vector<16x1xf32>
    %17 = vector.broadcast %16 : vector<16x1xf32> to vector<16x128xf32>
    %18 = arith.subf %2, %17 : vector<16x128xf32>
    %19 = arith.mulf %18, %18 : vector<16x128xf32>
    %cst_17 = arith.constant dense<0.000000e+00> : vector<16xf32>
    %20 = vector.multi_reduction <add>, %19, %cst_17 [1] : vector<16x128xf32> to vector<16xf32>
    %21 = vector.shape_cast %20 : vector<16xf32> to vector<16x1xf32>
    %cst_18 = arith.constant 1.280000e+02 : f32
    %22 = vector.broadcast %cst_18 : f32 to vector<16x1xf32>
    %23 = arith.divf %21, %22 : vector<16x1xf32>
    %24 = vector.broadcast %16 : vector<16x1xf32> to vector<16x128xf32>
    %25 = arith.subf %2, %24 : vector<16x128xf32>
    %cst_19 = arith.constant 9.99999974E-6 : f32
    %26 = vector.broadcast %cst_19 : f32 to vector<16x1xf32>
    %27 = arith.addf %23, %26 : vector<16x1xf32>
    %28 = math.rsqrt %27 : vector<16x1xf32>
    %29 = vector.broadcast %28 : vector<16x1xf32> to vector<16x128xf32>
    %30 = arith.mulf %25, %29 : vector<16x128xf32>
    %31 = vector.broadcast %11 : vector<1x128xf32> to vector<16x128xf32>
    %32 = arith.mulf %30, %31 : vector<16x128xf32>
    %33 = vector.broadcast %12 : vector<1x128xf32> to vector<16x128xf32>
    %34 = arith.addf %32, %33 : vector<16x128xf32>
    %35 = arith.truncf %34 : vector<16x128xf32> to vector<16x128xbf16>
    %c0_20 = arith.constant 0 : index
    %c0_21 = arith.constant 0 : index
    %36 = vector.load %arg7[%c0_20, %c0_21] : memref<128x384xbf16, #tpu.memory_space<vmem>>, vector<128x384xbf16>
    %cst_22 = arith.constant dense<0.000000e+00> : vector<16x384xf32>
    %37 = tpu.matmul %35, %36, %cst_22 {dimension_numbers = #tpu.dot_dimension_numbers<[1], [0], [0], [1], [0, 0, 1, 1], [], []>} : vector<16x128xbf16>, vector<128x384xbf16>, vector<16x384xf32> -> vector<16x384xf32>
    %c0_23 = arith.constant 0 : index
    %c0_24 = arith.constant 0 : index
    %38 = vector.load %arg8[%c0_23, %c0_24] : memref<1x384xf32, #tpu.memory_space<vmem>>, vector<1x384xf32>
    %39 = vector.broadcast %38 : vector<1x384xf32> to vector<16x384xf32>
    %40 = arith.addf %37, %39 : vector<16x384xf32>
    %41 = vector.extract_strided_slice %40 {offsets = [0, 0], sizes = [16, 128], strides = [1, 1]} : vector<16x384xf32> to vector<16x128xf32>
    %cst_25 = arith.constant 0.176776692 : f32
    %42 = vector.broadcast %cst_25 : f32 to vector<16x128xf32>
    %43 = arith.mulf %41, %42 : vector<16x128xf32>
    %44 = vector.extract_strided_slice %40 {offsets = [0, 128], sizes = [16, 128], strides = [1, 1]} : vector<16x384xf32> to vector<16x128xf32>
    %45 = vector.extract_strided_slice %40 {offsets = [0, 256], sizes = [16, 128], strides = [1, 1]} : vector<16x384xf32> to vector<16x128xf32>
    %46 = arith.truncf %43 : vector<16x128xf32> to vector<16x128xbf16>
    %47 = arith.truncf %44 : vector<16x128xf32> to vector<16x128xbf16>
    %48 = arith.truncf %45 : vector<16x128xf32> to vector<16x128xbf16>
    %49 = vector.extract_strided_slice %46 {offsets = [0, 0], sizes = [8, 128], strides = [1, 1]} : vector<16x128xbf16> to vector<8x128xbf16>
    %50 = vector.extract_strided_slice %47 {offsets = [0, 0], sizes = [8, 128], strides = [1, 1]} : vector<16x128xbf16> to vector<8x128xbf16>
    %51 = vector.extract_strided_slice %48 {offsets = [0, 0], sizes = [8, 128], strides = [1, 1]} : vector<16x128xbf16> to vector<8x128xbf16>
    %52 = vector.extract_strided_slice %7 {offsets = [0, 0, 0], sizes = [1, 8, 8], strides = [1, 1, 1]} : vector<2x8x8xi1> to vector<1x8x8xi1>
    %53 = vector.shape_cast %52 : vector<1x8x8xi1> to vector<8x8xi1>
    %54 = vector.extract_strided_slice %49 {offsets = [0, 0], sizes = [8, 32], strides = [1, 1]} : vector<8x128xbf16> to vector<8x32xbf16>
    %55 = vector.extract_strided_slice %50 {offsets = [0, 0], sizes = [8, 32], strides = [1, 1]} : vector<8x128xbf16> to vector<8x32xbf16>
    %cst_26 = arith.constant dense<0.000000e+00> : vector<8x8xf32>
    %56 = tpu.matmul %54, %55, %cst_26 {dimension_numbers = #tpu.dot_dimension_numbers<[1], [1], [0], [0], [0, 0, 1, 0], [], []>} : vector<8x32xbf16>, vector<8x32xbf16>, vector<8x8xf32> -> vector<8x8xf32>
    %cst_27 = arith.constant 9.99999971E-10 : f32
    %57 = vector.broadcast %cst_27 : f32 to vector<8x8xf32>
    %58 = arith.select %53, %56, %57 : vector<8x8xi1>, vector<8x8xf32>
    %cst_28 = arith.constant dense<0xFF800000> : vector<8xf32>
    %59 = vector.multi_reduction <maximumf>, %58, %cst_28 [1] : vector<8x8xf32> to vector<8xf32>
    %60 = vector.shape_cast %59 : vector<8xf32> to vector<8x1xf32>
    %61 = vector.broadcast %60 : vector<8x1xf32> to vector<8x8xf32>
    %62 = arith.subf %58, %61 : vector<8x8xf32>
    %63 = math.exp %62 : vector<8x8xf32>
    %cst_29 = arith.constant dense<0.000000e+00> : vector<8xf32>
    %64 = vector.multi_reduction <add>, %63, %cst_29 [1] : vector<8x8xf32> to vector<8xf32>
    %65 = vector.shape_cast %64 : vector<8xf32> to vector<8x1xf32>
    %66 = vector.broadcast %65 : vector<8x1xf32> to vector<8x8xf32>
    %67 = arith.divf %63, %66 : vector<8x8xf32>
    %68 = arith.truncf %67 : vector<8x8xf32> to vector<8x8xbf16>
    %69 = vector.extract_strided_slice %51 {offsets = [0, 0], sizes = [8, 32], strides = [1, 1]} : vector<8x128xbf16> to vector<8x32xbf16>
    %cst_30 = arith.constant dense<0.000000e+00> : vector<8x32xf32>
    %70 = tpu.matmul %68, %69, %cst_30 {dimension_numbers = #tpu.dot_dimension_numbers<[1], [0], [0], [1], [0, 0, 1, 1], [], []>} : vector<8x8xbf16>, vector<8x32xbf16>, vector<8x32xf32> -> vector<8x32xf32>
    %c0_31 = arith.constant 0 : index
    %c0_32 = arith.constant 0 : index
    %71 = vector.load %arg28[%c0_31, %c0_32] : memref<16x128xf32, #tpu.memory_space<vmem>>, vector<8x32xf32>
    tpu.vector_store %arg28[%c0_31, %c0_32], %70 {strides = array<i32>} : memref<16x128xf32, #tpu.memory_space<vmem>>, vector<8x32xf32>,
    %72 = vector.extract_strided_slice %49 {offsets = [0, 32], sizes = [8, 32], strides = [1, 1]} : vector<8x128xbf16> to vector<8x32xbf16>
    %73 = vector.extract_strided_slice %50 {offsets = [0, 32], sizes = [8, 32], strides = [1, 1]} : vector<8x128xbf16> to vector<8x32xbf16>
    %cst_33 = arith.constant dense<0.000000e+00> : vector<8x8xf32>
    %74 = tpu.matmul %72, %73, %cst_33 {dimension_numbers = #tpu.dot_dimension_numbers<[1], [1], [0], [0], [0, 0, 1, 0], [], []>} : vector<8x32xbf16>, vector<8x32xbf16>, vector<8x8xf32> -> vector<8x8xf32>
    %cst_34 = arith.constant 9.99999971E-10 : f32
    %75 = vector.broadcast %cst_34 : f32 to vector<8x8xf32>
    %76 = arith.select %53, %74, %75 : vector<8x8xi1>, vector<8x8xf32>
    %cst_35 = arith.constant dense<0xFF800000> : vector<8xf32>
    %77 = vector.multi_reduction <maximumf>, %76, %cst_35 [1] : vector<8x8xf32> to vector<8xf32>
    %78 = vector.shape_cast %77 : vector<8xf32> to vector<8x1xf32>
    %79 = vector.broadcast %78 : vector<8x1xf32> to vector<8x8xf32>
    %80 = arith.subf %76, %79 : vector<8x8xf32>
    %81 = math.exp %80 : vector<8x8xf32>
    %cst_36 = arith.constant dense<0.000000e+00> : vector<8xf32>
    %82 = vector.multi_reduction <add>, %81, %cst_36 [1] : vector<8x8xf32> to vector<8xf32>
    %83 = vector.shape_cast %82 : vector<8xf32> to vector<8x1xf32>
    %84 = vector.broadcast %83 : vector<8x1xf32> to vector<8x8xf32>
    %85 = arith.divf %81, %84 : vector<8x8xf32>
    %86 = arith.truncf %85 : vector<8x8xf32> to vector<8x8xbf16>
    %87 = vector.extract_strided_slice %51 {offsets = [0, 32], sizes = [8, 32], strides = [1, 1]} : vector<8x128xbf16> to vector<8x32xbf16>
    %cst_37 = arith.constant dense<0.000000e+00> : vector<8x32xf32>
    %88 = tpu.matmul %86, %87, %cst_37 {dimension_numbers = #tpu.dot_dimension_numbers<[1], [0], [0], [1], [0, 0, 1, 1], [], []>} : vector<8x8xbf16>, vector<8x32xbf16>, vector<8x32xf32> -> vector<8x32xf32>
    %c0_38 = arith.constant 0 : index
    %c32 = arith.constant 32 : index
    %89 = vector.load %arg28[%c0_38, %c32] : memref<16x128xf32, #tpu.memory_space<vmem>>, vector<8x32xf32>
    tpu.vector_store %arg28[%c0_38, %c32], %88 {strides = array<i32>} : memref<16x128xf32, #tpu.memory_space<vmem>>, vector<8x32xf32>,
    %90 = vector.extract_strided_slice %49 {offsets = [0, 64], sizes = [8, 32], strides = [1, 1]} : vector<8x128xbf16> to vector<8x32xbf16>
    %91 = vector.extract_strided_slice %50 {offsets = [0, 64], sizes = [8, 32], strides = [1, 1]} : vector<8x128xbf16> to vector<8x32xbf16>
    %cst_39 = arith.constant dense<0.000000e+00> : vector<8x8xf32>
    %92 = tpu.matmul %90, %91, %cst_39 {dimension_numbers = #tpu.dot_dimension_numbers<[1], [1], [0], [0], [0, 0, 1, 0], [], []>} : vector<8x32xbf16>, vector<8x32xbf16>, vector<8x8xf32> -> vector<8x8xf32>
    %cst_40 = arith.constant 9.99999971E-10 : f32
    %93 = vector.broadcast %cst_40 : f32 to vector<8x8xf32>
    %94 = arith.select %53, %92, %93 : vector<8x8xi1>, vector<8x8xf32>
    %cst_41 = arith.constant dense<0xFF800000> : vector<8xf32>
    %95 = vector.multi_reduction <maximumf>, %94, %cst_41 [1] : vector<8x8xf32> to vector<8xf32>
    %96 = vector.shape_cast %95 : vector<8xf32> to vector<8x1xf32>
    %97 = vector.broadcast %96 : vector<8x1xf32> to vector<8x8xf32>
    %98 = arith.subf %94, %97 : vector<8x8xf32>
    %99 = math.exp %98 : vector<8x8xf32>
    %cst_42 = arith.constant dense<0.000000e+00> : vector<8xf32>
    %100 = vector.multi_reduction <add>, %99, %cst_42 [1] : vector<8x8xf32> to vector<8xf32>
    %101 = vector.shape_cast %100 : vector<8xf32> to vector<8x1xf32>
    %102 = vector.broadcast %101 : vector<8x1xf32> to vector<8x8xf32>
    %103 = arith.divf %99, %102 : vector<8x8xf32>
    %104 = arith.truncf %103 : vector<8x8xf32> to vector<8x8xbf16>
    %105 = vector.extract_strided_slice %51 {offsets = [0, 64], sizes = [8, 32], strides = [1, 1]} : vector<8x128xbf16> to vector<8x32xbf16>
    %cst_43 = arith.constant dense<0.000000e+00> : vector<8x32xf32>
    %106 = tpu.matmul %104, %105, %cst_43 {dimension_numbers = #tpu.dot_dimension_numbers<[1], [0], [0], [1], [0, 0, 1, 1], [], []>} : vector<8x8xbf16>, vector<8x32xbf16>, vector<8x32xf32> -> vector<8x32xf32>
    %c0_44 = arith.constant 0 : index
    %c64 = arith.constant 64 : index
    %107 = vector.load %arg28[%c0_44, %c64] : memref<16x128xf32, #tpu.memory_space<vmem>>, vector<8x32xf32>
    tpu.vector_store %arg28[%c0_44, %c64], %106 {strides = array<i32>} : memref<16x128xf32, #tpu.memory_space<vmem>>, vector<8x32xf32>,
    %108 = vector.extract_strided_slice %49 {offsets = [0, 96], sizes = [8, 32], strides = [1, 1]} : vector<8x128xbf16> to vector<8x32xbf16>
    %109 = vector.extract_strided_slice %50 {offsets = [0, 96], sizes = [8, 32], strides = [1, 1]} : vector<8x128xbf16> to vector<8x32xbf16>
    %cst_45 = arith.constant dense<0.000000e+00> : vector<8x8xf32>
    %110 = tpu.matmul %108, %109, %cst_45 {dimension_numbers = #tpu.dot_dimension_numbers<[1], [1], [0], [0], [0, 0, 1, 0], [], []>} : vector<8x32xbf16>, vector<8x32xbf16>, vector<8x8xf32> -> vector<8x8xf32>
    %cst_46 = arith.constant 9.99999971E-10 : f32
    %111 = vector.broadcast %cst_46 : f32 to vector<8x8xf32>
    %112 = arith.select %53, %110, %111 : vector<8x8xi1>, vector<8x8xf32>
    %cst_47 = arith.constant dense<0xFF800000> : vector<8xf32>
    %113 = vector.multi_reduction <maximumf>, %112, %cst_47 [1] : vector<8x8xf32> to vector<8xf32>
    %114 = vector.shape_cast %113 : vector<8xf32> to vector<8x1xf32>
    %115 = vector.broadcast %114 : vector<8x1xf32> to vector<8x8xf32>
    %116 = arith.subf %112, %115 : vector<8x8xf32>
    %117 = math.exp %116 : vector<8x8xf32>
    %cst_48 = arith.constant dense<0.000000e+00> : vector<8xf32>
    %118 = vector.multi_reduction <add>, %117, %cst_48 [1] : vector<8x8xf32> to vector<8xf32>
    %119 = vector.shape_cast %118 : vector<8xf32> to vector<8x1xf32>
    %120 = vector.broadcast %119 : vector<8x1xf32> to vector<8x8xf32>
    %121 = arith.divf %117, %120 : vector<8x8xf32>
    %122 = arith.truncf %121 : vector<8x8xf32> to vector<8x8xbf16>
    %123 = vector.extract_strided_slice %51 {offsets = [0, 96], sizes = [8, 32], strides = [1, 1]} : vector<8x128xbf16> to vector<8x32xbf16>
    %cst_49 = arith.constant dense<0.000000e+00> : vector<8x32xf32>
    %124 = tpu.matmul %122, %123, %cst_49 {dimension_numbers = #tpu.dot_dimension_numbers<[1], [0], [0], [1], [0, 0, 1, 1], [], []>} : vector<8x8xbf16>, vector<8x32xbf16>, vector<8x32xf32> -> vector<8x32xf32>
    %c0_50 = arith.constant 0 : index
    %c96 = arith.constant 96 : index
    %125 = vector.load %arg28[%c0_50, %c96] : memref<16x128xf32, #tpu.memory_space<vmem>>, vector<8x32xf32>
    tpu.vector_store %arg28[%c0_50, %c96], %124 {strides = array<i32>} : memref<16x128xf32, #tpu.memory_space<vmem>>, vector<8x32xf32>,
    %126 = vector.extract_strided_slice %46 {offsets = [8, 0], sizes = [8, 128], strides = [1, 1]} : vector<16x128xbf16> to vector<8x128xbf16>
    %127 = vector.extract_strided_slice %47 {offsets = [8, 0], sizes = [8, 128], strides = [1, 1]} : vector<16x128xbf16> to vector<8x128xbf16>
    %128 = vector.extract_strided_slice %48 {offsets = [8, 0], sizes = [8, 128], strides = [1, 1]} : vector<16x128xbf16> to vector<8x128xbf16>
    %129 = vector.extract_strided_slice %7 {offsets = [1, 0, 0], sizes = [1, 8, 8], strides = [1, 1, 1]} : vector<2x8x8xi1> to vector<1x8x8xi1>
    %130 = vector.shape_cast %129 : vector<1x8x8xi1> to vector<8x8xi1>
    %131 = vector.extract_strided_slice %126 {offsets = [0, 0], sizes = [8, 32], strides = [1, 1]} : vector<8x128xbf16> to vector<8x32xbf16>
    %132 = vector.extract_strided_slice %127 {offsets = [0, 0], sizes = [8, 32], strides = [1, 1]} : vector<8x128xbf16> to vector<8x32xbf16>
    %cst_51 = arith.constant dense<0.000000e+00> : vector<8x8xf32>
    %133 = tpu.matmul %131, %132, %cst_51 {dimension_numbers = #tpu.dot_dimension_numbers<[1], [1], [0], [0], [0, 0, 1, 0], [], []>} : vector<8x32xbf16>, vector<8x32xbf16>, vector<8x8xf32> -> vector<8x8xf32>
    %cst_52 = arith.constant 9.99999971E-10 : f32
    %134 = vector.broadcast %cst_52 : f32 to vector<8x8xf32>
    %135 = arith.select %130, %133, %134 : vector<8x8xi1>, vector<8x8xf32>
    %cst_53 = arith.constant dense<0xFF800000> : vector<8xf32>
    %136 = vector.multi_reduction <maximumf>, %135, %cst_53 [1] : vector<8x8xf32> to vector<8xf32>
    %137 = vector.shape_cast %136 : vector<8xf32> to vector<8x1xf32>
    %138 = vector.broadcast %137 : vector<8x1xf32> to vector<8x8xf32>
    %139 = arith.subf %135, %138 : vector<8x8xf32>
    %140 = math.exp %139 : vector<8x8xf32>
    %cst_54 = arith.constant dense<0.000000e+00> : vector<8xf32>
    %141 = vector.multi_reduction <add>, %140, %cst_54 [1] : vector<8x8xf32> to vector<8xf32>
    %142 = vector.shape_cast %141 : vector<8xf32> to vector<8x1xf32>
    %143 = vector.broadcast %142 : vector<8x1xf32> to vector<8x8xf32>
    %144 = arith.divf %140, %143 : vector<8x8xf32>
    %145 = arith.truncf %144 : vector<8x8xf32> to vector<8x8xbf16>
    %146 = vector.extract_strided_slice %128 {offsets = [0, 0], sizes = [8, 32], strides = [1, 1]} : vector<8x128xbf16> to vector<8x32xbf16>
    %cst_55 = arith.constant dense<0.000000e+00> : vector<8x32xf32>
    %147 = tpu.matmul %145, %146, %cst_55 {dimension_numbers = #tpu.dot_dimension_numbers<[1], [0], [0], [1], [0, 0, 1, 1], [], []>} : vector<8x8xbf16>, vector<8x32xbf16>, vector<8x32xf32> -> vector<8x32xf32>
    %c8 = arith.constant 8 : index
    %c0_56 = arith.constant 0 : index
    %148 = vector.load %arg28[%c8, %c0_56] : memref<16x128xf32, #tpu.memory_space<vmem>>, vector<8x32xf32>
    tpu.vector_store %arg28[%c8, %c0_56], %147 {strides = array<i32>} : memref<16x128xf32, #tpu.memory_space<vmem>>, vector<8x32xf32>,
    %149 = vector.extract_strided_slice %126 {offsets = [0, 32], sizes = [8, 32], strides = [1, 1]} : vector<8x128xbf16> to vector<8x32xbf16>
    %150 = vector.extract_strided_slice %127 {offsets = [0, 32], sizes = [8, 32], strides = [1, 1]} : vector<8x128xbf16> to vector<8x32xbf16>
    %cst_57 = arith.constant dense<0.000000e+00> : vector<8x8xf32>
    %151 = tpu.matmul %149, %150, %cst_57 {dimension_numbers = #tpu.dot_dimension_numbers<[1], [1], [0], [0], [0, 0, 1, 0], [], []>} : vector<8x32xbf16>, vector<8x32xbf16>, vector<8x8xf32> -> vector<8x8xf32>
    %cst_58 = arith.constant 9.99999971E-10 : f32
    %152 = vector.broadcast %cst_58 : f32 to vector<8x8xf32>
    %153 = arith.select %130, %151, %152 : vector<8x8xi1>, vector<8x8xf32>
    %cst_59 = arith.constant dense<0xFF800000> : vector<8xf32>
    %154 = vector.multi_reduction <maximumf>, %153, %cst_59 [1] : vector<8x8xf32> to vector<8xf32>
    %155 = vector.shape_cast %154 : vector<8xf32> to vector<8x1xf32>
    %156 = vector.broadcast %155 : vector<8x1xf32> to vector<8x8xf32>
    %157 = arith.subf %153, %156 : vector<8x8xf32>
    %158 = math.exp %157 : vector<8x8xf32>
    %cst_60 = arith.constant dense<0.000000e+00> : vector<8xf32>
    %159 = vector.multi_reduction <add>, %158, %cst_60 [1] : vector<8x8xf32> to vector<8xf32>
    %160 = vector.shape_cast %159 : vector<8xf32> to vector<8x1xf32>
    %161 = vector.broadcast %160 : vector<8x1xf32> to vector<8x8xf32>
    %162 = arith.divf %158, %161 : vector<8x8xf32>
    %163 = arith.truncf %162 : vector<8x8xf32> to vector<8x8xbf16>
    %164 = vector.extract_strided_slice %128 {offsets = [0, 32], sizes = [8, 32], strides = [1, 1]} : vector<8x128xbf16> to vector<8x32xbf16>
    %cst_61 = arith.constant dense<0.000000e+00> : vector<8x32xf32>
    %165 = tpu.matmul %163, %164, %cst_61 {dimension_numbers = #tpu.dot_dimension_numbers<[1], [0], [0], [1], [0, 0, 1, 1], [], []>} : vector<8x8xbf16>, vector<8x32xbf16>, vector<8x32xf32> -> vector<8x32xf32>
    %c8_62 = arith.constant 8 : index
    %c32_63 = arith.constant 32 : index
    %166 = vector.load %arg28[%c8_62, %c32_63] : memref<16x128xf32, #tpu.memory_space<vmem>>, vector<8x32xf32>
    tpu.vector_store %arg28[%c8_62, %c32_63], %165 {strides = array<i32>} : memref<16x128xf32, #tpu.memory_space<vmem>>, vector<8x32xf32>,
    %167 = vector.extract_strided_slice %126 {offsets = [0, 64], sizes = [8, 32], strides = [1, 1]} : vector<8x128xbf16> to vector<8x32xbf16>
    %168 = vector.extract_strided_slice %127 {offsets = [0, 64], sizes = [8, 32], strides = [1, 1]} : vector<8x128xbf16> to vector<8x32xbf16>
    %cst_64 = arith.constant dense<0.000000e+00> : vector<8x8xf32>
    %169 = tpu.matmul %167, %168, %cst_64 {dimension_numbers = #tpu.dot_dimension_numbers<[1], [1], [0], [0], [0, 0, 1, 0], [], []>} : vector<8x32xbf16>, vector<8x32xbf16>, vector<8x8xf32> -> vector<8x8xf32>
    %cst_65 = arith.constant 9.99999971E-10 : f32
    %170 = vector.broadcast %cst_65 : f32 to vector<8x8xf32>
    %171 = arith.select %130, %169, %170 : vector<8x8xi1>, vector<8x8xf32>
    %cst_66 = arith.constant dense<0xFF800000> : vector<8xf32>
    %172 = vector.multi_reduction <maximumf>, %171, %cst_66 [1] : vector<8x8xf32> to vector<8xf32>
    %173 = vector.shape_cast %172 : vector<8xf32> to vector<8x1xf32>
    %174 = vector.broadcast %173 : vector<8x1xf32> to vector<8x8xf32>
    %175 = arith.subf %171, %174 : vector<8x8xf32>
    %176 = math.exp %175 : vector<8x8xf32>
    %cst_67 = arith.constant dense<0.000000e+00> : vector<8xf32>
    %177 = vector.multi_reduction <add>, %176, %cst_67 [1] : vector<8x8xf32> to vector<8xf32>
    %178 = vector.shape_cast %177 : vector<8xf32> to vector<8x1xf32>
    %179 = vector.broadcast %178 : vector<8x1xf32> to vector<8x8xf32>
    %180 = arith.divf %176, %179 : vector<8x8xf32>
    %181 = arith.truncf %180 : vector<8x8xf32> to vector<8x8xbf16>
    %182 = vector.extract_strided_slice %128 {offsets = [0, 64], sizes = [8, 32], strides = [1, 1]} : vector<8x128xbf16> to vector<8x32xbf16>
    %cst_68 = arith.constant dense<0.000000e+00> : vector<8x32xf32>
    %183 = tpu.matmul %181, %182, %cst_68 {dimension_numbers = #tpu.dot_dimension_numbers<[1], [0], [0], [1], [0, 0, 1, 1], [], []>} : vector<8x8xbf16>, vector<8x32xbf16>, vector<8x32xf32> -> vector<8x32xf32>
    %c8_69 = arith.constant 8 : index
    %c64_70 = arith.constant 64 : index
    %184 = vector.load %arg28[%c8_69, %c64_70] : memref<16x128xf32, #tpu.memory_space<vmem>>, vector<8x32xf32>
    tpu.vector_store %arg28[%c8_69, %c64_70], %183 {strides = array<i32>} : memref<16x128xf32, #tpu.memory_space<vmem>>, vector<8x32xf32>,
    %185 = vector.extract_strided_slice %126 {offsets = [0, 96], sizes = [8, 32], strides = [1, 1]} : vector<8x128xbf16> to vector<8x32xbf16>
    %186 = vector.extract_strided_slice %127 {offsets = [0, 96], sizes = [8, 32], strides = [1, 1]} : vector<8x128xbf16> to vector<8x32xbf16>
    %cst_71 = arith.constant dense<0.000000e+00> : vector<8x8xf32>
    %187 = tpu.matmul %185, %186, %cst_71 {dimension_numbers = #tpu.dot_dimension_numbers<[1], [1], [0], [0], [0, 0, 1, 0], [], []>} : vector<8x32xbf16>, vector<8x32xbf16>, vector<8x8xf32> -> vector<8x8xf32>
    %cst_72 = arith.constant 9.99999971E-10 : f32
    %188 = vector.broadcast %cst_72 : f32 to vector<8x8xf32>
    %189 = arith.select %130, %187, %188 : vector<8x8xi1>, vector<8x8xf32>
    %cst_73 = arith.constant dense<0xFF800000> : vector<8xf32>
    %190 = vector.multi_reduction <maximumf>, %189, %cst_73 [1] : vector<8x8xf32> to vector<8xf32>
    %191 = vector.shape_cast %190 : vector<8xf32> to vector<8x1xf32>
    %192 = vector.broadcast %191 : vector<8x1xf32> to vector<8x8xf32>
    %193 = arith.subf %189, %192 : vector<8x8xf32>
    %194 = math.exp %193 : vector<8x8xf32>
    %cst_74 = arith.constant dense<0.000000e+00> : vector<8xf32>
    %195 = vector.multi_reduction <add>, %194, %cst_74 [1] : vector<8x8xf32> to vector<8xf32>
    %196 = vector.shape_cast %195 : vector<8xf32> to vector<8x1xf32>
    %197 = vector.broadcast %196 : vector<8x1xf32> to vector<8x8xf32>
    %198 = arith.divf %194, %197 : vector<8x8xf32>
    %199 = arith.truncf %198 : vector<8x8xf32> to vector<8x8xbf16>
    %200 = vector.extract_strided_slice %128 {offsets = [0, 96], sizes = [8, 32], strides = [1, 1]} : vector<8x128xbf16> to vector<8x32xbf16>
    %cst_75 = arith.constant dense<0.000000e+00> : vector<8x32xf32>
    %201 = tpu.matmul %199, %200, %cst_75 {dimension_numbers = #tpu.dot_dimension_numbers<[1], [0], [0], [1], [0, 0, 1, 1], [], []>} : vector<8x8xbf16>, vector<8x32xbf16>, vector<8x32xf32> -> vector<8x32xf32>
    %c8_76 = arith.constant 8 : index
    %c96_77 = arith.constant 96 : index
    %202 = vector.load %arg28[%c8_76, %c96_77] : memref<16x128xf32, #tpu.memory_space<vmem>>, vector<8x32xf32>
    tpu.vector_store %arg28[%c8_76, %c96_77], %201 {strides = array<i32>} : memref<16x128xf32, #tpu.memory_space<vmem>>, vector<8x32xf32>,
    %c0_78 = arith.constant 0 : index
    %c0_79 = arith.constant 0 : index
    %203 = vector.load %arg28[%c0_78, %c0_79] : memref<16x128xf32, #tpu.memory_space<vmem>>, vector<16x128xf32>
    %204 = arith.truncf %203 : vector<16x128xf32> to vector<16x128xbf16>
    %c0_80 = arith.constant 0 : index
    %c0_81 = arith.constant 0 : index
    %205 = vector.load %arg9[%c0_80, %c0_81] : memref<128x128xbf16, #tpu.memory_space<vmem>>, vector<128x128xbf16>
    %cst_82 = arith.constant dense<0.000000e+00> : vector<16x128xf32>
    %206 = tpu.matmul %204, %205, %cst_82 {dimension_numbers = #tpu.dot_dimension_numbers<[1], [0], [0], [1], [0, 0, 1, 1], [], []>} : vector<16x128xbf16>, vector<128x128xbf16>, vector<16x128xf32> -> vector<16x128xf32>
    %207 = arith.addf %2, %206 : vector<16x128xf32>
    %c0_83 = arith.constant 0 : index
    %c0_84 = arith.constant 0 : index
    %208 = vector.load %arg10[%c0_83, %c0_84] : memref<1x128xf32, #tpu.memory_space<vmem>>, vector<1x128xf32>
    %209 = vector.broadcast %208 : vector<1x128xf32> to vector<16x128xf32>
    %210 = arith.addf %207, %209 : vector<16x128xf32>
    %c0_85 = arith.constant 0 : index
    %c0_86 = arith.constant 0 : index
    %211 = vector.load %arg11[%c0_85, %c0_86] : memref<1x128xf32, #tpu.memory_space<vmem>>, vector<1x128xf32>
    %c0_87 = arith.constant 0 : index
    %c0_88 = arith.constant 0 : index
    %212 = vector.load %arg12[%c0_87, %c0_88] : memref<1x128xf32, #tpu.memory_space<vmem>>, vector<1x128xf32>
    %cst_89 = arith.constant dense<0.000000e+00> : vector<16xf32>
    %213 = vector.multi_reduction <add>, %210, %cst_89 [1] : vector<16x128xf32> to vector<16xf32>
    %214 = vector.shape_cast %213 : vector<16xf32> to vector<16x1xf32>
    %cst_90 = arith.constant 1.280000e+02 : f32
    %215 = vector.broadcast %cst_90 : f32 to vector<16x1xf32>
    %216 = arith.divf %214, %215 : vector<16x1xf32>
    %217 = vector.broadcast %216 : vector<16x1xf32> to vector<16x128xf32>
    %218 = arith.subf %210, %217 : vector<16x128xf32>
    %219 = arith.mulf %218, %218 : vector<16x128xf32>
    %cst_91 = arith.constant dense<0.000000e+00> : vector<16xf32>
    %220 = vector.multi_reduction <add>, %219, %cst_91 [1] : vector<16x128xf32> to vector<16xf32>
    %221 = vector.shape_cast %220 : vector<16xf32> to vector<16x1xf32>
    %cst_92 = arith.constant 1.280000e+02 : f32
    %222 = vector.broadcast %cst_92 : f32 to vector<16x1xf32>
    %223 = arith.divf %221, %222 : vector<16x1xf32>
    %224 = vector.broadcast %216 : vector<16x1xf32> to vector<16x128xf32>
    %225 = arith.subf %210, %224 : vector<16x128xf32>
    %cst_93 = arith.constant 9.99999974E-6 : f32
    %226 = vector.broadcast %cst_93 : f32 to vector<16x1xf32>
    %227 = arith.addf %223, %226 : vector<16x1xf32>
    %228 = math.rsqrt %227 : vector<16x1xf32>
    %229 = vector.broadcast %228 : vector<16x1xf32> to vector<16x128xf32>
    %230 = arith.mulf %225, %229 : vector<16x128xf32>
    %231 = vector.broadcast %211 : vector<1x128xf32> to vector<16x128xf32>
    %232 = arith.mulf %230, %231 : vector<16x128xf32>
    %233 = vector.broadcast %212 : vector<1x128xf32> to vector<16x128xf32>
    %234 = arith.addf %232, %233 : vector<16x128xf32>
    %235 = arith.truncf %234 : vector<16x128xf32> to vector<16x128xbf16>
    %c0_94 = arith.constant 0 : index
    %c0_95 = arith.constant 0 : index
    %236 = vector.load %arg13[%c0_94, %c0_95] : memref<128x128xbf16, #tpu.memory_space<vmem>>, vector<128x128xbf16>
    %cst_96 = arith.constant dense<0.000000e+00> : vector<16x128xf32>
    %237 = tpu.matmul %235, %236, %cst_96 {dimension_numbers = #tpu.dot_dimension_numbers<[1], [0], [0], [1], [0, 0, 1, 1], [], []>} : vector<16x128xbf16>, vector<128x128xbf16>, vector<16x128xf32> -> vector<16x128xf32>
    %c0_97 = arith.constant 0 : index
    %c0_98 = arith.constant 0 : index
    %238 = vector.load %arg14[%c0_97, %c0_98] : memref<1x128xf32, #tpu.memory_space<vmem>>, vector<1x128xf32>
    %239 = vector.broadcast %238 : vector<1x128xf32> to vector<16x128xf32>
    %240 = arith.addf %237, %239 : vector<16x128xf32>
    %cst_99 = arith.constant 0.176776692 : f32
    %241 = vector.broadcast %cst_99 : f32 to vector<16x128xf32>
    %242 = arith.mulf %240, %241 : vector<16x128xf32>
    %c0_100 = arith.constant 0 : index
    %c0_101 = arith.constant 0 : index
    %243 = vector.load %arg15[%c0_100, %c0_101] : memref<128x256xbf16, #tpu.memory_space<vmem>>, vector<128x256xbf16>
    %cst_102 = arith.constant dense<0.000000e+00> : vector<32x256xf32>
    %244 = tpu.matmul %4, %243, %cst_102 {dimension_numbers = #tpu.dot_dimension_numbers<[1], [0], [0], [1], [0, 0, 1, 1], [], []>} : vector<32x128xbf16>, vector<128x256xbf16>, vector<32x256xf32> -> vector<32x256xf32>
    %c0_103 = arith.constant 0 : index
    %c0_104 = arith.constant 0 : index
    %245 = vector.load %arg16[%c0_103, %c0_104] : memref<1x256xf32, #tpu.memory_space<vmem>>, vector<1x256xf32>
    %246 = vector.broadcast %245 : vector<1x256xf32> to vector<32x256xf32>
    %247 = arith.addf %244, %246 : vector<32x256xf32>
    %248 = vector.extract_strided_slice %247 {offsets = [0, 0], sizes = [32, 128], strides = [1, 1]} : vector<32x256xf32> to vector<32x128xf32>
    %249 = vector.extract_strided_slice %247 {offsets = [0, 128], sizes = [32, 128], strides = [1, 1]} : vector<32x256xf32> to vector<32x128xf32>
    %250 = arith.truncf %242 : vector<16x128xf32> to vector<16x128xbf16>
    %251 = arith.truncf %248 : vector<32x128xf32> to vector<32x128xbf16>
    %252 = arith.truncf %249 : vector<32x128xf32> to vector<32x128xbf16>
    %253 = vector.extract_strided_slice %250 {offsets = [0, 0], sizes = [8, 128], strides = [1, 1]} : vector<16x128xbf16> to vector<8x128xbf16>
    %254 = vector.extract_strided_slice %251 {offsets = [0, 0], sizes = [16, 128], strides = [1, 1]} : vector<32x128xbf16> to vector<16x128xbf16>
    %255 = vector.extract_strided_slice %252 {offsets = [0, 0], sizes = [16, 128], strides = [1, 1]} : vector<32x128xbf16> to vector<16x128xbf16>
    %256 = vector.extract_strided_slice %10 {offsets = [0, 0, 0], sizes = [1, 8, 16], strides = [1, 1, 1]} : vector<2x8x16xi1> to vector<1x8x16xi1>
    %257 = vector.shape_cast %256 : vector<1x8x16xi1> to vector<8x16xi1>
    %258 = vector.extract_strided_slice %253 {offsets = [0, 0], sizes = [8, 32], strides = [1, 1]} : vector<8x128xbf16> to vector<8x32xbf16>
    %259 = vector.extract_strided_slice %254 {offsets = [0, 0], sizes = [16, 32], strides = [1, 1]} : vector<16x128xbf16> to vector<16x32xbf16>
    %cst_105 = arith.constant dense<0.000000e+00> : vector<8x16xf32>
    %260 = tpu.matmul %258, %259, %cst_105 {dimension_numbers = #tpu.dot_dimension_numbers<[1], [1], [0], [0], [0, 0, 1, 0], [], []>} : vector<8x32xbf16>, vector<16x32xbf16>, vector<8x16xf32> -> vector<8x16xf32>
    %cst_106 = arith.constant 9.99999971E-10 : f32
    %261 = vector.broadcast %cst_106 : f32 to vector<8x16xf32>
    %262 = arith.select %257, %260, %261 : vector<8x16xi1>, vector<8x16xf32>
    %cst_107 = arith.constant dense<0xFF800000> : vector<8xf32>
    %263 = vector.multi_reduction <maximumf>, %262, %cst_107 [1] : vector<8x16xf32> to vector<8xf32>
    %264 = vector.shape_cast %263 : vector<8xf32> to vector<8x1xf32>
    %265 = vector.broadcast %264 : vector<8x1xf32> to vector<8x16xf32>
    %266 = arith.subf %262, %265 : vector<8x16xf32>
    %267 = math.exp %266 : vector<8x16xf32>
    %cst_108 = arith.constant dense<0.000000e+00> : vector<8xf32>
    %268 = vector.multi_reduction <add>, %267, %cst_108 [1] : vector<8x16xf32> to vector<8xf32>
    %269 = vector.shape_cast %268 : vector<8xf32> to vector<8x1xf32>
    %270 = vector.broadcast %269 : vector<8x1xf32> to vector<8x16xf32>
    %271 = arith.divf %267, %270 : vector<8x16xf32>
    %272 = arith.truncf %271 : vector<8x16xf32> to vector<8x16xbf16>
    %273 = vector.extract_strided_slice %255 {offsets = [0, 0], sizes = [16, 32], strides = [1, 1]} : vector<16x128xbf16> to vector<16x32xbf16>
    %cst_109 = arith.constant dense<0.000000e+00> : vector<8x32xf32>
    %274 = tpu.matmul %272, %273, %cst_109 {dimension_numbers = #tpu.dot_dimension_numbers<[1], [0], [0], [1], [0, 0, 1, 1], [], []>} : vector<8x16xbf16>, vector<16x32xbf16>, vector<8x32xf32> -> vector<8x32xf32>
    %c0_110 = arith.constant 0 : index
    %c0_111 = arith.constant 0 : index
    %275 = vector.load %arg28[%c0_110, %c0_111] : memref<16x128xf32, #tpu.memory_space<vmem>>, vector<8x32xf32>
    tpu.vector_store %arg28[%c0_110, %c0_111], %274 {strides = array<i32>} : memref<16x128xf32, #tpu.memory_space<vmem>>, vector<8x32xf32>,
    %276 = vector.extract_strided_slice %253 {offsets = [0, 32], sizes = [8, 32], strides = [1, 1]} : vector<8x128xbf16> to vector<8x32xbf16>
    %277 = vector.extract_strided_slice %254 {offsets = [0, 32], sizes = [16, 32], strides = [1, 1]} : vector<16x128xbf16> to vector<16x32xbf16>
    %cst_112 = arith.constant dense<0.000000e+00> : vector<8x16xf32>
    %278 = tpu.matmul %276, %277, %cst_112 {dimension_numbers = #tpu.dot_dimension_numbers<[1], [1], [0], [0], [0, 0, 1, 0], [], []>} : vector<8x32xbf16>, vector<16x32xbf16>, vector<8x16xf32> -> vector<8x16xf32>
    %cst_113 = arith.constant 9.99999971E-10 : f32
    %279 = vector.broadcast %cst_113 : f32 to vector<8x16xf32>
    %280 = arith.select %257, %278, %279 : vector<8x16xi1>, vector<8x16xf32>
    %cst_114 = arith.constant dense<0xFF800000> : vector<8xf32>
    %281 = vector.multi_reduction <maximumf>, %280, %cst_114 [1] : vector<8x16xf32> to vector<8xf32>
    %282 = vector.shape_cast %281 : vector<8xf32> to vector<8x1xf32>
    %283 = vector.broadcast %282 : vector<8x1xf32> to vector<8x16xf32>
    %284 = arith.subf %280, %283 : vector<8x16xf32>
    %285 = math.exp %284 : vector<8x16xf32>
    %cst_115 = arith.constant dense<0.000000e+00> : vector<8xf32>
    %286 = vector.multi_reduction <add>, %285, %cst_115 [1] : vector<8x16xf32> to vector<8xf32>
    %287 = vector.shape_cast %286 : vector<8xf32> to vector<8x1xf32>
    %288 = vector.broadcast %287 : vector<8x1xf32> to vector<8x16xf32>
    %289 = arith.divf %285, %288 : vector<8x16xf32>
    %290 = arith.truncf %289 : vector<8x16xf32> to vector<8x16xbf16>
    %291 = vector.extract_strided_slice %255 {offsets = [0, 32], sizes = [16, 32], strides = [1, 1]} : vector<16x128xbf16> to vector<16x32xbf16>
    %cst_116 = arith.constant dense<0.000000e+00> : vector<8x32xf32>
    %292 = tpu.matmul %290, %291, %cst_116 {dimension_numbers = #tpu.dot_dimension_numbers<[1], [0], [0], [1], [0, 0, 1, 1], [], []>} : vector<8x16xbf16>, vector<16x32xbf16>, vector<8x32xf32> -> vector<8x32xf32>
    %c0_117 = arith.constant 0 : index
    %c32_118 = arith.constant 32 : index
    %293 = vector.load %arg28[%c0_117, %c32_118] : memref<16x128xf32, #tpu.memory_space<vmem>>, vector<8x32xf32>
    tpu.vector_store %arg28[%c0_117, %c32_118], %292 {strides = array<i32>} : memref<16x128xf32, #tpu.memory_space<vmem>>, vector<8x32xf32>,
    %294 = vector.extract_strided_slice %253 {offsets = [0, 64], sizes = [8, 32], strides = [1, 1]} : vector<8x128xbf16> to vector<8x32xbf16>
    %295 = vector.extract_strided_slice %254 {offsets = [0, 64], sizes = [16, 32], strides = [1, 1]} : vector<16x128xbf16> to vector<16x32xbf16>
    %cst_119 = arith.constant dense<0.000000e+00> : vector<8x16xf32>
    %296 = tpu.matmul %294, %295, %cst_119 {dimension_numbers = #tpu.dot_dimension_numbers<[1], [1], [0], [0], [0, 0, 1, 0], [], []>} : vector<8x32xbf16>, vector<16x32xbf16>, vector<8x16xf32> -> vector<8x16xf32>
    %cst_120 = arith.constant 9.99999971E-10 : f32
    %297 = vector.broadcast %cst_120 : f32 to vector<8x16xf32>
    %298 = arith.select %257, %296, %297 : vector<8x16xi1>, vector<8x16xf32>
    %cst_121 = arith.constant dense<0xFF800000> : vector<8xf32>
    %299 = vector.multi_reduction <maximumf>, %298, %cst_121 [1] : vector<8x16xf32> to vector<8xf32>
    %300 = vector.shape_cast %299 : vector<8xf32> to vector<8x1xf32>
    %301 = vector.broadcast %300 : vector<8x1xf32> to vector<8x16xf32>
    %302 = arith.subf %298, %301 : vector<8x16xf32>
    %303 = math.exp %302 : vector<8x16xf32>
    %cst_122 = arith.constant dense<0.000000e+00> : vector<8xf32>
    %304 = vector.multi_reduction <add>, %303, %cst_122 [1] : vector<8x16xf32> to vector<8xf32>
    %305 = vector.shape_cast %304 : vector<8xf32> to vector<8x1xf32>
    %306 = vector.broadcast %305 : vector<8x1xf32> to vector<8x16xf32>
    %307 = arith.divf %303, %306 : vector<8x16xf32>
    %308 = arith.truncf %307 : vector<8x16xf32> to vector<8x16xbf16>
    %309 = vector.extract_strided_slice %255 {offsets = [0, 64], sizes = [16, 32], strides = [1, 1]} : vector<16x128xbf16> to vector<16x32xbf16>
    %cst_123 = arith.constant dense<0.000000e+00> : vector<8x32xf32>
    %310 = tpu.matmul %308, %309, %cst_123 {dimension_numbers = #tpu.dot_dimension_numbers<[1], [0], [0], [1], [0, 0, 1, 1], [], []>} : vector<8x16xbf16>, vector<16x32xbf16>, vector<8x32xf32> -> vector<8x32xf32>
    %c0_124 = arith.constant 0 : index
    %c64_125 = arith.constant 64 : index
    %311 = vector.load %arg28[%c0_124, %c64_125] : memref<16x128xf32, #tpu.memory_space<vmem>>, vector<8x32xf32>
    tpu.vector_store %arg28[%c0_124, %c64_125], %310 {strides = array<i32>} : memref<16x128xf32, #tpu.memory_space<vmem>>, vector<8x32xf32>,
    %312 = vector.extract_strided_slice %253 {offsets = [0, 96], sizes = [8, 32], strides = [1, 1]} : vector<8x128xbf16> to vector<8x32xbf16>
    %313 = vector.extract_strided_slice %254 {offsets = [0, 96], sizes = [16, 32], strides = [1, 1]} : vector<16x128xbf16> to vector<16x32xbf16>
    %cst_126 = arith.constant dense<0.000000e+00> : vector<8x16xf32>
    %314 = tpu.matmul %312, %313, %cst_126 {dimension_numbers = #tpu.dot_dimension_numbers<[1], [1], [0], [0], [0, 0, 1, 0], [], []>} : vector<8x32xbf16>, vector<16x32xbf16>, vector<8x16xf32> -> vector<8x16xf32>
    %cst_127 = arith.constant 9.99999971E-10 : f32
    %315 = vector.broadcast %cst_127 : f32 to vector<8x16xf32>
    %316 = arith.select %257, %314, %315 : vector<8x16xi1>, vector<8x16xf32>
    %cst_128 = arith.constant dense<0xFF800000> : vector<8xf32>
    %317 = vector.multi_reduction <maximumf>, %316, %cst_128 [1] : vector<8x16xf32> to vector<8xf32>
    %318 = vector.shape_cast %317 : vector<8xf32> to vector<8x1xf32>
    %319 = vector.broadcast %318 : vector<8x1xf32> to vector<8x16xf32>
    %320 = arith.subf %316, %319 : vector<8x16xf32>
    %321 = math.exp %320 : vector<8x16xf32>
    %cst_129 = arith.constant dense<0.000000e+00> : vector<8xf32>
    %322 = vector.multi_reduction <add>, %321, %cst_129 [1] : vector<8x16xf32> to vector<8xf32>
    %323 = vector.shape_cast %322 : vector<8xf32> to vector<8x1xf32>
    %324 = vector.broadcast %323 : vector<8x1xf32> to vector<8x16xf32>
    %325 = arith.divf %321, %324 : vector<8x16xf32>
    %326 = arith.truncf %325 : vector<8x16xf32> to vector<8x16xbf16>
    %327 = vector.extract_strided_slice %255 {offsets = [0, 96], sizes = [16, 32], strides = [1, 1]} : vector<16x128xbf16> to vector<16x32xbf16>
    %cst_130 = arith.constant dense<0.000000e+00> : vector<8x32xf32>
    %328 = tpu.matmul %326, %327, %cst_130 {dimension_numbers = #tpu.dot_dimension_numbers<[1], [0], [0], [1], [0, 0, 1, 1], [], []>} : vector<8x16xbf16>, vector<16x32xbf16>, vector<8x32xf32> -> vector<8x32xf32>
    %c0_131 = arith.constant 0 : index
    %c96_132 = arith.constant 96 : index
    %329 = vector.load %arg28[%c0_131, %c96_132] : memref<16x128xf32, #tpu.memory_space<vmem>>, vector<8x32xf32>
    tpu.vector_store %arg28[%c0_131, %c96_132], %328 {strides = array<i32>} : memref<16x128xf32, #tpu.memory_space<vmem>>, vector<8x32xf32>,
    %330 = vector.extract_strided_slice %250 {offsets = [8, 0], sizes = [8, 128], strides = [1, 1]} : vector<16x128xbf16> to vector<8x128xbf16>
    %331 = vector.extract_strided_slice %251 {offsets = [16, 0], sizes = [16, 128], strides = [1, 1]} : vector<32x128xbf16> to vector<16x128xbf16>
    %332 = vector.extract_strided_slice %252 {offsets = [16, 0], sizes = [16, 128], strides = [1, 1]} : vector<32x128xbf16> to vector<16x128xbf16>
    %333 = vector.extract_strided_slice %10 {offsets = [1, 0, 0], sizes = [1, 8, 16], strides = [1, 1, 1]} : vector<2x8x16xi1> to vector<1x8x16xi1>
    %334 = vector.shape_cast %333 : vector<1x8x16xi1> to vector<8x16xi1>
    %335 = vector.extract_strided_slice %330 {offsets = [0, 0], sizes = [8, 32], strides = [1, 1]} : vector<8x128xbf16> to vector<8x32xbf16>
    %336 = vector.extract_strided_slice %331 {offsets = [0, 0], sizes = [16, 32], strides = [1, 1]} : vector<16x128xbf16> to vector<16x32xbf16>
    %cst_133 = arith.constant dense<0.000000e+00> : vector<8x16xf32>
    %337 = tpu.matmul %335, %336, %cst_133 {dimension_numbers = #tpu.dot_dimension_numbers<[1], [1], [0], [0], [0, 0, 1, 0], [], []>} : vector<8x32xbf16>, vector<16x32xbf16>, vector<8x16xf32> -> vector<8x16xf32>
    %cst_134 = arith.constant 9.99999971E-10 : f32
    %338 = vector.broadcast %cst_134 : f32 to vector<8x16xf32>
    %339 = arith.select %334, %337, %338 : vector<8x16xi1>, vector<8x16xf32>
    %cst_135 = arith.constant dense<0xFF800000> : vector<8xf32>
    %340 = vector.multi_reduction <maximumf>, %339, %cst_135 [1] : vector<8x16xf32> to vector<8xf32>
    %341 = vector.shape_cast %340 : vector<8xf32> to vector<8x1xf32>
    %342 = vector.broadcast %341 : vector<8x1xf32> to vector<8x16xf32>
    %343 = arith.subf %339, %342 : vector<8x16xf32>
    %344 = math.exp %343 : vector<8x16xf32>
    %cst_136 = arith.constant dense<0.000000e+00> : vector<8xf32>
    %345 = vector.multi_reduction <add>, %344, %cst_136 [1] : vector<8x16xf32> to vector<8xf32>
    %346 = vector.shape_cast %345 : vector<8xf32> to vector<8x1xf32>
    %347 = vector.broadcast %346 : vector<8x1xf32> to vector<8x16xf32>
    %348 = arith.divf %344, %347 : vector<8x16xf32>
    %349 = arith.truncf %348 : vector<8x16xf32> to vector<8x16xbf16>
    %350 = vector.extract_strided_slice %332 {offsets = [0, 0], sizes = [16, 32], strides = [1, 1]} : vector<16x128xbf16> to vector<16x32xbf16>
    %cst_137 = arith.constant dense<0.000000e+00> : vector<8x32xf32>
    %351 = tpu.matmul %349, %350, %cst_137 {dimension_numbers = #tpu.dot_dimension_numbers<[1], [0], [0], [1], [0, 0, 1, 1], [], []>} : vector<8x16xbf16>, vector<16x32xbf16>, vector<8x32xf32> -> vector<8x32xf32>
    %c8_138 = arith.constant 8 : index
    %c0_139 = arith.constant 0 : index
    %352 = vector.load %arg28[%c8_138, %c0_139] : memref<16x128xf32, #tpu.memory_space<vmem>>, vector<8x32xf32>
    tpu.vector_store %arg28[%c8_138, %c0_139], %351 {strides = array<i32>} : memref<16x128xf32, #tpu.memory_space<vmem>>, vector<8x32xf32>,
    %353 = vector.extract_strided_slice %330 {offsets = [0, 32], sizes = [8, 32], strides = [1, 1]} : vector<8x128xbf16> to vector<8x32xbf16>
    %354 = vector.extract_strided_slice %331 {offsets = [0, 32], sizes = [16, 32], strides = [1, 1]} : vector<16x128xbf16> to vector<16x32xbf16>
    %cst_140 = arith.constant dense<0.000000e+00> : vector<8x16xf32>
    %355 = tpu.matmul %353, %354, %cst_140 {dimension_numbers = #tpu.dot_dimension_numbers<[1], [1], [0], [0], [0, 0, 1, 0], [], []>} : vector<8x32xbf16>, vector<16x32xbf16>, vector<8x16xf32> -> vector<8x16xf32>
    %cst_141 = arith.constant 9.99999971E-10 : f32
    %356 = vector.broadcast %cst_141 : f32 to vector<8x16xf32>
    %357 = arith.select %334, %355, %356 : vector<8x16xi1>, vector<8x16xf32>
    %cst_142 = arith.constant dense<0xFF800000> : vector<8xf32>
    %358 = vector.multi_reduction <maximumf>, %357, %cst_142 [1] : vector<8x16xf32> to vector<8xf32>
    %359 = vector.shape_cast %358 : vector<8xf32> to vector<8x1xf32>
    %360 = vector.broadcast %359 : vector<8x1xf32> to vector<8x16xf32>
    %361 = arith.subf %357, %360 : vector<8x16xf32>
    %362 = math.exp %361 : vector<8x16xf32>
    %cst_143 = arith.constant dense<0.000000e+00> : vector<8xf32>
    %363 = vector.multi_reduction <add>, %362, %cst_143 [1] : vector<8x16xf32> to vector<8xf32>
    %364 = vector.shape_cast %363 : vector<8xf32> to vector<8x1xf32>
    %365 = vector.broadcast %364 : vector<8x1xf32> to vector<8x16xf32>
    %366 = arith.divf %362, %365 : vector<8x16xf32>
    %367 = arith.truncf %366 : vector<8x16xf32> to vector<8x16xbf16>
    %368 = vector.extract_strided_slice %332 {offsets = [0, 32], sizes = [16, 32], strides = [1, 1]} : vector<16x128xbf16> to vector<16x32xbf16>
    %cst_144 = arith.constant dense<0.000000e+00> : vector<8x32xf32>
    %369 = tpu.matmul %367, %368, %cst_144 {dimension_numbers = #tpu.dot_dimension_numbers<[1], [0], [0], [1], [0, 0, 1, 1], [], []>} : vector<8x16xbf16>, vector<16x32xbf16>, vector<8x32xf32> -> vector<8x32xf32>
    %c8_145 = arith.constant 8 : index
    %c32_146 = arith.constant 32 : index
    %370 = vector.load %arg28[%c8_145, %c32_146] : memref<16x128xf32, #tpu.memory_space<vmem>>, vector<8x32xf32>
    tpu.vector_store %arg28[%c8_145, %c32_146], %369 {strides = array<i32>} : memref<16x128xf32, #tpu.memory_space<vmem>>, vector<8x32xf32>,
    %371 = vector.extract_strided_slice %330 {offsets = [0, 64], sizes = [8, 32], strides = [1, 1]} : vector<8x128xbf16> to vector<8x32xbf16>
    %372 = vector.extract_strided_slice %331 {offsets = [0, 64], sizes = [16, 32], strides = [1, 1]} : vector<16x128xbf16> to vector<16x32xbf16>
    %cst_147 = arith.constant dense<0.000000e+00> : vector<8x16xf32>
    %373 = tpu.matmul %371, %372, %cst_147 {dimension_numbers = #tpu.dot_dimension_numbers<[1], [1], [0], [0], [0, 0, 1, 0], [], []>} : vector<8x32xbf16>, vector<16x32xbf16>, vector<8x16xf32> -> vector<8x16xf32>
    %cst_148 = arith.constant 9.99999971E-10 : f32
    %374 = vector.broadcast %cst_148 : f32 to vector<8x16xf32>
    %375 = arith.select %334, %373, %374 : vector<8x16xi1>, vector<8x16xf32>
    %cst_149 = arith.constant dense<0xFF800000> : vector<8xf32>
    %376 = vector.multi_reduction <maximumf>, %375, %cst_149 [1] : vector<8x16xf32> to vector<8xf32>
    %377 = vector.shape_cast %376 : vector<8xf32> to vector<8x1xf32>
    %378 = vector.broadcast %377 : vector<8x1xf32> to vector<8x16xf32>
    %379 = arith.subf %375, %378 : vector<8x16xf32>
    %380 = math.exp %379 : vector<8x16xf32>
    %cst_150 = arith.constant dense<0.000000e+00> : vector<8xf32>
    %381 = vector.multi_reduction <add>, %380, %cst_150 [1] : vector<8x16xf32> to vector<8xf32>
    %382 = vector.shape_cast %381 : vector<8xf32> to vector<8x1xf32>
    %383 = vector.broadcast %382 : vector<8x1xf32> to vector<8x16xf32>
    %384 = arith.divf %380, %383 : vector<8x16xf32>
    %385 = arith.truncf %384 : vector<8x16xf32> to vector<8x16xbf16>
    %386 = vector.extract_strided_slice %332 {offsets = [0, 64], sizes = [16, 32], strides = [1, 1]} : vector<16x128xbf16> to vector<16x32xbf16>
    %cst_151 = arith.constant dense<0.000000e+00> : vector<8x32xf32>
    %387 = tpu.matmul %385, %386, %cst_151 {dimension_numbers = #tpu.dot_dimension_numbers<[1], [0], [0], [1], [0, 0, 1, 1], [], []>} : vector<8x16xbf16>, vector<16x32xbf16>, vector<8x32xf32> -> vector<8x32xf32>
    %c8_152 = arith.constant 8 : index
    %c64_153 = arith.constant 64 : index
    %388 = vector.load %arg28[%c8_152, %c64_153] : memref<16x128xf32, #tpu.memory_space<vmem>>, vector<8x32xf32>
    tpu.vector_store %arg28[%c8_152, %c64_153], %387 {strides = array<i32>} : memref<16x128xf32, #tpu.memory_space<vmem>>, vector<8x32xf32>,
    %389 = vector.extract_strided_slice %330 {offsets = [0, 96], sizes = [8, 32], strides = [1, 1]} : vector<8x128xbf16> to vector<8x32xbf16>
    %390 = vector.extract_strided_slice %331 {offsets = [0, 96], sizes = [16, 32], strides = [1, 1]} : vector<16x128xbf16> to vector<16x32xbf16>
    %cst_154 = arith.constant dense<0.000000e+00> : vector<8x16xf32>
    %391 = tpu.matmul %389, %390, %cst_154 {dimension_numbers = #tpu.dot_dimension_numbers<[1], [1], [0], [0], [0, 0, 1, 0], [], []>} : vector<8x32xbf16>, vector<16x32xbf16>, vector<8x16xf32> -> vector<8x16xf32>
    %cst_155 = arith.constant 9.99999971E-10 : f32
    %392 = vector.broadcast %cst_155 : f32 to vector<8x16xf32>
    %393 = arith.select %334, %391, %392 : vector<8x16xi1>, vector<8x16xf32>
    %cst_156 = arith.constant dense<0xFF800000> : vector<8xf32>
    %394 = vector.multi_reduction <maximumf>, %393, %cst_156 [1] : vector<8x16xf32> to vector<8xf32>
    %395 = vector.shape_cast %394 : vector<8xf32> to vector<8x1xf32>
    %396 = vector.broadcast %395 : vector<8x1xf32> to vector<8x16xf32>
    %397 = arith.subf %393, %396 : vector<8x16xf32>
    %398 = math.exp %397 : vector<8x16xf32>
    %cst_157 = arith.constant dense<0.000000e+00> : vector<8xf32>
    %399 = vector.multi_reduction <add>, %398, %cst_157 [1] : vector<8x16xf32> to vector<8xf32>
    %400 = vector.shape_cast %399 : vector<8xf32> to vector<8x1xf32>
    %401 = vector.broadcast %400 : vector<8x1xf32> to vector<8x16xf32>
    %402 = arith.divf %398, %401 : vector<8x16xf32>
    %403 = arith.truncf %402 : vector<8x16xf32> to vector<8x16xbf16>
    %404 = vector.extract_strided_slice %332 {offsets = [0, 96], sizes = [16, 32], strides = [1, 1]} : vector<16x128xbf16> to vector<16x32xbf16>
    %cst_158 = arith.constant dense<0.000000e+00> : vector<8x32xf32>
    %405 = tpu.matmul %403, %404, %cst_158 {dimension_numbers = #tpu.dot_dimension_numbers<[1], [0], [0], [1], [0, 0, 1, 1], [], []>} : vector<8x16xbf16>, vector<16x32xbf16>, vector<8x32xf32> -> vector<8x32xf32>
    %c8_159 = arith.constant 8 : index
    %c96_160 = arith.constant 96 : index
    %406 = vector.load %arg28[%c8_159, %c96_160] : memref<16x128xf32, #tpu.memory_space<vmem>>, vector<8x32xf32>
    tpu.vector_store %arg28[%c8_159, %c96_160], %405 {strides = array<i32>} : memref<16x128xf32, #tpu.memory_space<vmem>>, vector<8x32xf32>,
    %c0_161 = arith.constant 0 : index
    %c0_162 = arith.constant 0 : index
    %407 = vector.load %arg28[%c0_161, %c0_162] : memref<16x128xf32, #tpu.memory_space<vmem>>, vector<16x128xf32>
    %408 = arith.truncf %407 : vector<16x128xf32> to vector<16x128xbf16>
    %c0_163 = arith.constant 0 : index
    %c0_164 = arith.constant 0 : index
    %409 = vector.load %arg17[%c0_163, %c0_164] : memref<128x128xbf16, #tpu.memory_space<vmem>>, vector<128x128xbf16>
    %cst_165 = arith.constant dense<0.000000e+00> : vector<16x128xf32>
    %410 = tpu.matmul %408, %409, %cst_165 {dimension_numbers = #tpu.dot_dimension_numbers<[1], [0], [0], [1], [0, 0, 1, 1], [], []>} : vector<16x128xbf16>, vector<128x128xbf16>, vector<16x128xf32> -> vector<16x128xf32>
    %411 = arith.addf %210, %410 : vector<16x128xf32>
    %c0_166 = arith.constant 0 : index
    %c0_167 = arith.constant 0 : index
    %412 = vector.load %arg18[%c0_166, %c0_167] : memref<1x128xf32, #tpu.memory_space<vmem>>, vector<1x128xf32>
    %413 = vector.broadcast %412 : vector<1x128xf32> to vector<16x128xf32>
    %414 = arith.addf %411, %413 : vector<16x128xf32>
    %c0_168 = arith.constant 0 : index
    %c0_169 = arith.constant 0 : index
    %415 = vector.load %arg19[%c0_168, %c0_169] : memref<1x128xf32, #tpu.memory_space<vmem>>, vector<1x128xf32>
    %c0_170 = arith.constant 0 : index
    %c0_171 = arith.constant 0 : index
    %416 = vector.load %arg20[%c0_170, %c0_171] : memref<1x128xf32, #tpu.memory_space<vmem>>, vector<1x128xf32>
    %cst_172 = arith.constant dense<0.000000e+00> : vector<16xf32>
    %417 = vector.multi_reduction <add>, %414, %cst_172 [1] : vector<16x128xf32> to vector<16xf32>
    %418 = vector.shape_cast %417 : vector<16xf32> to vector<16x1xf32>
    %cst_173 = arith.constant 1.280000e+02 : f32
    %419 = vector.broadcast %cst_173 : f32 to vector<16x1xf32>
    %420 = arith.divf %418, %419 : vector<16x1xf32>
    %421 = vector.broadcast %420 : vector<16x1xf32> to vector<16x128xf32>
    %422 = arith.subf %414, %421 : vector<16x128xf32>
    %423 = arith.mulf %422, %422 : vector<16x128xf32>
    %cst_174 = arith.constant dense<0.000000e+00> : vector<16xf32>
    %424 = vector.multi_reduction <add>, %423, %cst_174 [1] : vector<16x128xf32> to vector<16xf32>
    %425 = vector.shape_cast %424 : vector<16xf32> to vector<16x1xf32>
    %cst_175 = arith.constant 1.280000e+02 : f32
    %426 = vector.broadcast %cst_175 : f32 to vector<16x1xf32>
    %427 = arith.divf %425, %426 : vector<16x1xf32>
    %428 = vector.broadcast %420 : vector<16x1xf32> to vector<16x128xf32>
    %429 = arith.subf %414, %428 : vector<16x128xf32>
    %cst_176 = arith.constant 9.99999974E-6 : f32
    %430 = vector.broadcast %cst_176 : f32 to vector<16x1xf32>
    %431 = arith.addf %427, %430 : vector<16x1xf32>
    %432 = math.rsqrt %431 : vector<16x1xf32>
    %433 = vector.broadcast %432 : vector<16x1xf32> to vector<16x128xf32>
    %434 = arith.mulf %429, %433 : vector<16x128xf32>
    %435 = vector.broadcast %415 : vector<1x128xf32> to vector<16x128xf32>
    %436 = arith.mulf %434, %435 : vector<16x128xf32>
    %437 = vector.broadcast %416 : vector<1x128xf32> to vector<16x128xf32>
    %438 = arith.addf %436, %437 : vector<16x128xf32>
    %439 = arith.truncf %438 : vector<16x128xf32> to vector<16x128xbf16>
    %c0_177 = arith.constant 0 : index
    %c0_178 = arith.constant 0 : index
    %440 = vector.load %arg21[%c0_177, %c0_178] : memref<128x256xbf16, #tpu.memory_space<vmem>>, vector<128x256xbf16>
    %cst_179 = arith.constant dense<0.000000e+00> : vector<16x256xf32>
    %441 = tpu.matmul %439, %440, %cst_179 {dimension_numbers = #tpu.dot_dimension_numbers<[1], [0], [0], [1], [0, 0, 1, 1], [], []>} : vector<16x128xbf16>, vector<128x256xbf16>, vector<16x256xf32> -> vector<16x256xf32>
    %c0_180 = arith.constant 0 : index
    %c0_181 = arith.constant 0 : index
    %442 = vector.load %arg22[%c0_180, %c0_181] : memref<1x256xf32, #tpu.memory_space<vmem>>, vector<1x256xf32>
    %443 = vector.broadcast %442 : vector<1x256xf32> to vector<16x256xf32>
    %444 = arith.addf %441, %443 : vector<16x256xf32>
    %cst_182 = arith.constant 0.000000e+00 : f32
    %445 = vector.broadcast %cst_182 : f32 to vector<16x256xf32>
    %446 = arith.maximumf %444, %445 : vector<16x256xf32>
    %447 = arith.truncf %446 : vector<16x256xf32> to vector<16x256xbf16>
    %c0_183 = arith.constant 0 : index
    %c0_184 = arith.constant 0 : index
    %448 = vector.load %arg23[%c0_183, %c0_184] : memref<256x128xbf16, #tpu.memory_space<vmem>>, vector<256x128xbf16>
    %cst_185 = arith.constant dense<0.000000e+00> : vector<16x128xf32>
    %449 = tpu.matmul %447, %448, %cst_185 {dimension_numbers = #tpu.dot_dimension_numbers<[1], [0], [0], [1], [0, 0, 1, 1], [], []>} : vector<16x256xbf16>, vector<256x128xbf16>, vector<16x128xf32> -> vector<16x128xf32>
    %450 = arith.addf %414, %449 : vector<16x128xf32>
    %c0_186 = arith.constant 0 : index
    %c0_187 = arith.constant 0 : index
    %451 = vector.load %arg24[%c0_186, %c0_187] : memref<1x128xf32, #tpu.memory_space<vmem>>, vector<1x128xf32>
    %452 = vector.broadcast %451 : vector<1x128xf32> to vector<16x128xf32>
    %453 = arith.addf %450, %452 : vector<16x128xf32>
    %c0_188 = arith.constant 0 : index
    %c0_189 = arith.constant 0 : index
    %454 = vector.load %arg25[%c0_188, %c0_189] : memref<1x128xf32, #tpu.memory_space<vmem>>, vector<1x128xf32>
    %c0_190 = arith.constant 0 : index
    %c0_191 = arith.constant 0 : index
    %455 = vector.load %arg26[%c0_190, %c0_191] : memref<1x128xf32, #tpu.memory_space<vmem>>, vector<1x128xf32>
    %cst_192 = arith.constant dense<0.000000e+00> : vector<16xf32>
    %456 = vector.multi_reduction <add>, %453, %cst_192 [1] : vector<16x128xf32> to vector<16xf32>
    %457 = vector.shape_cast %456 : vector<16xf32> to vector<16x1xf32>
    %cst_193 = arith.constant 1.280000e+02 : f32
    %458 = vector.broadcast %cst_193 : f32 to vector<16x1xf32>
    %459 = arith.divf %457, %458 : vector<16x1xf32>
    %460 = vector.broadcast %459 : vector<16x1xf32> to vector<16x128xf32>
    %461 = arith.subf %453, %460 : vector<16x128xf32>
    %462 = arith.mulf %461, %461 : vector<16x128xf32>
    %cst_194 = arith.constant dense<0.000000e+00> : vector<16xf32>
    %463 = vector.multi_reduction <add>, %462, %cst_194 [1] : vector<16x128xf32> to vector<16xf32>
    %464 = vector.shape_cast %463 : vector<16xf32> to vector<16x1xf32>
    %cst_195 = arith.constant 1.280000e+02 : f32
    %465 = vector.broadcast %cst_195 : f32 to vector<16x1xf32>
    %466 = arith.divf %464, %465 : vector<16x1xf32>
    %467 = vector.broadcast %459 : vector<16x1xf32> to vector<16x128xf32>
    %468 = arith.subf %453, %467 : vector<16x128xf32>
    %cst_196 = arith.constant 9.99999974E-6 : f32
    %469 = vector.broadcast %cst_196 : f32 to vector<16x1xf32>
    %470 = arith.addf %466, %469 : vector<16x1xf32>
    %471 = math.rsqrt %470 : vector<16x1xf32>
    %472 = vector.broadcast %471 : vector<16x1xf32> to vector<16x128xf32>
    %473 = arith.mulf %468, %472 : vector<16x128xf32>
    %474 = vector.broadcast %454 : vector<1x128xf32> to vector<16x128xf32>
    %475 = arith.mulf %473, %474 : vector<16x128xf32>
    %476 = vector.broadcast %455 : vector<1x128xf32> to vector<16x128xf32>
    %477 = arith.addf %475, %476 : vector<16x128xf32>
    %478 = vector.shape_cast %477 : vector<16x128xf32> to vector<2x8x128xf32>
    %c0_197 = arith.constant 0 : index
    %c0_198 = arith.constant 0 : index
    %c0_199 = arith.constant 0 : index
    %479 = vector.load %arg27[%c0_197, %c0_198, %c0_199] : memref<2x8x128xf32, #tpu.memory_space<vmem>>, vector<2x8x128xf32>
    tpu.vector_store %arg27[%c0_197, %c0_198, %c0_199], %478 {strides = array<i32>} : memref<2x8x128xf32, #tpu.memory_space<vmem>>, vector<2x8x128xf32>,
    return
  }
  func.func @transform_0(%arg0: i32) -> (i32, i32, i32) {
    %c0_i32 = arith.constant 0 : i32
    %c0_i32_0 = arith.constant 0 : i32
    %c0_i32_1 = arith.constant 0 : i32
    return %arg0, %c0_i32, %c0_i32_0 : i32, i32, i32
  }
  func.func @transform_1(%arg0: i32) -> (i32, i32, i32) {
    %c0_i32 = arith.constant 0 : i32
    %c0_i32_0 = arith.constant 0 : i32
    %c0_i32_1 = arith.constant 0 : i32
    return %arg0, %c0_i32, %c0_i32_0 : i32, i32, i32
  }
  func.func @transform_2(%arg0: i32) -> (i32, i32, i32) {
    %c0_i32 = arith.constant 0 : i32
    %c0_i32_0 = arith.constant 0 : i32
    %c0_i32_1 = arith.constant 0 : i32
    return %arg0, %c0_i32, %c0_i32_0 : i32, i32, i32
  }
  func.func @transform_3(%arg0: i32) -> (i32, i32, i32) {
    %c0_i32 = arith.constant 0 : i32
    %c0_i32_0 = arith.constant 0 : i32
    %c0_i32_1 = arith.constant 0 : i32
    return %arg0, %c0_i32, %c0_i32_0 : i32, i32, i32
  }
  func.func @transform_4(%arg0: i32) -> (i32, i32) {
    %c0_i32 = arith.constant 0 : i32
    %c0_i32_0 = arith.constant 0 : i32
    %c0_i32_1 = arith.constant 0 : i32
    return %c0_i32, %c0_i32_0 : i32, i32
  }
  func.func @transform_5(%arg0: i32) -> (i32, i32) {
    %c0_i32 = arith.constant 0 : i32
    %c0_i32_0 = arith.constant 0 : i32
    %c0_i32_1 = arith.constant 0 : i32
    return %c0_i32, %c0_i32_0 : i32, i32
  }
  func.func @transform_6(%arg0: i32) -> (i32, i32) {
    %c0_i32 = arith.constant 0 : i32
    %c0_i32_0 = arith.constant 0 : i32
    %c0_i32_1 = arith.constant 0 : i32
    return %c0_i32, %c0_i32_0 : i32, i32
  }
  func.func @transform_7(%arg0: i32) -> (i32, i32) {
    %c0_i32 = arith.constant 0 : i32
    %c0_i32_0 = arith.constant 0 : i32
    %c0_i32_1 = arith.constant 0 : i32
    return %c0_i32, %c0_i32_0 : i32, i32
  }
  func.func @transform_8(%arg0: i32) -> (i32, i32) {
    %c0_i32 = arith.constant 0 : i32
    %c0_i32_0 = arith.constant 0 : i32
    %c0_i32_1 = arith.constant 0 : i32
    return %c0_i32, %c0_i32_0 : i32, i32
  }
  func.func @transform_9(%arg0: i32) -> (i32, i32) {
    %c0_i32 = arith.constant 0 : i32
    %c0_i32_0 = arith.constant 0 : i32
    %c0_i32_1 = arith.constant 0 : i32
    return %c0_i32, %c0_i32_0 : i32, i32
  }
  func.func @transform_10(%arg0: i32) -> (i32, i32) {
    %c0_i32 = arith.constant 0 : i32
    %c0_i32_0 = arith.constant 0 : i32
    %c0_i32_1 = arith.constant 0 : i32
    return %c0_i32, %c0_i32_0 : i32, i32
  }
  func.func @transform_11(%arg0: i32) -> (i32, i32) {
    %c0_i32 = arith.constant 0 : i32
    %c0_i32_0 = arith.constant 0 : i32
    %c0_i32_1 = arith.constant 0 : i32
    return %c0_i32, %c0_i32_0 : i32, i32
  }
  func.func @transform_12(%arg0: i32) -> (i32, i32) {
    %c0_i32 = arith.constant 0 : i32
    %c0_i32_0 = arith.constant 0 : i32
    %c0_i32_1 = arith.constant 0 : i32
    return %c0_i32, %c0_i32_0 : i32, i32
  }
  func.func @transform_13(%arg0: i32) -> (i32, i32) {
    %c0_i32 = arith.constant 0 : i32
    %c0_i32_0 = arith.constant 0 : i32
    %c0_i32_1 = arith.constant 0 : i32
    return %c0_i32, %c0_i32_0 : i32, i32
  }
  func.func @transform_14(%arg0: i32) -> (i32, i32) {
    %c0_i32 = arith.constant 0 : i32
    %c0_i32_0 = arith.constant 0 : i32
    %c0_i32_1 = arith.constant 0 : i32
    return %c0_i32, %c0_i32_0 : i32, i32
  }
  func.func @transform_15(%arg0: i32) -> (i32, i32) {
    %c0_i32 = arith.constant 0 : i32
    %c0_i32_0 = arith.constant 0 : i32
    %c0_i32_1 = arith.constant 0 : i32
    return %c0_i32, %c0_i32_0 : i32, i32
  }
  func.func @transform_16(%arg0: i32) -> (i32, i32) {
    %c0_i32 = arith.constant 0 : i32
    %c0_i32_0 = arith.constant 0 : i32
    %c0_i32_1 = arith.constant 0 : i32
    return %c0_i32, %c0_i32_0 : i32, i32
  }
  func.func @transform_17(%arg0: i32) -> (i32, i32) {
    %c0_i32 = arith.constant 0 : i32
    %c0_i32_0 = arith.constant 0 : i32
    %c0_i32_1 = arith.constant 0 : i32
    return %c0_i32, %c0_i32_0 : i32, i32
  }
  func.func @transform_18(%arg0: i32) -> (i32, i32) {
    %c0_i32 = arith.constant 0 : i32
    %c0_i32_0 = arith.constant 0 : i32
    %c0_i32_1 = arith.constant 0 : i32
    return %c0_i32, %c0_i32_0 : i32, i32
  }
  func.func @transform_19(%arg0: i32) -> (i32, i32) {
    %c0_i32 = arith.constant 0 : i32
    %c0_i32_0 = arith.constant 0 : i32
    %c0_i32_1 = arith.constant 0 : i32
    return %c0_i32, %c0_i32_0 : i32, i32
  }
  func.func @transform_20(%arg0: i32) -> (i32, i32) {
    %c0_i32 = arith.constant 0 : i32
    %c0_i32_0 = arith.constant 0 : i32
    %c0_i32_1 = arith.constant 0 : i32
    return %c0_i32, %c0_i32_0 : i32, i32
  }
  func.func @transform_21(%arg0: i32) -> (i32, i32) {
    %c0_i32 = arith.constant 0 : i32
    %c0_i32_0 = arith.constant 0 : i32
    %c0_i32_1 = arith.constant 0 : i32
    return %c0_i32, %c0_i32_0 : i32, i32
  }
  func.func @transform_22(%arg0: i32) -> (i32, i32) {
    %c0_i32 = arith.constant 0 : i32
    %c0_i32_0 = arith.constant 0 : i32
    %c0_i32_1 = arith.constant 0 : i32
    return %c0_i32, %c0_i32_0 : i32, i32
  }
  func.func @transform_23(%arg0: i32) -> (i32, i32) {
    %c0_i32 = arith.constant 0 : i32
    %c0_i32_0 = arith.constant 0 : i32
    %c0_i32_1 = arith.constant 0 : i32
    return %c0_i32, %c0_i32_0 : i32, i32
  }
  func.func @transform_24(%arg0: i32) -> (i32, i32) {
    %c0_i32 = arith.constant 0 : i32
    %c0_i32_0 = arith.constant 0 : i32
    %c0_i32_1 = arith.constant 0 : i32
    return %c0_i32, %c0_i32_0 : i32, i32
  }
  func.func @transform_25(%arg0: i32) -> (i32, i32) {
    %c0_i32 = arith.constant 0 : i32
    %c0_i32_0 = arith.constant 0 : i32
    %c0_i32_1 = arith.constant 0 : i32
    return %c0_i32, %c0_i32_0 : i32, i32
  }
  func.func @transform_26(%arg0: i32) -> (i32, i32, i32) {
    %c0_i32 = arith.constant 0 : i32
    %c0_i32_0 = arith.constant 0 : i32
    %c0_i32_1 = arith.constant 0 : i32
    return %arg0, %c0_i32, %c0_i32_0 : i32, i32, i32
  }
}

module attributes {stable_mosaic.version = 11 : i64} {
  func.func @_decoder_layer_kernel(%arg0: i32, %arg1: memref<2x8x128xbf16, #tpu.memory_space<vmem>>, %arg2: memref<2x16x128xbf16, #tpu.memory_space<vmem>>, %arg3: memref<2x8x8xi8, #tpu.memory_space<vmem>>, %arg4: memref<2x8x16xi8, #tpu.memory_space<vmem>>, %arg5: memref<1x128xf32, #tpu.memory_space<vmem>>, %arg6: memref<1x128xf32, #tpu.memory_space<vmem>>, %arg7: memref<128x384xbf16, #tpu.memory_space<vmem>>, %arg8: memref<1x384xf32, #tpu.memory_space<vmem>>, %arg9: memref<128x128xbf16, #tpu.memory_space<vmem>>, %arg10: memref<1x128xf32, #tpu.memory_space<vmem>>, %arg11: memref<1x128xf32, #tpu.memory_space<vmem>>, %arg12: memref<1x128xf32, #tpu.memory_space<vmem>>, %arg13: memref<128x128xbf16, #tpu.memory_space<vmem>>, %arg14: memref<1x128xf32, #tpu.memory_space<vmem>>, %arg15: memref<128x256xbf16, #tpu.memory_space<vmem>>, %arg16: memref<1x256xf32, #tpu.memory_space<vmem>>, %arg17: memref<128x128xbf16, #tpu.memory_space<vmem>>, %arg18: memref<1x128xf32, #tpu.memory_space<vmem>>, %arg19: memref<1x128xf32, #tpu.memory_space<vmem>>, %arg20: memref<1x128xf32, #tpu.memory_space<vmem>>, %arg21: memref<128x256xbf16, #tpu.memory_space<vmem>>, %arg22: memref<1x256xf32, #tpu.memory_space<vmem>>, %arg23: memref<256x128xbf16, #tpu.memory_space<vmem>>, %arg24: memref<1x128xf32, #tpu.memory_space<vmem>>, %arg25: memref<1x128xf32, #tpu.memory_space<vmem>>, %arg26: memref<1x128xf32, #tpu.memory_space<vmem>>, %arg27: memref<2x8x128xbf16, #tpu.memory_space<vmem>>, %arg28: memref<16x128xf32, #tpu.memory_space<vmem>>) attributes {dimension_semantics = [#tpu.dimension_semantics<parallel>], iteration_bounds = array<i64: 1>, scalar_prefetch = 0 : i64, scratch_operands = 1 : i64, tpu.core_type = #tpu.core_type<tc>, window_params = [{transform_indices = @transform_0, window_bounds = array<i64: 2, 8, 128>}, {transform_indices = @transform_1, window_bounds = array<i64: 2, 16, 128>}, {transform_indices = @transform_2, window_bounds = array<i64: 2, 8, 8>}, {transform_indices = @transform_3, window_bounds = array<i64: 2, 8, 16>}, {pipeline_mode = #tpu.pipeline_mode<synchronous>, transform_indices = @transform_4, window_bounds = array<i64: 1, 128>}, {pipeline_mode = #tpu.pipeline_mode<synchronous>, transform_indices = @transform_5, window_bounds = array<i64: 1, 128>}, {pipeline_mode = #tpu.pipeline_mode<synchronous>, transform_indices = @transform_6, window_bounds = array<i64: 128, 384>}, {pipeline_mode = #tpu.pipeline_mode<synchronous>, transform_indices = @transform_7, window_bounds = array<i64: 1, 384>}, {pipeline_mode = #tpu.pipeline_mode<synchronous>, transform_indices = @transform_8, window_bounds = array<i64: 128, 128>}, {pipeline_mode = #tpu.pipeline_mode<synchronous>, transform_indices = @transform_9, window_bounds = array<i64: 1, 128>}, {pipeline_mode = #tpu.pipeline_mode<synchronous>, transform_indices = @transform_10, window_bounds = array<i64: 1, 128>}, {pipeline_mode = #tpu.pipeline_mode<synchronous>, transform_indices = @transform_11, window_bounds = array<i64: 1, 128>}, {pipeline_mode = #tpu.pipeline_mode<synchronous>, transform_indices = @transform_12, window_bounds = array<i64: 128, 128>}, {pipeline_mode = #tpu.pipeline_mode<synchronous>, transform_indices = @transform_13, window_bounds = array<i64: 1, 128>}, {pipeline_mode = #tpu.pipeline_mode<synchronous>, transform_indices = @transform_14, window_bounds = array<i64: 128, 256>}, {pipeline_mode = #tpu.pipeline_mode<synchronous>, transform_indices = @transform_15, window_bounds = array<i64: 1, 256>}, {pipeline_mode = #tpu.pipeline_mode<synchronous>, transform_indices = @transform_16, window_bounds = array<i64: 128, 128>}, {pipeline_mode = #tpu.pipeline_mode<synchronous>, transform_indices = @transform_17, window_bounds = array<i64: 1, 128>}, {pipeline_mode = #tpu.pipeline_mode<synchronous>, transform_indices = @transform_18, window_bounds = array<i64: 1, 128>}, {pipeline_mode = #tpu.pipeline_mode<synchronous>, transform_indices = @transform_19, window_bounds = array<i64: 1, 128>}, {pipeline_mode = #tpu.pipeline_mode<synchronous>, transform_indices = @transform_20, window_bounds = array<i64: 128, 256>}, {pipeline_mode = #tpu.pipeline_mode<synchronous>, transform_indices = @transform_21, window_bounds = array<i64: 1, 256>}, {pipeline_mode = #tpu.pipeline_mode<synchronous>, transform_indices = @transform_22, window_bounds = array<i64: 256, 128>}, {pipeline_mode = #tpu.pipeline_mode<synchronous>, transform_indices = @transform_23, window_bounds = array<i64: 1, 128>}, {pipeline_mode = #tpu.pipeline_mode<synchronous>, transform_indices = @transform_24, window_bounds = array<i64: 1, 128>}, {pipeline_mode = #tpu.pipeline_mode<synchronous>, transform_indices = @transform_25, window_bounds = array<i64: 1, 128>}, {transform_indices = @transform_26, window_bounds = array<i64: 2, 8, 128>}]} {
    %c0 = arith.constant 0 : index
    %c0_0 = arith.constant 0 : index
    %c0_1 = arith.constant 0 : index
    %0 = vector.load %arg1[%c0, %c0_0, %c0_1] : memref<2x8x128xbf16, #tpu.memory_space<vmem>>, vector<2x8x128xbf16>
    %1 = arith.extf %0 : vector<2x8x128xbf16> to vector<2x8x128xf32>
    %2 = vector.shape_cast %1 : vector<2x8x128xf32> to vector<16x128xf32>
    %c0_2 = arith.constant 0 : index
    %c0_3 = arith.constant 0 : index
    %c0_4 = arith.constant 0 : index
    %3 = vector.load %arg2[%c0_2, %c0_3, %c0_4] : memref<2x16x128xbf16, #tpu.memory_space<vmem>>, vector<2x16x128xbf16>
    %4 = vector.shape_cast %3 : vector<2x16x128xbf16> to vector<32x128xbf16>
    %c0_5 = arith.constant 0 : index
    %c0_6 = arith.constant 0 : index
    %c0_7 = arith.constant 0 : index
    %5 = vector.load %arg3[%c0_5, %c0_6, %c0_7] : memref<2x8x8xi8, #tpu.memory_space<vmem>>, vector<2x8x8xi8>
    %c0_i8 = arith.constant 0 : i8
    %6 = vector.broadcast %c0_i8 : i8 to vector<2x8x8xi8>
    %7 = arith.cmpi ne, %5, %6 : vector<2x8x8xi8>
    %c0_8 = arith.constant 0 : index
    %c0_9 = arith.constant 0 : index
    %c0_10 = arith.constant 0 : index
    %8 = vector.load %arg4[%c0_8, %c0_9, %c0_10] : memref<2x8x16xi8, #tpu.memory_space<vmem>>, vector<2x8x16xi8>
    %c0_i8_11 = arith.constant 0 : i8
    %9 = vector.broadcast %c0_i8_11 : i8 to vector<2x8x16xi8>
    %10 = arith.cmpi ne, %8, %9 : vector<2x8x16xi8>
    %c0_12 = arith.constant 0 : index
    %c0_13 = arith.constant 0 : index
    %11 = vector.load %arg5[%c0_12, %c0_13] : memref<1x128xf32, #tpu.memory_space<vmem>>, vector<1x128xf32>
    %c0_14 = arith.constant 0 : index
    %c0_15 = arith.constant 0 : index
    %12 = vector.load %arg6[%c0_14, %c0_15] : memref<1x128xf32, #tpu.memory_space<vmem>>, vector<1x128xf32>
    %cst = arith.constant dense<0.000000e+00> : vector<16xf32>
    %13 = vector.multi_reduction <add>, %2, %cst [1] : vector<16x128xf32> to vector<16xf32>
    %14 = vector.shape_cast %13 : vector<16xf32> to vector<16x1xf32>
    %cst_16 = arith.constant 1.280000e+02 : f32
    %15 = vector.broadcast %cst_16 : f32 to vector<16x1xf32>
    %16 = arith.divf %14, %15 : vector<16x1xf32>
    %17 = vector.broadcast %16 : vector<16x1xf32> to vector<16x128xf32>
    %18 = arith.subf %2, %17 : vector<16x128xf32>
    %19 = arith.mulf %18, %18 : vector<16x128xf32>
    %cst_17 = arith.constant dense<0.000000e+00> : vector<16xf32>
    %20 = vector.multi_reduction <add>, %19, %cst_17 [1] : vector<16x128xf32> to vector<16xf32>
    %21 = vector.shape_cast %20 : vector<16xf32> to vector<16x1xf32>
    %cst_18 = arith.constant 1.280000e+02 : f32
    %22 = vector.broadcast %cst_18 : f32 to vector<16x1xf32>
    %23 = arith.divf %21, %22 : vector<16x1xf32>
    %24 = vector.broadcast %16 : vector<16x1xf32> to vector<16x128xf32>
    %25 = arith.subf %2, %24 : vector<16x128xf32>
    %cst_19 = arith.constant 9.99999974E-6 : f32
    %26 = vector.broadcast %cst_19 : f32 to vector<16x1xf32>
    %27 = arith.addf %23, %26 : vector<16x1xf32>
    %28 = math.rsqrt %27 : vector<16x1xf32>
    %29 = vector.broadcast %28 : vector<16x1xf32> to vector<16x128xf32>
    %30 = arith.mulf %25, %29 : vector<16x128xf32>
    %31 = vector.broadcast %11 : vector<1x128xf32> to vector<16x128xf32>
    %32 = arith.mulf %30, %31 : vector<16x128xf32>
    %33 = vector.broadcast %12 : vector<1x128xf32> to vector<16x128xf32>
    %34 = arith.addf %32, %33 : vector<16x128xf32>
    %35 = arith.truncf %34 : vector<16x128xf32> to vector<16x128xbf16>
    %c0_20 = arith.constant 0 : index
    %c0_21 = arith.constant 0 : index
    %36 = vector.load %arg7[%c0_20, %c0_21] : memref<128x384xbf16, #tpu.memory_space<vmem>>, vector<128x384xbf16>
    %cst_22 = arith.constant dense<0.000000e+00> : vector<16x384xf32>
    %37 = tpu.matmul %35, %36, %cst_22 {dimension_numbers = #tpu.dot_dimension_numbers<[1], [0], [0], [1], [0, 0, 1, 1], [], []>} : vector<16x128xbf16>, vector<128x384xbf16>, vector<16x384xf32> -> vector<16x384xf32>
    %c0_23 = arith.constant 0 : index
    %c0_24 = arith.constant 0 : index
    %38 = vector.load %arg8[%c0_23, %c0_24] : memref<1x384xf32, #tpu.memory_space<vmem>>, vector<1x384xf32>
    %39 = vector.broadcast %38 : vector<1x384xf32> to vector<16x384xf32>
    %40 = arith.addf %37, %39 : vector<16x384xf32>
    %41 = vector.extract_strided_slice %40 {offsets = [0, 0], sizes = [16, 128], strides = [1, 1]} : vector<16x384xf32> to vector<16x128xf32>
    %cst_25 = arith.constant 0.176776692 : f32
    %42 = vector.broadcast %cst_25 : f32 to vector<16x128xf32>
    %43 = arith.mulf %41, %42 : vector<16x128xf32>
    %44 = vector.extract_strided_slice %40 {offsets = [0, 128], sizes = [16, 128], strides = [1, 1]} : vector<16x384xf32> to vector<16x128xf32>
    %45 = vector.extract_strided_slice %40 {offsets = [0, 256], sizes = [16, 128], strides = [1, 1]} : vector<16x384xf32> to vector<16x128xf32>
    %46 = arith.truncf %43 : vector<16x128xf32> to vector<16x128xbf16>
    %47 = arith.truncf %44 : vector<16x128xf32> to vector<16x128xbf16>
    %48 = arith.truncf %45 : vector<16x128xf32> to vector<16x128xbf16>
    %49 = vector.extract_strided_slice %46 {offsets = [0, 0], sizes = [8, 128], strides = [1, 1]} : vector<16x128xbf16> to vector<8x128xbf16>
    %50 = vector.extract_strided_slice %47 {offsets = [0, 0], sizes = [8, 128], strides = [1, 1]} : vector<16x128xbf16> to vector<8x128xbf16>
    %51 = vector.extract_strided_slice %48 {offsets = [0, 0], sizes = [8, 128], strides = [1, 1]} : vector<16x128xbf16> to vector<8x128xbf16>
    %52 = vector.extract_strided_slice %7 {offsets = [0, 0, 0], sizes = [1, 8, 8], strides = [1, 1, 1]} : vector<2x8x8xi1> to vector<1x8x8xi1>
    %53 = vector.shape_cast %52 : vector<1x8x8xi1> to vector<8x8xi1>
    %54 = vector.extract_strided_slice %49 {offsets = [0, 0], sizes = [8, 32], strides = [1, 1]} : vector<8x128xbf16> to vector<8x32xbf16>
    %55 = vector.extract_strided_slice %50 {offsets = [0, 0], sizes = [8, 32], strides = [1, 1]} : vector<8x128xbf16> to vector<8x32xbf16>
    %cst_26 = arith.constant dense<0.000000e+00> : vector<8x8xf32>
    %56 = tpu.matmul %54, %55, %cst_26 {dimension_numbers = #tpu.dot_dimension_numbers<[1], [1], [0], [0], [0, 0, 1, 0], [], []>} : vector<8x32xbf16>, vector<8x32xbf16>, vector<8x8xf32> -> vector<8x8xf32>
    %cst_27 = arith.constant 9.99999971E-10 : f32
    %57 = vector.broadcast %cst_27 : f32 to vector<8x8xf32>
    %58 = arith.select %53, %56, %57 : vector<8x8xi1>, vector<8x8xf32>
    %cst_28 = arith.constant dense<0xFF800000> : vector<8xf32>
    %59 = vector.multi_reduction <maximumf>, %58, %cst_28 [1] : vector<8x8xf32> to vector<8xf32>
    %60 = vector.shape_cast %59 : vector<8xf32> to vector<8x1xf32>
    %61 = vector.broadcast %60 : vector<8x1xf32> to vector<8x8xf32>
    %62 = arith.subf %58, %61 : vector<8x8xf32>
    %63 = math.exp %62 : vector<8x8xf32>
    %cst_29 = arith.constant dense<0.000000e+00> : vector<8xf32>
    %64 = vector.multi_reduction <add>, %63, %cst_29 [1] : vector<8x8xf32> to vector<8xf32>
    %65 = vector.shape_cast %64 : vector<8xf32> to vector<8x1xf32>
    %66 = vector.broadcast %65 : vector<8x1xf32> to vector<8x8xf32>
    %67 = arith.divf %63, %66 : vector<8x8xf32>
    %68 = arith.truncf %67 : vector<8x8xf32> to vector<8x8xbf16>
    %69 = vector.extract_strided_slice %51 {offsets = [0, 0], sizes = [8, 32], strides = [1, 1]} : vector<8x128xbf16> to vector<8x32xbf16>
    %cst_30 = arith.constant dense<0.000000e+00> : vector<8x32xf32>
    %70 = tpu.matmul %68, %69, %cst_30 {dimension_numbers = #tpu.dot_dimension_numbers<[1], [0], [0], [1], [0, 0, 1, 1], [], []>} : vector<8x8xbf16>, vector<8x32xbf16>, vector<8x32xf32> -> vector<8x32xf32>
    %c0_31 = arith.constant 0 : index
    %c0_32 = arith.constant 0 : index
    %71 = vector.load %arg28[%c0_31, %c0_32] : memref<16x128xf32, #tpu.memory_space<vmem>>, vector<8x32xf32>
    tpu.vector_store %arg28[%c0_31, %c0_32], %70 {strides = array<i32>} : memref<16x128xf32, #tpu.memory_space<vmem>>, vector<8x32xf32>,
    %72 = vector.extract_strided_slice %49 {offsets = [0, 32], sizes = [8, 32], strides = [1, 1]} : vector<8x128xbf16> to vector<8x32xbf16>
    %73 = vector.extract_strided_slice %50 {offsets = [0, 32], sizes = [8, 32], strides = [1, 1]} : vector<8x128xbf16> to vector<8x32xbf16>
    %cst_33 = arith.constant dense<0.000000e+00> : vector<8x8xf32>
    %74 = tpu.matmul %72, %73, %cst_33 {dimension_numbers = #tpu.dot_dimension_numbers<[1], [1], [0], [0], [0, 0, 1, 0], [], []>} : vector<8x32xbf16>, vector<8x32xbf16>, vector<8x8xf32> -> vector<8x8xf32>
    %cst_34 = arith.constant 9.99999971E-10 : f32
    %75 = vector.broadcast %cst_34 : f32 to vector<8x8xf32>
    %76 = arith.select %53, %74, %75 : vector<8x8xi1>, vector<8x8xf32>
    %cst_35 = arith.constant dense<0xFF800000> : vector<8xf32>
    %77 = vector.multi_reduction <maximumf>, %76, %cst_35 [1] : vector<8x8xf32> to vector<8xf32>
    %78 = vector.shape_cast %77 : vector<8xf32> to vector<8x1xf32>
    %79 = vector.broadcast %78 : vector<8x1xf32> to vector<8x8xf32>
    %80 = arith.subf %76, %79 : vector<8x8xf32>
    %81 = math.exp %80 : vector<8x8xf32>
    %cst_36 = arith.constant dense<0.000000e+00> : vector<8xf32>
    %82 = vector.multi_reduction <add>, %81, %cst_36 [1] : vector<8x8xf32> to vector<8xf32>
    %83 = vector.shape_cast %82 : vector<8xf32> to vector<8x1xf32>
    %84 = vector.broadcast %83 : vector<8x1xf32> to vector<8x8xf32>
    %85 = arith.divf %81, %84 : vector<8x8xf32>
    %86 = arith.truncf %85 : vector<8x8xf32> to vector<8x8xbf16>
    %87 = vector.extract_strided_slice %51 {offsets = [0, 32], sizes = [8, 32], strides = [1, 1]} : vector<8x128xbf16> to vector<8x32xbf16>
    %cst_37 = arith.constant dense<0.000000e+00> : vector<8x32xf32>
    %88 = tpu.matmul %86, %87, %cst_37 {dimension_numbers = #tpu.dot_dimension_numbers<[1], [0], [0], [1], [0, 0, 1, 1], [], []>} : vector<8x8xbf16>, vector<8x32xbf16>, vector<8x32xf32> -> vector<8x32xf32>
    %c0_38 = arith.constant 0 : index
    %c32 = arith.constant 32 : index
    %89 = vector.load %arg28[%c0_38, %c32] : memref<16x128xf32, #tpu.memory_space<vmem>>, vector<8x32xf32>
    tpu.vector_store %arg28[%c0_38, %c32], %88 {strides = array<i32>} : memref<16x128xf32, #tpu.memory_space<vmem>>, vector<8x32xf32>,
    %90 = vector.extract_strided_slice %49 {offsets = [0, 64], sizes = [8, 32], strides = [1, 1]} : vector<8x128xbf16> to vector<8x32xbf16>
    %91 = vector.extract_strided_slice %50 {offsets = [0, 64], sizes = [8, 32], strides = [1, 1]} : vector<8x128xbf16> to vector<8x32xbf16>
    %cst_39 = arith.constant dense<0.000000e+00> : vector<8x8xf32>
    %92 = tpu.matmul %90, %91, %cst_39 {dimension_numbers = #tpu.dot_dimension_numbers<[1], [1], [0], [0], [0, 0, 1, 0], [], []>} : vector<8x32xbf16>, vector<8x32xbf16>, vector<8x8xf32> -> vector<8x8xf32>
    %cst_40 = arith.constant 9.99999971E-10 : f32
    %93 = vector.broadcast %cst_40 : f32 to vector<8x8xf32>
    %94 = arith.select %53, %92, %93 : vector<8x8xi1>, vector<8x8xf32>
    %cst_41 = arith.constant dense<0xFF800000> : vector<8xf32>
    %95 = vector.multi_reduction <maximumf>, %94, %cst_41 [1] : vector<8x8xf32> to vector<8xf32>
    %96 = vector.shape_cast %95 : vector<8xf32> to vector<8x1xf32>
    %97 = vector.broadcast %96 : vector<8x1xf32> to vector<8x8xf32>
    %98 = arith.subf %94, %97 : vector<8x8xf32>
    %99 = math.exp %98 : vector<8x8xf32>
    %cst_42 = arith.constant dense<0.000000e+00> : vector<8xf32>
    %100 = vector.multi_reduction <add>, %99, %cst_42 [1] : vector<8x8xf32> to vector<8xf32>
    %101 = vector.shape_cast %100 : vector<8xf32> to vector<8x1xf32>
    %102 = vector.broadcast %101 : vector<8x1xf32> to vector<8x8xf32>
    %103 = arith.divf %99, %102 : vector<8x8xf32>
    %104 = arith.truncf %103 : vector<8x8xf32> to vector<8x8xbf16>
    %105 = vector.extract_strided_slice %51 {offsets = [0, 64], sizes = [8, 32], strides = [1, 1]} : vector<8x128xbf16> to vector<8x32xbf16>
    %cst_43 = arith.constant dense<0.000000e+00> : vector<8x32xf32>
    %106 = tpu.matmul %104, %105, %cst_43 {dimension_numbers = #tpu.dot_dimension_numbers<[1], [0], [0], [1], [0, 0, 1, 1], [], []>} : vector<8x8xbf16>, vector<8x32xbf16>, vector<8x32xf32> -> vector<8x32xf32>
    %c0_44 = arith.constant 0 : index
    %c64 = arith.constant 64 : index
    %107 = vector.load %arg28[%c0_44, %c64] : memref<16x128xf32, #tpu.memory_space<vmem>>, vector<8x32xf32>
    tpu.vector_store %arg28[%c0_44, %c64], %106 {strides = array<i32>} : memref<16x128xf32, #tpu.memory_space<vmem>>, vector<8x32xf32>,
    %108 = vector.extract_strided_slice %49 {offsets = [0, 96], sizes = [8, 32], strides = [1, 1]} : vector<8x128xbf16> to vector<8x32xbf16>
    %109 = vector.extract_strided_slice %50 {offsets = [0, 96], sizes = [8, 32], strides = [1, 1]} : vector<8x128xbf16> to vector<8x32xbf16>
    %cst_45 = arith.constant dense<0.000000e+00> : vector<8x8xf32>
    %110 = tpu.matmul %108, %109, %cst_45 {dimension_numbers = #tpu.dot_dimension_numbers<[1], [1], [0], [0], [0, 0, 1, 0], [], []>} : vector<8x32xbf16>, vector<8x32xbf16>, vector<8x8xf32> -> vector<8x8xf32>
    %cst_46 = arith.constant 9.99999971E-10 : f32
    %111 = vector.broadcast %cst_46 : f32 to vector<8x8xf32>
    %112 = arith.select %53, %110, %111 : vector<8x8xi1>, vector<8x8xf32>
    %cst_47 = arith.constant dense<0xFF800000> : vector<8xf32>
    %113 = vector.multi_reduction <maximumf>, %112, %cst_47 [1] : vector<8x8xf32> to vector<8xf32>
    %114 = vector.shape_cast %113 : vector<8xf32> to vector<8x1xf32>
    %115 = vector.broadcast %114 : vector<8x1xf32> to vector<8x8xf32>
    %116 = arith.subf %112, %115 : vector<8x8xf32>
    %117 = math.exp %116 : vector<8x8xf32>
    %cst_48 = arith.constant dense<0.000000e+00> : vector<8xf32>
    %118 = vector.multi_reduction <add>, %117, %cst_48 [1] : vector<8x8xf32> to vector<8xf32>
    %119 = vector.shape_cast %118 : vector<8xf32> to vector<8x1xf32>
    %120 = vector.broadcast %119 : vector<8x1xf32> to vector<8x8xf32>
    %121 = arith.divf %117, %120 : vector<8x8xf32>
    %122 = arith.truncf %121 : vector<8x8xf32> to vector<8x8xbf16>
    %123 = vector.extract_strided_slice %51 {offsets = [0, 96], sizes = [8, 32], strides = [1, 1]} : vector<8x128xbf16> to vector<8x32xbf16>
    %cst_49 = arith.constant dense<0.000000e+00> : vector<8x32xf32>
    %124 = tpu.matmul %122, %123, %cst_49 {dimension_numbers = #tpu.dot_dimension_numbers<[1], [0], [0], [1], [0, 0, 1, 1], [], []>} : vector<8x8xbf16>, vector<8x32xbf16>, vector<8x32xf32> -> vector<8x32xf32>
    %c0_50 = arith.constant 0 : index
    %c96 = arith.constant 96 : index
    %125 = vector.load %arg28[%c0_50, %c96] : memref<16x128xf32, #tpu.memory_space<vmem>>, vector<8x32xf32>
    tpu.vector_store %arg28[%c0_50, %c96], %124 {strides = array<i32>} : memref<16x128xf32, #tpu.memory_space<vmem>>, vector<8x32xf32>,
    %126 = vector.extract_strided_slice %46 {offsets = [8, 0], sizes = [8, 128], strides = [1, 1]} : vector<16x128xbf16> to vector<8x128xbf16>
    %127 = vector.extract_strided_slice %47 {offsets = [8, 0], sizes = [8, 128], strides = [1, 1]} : vector<16x128xbf16> to vector<8x128xbf16>
    %128 = vector.extract_strided_slice %48 {offsets = [8, 0], sizes = [8, 128], strides = [1, 1]} : vector<16x128xbf16> to vector<8x128xbf16>
    %129 = vector.extract_strided_slice %7 {offsets = [1, 0, 0], sizes = [1, 8, 8], strides = [1, 1, 1]} : vector<2x8x8xi1> to vector<1x8x8xi1>
    %130 = vector.shape_cast %129 : vector<1x8x8xi1> to vector<8x8xi1>
    %131 = vector.extract_strided_slice %126 {offsets = [0, 0], sizes = [8, 32], strides = [1, 1]} : vector<8x128xbf16> to vector<8x32xbf16>
    %132 = vector.extract_strided_slice %127 {offsets = [0, 0], sizes = [8, 32], strides = [1, 1]} : vector<8x128xbf16> to vector<8x32xbf16>
    %cst_51 = arith.constant dense<0.000000e+00> : vector<8x8xf32>
    %133 = tpu.matmul %131, %132, %cst_51 {dimension_numbers = #tpu.dot_dimension_numbers<[1], [1], [0], [0], [0, 0, 1, 0], [], []>} : vector<8x32xbf16>, vector<8x32xbf16>, vector<8x8xf32> -> vector<8x8xf32>
    %cst_52 = arith.constant 9.99999971E-10 : f32
    %134 = vector.broadcast %cst_52 : f32 to vector<8x8xf32>
    %135 = arith.select %130, %133, %134 : vector<8x8xi1>, vector<8x8xf32>
    %cst_53 = arith.constant dense<0xFF800000> : vector<8xf32>
    %136 = vector.multi_reduction <maximumf>, %135, %cst_53 [1] : vector<8x8xf32> to vector<8xf32>
    %137 = vector.shape_cast %136 : vector<8xf32> to vector<8x1xf32>
    %138 = vector.broadcast %137 : vector<8x1xf32> to vector<8x8xf32>
    %139 = arith.subf %135, %138 : vector<8x8xf32>
    %140 = math.exp %139 : vector<8x8xf32>
    %cst_54 = arith.constant dense<0.000000e+00> : vector<8xf32>
    %141 = vector.multi_reduction <add>, %140, %cst_54 [1] : vector<8x8xf32> to vector<8xf32>
    %142 = vector.shape_cast %141 : vector<8xf32> to vector<8x1xf32>
    %143 = vector.broadcast %142 : vector<8x1xf32> to vector<8x8xf32>
    %144 = arith.divf %140, %143 : vector<8x8xf32>
    %145 = arith.truncf %144 : vector<8x8xf32> to vector<8x8xbf16>
    %146 = vector.extract_strided_slice %128 {offsets = [0, 0], sizes = [8, 32], strides = [1, 1]} : vector<8x128xbf16> to vector<8x32xbf16>
    %cst_55 = arith.constant dense<0.000000e+00> : vector<8x32xf32>
    %147 = tpu.matmul %145, %146, %cst_55 {dimension_numbers = #tpu.dot_dimension_numbers<[1], [0], [0], [1], [0, 0, 1, 1], [], []>} : vector<8x8xbf16>, vector<8x32xbf16>, vector<8x32xf32> -> vector<8x32xf32>
    %c8 = arith.constant 8 : index
    %c0_56 = arith.constant 0 : index
    %148 = vector.load %arg28[%c8, %c0_56] : memref<16x128xf32, #tpu.memory_space<vmem>>, vector<8x32xf32>
    tpu.vector_store %arg28[%c8, %c0_56], %147 {strides = array<i32>} : memref<16x128xf32, #tpu.memory_space<vmem>>, vector<8x32xf32>,
    %149 = vector.extract_strided_slice %126 {offsets = [0, 32], sizes = [8, 32], strides = [1, 1]} : vector<8x128xbf16> to vector<8x32xbf16>
    %150 = vector.extract_strided_slice %127 {offsets = [0, 32], sizes = [8, 32], strides = [1, 1]} : vector<8x128xbf16> to vector<8x32xbf16>
    %cst_57 = arith.constant dense<0.000000e+00> : vector<8x8xf32>
    %151 = tpu.matmul %149, %150, %cst_57 {dimension_numbers = #tpu.dot_dimension_numbers<[1], [1], [0], [0], [0, 0, 1, 0], [], []>} : vector<8x32xbf16>, vector<8x32xbf16>, vector<8x8xf32> -> vector<8x8xf32>
    %cst_58 = arith.constant 9.99999971E-10 : f32
    %152 = vector.broadcast %cst_58 : f32 to vector<8x8xf32>
    %153 = arith.select %130, %151, %152 : vector<8x8xi1>, vector<8x8xf32>
    %cst_59 = arith.constant dense<0xFF800000> : vector<8xf32>
    %154 = vector.multi_reduction <maximumf>, %153, %cst_59 [1] : vector<8x8xf32> to vector<8xf32>
    %155 = vector.shape_cast %154 : vector<8xf32> to vector<8x1xf32>
    %156 = vector.broadcast %155 : vector<8x1xf32> to vector<8x8xf32>
    %157 = arith.subf %153, %156 : vector<8x8xf32>
    %158 = math.exp %157 : vector<8x8xf32>
    %cst_60 = arith.constant dense<0.000000e+00> : vector<8xf32>
    %159 = vector.multi_reduction <add>, %158, %cst_60 [1] : vector<8x8xf32> to vector<8xf32>
    %160 = vector.shape_cast %159 : vector<8xf32> to vector<8x1xf32>
    %161 = vector.broadcast %160 : vector<8x1xf32> to vector<8x8xf32>
    %162 = arith.divf %158, %161 : vector<8x8xf32>
    %163 = arith.truncf %162 : vector<8x8xf32> to vector<8x8xbf16>
    %164 = vector.extract_strided_slice %128 {offsets = [0, 32], sizes = [8, 32], strides = [1, 1]} : vector<8x128xbf16> to vector<8x32xbf16>
    %cst_61 = arith.constant dense<0.000000e+00> : vector<8x32xf32>
    %165 = tpu.matmul %163, %164, %cst_61 {dimension_numbers = #tpu.dot_dimension_numbers<[1], [0], [0], [1], [0, 0, 1, 1], [], []>} : vector<8x8xbf16>, vector<8x32xbf16>, vector<8x32xf32> -> vector<8x32xf32>
    %c8_62 = arith.constant 8 : index
    %c32_63 = arith.constant 32 : index
    %166 = vector.load %arg28[%c8_62, %c32_63] : memref<16x128xf32, #tpu.memory_space<vmem>>, vector<8x32xf32>
    tpu.vector_store %arg28[%c8_62, %c32_63], %165 {strides = array<i32>} : memref<16x128xf32, #tpu.memory_space<vmem>>, vector<8x32xf32>,
    %167 = vector.extract_strided_slice %126 {offsets = [0, 64], sizes = [8, 32], strides = [1, 1]} : vector<8x128xbf16> to vector<8x32xbf16>
    %168 = vector.extract_strided_slice %127 {offsets = [0, 64], sizes = [8, 32], strides = [1, 1]} : vector<8x128xbf16> to vector<8x32xbf16>
    %cst_64 = arith.constant dense<0.000000e+00> : vector<8x8xf32>
    %169 = tpu.matmul %167, %168, %cst_64 {dimension_numbers = #tpu.dot_dimension_numbers<[1], [1], [0], [0], [0, 0, 1, 0], [], []>} : vector<8x32xbf16>, vector<8x32xbf16>, vector<8x8xf32> -> vector<8x8xf32>
    %cst_65 = arith.constant 9.99999971E-10 : f32
    %170 = vector.broadcast %cst_65 : f32 to vector<8x8xf32>
    %171 = arith.select %130, %169, %170 : vector<8x8xi1>, vector<8x8xf32>
    %cst_66 = arith.constant dense<0xFF800000> : vector<8xf32>
    %172 = vector.multi_reduction <maximumf>, %171, %cst_66 [1] : vector<8x8xf32> to vector<8xf32>
    %173 = vector.shape_cast %172 : vector<8xf32> to vector<8x1xf32>
    %174 = vector.broadcast %173 : vector<8x1xf32> to vector<8x8xf32>
    %175 = arith.subf %171, %174 : vector<8x8xf32>
    %176 = math.exp %175 : vector<8x8xf32>
    %cst_67 = arith.constant dense<0.000000e+00> : vector<8xf32>
    %177 = vector.multi_reduction <add>, %176, %cst_67 [1] : vector<8x8xf32> to vector<8xf32>
    %178 = vector.shape_cast %177 : vector<8xf32> to vector<8x1xf32>
    %179 = vector.broadcast %178 : vector<8x1xf32> to vector<8x8xf32>
    %180 = arith.divf %176, %179 : vector<8x8xf32>
    %181 = arith.truncf %180 : vector<8x8xf32> to vector<8x8xbf16>
    %182 = vector.extract_strided_slice %128 {offsets = [0, 64], sizes = [8, 32], strides = [1, 1]} : vector<8x128xbf16> to vector<8x32xbf16>
    %cst_68 = arith.constant dense<0.000000e+00> : vector<8x32xf32>
    %183 = tpu.matmul %181, %182, %cst_68 {dimension_numbers = #tpu.dot_dimension_numbers<[1], [0], [0], [1], [0, 0, 1, 1], [], []>} : vector<8x8xbf16>, vector<8x32xbf16>, vector<8x32xf32> -> vector<8x32xf32>
    %c8_69 = arith.constant 8 : index
    %c64_70 = arith.constant 64 : index
    %184 = vector.load %arg28[%c8_69, %c64_70] : memref<16x128xf32, #tpu.memory_space<vmem>>, vector<8x32xf32>
    tpu.vector_store %arg28[%c8_69, %c64_70], %183 {strides = array<i32>} : memref<16x128xf32, #tpu.memory_space<vmem>>, vector<8x32xf32>,
    %185 = vector.extract_strided_slice %126 {offsets = [0, 96], sizes = [8, 32], strides = [1, 1]} : vector<8x128xbf16> to vector<8x32xbf16>
    %186 = vector.extract_strided_slice %127 {offsets = [0, 96], sizes = [8, 32], strides = [1, 1]} : vector<8x128xbf16> to vector<8x32xbf16>
    %cst_71 = arith.constant dense<0.000000e+00> : vector<8x8xf32>
    %187 = tpu.matmul %185, %186, %cst_71 {dimension_numbers = #tpu.dot_dimension_numbers<[1], [1], [0], [0], [0, 0, 1, 0], [], []>} : vector<8x32xbf16>, vector<8x32xbf16>, vector<8x8xf32> -> vector<8x8xf32>
    %cst_72 = arith.constant 9.99999971E-10 : f32
    %188 = vector.broadcast %cst_72 : f32 to vector<8x8xf32>
    %189 = arith.select %130, %187, %188 : vector<8x8xi1>, vector<8x8xf32>
    %cst_73 = arith.constant dense<0xFF800000> : vector<8xf32>
    %190 = vector.multi_reduction <maximumf>, %189, %cst_73 [1] : vector<8x8xf32> to vector<8xf32>
    %191 = vector.shape_cast %190 : vector<8xf32> to vector<8x1xf32>
    %192 = vector.broadcast %191 : vector<8x1xf32> to vector<8x8xf32>
    %193 = arith.subf %189, %192 : vector<8x8xf32>
    %194 = math.exp %193 : vector<8x8xf32>
    %cst_74 = arith.constant dense<0.000000e+00> : vector<8xf32>
    %195 = vector.multi_reduction <add>, %194, %cst_74 [1] : vector<8x8xf32> to vector<8xf32>
    %196 = vector.shape_cast %195 : vector<8xf32> to vector<8x1xf32>
    %197 = vector.broadcast %196 : vector<8x1xf32> to vector<8x8xf32>
    %198 = arith.divf %194, %197 : vector<8x8xf32>
    %199 = arith.truncf %198 : vector<8x8xf32> to vector<8x8xbf16>
    %200 = vector.extract_strided_slice %128 {offsets = [0, 96], sizes = [8, 32], strides = [1, 1]} : vector<8x128xbf16> to vector<8x32xbf16>
    %cst_75 = arith.constant dense<0.000000e+00> : vector<8x32xf32>
    %201 = tpu.matmul %199, %200, %cst_75 {dimension_numbers = #tpu.dot_dimension_numbers<[1], [0], [0], [1], [0, 0, 1, 1], [], []>} : vector<8x8xbf16>, vector<8x32xbf16>, vector<8x32xf32> -> vector<8x32xf32>
    %c8_76 = arith.constant 8 : index
    %c96_77 = arith.constant 96 : index
    %202 = vector.load %arg28[%c8_76, %c96_77] : memref<16x128xf32, #tpu.memory_space<vmem>>, vector<8x32xf32>
    tpu.vector_store %arg28[%c8_76, %c96_77], %201 {strides = array<i32>} : memref<16x128xf32, #tpu.memory_space<vmem>>, vector<8x32xf32>,
    %c0_78 = arith.constant 0 : index
    %c0_79 = arith.constant 0 : index
    %203 = vector.load %arg28[%c0_78, %c0_79] : memref<16x128xf32, #tpu.memory_space<vmem>>, vector<16x128xf32>
    %204 = arith.truncf %203 : vector<16x128xf32> to vector<16x128xbf16>
    %c0_80 = arith.constant 0 : index
    %c0_81 = arith.constant 0 : index
    %205 = vector.load %arg9[%c0_80, %c0_81] : memref<128x128xbf16, #tpu.memory_space<vmem>>, vector<128x128xbf16>
    %cst_82 = arith.constant dense<0.000000e+00> : vector<16x128xf32>
    %206 = tpu.matmul %204, %205, %cst_82 {dimension_numbers = #tpu.dot_dimension_numbers<[1], [0], [0], [1], [0, 0, 1, 1], [], []>} : vector<16x128xbf16>, vector<128x128xbf16>, vector<16x128xf32> -> vector<16x128xf32>
    %207 = arith.addf %2, %206 : vector<16x128xf32>
    %c0_83 = arith.constant 0 : index
    %c0_84 = arith.constant 0 : index
    %208 = vector.load %arg10[%c0_83, %c0_84] : memref<1x128xf32, #tpu.memory_space<vmem>>, vector<1x128xf32>
    %209 = vector.broadcast %208 : vector<1x128xf32> to vector<16x128xf32>
    %210 = arith.addf %207, %209 : vector<16x128xf32>
    %c0_85 = arith.constant 0 : index
    %c0_86 = arith.constant 0 : index
    %211 = vector.load %arg11[%c0_85, %c0_86] : memref<1x128xf32, #tpu.memory_space<vmem>>, vector<1x128xf32>
    %c0_87 = arith.constant 0 : index
    %c0_88 = arith.constant 0 : index
    %212 = vector.load %arg12[%c0_87, %c0_88] : memref<1x128xf32, #tpu.memory_space<vmem>>, vector<1x128xf32>
    %cst_89 = arith.constant dense<0.000000e+00> : vector<16xf32>
    %213 = vector.multi_reduction <add>, %210, %cst_89 [1] : vector<16x128xf32> to vector<16xf32>
    %214 = vector.shape_cast %213 : vector<16xf32> to vector<16x1xf32>
    %cst_90 = arith.constant 1.280000e+02 : f32
    %215 = vector.broadcast %cst_90 : f32 to vector<16x1xf32>
    %216 = arith.divf %214, %215 : vector<16x1xf32>
    %217 = vector.broadcast %216 : vector<16x1xf32> to vector<16x128xf32>
    %218 = arith.subf %210, %217 : vector<16x128xf32>
    %219 = arith.mulf %218, %218 : vector<16x128xf32>
    %cst_91 = arith.constant dense<0.000000e+00> : vector<16xf32>
    %220 = vector.multi_reduction <add>, %219, %cst_91 [1] : vector<16x128xf32> to vector<16xf32>
    %221 = vector.shape_cast %220 : vector<16xf32> to vector<16x1xf32>
    %cst_92 = arith.constant 1.280000e+02 : f32
    %222 = vector.broadcast %cst_92 : f32 to vector<16x1xf32>
    %223 = arith.divf %221, %222 : vector<16x1xf32>
    %224 = vector.broadcast %216 : vector<16x1xf32> to vector<16x128xf32>
    %225 = arith.subf %210, %224 : vector<16x128xf32>
    %cst_93 = arith.constant 9.99999974E-6 : f32
    %226 = vector.broadcast %cst_93 : f32 to vector<16x1xf32>
    %227 = arith.addf %223, %226 : vector<16x1xf32>
    %228 = math.rsqrt %227 : vector<16x1xf32>
    %229 = vector.broadcast %228 : vector<16x1xf32> to vector<16x128xf32>
    %230 = arith.mulf %225, %229 : vector<16x128xf32>
    %231 = vector.broadcast %211 : vector<1x128xf32> to vector<16x128xf32>
    %232 = arith.mulf %230, %231 : vector<16x128xf32>
    %233 = vector.broadcast %212 : vector<1x128xf32> to vector<16x128xf32>
    %234 = arith.addf %232, %233 : vector<16x128xf32>
    %235 = arith.truncf %234 : vector<16x128xf32> to vector<16x128xbf16>
    %c0_94 = arith.constant 0 : index
    %c0_95 = arith.constant 0 : index
    %236 = vector.load %arg13[%c0_94, %c0_95] : memref<128x128xbf16, #tpu.memory_space<vmem>>, vector<128x128xbf16>
    %cst_96 = arith.constant dense<0.000000e+00> : vector<16x128xf32>
    %237 = tpu.matmul %235, %236, %cst_96 {dimension_numbers = #tpu.dot_dimension_numbers<[1], [0], [0], [1], [0, 0, 1, 1], [], []>} : vector<16x128xbf16>, vector<128x128xbf16>, vector<16x128xf32> -> vector<16x128xf32>
    %c0_97 = arith.constant 0 : index
    %c0_98 = arith.constant 0 : index
    %238 = vector.load %arg14[%c0_97, %c0_98] : memref<1x128xf32, #tpu.memory_space<vmem>>, vector<1x128xf32>
    %239 = vector.broadcast %238 : vector<1x128xf32> to vector<16x128xf32>
    %240 = arith.addf %237, %239 : vector<16x128xf32>
    %cst_99 = arith.constant 0.176776692 : f32
    %241 = vector.broadcast %cst_99 : f32 to vector<16x128xf32>
    %242 = arith.mulf %240, %241 : vector<16x128xf32>
    %c0_100 = arith.constant 0 : index
    %c0_101 = arith.constant 0 : index
    %243 = vector.load %arg15[%c0_100, %c0_101] : memref<128x256xbf16, #tpu.memory_space<vmem>>, vector<128x256xbf16>
    %cst_102 = arith.constant dense<0.000000e+00> : vector<32x256xf32>
    %244 = tpu.matmul %4, %243, %cst_102 {dimension_numbers = #tpu.dot_dimension_numbers<[1], [0], [0], [1], [0, 0, 1, 1], [], []>} : vector<32x128xbf16>, vector<128x256xbf16>, vector<32x256xf32> -> vector<32x256xf32>
    %c0_103 = arith.constant 0 : index
    %c0_104 = arith.constant 0 : index
    %245 = vector.load %arg16[%c0_103, %c0_104] : memref<1x256xf32, #tpu.memory_space<vmem>>, vector<1x256xf32>
    %246 = vector.broadcast %245 : vector<1x256xf32> to vector<32x256xf32>
    %247 = arith.addf %244, %246 : vector<32x256xf32>
    %248 = vector.extract_strided_slice %247 {offsets = [0, 0], sizes = [32, 128], strides = [1, 1]} : vector<32x256xf32> to vector<32x128xf32>
    %249 = vector.extract_strided_slice %247 {offsets = [0, 128], sizes = [32, 128], strides = [1, 1]} : vector<32x256xf32> to vector<32x128xf32>
    %250 = arith.truncf %242 : vector<16x128xf32> to vector<16x128xbf16>
    %251 = arith.truncf %248 : vector<32x128xf32> to vector<32x128xbf16>
    %252 = arith.truncf %249 : vector<32x128xf32> to vector<32x128xbf16>
    %253 = vector.extract_strided_slice %250 {offsets = [0, 0], sizes = [8, 128], strides = [1, 1]} : vector<16x128xbf16> to vector<8x128xbf16>
    %254 = vector.extract_strided_slice %251 {offsets = [0, 0], sizes = [16, 128], strides = [1, 1]} : vector<32x128xbf16> to vector<16x128xbf16>
    %255 = vector.extract_strided_slice %252 {offsets = [0, 0], sizes = [16, 128], strides = [1, 1]} : vector<32x128xbf16> to vector<16x128xbf16>
    %256 = vector.extract_strided_slice %10 {offsets = [0, 0, 0], sizes = [1, 8, 16], strides = [1, 1, 1]} : vector<2x8x16xi1> to vector<1x8x16xi1>
    %257 = vector.shape_cast %256 : vector<1x8x16xi1> to vector<8x16xi1>
    %258 = vector.extract_strided_slice %253 {offsets = [0, 0], sizes = [8, 32], strides = [1, 1]} : vector<8x128xbf16> to vector<8x32xbf16>
    %259 = vector.extract_strided_slice %254 {offsets = [0, 0], sizes = [16, 32], strides = [1, 1]} : vector<16x128xbf16> to vector<16x32xbf16>
    %cst_105 = arith.constant dense<0.000000e+00> : vector<8x16xf32>
    %260 = tpu.matmul %258, %259, %cst_105 {dimension_numbers = #tpu.dot_dimension_numbers<[1], [1], [0], [0], [0, 0, 1, 0], [], []>} : vector<8x32xbf16>, vector<16x32xbf16>, vector<8x16xf32> -> vector<8x16xf32>
    %cst_106 = arith.constant 9.99999971E-10 : f32
    %261 = vector.broadcast %cst_106 : f32 to vector<8x16xf32>
    %262 = arith.select %257, %260, %261 : vector<8x16xi1>, vector<8x16xf32>
    %cst_107 = arith.constant dense<0xFF800000> : vector<8xf32>
    %263 = vector.multi_reduction <maximumf>, %262, %cst_107 [1] : vector<8x16xf32> to vector<8xf32>
    %264 = vector.shape_cast %263 : vector<8xf32> to vector<8x1xf32>
    %265 = vector.broadcast %264 : vector<8x1xf32> to vector<8x16xf32>
    %266 = arith.subf %262, %265 : vector<8x16xf32>
    %267 = math.exp %266 : vector<8x16xf32>
    %cst_108 = arith.constant dense<0.000000e+00> : vector<8xf32>
    %268 = vector.multi_reduction <add>, %267, %cst_108 [1] : vector<8x16xf32> to vector<8xf32>
    %269 = vector.shape_cast %268 : vector<8xf32> to vector<8x1xf32>
    %270 = vector.broadcast %269 : vector<8x1xf32> to vector<8x16xf32>
    %271 = arith.divf %267, %270 : vector<8x16xf32>
    %272 = arith.truncf %271 : vector<8x16xf32> to vector<8x16xbf16>
    %273 = vector.extract_strided_slice %255 {offsets = [0, 0], sizes = [16, 32], strides = [1, 1]} : vector<16x128xbf16> to vector<16x32xbf16>
    %cst_109 = arith.constant dense<0.000000e+00> : vector<8x32xf32>
    %274 = tpu.matmul %272, %273, %cst_109 {dimension_numbers = #tpu.dot_dimension_numbers<[1], [0], [0], [1], [0, 0, 1, 1], [], []>} : vector<8x16xbf16>, vector<16x32xbf16>, vector<8x32xf32> -> vector<8x32xf32>
    %c0_110 = arith.constant 0 : index
    %c0_111 = arith.constant 0 : index
    %275 = vector.load %arg28[%c0_110, %c0_111] : memref<16x128xf32, #tpu.memory_space<vmem>>, vector<8x32xf32>
    tpu.vector_store %arg28[%c0_110, %c0_111], %274 {strides = array<i32>} : memref<16x128xf32, #tpu.memory_space<vmem>>, vector<8x32xf32>,
    %276 = vector.extract_strided_slice %253 {offsets = [0, 32], sizes = [8, 32], strides = [1, 1]} : vector<8x128xbf16> to vector<8x32xbf16>
    %277 = vector.extract_strided_slice %254 {offsets = [0, 32], sizes = [16, 32], strides = [1, 1]} : vector<16x128xbf16> to vector<16x32xbf16>
    %cst_112 = arith.constant dense<0.000000e+00> : vector<8x16xf32>
    %278 = tpu.matmul %276, %277, %cst_112 {dimension_numbers = #tpu.dot_dimension_numbers<[1], [1], [0], [0], [0, 0, 1, 0], [], []>} : vector<8x32xbf16>, vector<16x32xbf16>, vector<8x16xf32> -> vector<8x16xf32>
    %cst_113 = arith.constant 9.99999971E-10 : f32
    %279 = vector.broadcast %cst_113 : f32 to vector<8x16xf32>
    %280 = arith.select %257, %278, %279 : vector<8x16xi1>, vector<8x16xf32>
    %cst_114 = arith.constant dense<0xFF800000> : vector<8xf32>
    %281 = vector.multi_reduction <maximumf>, %280, %cst_114 [1] : vector<8x16xf32> to vector<8xf32>
    %282 = vector.shape_cast %281 : vector<8xf32> to vector<8x1xf32>
    %283 = vector.broadcast %282 : vector<8x1xf32> to vector<8x16xf32>
    %284 = arith.subf %280, %283 : vector<8x16xf32>
    %285 = math.exp %284 : vector<8x16xf32>
    %cst_115 = arith.constant dense<0.000000e+00> : vector<8xf32>
    %286 = vector.multi_reduction <add>, %285, %cst_115 [1] : vector<8x16xf32> to vector<8xf32>
    %287 = vector.shape_cast %286 : vector<8xf32> to vector<8x1xf32>
    %288 = vector.broadcast %287 : vector<8x1xf32> to vector<8x16xf32>
    %289 = arith.divf %285, %288 : vector<8x16xf32>
    %290 = arith.truncf %289 : vector<8x16xf32> to vector<8x16xbf16>
    %291 = vector.extract_strided_slice %255 {offsets = [0, 32], sizes = [16, 32], strides = [1, 1]} : vector<16x128xbf16> to vector<16x32xbf16>
    %cst_116 = arith.constant dense<0.000000e+00> : vector<8x32xf32>
    %292 = tpu.matmul %290, %291, %cst_116 {dimension_numbers = #tpu.dot_dimension_numbers<[1], [0], [0], [1], [0, 0, 1, 1], [], []>} : vector<8x16xbf16>, vector<16x32xbf16>, vector<8x32xf32> -> vector<8x32xf32>
    %c0_117 = arith.constant 0 : index
    %c32_118 = arith.constant 32 : index
    %293 = vector.load %arg28[%c0_117, %c32_118] : memref<16x128xf32, #tpu.memory_space<vmem>>, vector<8x32xf32>
    tpu.vector_store %arg28[%c0_117, %c32_118], %292 {strides = array<i32>} : memref<16x128xf32, #tpu.memory_space<vmem>>, vector<8x32xf32>,
    %294 = vector.extract_strided_slice %253 {offsets = [0, 64], sizes = [8, 32], strides = [1, 1]} : vector<8x128xbf16> to vector<8x32xbf16>
    %295 = vector.extract_strided_slice %254 {offsets = [0, 64], sizes = [16, 32], strides = [1, 1]} : vector<16x128xbf16> to vector<16x32xbf16>
    %cst_119 = arith.constant dense<0.000000e+00> : vector<8x16xf32>
    %296 = tpu.matmul %294, %295, %cst_119 {dimension_numbers = #tpu.dot_dimension_numbers<[1], [1], [0], [0], [0, 0, 1, 0], [], []>} : vector<8x32xbf16>, vector<16x32xbf16>, vector<8x16xf32> -> vector<8x16xf32>
    %cst_120 = arith.constant 9.99999971E-10 : f32
    %297 = vector.broadcast %cst_120 : f32 to vector<8x16xf32>
    %298 = arith.select %257, %296, %297 : vector<8x16xi1>, vector<8x16xf32>
    %cst_121 = arith.constant dense<0xFF800000> : vector<8xf32>
    %299 = vector.multi_reduction <maximumf>, %298, %cst_121 [1] : vector<8x16xf32> to vector<8xf32>
    %300 = vector.shape_cast %299 : vector<8xf32> to vector<8x1xf32>
    %301 = vector.broadcast %300 : vector<8x1xf32> to vector<8x16xf32>
    %302 = arith.subf %298, %301 : vector<8x16xf32>
    %303 = math.exp %302 : vector<8x16xf32>
    %cst_122 = arith.constant dense<0.000000e+00> : vector<8xf32>
    %304 = vector.multi_reduction <add>, %303, %cst_122 [1] : vector<8x16xf32> to vector<8xf32>
    %305 = vector.shape_cast %304 : vector<8xf32> to vector<8x1xf32>
    %306 = vector.broadcast %305 : vector<8x1xf32> to vector<8x16xf32>
    %307 = arith.divf %303, %306 : vector<8x16xf32>
    %308 = arith.truncf %307 : vector<8x16xf32> to vector<8x16xbf16>
    %309 = vector.extract_strided_slice %255 {offsets = [0, 64], sizes = [16, 32], strides = [1, 1]} : vector<16x128xbf16> to vector<16x32xbf16>
    %cst_123 = arith.constant dense<0.000000e+00> : vector<8x32xf32>
    %310 = tpu.matmul %308, %309, %cst_123 {dimension_numbers = #tpu.dot_dimension_numbers<[1], [0], [0], [1], [0, 0, 1, 1], [], []>} : vector<8x16xbf16>, vector<16x32xbf16>, vector<8x32xf32> -> vector<8x32xf32>
    %c0_124 = arith.constant 0 : index
    %c64_125 = arith.constant 64 : index
    %311 = vector.load %arg28[%c0_124, %c64_125] : memref<16x128xf32, #tpu.memory_space<vmem>>, vector<8x32xf32>
    tpu.vector_store %arg28[%c0_124, %c64_125], %310 {strides = array<i32>} : memref<16x128xf32, #tpu.memory_space<vmem>>, vector<8x32xf32>,
    %312 = vector.extract_strided_slice %253 {offsets = [0, 96], sizes = [8, 32], strides = [1, 1]} : vector<8x128xbf16> to vector<8x32xbf16>
    %313 = vector.extract_strided_slice %254 {offsets = [0, 96], sizes = [16, 32], strides = [1, 1]} : vector<16x128xbf16> to vector<16x32xbf16>
    %cst_126 = arith.constant dense<0.000000e+00> : vector<8x16xf32>
    %314 = tpu.matmul %312, %313, %cst_126 {dimension_numbers = #tpu.dot_dimension_numbers<[1], [1], [0], [0], [0, 0, 1, 0], [], []>} : vector<8x32xbf16>, vector<16x32xbf16>, vector<8x16xf32> -> vector<8x16xf32>
    %cst_127 = arith.constant 9.99999971E-10 : f32
    %315 = vector.broadcast %cst_127 : f32 to vector<8x16xf32>
    %316 = arith.select %257, %314, %315 : vector<8x16xi1>, vector<8x16xf32>
    %cst_128 = arith.constant dense<0xFF800000> : vector<8xf32>
    %317 = vector.multi_reduction <maximumf>, %316, %cst_128 [1] : vector<8x16xf32> to vector<8xf32>
    %318 = vector.shape_cast %317 : vector<8xf32> to vector<8x1xf32>
    %319 = vector.broadcast %318 : vector<8x1xf32> to vector<8x16xf32>
    %320 = arith.subf %316, %319 : vector<8x16xf32>
    %321 = math.exp %320 : vector<8x16xf32>
    %cst_129 = arith.constant dense<0.000000e+00> : vector<8xf32>
    %322 = vector.multi_reduction <add>, %321, %cst_129 [1] : vector<8x16xf32> to vector<8xf32>
    %323 = vector.shape_cast %322 : vector<8xf32> to vector<8x1xf32>
    %324 = vector.broadcast %323 : vector<8x1xf32> to vector<8x16xf32>
    %325 = arith.divf %321, %324 : vector<8x16xf32>
    %326 = arith.truncf %325 : vector<8x16xf32> to vector<8x16xbf16>
    %327 = vector.extract_strided_slice %255 {offsets = [0, 96], sizes = [16, 32], strides = [1, 1]} : vector<16x128xbf16> to vector<16x32xbf16>
    %cst_130 = arith.constant dense<0.000000e+00> : vector<8x32xf32>
    %328 = tpu.matmul %326, %327, %cst_130 {dimension_numbers = #tpu.dot_dimension_numbers<[1], [0], [0], [1], [0, 0, 1, 1], [], []>} : vector<8x16xbf16>, vector<16x32xbf16>, vector<8x32xf32> -> vector<8x32xf32>
    %c0_131 = arith.constant 0 : index
    %c96_132 = arith.constant 96 : index
    %329 = vector.load %arg28[%c0_131, %c96_132] : memref<16x128xf32, #tpu.memory_space<vmem>>, vector<8x32xf32>
    tpu.vector_store %arg28[%c0_131, %c96_132], %328 {strides = array<i32>} : memref<16x128xf32, #tpu.memory_space<vmem>>, vector<8x32xf32>,
    %330 = vector.extract_strided_slice %250 {offsets = [8, 0], sizes = [8, 128], strides = [1, 1]} : vector<16x128xbf16> to vector<8x128xbf16>
    %331 = vector.extract_strided_slice %251 {offsets = [16, 0], sizes = [16, 128], strides = [1, 1]} : vector<32x128xbf16> to vector<16x128xbf16>
    %332 = vector.extract_strided_slice %252 {offsets = [16, 0], sizes = [16, 128], strides = [1, 1]} : vector<32x128xbf16> to vector<16x128xbf16>
    %333 = vector.extract_strided_slice %10 {offsets = [1, 0, 0], sizes = [1, 8, 16], strides = [1, 1, 1]} : vector<2x8x16xi1> to vector<1x8x16xi1>
    %334 = vector.shape_cast %333 : vector<1x8x16xi1> to vector<8x16xi1>
    %335 = vector.extract_strided_slice %330 {offsets = [0, 0], sizes = [8, 32], strides = [1, 1]} : vector<8x128xbf16> to vector<8x32xbf16>
    %336 = vector.extract_strided_slice %331 {offsets = [0, 0], sizes = [16, 32], strides = [1, 1]} : vector<16x128xbf16> to vector<16x32xbf16>
    %cst_133 = arith.constant dense<0.000000e+00> : vector<8x16xf32>
    %337 = tpu.matmul %335, %336, %cst_133 {dimension_numbers = #tpu.dot_dimension_numbers<[1], [1], [0], [0], [0, 0, 1, 0], [], []>} : vector<8x32xbf16>, vector<16x32xbf16>, vector<8x16xf32> -> vector<8x16xf32>
    %cst_134 = arith.constant 9.99999971E-10 : f32
    %338 = vector.broadcast %cst_134 : f32 to vector<8x16xf32>
    %339 = arith.select %334, %337, %338 : vector<8x16xi1>, vector<8x16xf32>
    %cst_135 = arith.constant dense<0xFF800000> : vector<8xf32>
    %340 = vector.multi_reduction <maximumf>, %339, %cst_135 [1] : vector<8x16xf32> to vector<8xf32>
    %341 = vector.shape_cast %340 : vector<8xf32> to vector<8x1xf32>
    %342 = vector.broadcast %341 : vector<8x1xf32> to vector<8x16xf32>
    %343 = arith.subf %339, %342 : vector<8x16xf32>
    %344 = math.exp %343 : vector<8x16xf32>
    %cst_136 = arith.constant dense<0.000000e+00> : vector<8xf32>
    %345 = vector.multi_reduction <add>, %344, %cst_136 [1] : vector<8x16xf32> to vector<8xf32>
    %346 = vector.shape_cast %345 : vector<8xf32> to vector<8x1xf32>
    %347 = vector.broadcast %346 : vector<8x1xf32> to vector<8x16xf32>
    %348 = arith.divf %344, %347 : vector<8x16xf32>
    %349 = arith.truncf %348 : vector<8x16xf32> to vector<8x16xbf16>
    %350 = vector.extract_strided_slice %332 {offsets = [0, 0], sizes = [16, 32], strides = [1, 1]} : vector<16x128xbf16> to vector<16x32xbf16>
    %cst_137 = arith.constant dense<0.000000e+00> : vector<8x32xf32>
    %351 = tpu.matmul %349, %350, %cst_137 {dimension_numbers = #tpu.dot_dimension_numbers<[1], [0], [0], [1], [0, 0, 1, 1], [], []>} : vector<8x16xbf16>, vector<16x32xbf16>, vector<8x32xf32> -> vector<8x32xf32>
    %c8_138 = arith.constant 8 : index
    %c0_139 = arith.constant 0 : index
    %352 = vector.load %arg28[%c8_138, %c0_139] : memref<16x128xf32, #tpu.memory_space<vmem>>, vector<8x32xf32>
    tpu.vector_store %arg28[%c8_138, %c0_139], %351 {strides = array<i32>} : memref<16x128xf32, #tpu.memory_space<vmem>>, vector<8x32xf32>,
    %353 = vector.extract_strided_slice %330 {offsets = [0, 32], sizes = [8, 32], strides = [1, 1]} : vector<8x128xbf16> to vector<8x32xbf16>
    %354 = vector.extract_strided_slice %331 {offsets = [0, 32], sizes = [16, 32], strides = [1, 1]} : vector<16x128xbf16> to vector<16x32xbf16>
    %cst_140 = arith.constant dense<0.000000e+00> : vector<8x16xf32>
    %355 = tpu.matmul %353, %354, %cst_140 {dimension_numbers = #tpu.dot_dimension_numbers<[1], [1], [0], [0], [0, 0, 1, 0], [], []>} : vector<8x32xbf16>, vector<16x32xbf16>, vector<8x16xf32> -> vector<8x16xf32>
    %cst_141 = arith.constant 9.99999971E-10 : f32
    %356 = vector.broadcast %cst_141 : f32 to vector<8x16xf32>
    %357 = arith.select %334, %355, %356 : vector<8x16xi1>, vector<8x16xf32>
    %cst_142 = arith.constant dense<0xFF800000> : vector<8xf32>
    %358 = vector.multi_reduction <maximumf>, %357, %cst_142 [1] : vector<8x16xf32> to vector<8xf32>
    %359 = vector.shape_cast %358 : vector<8xf32> to vector<8x1xf32>
    %360 = vector.broadcast %359 : vector<8x1xf32> to vector<8x16xf32>
    %361 = arith.subf %357, %360 : vector<8x16xf32>
    %362 = math.exp %361 : vector<8x16xf32>
    %cst_143 = arith.constant dense<0.000000e+00> : vector<8xf32>
    %363 = vector.multi_reduction <add>, %362, %cst_143 [1] : vector<8x16xf32> to vector<8xf32>
    %364 = vector.shape_cast %363 : vector<8xf32> to vector<8x1xf32>
    %365 = vector.broadcast %364 : vector<8x1xf32> to vector<8x16xf32>
    %366 = arith.divf %362, %365 : vector<8x16xf32>
    %367 = arith.truncf %366 : vector<8x16xf32> to vector<8x16xbf16>
    %368 = vector.extract_strided_slice %332 {offsets = [0, 32], sizes = [16, 32], strides = [1, 1]} : vector<16x128xbf16> to vector<16x32xbf16>
    %cst_144 = arith.constant dense<0.000000e+00> : vector<8x32xf32>
    %369 = tpu.matmul %367, %368, %cst_144 {dimension_numbers = #tpu.dot_dimension_numbers<[1], [0], [0], [1], [0, 0, 1, 1], [], []>} : vector<8x16xbf16>, vector<16x32xbf16>, vector<8x32xf32> -> vector<8x32xf32>
    %c8_145 = arith.constant 8 : index
    %c32_146 = arith.constant 32 : index
    %370 = vector.load %arg28[%c8_145, %c32_146] : memref<16x128xf32, #tpu.memory_space<vmem>>, vector<8x32xf32>
    tpu.vector_store %arg28[%c8_145, %c32_146], %369 {strides = array<i32>} : memref<16x128xf32, #tpu.memory_space<vmem>>, vector<8x32xf32>,
    %371 = vector.extract_strided_slice %330 {offsets = [0, 64], sizes = [8, 32], strides = [1, 1]} : vector<8x128xbf16> to vector<8x32xbf16>
    %372 = vector.extract_strided_slice %331 {offsets = [0, 64], sizes = [16, 32], strides = [1, 1]} : vector<16x128xbf16> to vector<16x32xbf16>
    %cst_147 = arith.constant dense<0.000000e+00> : vector<8x16xf32>
    %373 = tpu.matmul %371, %372, %cst_147 {dimension_numbers = #tpu.dot_dimension_numbers<[1], [1], [0], [0], [0, 0, 1, 0], [], []>} : vector<8x32xbf16>, vector<16x32xbf16>, vector<8x16xf32> -> vector<8x16xf32>
    %cst_148 = arith.constant 9.99999971E-10 : f32
    %374 = vector.broadcast %cst_148 : f32 to vector<8x16xf32>
    %375 = arith.select %334, %373, %374 : vector<8x16xi1>, vector<8x16xf32>
    %cst_149 = arith.constant dense<0xFF800000> : vector<8xf32>
    %376 = vector.multi_reduction <maximumf>, %375, %cst_149 [1] : vector<8x16xf32> to vector<8xf32>
    %377 = vector.shape_cast %376 : vector<8xf32> to vector<8x1xf32>
    %378 = vector.broadcast %377 : vector<8x1xf32> to vector<8x16xf32>
    %379 = arith.subf %375, %378 : vector<8x16xf32>
    %380 = math.exp %379 : vector<8x16xf32>
    %cst_150 = arith.constant dense<0.000000e+00> : vector<8xf32>
    %381 = vector.multi_reduction <add>, %380, %cst_150 [1] : vector<8x16xf32> to vector<8xf32>
    %382 = vector.shape_cast %381 : vector<8xf32> to vector<8x1xf32>
    %383 = vector.broadcast %382 : vector<8x1xf32> to vector<8x16xf32>
    %384 = arith.divf %380, %383 : vector<8x16xf32>
    %385 = arith.truncf %384 : vector<8x16xf32> to vector<8x16xbf16>
    %386 = vector.extract_strided_slice %332 {offsets = [0, 64], sizes = [16, 32], strides = [1, 1]} : vector<16x128xbf16> to vector<16x32xbf16>
    %cst_151 = arith.constant dense<0.000000e+00> : vector<8x32xf32>
    %387 = tpu.matmul %385, %386, %cst_151 {dimension_numbers = #tpu.dot_dimension_numbers<[1], [0], [0], [1], [0, 0, 1, 1], [], []>} : vector<8x16xbf16>, vector<16x32xbf16>, vector<8x32xf32> -> vector<8x32xf32>
    %c8_152 = arith.constant 8 : index
    %c64_153 = arith.constant 64 : index
    %388 = vector.load %arg28[%c8_152, %c64_153] : memref<16x128xf32, #tpu.memory_space<vmem>>, vector<8x32xf32>
    tpu.vector_store %arg28[%c8_152, %c64_153], %387 {strides = array<i32>} : memref<16x128xf32, #tpu.memory_space<vmem>>, vector<8x32xf32>,
    %389 = vector.extract_strided_slice %330 {offsets = [0, 96], sizes = [8, 32], strides = [1, 1]} : vector<8x128xbf16> to vector<8x32xbf16>
    %390 = vector.extract_strided_slice %331 {offsets = [0, 96], sizes = [16, 32], strides = [1, 1]} : vector<16x128xbf16> to vector<16x32xbf16>
    %cst_154 = arith.constant dense<0.000000e+00> : vector<8x16xf32>
    %391 = tpu.matmul %389, %390, %cst_154 {dimension_numbers = #tpu.dot_dimension_numbers<[1], [1], [0], [0], [0, 0, 1, 0], [], []>} : vector<8x32xbf16>, vector<16x32xbf16>, vector<8x16xf32> -> vector<8x16xf32>
    %cst_155 = arith.constant 9.99999971E-10 : f32
    %392 = vector.broadcast %cst_155 : f32 to vector<8x16xf32>
    %393 = arith.select %334, %391, %392 : vector<8x16xi1>, vector<8x16xf32>
    %cst_156 = arith.constant dense<0xFF800000> : vector<8xf32>
    %394 = vector.multi_reduction <maximumf>, %393, %cst_156 [1] : vector<8x16xf32> to vector<8xf32>
    %395 = vector.shape_cast %394 : vector<8xf32> to vector<8x1xf32>
    %396 = vector.broadcast %395 : vector<8x1xf32> to vector<8x16xf32>
    %397 = arith.subf %393, %396 : vector<8x16xf32>
    %398 = math.exp %397 : vector<8x16xf32>
    %cst_157 = arith.constant dense<0.000000e+00> : vector<8xf32>
    %399 = vector.multi_reduction <add>, %398, %cst_157 [1] : vector<8x16xf32> to vector<8xf32>
    %400 = vector.shape_cast %399 : vector<8xf32> to vector<8x1xf32>
    %401 = vector.broadcast %400 : vector<8x1xf32> to vector<8x16xf32>
    %402 = arith.divf %398, %401 : vector<8x16xf32>
    %403 = arith.truncf %402 : vector<8x16xf32> to vector<8x16xbf16>
    %404 = vector.extract_strided_slice %332 {offsets = [0, 96], sizes = [16, 32], strides = [1, 1]} : vector<16x128xbf16> to vector<16x32xbf16>
    %cst_158 = arith.constant dense<0.000000e+00> : vector<8x32xf32>
    %405 = tpu.matmul %403, %404, %cst_158 {dimension_numbers = #tpu.dot_dimension_numbers<[1], [0], [0], [1], [0, 0, 1, 1], [], []>} : vector<8x16xbf16>, vector<16x32xbf16>, vector<8x32xf32> -> vector<8x32xf32>
    %c8_159 = arith.constant 8 : index
    %c96_160 = arith.constant 96 : index
    %406 = vector.load %arg28[%c8_159, %c96_160] : memref<16x128xf32, #tpu.memory_space<vmem>>, vector<8x32xf32>
    tpu.vector_store %arg28[%c8_159, %c96_160], %405 {strides = array<i32>} : memref<16x128xf32, #tpu.memory_space<vmem>>, vector<8x32xf32>,
    %c0_161 = arith.constant 0 : index
    %c0_162 = arith.constant 0 : index
    %407 = vector.load %arg28[%c0_161, %c0_162] : memref<16x128xf32, #tpu.memory_space<vmem>>, vector<16x128xf32>
    %408 = arith.truncf %407 : vector<16x128xf32> to vector<16x128xbf16>
    %c0_163 = arith.constant 0 : index
    %c0_164 = arith.constant 0 : index
    %409 = vector.load %arg17[%c0_163, %c0_164] : memref<128x128xbf16, #tpu.memory_space<vmem>>, vector<128x128xbf16>
    %cst_165 = arith.constant dense<0.000000e+00> : vector<16x128xf32>
    %410 = tpu.matmul %408, %409, %cst_165 {dimension_numbers = #tpu.dot_dimension_numbers<[1], [0], [0], [1], [0, 0, 1, 1], [], []>} : vector<16x128xbf16>, vector<128x128xbf16>, vector<16x128xf32> -> vector<16x128xf32>
    %411 = arith.addf %210, %410 : vector<16x128xf32>
    %c0_166 = arith.constant 0 : index
    %c0_167 = arith.constant 0 : index
    %412 = vector.load %arg18[%c0_166, %c0_167] : memref<1x128xf32, #tpu.memory_space<vmem>>, vector<1x128xf32>
    %413 = vector.broadcast %412 : vector<1x128xf32> to vector<16x128xf32>
    %414 = arith.addf %411, %413 : vector<16x128xf32>
    %c0_168 = arith.constant 0 : index
    %c0_169 = arith.constant 0 : index
    %415 = vector.load %arg19[%c0_168, %c0_169] : memref<1x128xf32, #tpu.memory_space<vmem>>, vector<1x128xf32>
    %c0_170 = arith.constant 0 : index
    %c0_171 = arith.constant 0 : index
    %416 = vector.load %arg20[%c0_170, %c0_171] : memref<1x128xf32, #tpu.memory_space<vmem>>, vector<1x128xf32>
    %cst_172 = arith.constant dense<0.000000e+00> : vector<16xf32>
    %417 = vector.multi_reduction <add>, %414, %cst_172 [1] : vector<16x128xf32> to vector<16xf32>
    %418 = vector.shape_cast %417 : vector<16xf32> to vector<16x1xf32>
    %cst_173 = arith.constant 1.280000e+02 : f32
    %419 = vector.broadcast %cst_173 : f32 to vector<16x1xf32>
    %420 = arith.divf %418, %419 : vector<16x1xf32>
    %421 = vector.broadcast %420 : vector<16x1xf32> to vector<16x128xf32>
    %422 = arith.subf %414, %421 : vector<16x128xf32>
    %423 = arith.mulf %422, %422 : vector<16x128xf32>
    %cst_174 = arith.constant dense<0.000000e+00> : vector<16xf32>
    %424 = vector.multi_reduction <add>, %423, %cst_174 [1] : vector<16x128xf32> to vector<16xf32>
    %425 = vector.shape_cast %424 : vector<16xf32> to vector<16x1xf32>
    %cst_175 = arith.constant 1.280000e+02 : f32
    %426 = vector.broadcast %cst_175 : f32 to vector<16x1xf32>
    %427 = arith.divf %425, %426 : vector<16x1xf32>
    %428 = vector.broadcast %420 : vector<16x1xf32> to vector<16x128xf32>
    %429 = arith.subf %414, %428 : vector<16x128xf32>
    %cst_176 = arith.constant 9.99999974E-6 : f32
    %430 = vector.broadcast %cst_176 : f32 to vector<16x1xf32>
    %431 = arith.addf %427, %430 : vector<16x1xf32>
    %432 = math.rsqrt %431 : vector<16x1xf32>
    %433 = vector.broadcast %432 : vector<16x1xf32> to vector<16x128xf32>
    %434 = arith.mulf %429, %433 : vector<16x128xf32>
    %435 = vector.broadcast %415 : vector<1x128xf32> to vector<16x128xf32>
    %436 = arith.mulf %434, %435 : vector<16x128xf32>
    %437 = vector.broadcast %416 : vector<1x128xf32> to vector<16x128xf32>
    %438 = arith.addf %436, %437 : vector<16x128xf32>
    %439 = arith.truncf %438 : vector<16x128xf32> to vector<16x128xbf16>
    %c0_177 = arith.constant 0 : index
    %c0_178 = arith.constant 0 : index
    %440 = vector.load %arg21[%c0_177, %c0_178] : memref<128x256xbf16, #tpu.memory_space<vmem>>, vector<128x256xbf16>
    %cst_179 = arith.constant dense<0.000000e+00> : vector<16x256xf32>
    %441 = tpu.matmul %439, %440, %cst_179 {dimension_numbers = #tpu.dot_dimension_numbers<[1], [0], [0], [1], [0, 0, 1, 1], [], []>} : vector<16x128xbf16>, vector<128x256xbf16>, vector<16x256xf32> -> vector<16x256xf32>
    %c0_180 = arith.constant 0 : index
    %c0_181 = arith.constant 0 : index
    %442 = vector.load %arg22[%c0_180, %c0_181] : memref<1x256xf32, #tpu.memory_space<vmem>>, vector<1x256xf32>
    %443 = vector.broadcast %442 : vector<1x256xf32> to vector<16x256xf32>
    %444 = arith.addf %441, %443 : vector<16x256xf32>
    %cst_182 = arith.constant 0.000000e+00 : f32
    %445 = vector.broadcast %cst_182 : f32 to vector<16x256xf32>
    %446 = arith.maximumf %444, %445 : vector<16x256xf32>
    %447 = arith.truncf %446 : vector<16x256xf32> to vector<16x256xbf16>
    %c0_183 = arith.constant 0 : index
    %c0_184 = arith.constant 0 : index
    %448 = vector.load %arg23[%c0_183, %c0_184] : memref<256x128xbf16, #tpu.memory_space<vmem>>, vector<256x128xbf16>
    %cst_185 = arith.constant dense<0.000000e+00> : vector<16x128xf32>
    %449 = tpu.matmul %447, %448, %cst_185 {dimension_numbers = #tpu.dot_dimension_numbers<[1], [0], [0], [1], [0, 0, 1, 1], [], []>} : vector<16x256xbf16>, vector<256x128xbf16>, vector<16x128xf32> -> vector<16x128xf32>
    %450 = arith.addf %414, %449 : vector<16x128xf32>
    %c0_186 = arith.constant 0 : index
    %c0_187 = arith.constant 0 : index
    %451 = vector.load %arg24[%c0_186, %c0_187] : memref<1x128xf32, #tpu.memory_space<vmem>>, vector<1x128xf32>
    %452 = vector.broadcast %451 : vector<1x128xf32> to vector<16x128xf32>
    %453 = arith.addf %450, %452 : vector<16x128xf32>
    %454 = vector.shape_cast %453 : vector<16x128xf32> to vector<2x8x128xf32>
    %455 = arith.truncf %454 : vector<2x8x128xf32> to vector<2x8x128xbf16>
    %c0_188 = arith.constant 0 : index
    %c0_189 = arith.constant 0 : index
    %c0_190 = arith.constant 0 : index
    %456 = vector.load %arg27[%c0_188, %c0_189, %c0_190] : memref<2x8x128xbf16, #tpu.memory_space<vmem>>, vector<2x8x128xbf16>
    tpu.vector_store %arg27[%c0_188, %c0_189, %c0_190], %455 {strides = array<i32>} : memref<2x8x128xbf16, #tpu.memory_space<vmem>>, vector<2x8x128xbf16>,
    return
  }
  func.func @transform_0(%arg0: i32) -> (i32, i32, i32) {
    %c0_i32 = arith.constant 0 : i32
    %c0_i32_0 = arith.constant 0 : i32
    %c0_i32_1 = arith.constant 0 : i32
    return %arg0, %c0_i32, %c0_i32_0 : i32, i32, i32
  }
  func.func @transform_1(%arg0: i32) -> (i32, i32, i32) {
    %c0_i32 = arith.constant 0 : i32
    %c0_i32_0 = arith.constant 0 : i32
    %c0_i32_1 = arith.constant 0 : i32
    return %arg0, %c0_i32, %c0_i32_0 : i32, i32, i32
  }
  func.func @transform_2(%arg0: i32) -> (i32, i32, i32) {
    %c0_i32 = arith.constant 0 : i32
    %c0_i32_0 = arith.constant 0 : i32
    %c0_i32_1 = arith.constant 0 : i32
    return %arg0, %c0_i32, %c0_i32_0 : i32, i32, i32
  }
  func.func @transform_3(%arg0: i32) -> (i32, i32, i32) {
    %c0_i32 = arith.constant 0 : i32
    %c0_i32_0 = arith.constant 0 : i32
    %c0_i32_1 = arith.constant 0 : i32
    return %arg0, %c0_i32, %c0_i32_0 : i32, i32, i32
  }
  func.func @transform_4(%arg0: i32) -> (i32, i32) {
    %c0_i32 = arith.constant 0 : i32
    %c0_i32_0 = arith.constant 0 : i32
    %c0_i32_1 = arith.constant 0 : i32
    return %c0_i32, %c0_i32_0 : i32, i32
  }
  func.func @transform_5(%arg0: i32) -> (i32, i32) {
    %c0_i32 = arith.constant 0 : i32
    %c0_i32_0 = arith.constant 0 : i32
    %c0_i32_1 = arith.constant 0 : i32
    return %c0_i32, %c0_i32_0 : i32, i32
  }
  func.func @transform_6(%arg0: i32) -> (i32, i32) {
    %c0_i32 = arith.constant 0 : i32
    %c0_i32_0 = arith.constant 0 : i32
    %c0_i32_1 = arith.constant 0 : i32
    return %c0_i32, %c0_i32_0 : i32, i32
  }
  func.func @transform_7(%arg0: i32) -> (i32, i32) {
    %c0_i32 = arith.constant 0 : i32
    %c0_i32_0 = arith.constant 0 : i32
    %c0_i32_1 = arith.constant 0 : i32
    return %c0_i32, %c0_i32_0 : i32, i32
  }
  func.func @transform_8(%arg0: i32) -> (i32, i32) {
    %c0_i32 = arith.constant 0 : i32
    %c0_i32_0 = arith.constant 0 : i32
    %c0_i32_1 = arith.constant 0 : i32
    return %c0_i32, %c0_i32_0 : i32, i32
  }
  func.func @transform_9(%arg0: i32) -> (i32, i32) {
    %c0_i32 = arith.constant 0 : i32
    %c0_i32_0 = arith.constant 0 : i32
    %c0_i32_1 = arith.constant 0 : i32
    return %c0_i32, %c0_i32_0 : i32, i32
  }
  func.func @transform_10(%arg0: i32) -> (i32, i32) {
    %c0_i32 = arith.constant 0 : i32
    %c0_i32_0 = arith.constant 0 : i32
    %c0_i32_1 = arith.constant 0 : i32
    return %c0_i32, %c0_i32_0 : i32, i32
  }
  func.func @transform_11(%arg0: i32) -> (i32, i32) {
    %c0_i32 = arith.constant 0 : i32
    %c0_i32_0 = arith.constant 0 : i32
    %c0_i32_1 = arith.constant 0 : i32
    return %c0_i32, %c0_i32_0 : i32, i32
  }
  func.func @transform_12(%arg0: i32) -> (i32, i32) {
    %c0_i32 = arith.constant 0 : i32
    %c0_i32_0 = arith.constant 0 : i32
    %c0_i32_1 = arith.constant 0 : i32
    return %c0_i32, %c0_i32_0 : i32, i32
  }
  func.func @transform_13(%arg0: i32) -> (i32, i32) {
    %c0_i32 = arith.constant 0 : i32
    %c0_i32_0 = arith.constant 0 : i32
    %c0_i32_1 = arith.constant 0 : i32
    return %c0_i32, %c0_i32_0 : i32, i32
  }
  func.func @transform_14(%arg0: i32) -> (i32, i32) {
    %c0_i32 = arith.constant 0 : i32
    %c0_i32_0 = arith.constant 0 : i32
    %c0_i32_1 = arith.constant 0 : i32
    return %c0_i32, %c0_i32_0 : i32, i32
  }
  func.func @transform_15(%arg0: i32) -> (i32, i32) {
    %c0_i32 = arith.constant 0 : i32
    %c0_i32_0 = arith.constant 0 : i32
    %c0_i32_1 = arith.constant 0 : i32
    return %c0_i32, %c0_i32_0 : i32, i32
  }
  func.func @transform_16(%arg0: i32) -> (i32, i32) {
    %c0_i32 = arith.constant 0 : i32
    %c0_i32_0 = arith.constant 0 : i32
    %c0_i32_1 = arith.constant 0 : i32
    return %c0_i32, %c0_i32_0 : i32, i32
  }
  func.func @transform_17(%arg0: i32) -> (i32, i32) {
    %c0_i32 = arith.constant 0 : i32
    %c0_i32_0 = arith.constant 0 : i32
    %c0_i32_1 = arith.constant 0 : i32
    return %c0_i32, %c0_i32_0 : i32, i32
  }
  func.func @transform_18(%arg0: i32) -> (i32, i32) {
    %c0_i32 = arith.constant 0 : i32
    %c0_i32_0 = arith.constant 0 : i32
    %c0_i32_1 = arith.constant 0 : i32
    return %c0_i32, %c0_i32_0 : i32, i32
  }
  func.func @transform_19(%arg0: i32) -> (i32, i32) {
    %c0_i32 = arith.constant 0 : i32
    %c0_i32_0 = arith.constant 0 : i32
    %c0_i32_1 = arith.constant 0 : i32
    return %c0_i32, %c0_i32_0 : i32, i32
  }
  func.func @transform_20(%arg0: i32) -> (i32, i32) {
    %c0_i32 = arith.constant 0 : i32
    %c0_i32_0 = arith.constant 0 : i32
    %c0_i32_1 = arith.constant 0 : i32
    return %c0_i32, %c0_i32_0 : i32, i32
  }
  func.func @transform_21(%arg0: i32) -> (i32, i32) {
    %c0_i32 = arith.constant 0 : i32
    %c0_i32_0 = arith.constant 0 : i32
    %c0_i32_1 = arith.constant 0 : i32
    return %c0_i32, %c0_i32_0 : i32, i32
  }
  func.func @transform_22(%arg0: i32) -> (i32, i32) {
    %c0_i32 = arith.constant 0 : i32
    %c0_i32_0 = arith.constant 0 : i32
    %c0_i32_1 = arith.constant 0 : i32
    return %c0_i32, %c0_i32_0 : i32, i32
  }
  func.func @transform_23(%arg0: i32) -> (i32, i32) {
    %c0_i32 = arith.constant 0 : i32
    %c0_i32_0 = arith.constant 0 : i32
    %c0_i32_1 = arith.constant 0 : i32
    return %c0_i32, %c0_i32_0 : i32, i32
  }
  func.func @transform_24(%arg0: i32) -> (i32, i32) {
    %c0_i32 = arith.constant 0 : i32
    %c0_i32_0 = arith.constant 0 : i32
    %c0_i32_1 = arith.constant 0 : i32
    return %c0_i32, %c0_i32_0 : i32, i32
  }
  func.func @transform_25(%arg0: i32) -> (i32, i32) {
    %c0_i32 = arith.constant 0 : i32
    %c0_i32_0 = arith.constant 0 : i32
    %c0_i32_1 = arith.constant 0 : i32
    return %c0_i32, %c0_i32_0 : i32, i32
  }
  func.func @transform_26(%arg0: i32) -> (i32, i32, i32) {
    %c0_i32 = arith.constant 0 : i32
    %c0_i32_0 = arith.constant 0 : i32
    %c0_i32_1 = arith.constant 0 : i32
    return %arg0, %c0_i32, %c0_i32_0 : i32, i32, i32
  }
}

</mosaic_0001>

<llo_original>
// kernel: decoder_forward.3
$region0: #{decoder_forward.3}
  #allocation0 [shape = 'u32[]', space=smem, size = 0x4, offset = 0x4, fixed_abs, tag = 'smem constant byte address 0x4 - core index']
  #allocation1 [shape = 'u32[144,128]{1,0:T(1,128)}', space=vmem, size = 0x12000, scoped, tag = 'internal scratch']
  #allocation2 [shape = 'f32[16,128]{1,0:T(8,128)}', space=vmem, size = 0x2000, scoped, tag = 'scratch operand']
  %s0 = inlined_call_operand.vmem [shape: bf16[2,8,128], index: 0, kind: input, shape index: {}]
  %s1 = inlined_call_operand.vmem [shape: bf16[2,16,128], index: 1, kind: input, shape index: {}]
  %s2 = inlined_call_operand.vmem [shape: s8[2,8,8], index: 2, kind: input, shape index: {}]
  %s3 = inlined_call_operand.vmem [shape: s8[2,8,16], index: 3, kind: input, shape index: {}]
  %s4 = inlined_call_operand.vmem [shape: f32[1,128], index: 4, kind: input, shape index: {}]
  %s5 = inlined_call_operand.vmem [shape: f32[1,128], index: 5, kind: input, shape index: {}]
  %s6 = inlined_call_operand.vmem [shape: bf16[128,384], index: 6, kind: input, shape index: {}]
  %s7 = inlined_call_operand.vmem [shape: f32[1,384], index: 7, kind: input, shape index: {}]
  %s8 = inlined_call_operand.vmem [shape: bf16[128,128], index: 8, kind: input, shape index: {}]
  %s9 = inlined_call_operand.vmem [shape: f32[1,128], index: 9, kind: input, shape index: {}]
  %s10 = inlined_call_operand.vmem [shape: f32[1,128], index: 10, kind: input, shape index: {}]
  %s11 = inlined_call_operand.vmem [shape: f32[1,128], index: 11, kind: input, shape index: {}]
  %s12 = inlined_call_operand.vmem [shape: bf16[128,128], index: 12, kind: input, shape index: {}]
  %s13 = inlined_call_operand.vmem [shape: f32[1,128], index: 13, kind: input, shape index: {}]
  %s14 = inlined_call_operand.vmem [shape: bf16[128,256], index: 14, kind: input, shape index: {}]
  %s15 = inlined_call_operand.vmem [shape: f32[1,256], index: 15, kind: input, shape index: {}]
  %s16 = inlined_call_operand.vmem [shape: bf16[128,128], index: 16, kind: input, shape index: {}]
  %s17 = inlined_call_operand.vmem [shape: f32[1,128], index: 17, kind: input, shape index: {}]
  %s18 = inlined_call_operand.vmem [shape: f32[1,128], index: 18, kind: input, shape index: {}]
  %s19 = inlined_call_operand.vmem [shape: f32[1,128], index: 19, kind: input, shape index: {}]
  %s20 = inlined_call_operand.vmem [shape: bf16[128,256], index: 20, kind: input, shape index: {}]
  %s21 = inlined_call_operand.vmem [shape: f32[1,256], index: 21, kind: input, shape index: {}]
  %s22 = inlined_call_operand.vmem [shape: bf16[256,128], index: 22, kind: input, shape index: {}]
  %s23 = inlined_call_operand.vmem [shape: f32[1,128], index: 23, kind: input, shape index: {}]
  %s24 = inlined_call_operand.vmem [shape: f32[1,128], index: 24, kind: input, shape index: {}]
  %s25 = inlined_call_operand.vmem [shape: f32[1,128], index: 25, kind: input, shape index: {}]
  %s26 = inlined_call_operand.hbm [shape: f32[2,8,128], index: 26, kind: output, shape index: {}]
  %s27 = sld [smem:[#allocation0]]
  $region114: #{decoder_forward.3} parent=0
    _
  %s29 = ssub.s32 1, %s27
  %s30 = scalar_select 0, %s29, %s27
  $region1: #{decoder_forward.3} parent=0
    #allocation3 [shape = 'u8[8192]{0}', space=vmem, size = 0x2000, scoped, tag = 'output window, operand 0, single buffered']
    #allocation4 [shape = 's32[1]{0}', space=sflag, size = 0x4, scoped, tag = 'scoped memory for decoder_forward.3']
    %31 = vsyncpa [#allocation4], 0
    // Predicated region
    $region2: #{decoder_forward.3} parent=1 // pred_check
      _
    $region3: #{decoder_forward.3} parent=1 // pred_check_branch
      %33 = sbr.rel (0) target = $region5
    $region4: #{decoder_forward.3} parent=1 // pred_region
      _
    $region5: #{decoder_forward.3} parent=1 // pred_fallthru
      _
    // Predicated region
    $region6: #{decoder_forward.3} parent=1 // pred_check
      _
    $region7: #{decoder_forward.3} parent=1 // pred_check_branch
      %35 = sbr.rel (0) target = $region9
    $region8: #{decoder_forward.3} parent=1 // pred_region
      _
    $region9: #{decoder_forward.3} parent=1 // pred_fallthru
      _
    // Predicated region
    $region10: #{decoder_forward.3} parent=1 // pred_check
      _
    $region11: #{decoder_forward.3} parent=1 // pred_check_branch
      %37 = sbr.rel (0) target = $region13
    $region12: #{decoder_forward.3} parent=1 // pred_region
      _
    $region13: #{decoder_forward.3} parent=1 // pred_fallthru
      _
    // Predicated region
    $region14: #{decoder_forward.3} parent=1 // pred_check
      _
    $region15: #{decoder_forward.3} parent=1 // pred_check_branch
      %39 = sbr.rel (0) target = $region17
    $region16: #{decoder_forward.3} parent=1 // pred_region
      _
    $region17: #{decoder_forward.3} parent=1 // pred_fallthru
      _
    // Predicated region
    $region18: #{decoder_forward.3} parent=1 // pred_check
      _
    $region19: #{decoder_forward.3} parent=1 // pred_check_branch
      %41 = sbr.rel (0) target = $region21
    $region20: #{decoder_forward.3} parent=1 // pred_region
      _
    $region21: #{decoder_forward.3} parent=1 // pred_fallthru
      _
    // Predicated region
    $region22: #{decoder_forward.3} parent=1 // pred_check
      _
    $region23: #{decoder_forward.3} parent=1 // pred_check_branch
      %43 = sbr.rel (0) target = $region25
    $region24: #{decoder_forward.3} parent=1 // pred_region
      _
    $region25: #{decoder_forward.3} parent=1 // pred_fallthru
      _
    // Predicated region
    $region26: #{decoder_forward.3} parent=1 // pred_check
      _
    $region27: #{decoder_forward.3} parent=1 // pred_check_branch
      %45 = sbr.rel (0) target = $region29
    $region28: #{decoder_forward.3} parent=1 // pred_region
      _
    $region29: #{decoder_forward.3} parent=1 // pred_fallthru
      _
    // Predicated region
    $region30: #{decoder_forward.3} parent=1 // pred_check
      _
    $region31: #{decoder_forward.3} parent=1 // pred_check_branch
      %47 = sbr.rel (0) target = $region33
    $region32: #{decoder_forward.3} parent=1 // pred_region
      _
    $region33: #{decoder_forward.3} parent=1 // pred_fallthru
      _
    // Predicated region
    $region34: #{decoder_forward.3} parent=1 // pred_check
      _
    $region35: #{decoder_forward.3} parent=1 // pred_check_branch
      %49 = sbr.rel (0) target = $region37
    $region36: #{decoder_forward.3} parent=1 // pred_region
      _
    $region37: #{decoder_forward.3} parent=1 // pred_fallthru
      _
    // Predicated region
    $region38: #{decoder_forward.3} parent=1 // pred_check
      _
    $region39: #{decoder_forward.3} parent=1 // pred_check_branch
      %51 = sbr.rel (0) target = $region41
    $region40: #{decoder_forward.3} parent=1 // pred_region
      _
    $region41: #{decoder_forward.3} parent=1 // pred_fallthru
      _
    // Predicated region
    $region42: #{decoder_forward.3} parent=1 // pred_check
      _
    $region43: #{decoder_forward.3} parent=1 // pred_check_branch
      %53 = sbr.rel (0) target = $region45
    $region44: #{decoder_forward.3} parent=1 // pred_region
      _
    $region45: #{decoder_forward.3} parent=1 // pred_fallthru
      _
    // Predicated region
    $region46: #{decoder_forward.3} parent=1 // pred_check
      _
    $region47: #{decoder_forward.3} parent=1 // pred_check_branch
      %55 = sbr.rel (0) target = $region49
    $region48: #{decoder_forward.3} parent=1 // pred_region
      _
    $region49: #{decoder_forward.3} parent=1 // pred_fallthru
      _
    // Predicated region
    $region50: #{decoder_forward.3} parent=1 // pred_check
      _
    $region51: #{decoder_forward.3} parent=1 // pred_check_branch
      %57 = sbr.rel (0) target = $region53
    $region52: #{decoder_forward.3} parent=1 // pred_region
      _
    $region53: #{decoder_forward.3} parent=1 // pred_fallthru
      _
    // Predicated region
    $region54: #{decoder_forward.3} parent=1 // pred_check
      _
    $region55: #{decoder_forward.3} parent=1 // pred_check_branch
      %59 = sbr.rel (0) target = $region57
    $region56: #{decoder_forward.3} parent=1 // pred_region
      _
    $region57: #{decoder_forward.3} parent=1 // pred_fallthru
      _
    // Predicated region
    $region58: #{decoder_forward.3} parent=1 // pred_check
      _
    $region59: #{decoder_forward.3} parent=1 // pred_check_branch
      %61 = sbr.rel (0) target = $region61
    $region60: #{decoder_forward.3} parent=1 // pred_region
      _
    $region61: #{decoder_forward.3} parent=1 // pred_fallthru
      _
    // Predicated region
    $region62: #{decoder_forward.3} parent=1 // pred_check
      _
    $region63: #{decoder_forward.3} parent=1 // pred_check_branch
      %63 = sbr.rel (0) target = $region65
    $region64: #{decoder_forward.3} parent=1 // pred_region
      _
    $region65: #{decoder_forward.3} parent=1 // pred_fallthru
      _
    // Predicated region
    $region66: #{decoder_forward.3} parent=1 // pred_check
      _
    $region67: #{decoder_forward.3} parent=1 // pred_check_branch
      %65 = sbr.rel (0) target = $region69
    $region68: #{decoder_forward.3} parent=1 // pred_region
      _
    $region69: #{decoder_forward.3} parent=1 // pred_fallthru
      _
    // Predicated region
    $region70: #{decoder_forward.3} parent=1 // pred_check
      _
    $region71: #{decoder_forward.3} parent=1 // pred_check_branch
      %67 = sbr.rel (0) target = $region73
    $region72: #{decoder_forward.3} parent=1 // pred_region
      _
    $region73: #{decoder_forward.3} parent=1 // pred_fallthru
      _
    // Predicated region
    $region74: #{decoder_forward.3} parent=1 // pred_check
      _
    $region75: #{decoder_forward.3} parent=1 // pred_check_branch
      %69 = sbr.rel (0) target = $region77
    $region76: #{decoder_forward.3} parent=1 // pred_region
      _
    $region77: #{decoder_forward.3} parent=1 // pred_fallthru
      _
    // Predicated region
    $region78: #{decoder_forward.3} parent=1 // pred_check
      _
    $region79: #{decoder_forward.3} parent=1 // pred_check_branch
      %71 = sbr.rel (0) target = $region81
    $region80: #{decoder_forward.3} parent=1 // pred_region
      _
    $region81: #{decoder_forward.3} parent=1 // pred_fallthru
      _
    // Predicated region
    $region82: #{decoder_forward.3} parent=1 // pred_check
      _
    $region83: #{decoder_forward.3} parent=1 // pred_check_branch
      %73 = sbr.rel (0) target = $region85
    $region84: #{decoder_forward.3} parent=1 // pred_region
      _
    $region85: #{decoder_forward.3} parent=1 // pred_fallthru
      _
    // Predicated region
    $region86: #{decoder_forward.3} parent=1 // pred_check
      _
    $region87: #{decoder_forward.3} parent=1 // pred_check_branch
      %75 = sbr.rel (0) target = $region89
    $region88: #{decoder_forward.3} parent=1 // pred_region
      _
    $region89: #{decoder_forward.3} parent=1 // pred_fallthru
      _
    // Predicated region
    $region90: #{decoder_forward.3} parent=1 // pred_check
      _
    $region91: #{decoder_forward.3} parent=1 // pred_check_branch
      %77 = sbr.rel (0) target = $region93
    $region92: #{decoder_forward.3} parent=1 // pred_region
      _
    $region93: #{decoder_forward.3} parent=1 // pred_fallthru
      _
    // Predicated region
    $region94: #{decoder_forward.3} parent=1 // pred_check
      _
    $region95: #{decoder_forward.3} parent=1 // pred_check_branch
      %79 = sbr.rel (0) target = $region97
    $region96: #{decoder_forward.3} parent=1 // pred_region
      _
    $region97: #{decoder_forward.3} parent=1 // pred_fallthru
      _
    // Predicated region
    $region98: #{decoder_forward.3} parent=1 // pred_check
      _
    $region99: #{decoder_forward.3} parent=1 // pred_check_branch
      %81 = sbr.rel (0) target = $region101
    $region100: #{decoder_forward.3} parent=1 // pred_region
      _
    $region101: #{decoder_forward.3} parent=1 // pred_fallthru
      _
    // Predicated region
    $region102: #{decoder_forward.3} parent=1 // pred_check
      _
    $region103: #{decoder_forward.3} parent=1 // pred_check_branch
      %83 = sbr.rel (0) target = $region105
    $region104: #{decoder_forward.3} parent=1 // pred_region
      _
    $region105: #{decoder_forward.3} parent=1 // pred_fallthru
      _
    %v87 = vld [vmem:[%s0] sm:$0xf]
    %v88 = vld [vmem:[%s0 + $0x4] sm:$0xf]
    %v89 = vunpack.c.l.bf16 %v87
    %v90 = vunpack.c.l.bf16 %v88
    %v91 = vld [vmem:[%s1] sm:$0xf]
    %v92 = vld [vmem:[%s1 + $0x4] sm:$0xf]
    %v93 = vld [vmem:[%s1 + $0x8] sm:$0xf]
    %v94 = vld [vmem:[%s1 + $0xc] sm:$0xf]
    %v95 = vld [vmem:[%s2] sm:$0x3]
    %v96 = vld [vmem:[%s2 + $0x2] sm:$0x3]
    %vm97 = vnez %v95
    %vm98 = vnez %v96
    %v99 = vld [vmem:[%s3] sm:$0x3]
    %v100 = vld [vmem:[%s3 + $0x2] sm:$0x3]
    %vm101 = vnez %v99
    %vm102 = vnez %v100
    %v103 = vld [vmem:[%s4] sm:$0x1]
    %v104 = vld [vmem:[%s5] sm:$0x1]
    %105 = vadd.xlane.f32.xlu0 %v89
    %v106 = vpop.xlane.xlu0 %105
    %107 = vadd.xlane.f32.xlu0 %v90
    %v108 = vpop.xlane.xlu0 %107
    %v109 = vrcp.pop 128.0
    %v110 = vmul.f32 %v106, %v109
    %v111 = vmul.f32 %v108, %v109
    %v112 = vsub.f32 %v89, %v110
    %v113 = vsub.f32 %v90, %v111
    %v114 = vmul.f32 %v112, %v112
    %v115 = vmul.f32 %v113, %v113
    %116 = vadd.xlane.f32.xlu0 %v114
    %v117 = vpop.xlane.xlu0 %116
    %118 = vadd.xlane.f32.xlu0 %v115
    %v119 = vpop.xlane.xlu0 %118
    %v120 = vmul.f32 %v117, %v109
    %v121 = vmul.f32 %v119, %v109
    %v122 = vadd.f32 %v120, 1e-05
    %v123 = vadd.f32 %v121, 1e-05
    %v124 = vrsqrt.pop %v122
    %v125 = vrsqrt.pop %v123
    %v126 = vmul.f32 %v112, %v124
    %v127 = vmul.f32 %v113, %v125
    %v129 = vlaneseq
    %v130 = vshrl.u32 %v129, 7
    %v131 = vsub.s32 0, %v130
    %v132 = vrot.slane %v103, %v131
    %v134 = vmul.f32 %v126, %v132
    %v135 = vmul.f32 %v127, %v132
    %v137 = vlaneseq
    %v138 = vshrl.u32 %v137, 7
    %v139 = vsub.s32 0, %v138
    %v140 = vrot.slane %v104, %v139
    %v142 = vadd.f32 %v134, %v140
    %v143 = vadd.f32 %v135, %v140
    %v144 = vpack.c.bf16 %v143, %v142
    %v145 = vld [vmem:[%s6] sm:$0xff]
    %v146 = vld [vmem:[%s6 + $0x8] sm:$0xf]
    %v147 = vld [vmem:[%s6 + $0xc] sm:$0xff]
    %v148 = vld [vmem:[%s6 + $0x14] sm:$0xf]
    %v149 = vld [vmem:[%s6 + $0x18] sm:$0xff]
    %v150 = vld [vmem:[%s6 + $0x20] sm:$0xf]
    %v151 = vld [vmem:[%s6 + $0x24] sm:$0xff]
    %v152 = vld [vmem:[%s6 + $0x2c] sm:$0xf]
    %v153 = vld [vmem:[%s6 + $0x30] sm:$0xff]
    %v154 = vld [vmem:[%s6 + $0x38] sm:$0xf]
    %v155 = vld [vmem:[%s6 + $0x3c] sm:$0xff]
    %v156 = vld [vmem:[%s6 + $0x44] sm:$0xf]
    %v157 = vld [vmem:[%s6 + $0x48] sm:$0xff]
    %v158 = vld [vmem:[%s6 + $0x50] sm:$0xf]
    %v159 = vld [vmem:[%s6 + $0x54] sm:$0xff]
    %v160 = vld [vmem:[%s6 + $0x5c] sm:$0xf]
    %v161 = vld [vmem:[%s6 + $0x60] sm:$0xff]
    %v162 = vld [vmem:[%s6 + $0x68] sm:$0xf]
    %v163 = vld [vmem:[%s6 + $0x6c] sm:$0xff]
    %v164 = vld [vmem:[%s6 + $0x74] sm:$0xf]
    %v165 = vld [vmem:[%s6 + $0x78] sm:$0xff]
    %v166 = vld [vmem:[%s6 + $0x80] sm:$0xf]
    %v167 = vld [vmem:[%s6 + $0x84] sm:$0xff]
    %v168 = vld [vmem:[%s6 + $0x8c] sm:$0xf]
    %v169 = vld [vmem:[%s6 + $0x90] sm:$0xff]
    %v170 = vld [vmem:[%s6 + $0x98] sm:$0xf]
    %v171 = vld [vmem:[%s6 + $0x9c] sm:$0xff]
    %v172 = vld [vmem:[%s6 + $0xa4] sm:$0xf]
    %v173 = vld [vmem:[%s6 + $0xa8] sm:$0xff]
    %v174 = vld [vmem:[%s6 + $0xb0] sm:$0xf]
    %v175 = vld [vmem:[%s6 + $0xb4] sm:$0xff]
    %v176 = vld [vmem:[%s6 + $0xbc] sm:$0xf]
    %v177 = vld [vmem:[%s7] sm:$0x7]
    %v179 = vlaneseq
    %v180 = vshrl.u32 %v179, 7
    %v181 = vsub.s32 0, %v180
    %v182 = vrot.slane %v177, %v181
    %v183 = vlaneseq
    %v184 = vshrl.u32 %v183, 7
    %v185 = vsub.s32 1, %v184
    %v186 = vrot.slane %v177, %v185
    %v187 = vlaneseq
    %v188 = vshrl.u32 %v187, 7
    %v189 = vsub.s32 2, %v188
    %v190 = vrot.slane %v177, %v189
    %v226 = vunpack.c.l.b16 %v145
    %v227 = vunpack.c.h.b16 %v145
    %v228 = vunpack.c.l.b16 %v146
    %v229 = vunpack.c.l.b16 %v147
    %v230 = vunpack.c.h.b16 %v147
    %v231 = vunpack.c.l.b16 %v148
    %v232 = vunpack.c.l.b16 %v149
    %v233 = vunpack.c.h.b16 %v149
    %v234 = vunpack.c.l.b16 %v150
    %v235 = vunpack.c.l.b16 %v151
    %v236 = vunpack.c.h.b16 %v151
    %v237 = vunpack.c.l.b16 %v152
    %v238 = vunpack.c.l.b16 %v153
    %v239 = vunpack.c.h.b16 %v153
    %v240 = vunpack.c.l.b16 %v154
    %v241 = vunpack.c.l.b16 %v155
    %v242 = vunpack.c.h.b16 %v155
    %v243 = vunpack.c.l.b16 %v156
    %v244 = vunpack.c.l.b16 %v157
    %v245 = vunpack.c.h.b16 %v157
    %v246 = vunpack.c.l.b16 %v158
    %v247 = vunpack.c.l.b16 %v159
    %v248 = vunpack.c.h.b16 %v159
    %v249 = vunpack.c.l.b16 %v160
    %v250 = vunpack.c.l.b16 %v161
    %v251 = vunpack.c.h.b16 %v161
    %v252 = vunpack.c.l.b16 %v162
    %v253 = vunpack.c.l.b16 %v163
    %v254 = vunpack.c.h.b16 %v163
    %v255 = vunpack.c.l.b16 %v164
    %v256 = vunpack.c.l.b16 %v165
    %v257 = vunpack.c.h.b16 %v165
    %v258 = vunpack.c.l.b16 %v166
    %v259 = vunpack.c.l.b16 %v167
    %v260 = vunpack.c.h.b16 %v167
    %v261 = vunpack.c.l.b16 %v168
    %v262 = vunpack.c.l.b16 %v169
    %v263 = vunpack.c.h.b16 %v169
    %v264 = vunpack.c.l.b16 %v170
    %v265 = vunpack.c.l.b16 %v171
    %v266 = vunpack.c.h.b16 %v171
    %v267 = vunpack.c.l.b16 %v172
    %v268 = vunpack.c.l.b16 %v173
    %v269 = vunpack.c.h.b16 %v173
    %v270 = vunpack.c.l.b16 %v174
    %v271 = vunpack.c.l.b16 %v175
    %v272 = vunpack.c.h.b16 %v175
    %v273 = vunpack.c.l.b16 %v176
    %v274 = vpack.c.b16 %v229, %v226
    %v275 = vpack.c.b16 %v230, %v227
    %v276 = vpack.c.b16 %v231, %v228
    %v277 = vpack.c.b16 %v235, %v232
    %v278 = vpack.c.b16 %v236, %v233
    %v279 = vpack.c.b16 %v237, %v234
    %v280 = vpack.c.b16 %v241, %v238
    %v281 = vpack.c.b16 %v242, %v239
    %v282 = vpack.c.b16 %v243, %v240
    %v283 = vpack.c.b16 %v247, %v244
    %v284 = vpack.c.b16 %v248, %v245
    %v285 = vpack.c.b16 %v249, %v246
    %v286 = vpack.c.b16 %v253, %v250
    %v287 = vpack.c.b16 %v254, %v251
    %v288 = vpack.c.b16 %v255, %v252
    %v289 = vpack.c.b16 %v259, %v256
    %v290 = vpack.c.b16 %v260, %v257
    %v291 = vpack.c.b16 %v261, %v258
    %v292 = vpack.c.b16 %v265, %v262
    %v293 = vpack.c.b16 %v266, %v263
    %v294 = vpack.c.b16 %v267, %v264
    %v295 = vpack.c.b16 %v271, %v268
    %v296 = vpack.c.b16 %v272, %v269
    %v297 = vpack.c.b16 %v273, %v270
    %322 = vmatprep.subr.bf16.mxu0 %v275
    %323 = vmatpush1.bf16.msra.mxu0 %v274
    %324 = vmatprep.subr.bf16.mxu0 %v278
    %325 = vmatpush1.bf16.msra.mxu0 %v277
    %326 = vmatprep.subr.bf16.mxu0 %v281
    %327 = vmatpush1.bf16.msra.mxu0 %v280
    %328 = vmatprep.subr.bf16.mxu0 %v284
    %329 = vmatpush1.bf16.msra.mxu0 %v283
    %330 = vmatprep.subr.bf16.mxu0 %v287
    %331 = vmatpush1.bf16.msra.mxu0 %v286
    %332 = vmatprep.subr.bf16.mxu0 %v290
    %333 = vmatpush1.bf16.msra.mxu0 %v289
    %334 = vmatprep.subr.bf16.mxu0 %v293
    %335 = vmatpush1.bf16.msra.mxu0 %v292
    %336 = vmatprep.subr.bf16.mxu0 %v296
    %337 = vmatpush1.bf16.msra.mxu0 %v295
    %338 = vmatprep.subr.bf16.mxu0 0
    %339 = vmatpush1.bf16.msra.mxu0 0
    %340 = vmatprep.subr.bf16.mxu0 0
    %341 = vmatpush1.bf16.msra.mxu0 0
    %342 = vmatprep.subr.bf16.mxu0 0
    %343 = vmatpush1.bf16.msra.mxu0 0
    %344 = vmatprep.subr.bf16.mxu0 0
    %345 = vmatpush1.bf16.msra.mxu0 0
    %346 = vmatprep.subr.bf16.mxu0 0
    %347 = vmatpush1.bf16.msra.mxu0 0
    %348 = vmatprep.subr.bf16.mxu0 0
    %349 = vmatpush1.bf16.msra.mxu0 0
    %350 = vmatprep.subr.bf16.mxu0 0
    %351 = vmatpush1.bf16.msra.mxu0 0
    %352 = vmatprep.subr.bf16.mxu0 0
    %353 = vmatpush1.bf16.msra.mxu0 0
    %354 = vmatprep.mubr.bf16.mxu0 0
    %355 = vmatmul.mubr.bf16.gmra.mrb[0].mxu0 %v144
    %v356 = vpop.f32.mrb[0].mxu0
    %v357 = vadd.f32 %v182, %v356
    %v358 = vpop.f32.mrb[0].mxu0
    %v359 = vadd.f32 %v186, %v358
    %v360 = vpop.f32.mrb[0].mxu0
    %v361 = vadd.f32 %v182, %v360
    %v362 = vpop.f32.mrb[0].mxu0
    %v363 = vadd.f32 %v186, %v362
    %364 = vdwg.mxu0
    %365 = vmatprep.subr.bf16.mxu0 0
    %366 = vmatpush1.bf16.msra.mxu0 %v276
    %367 = vmatprep.subr.bf16.mxu0 0
    %368 = vmatpush1.bf16.msra.mxu0 %v279
    %369 = vmatprep.subr.bf16.mxu0 0
    %370 = vmatpush1.bf16.msra.mxu0 %v282
    %371 = vmatprep.subr.bf16.mxu0 0
    %372 = vmatpush1.bf16.msra.mxu0 %v285
    %373 = vmatprep.subr.bf16.mxu0 0
    %374 = vmatpush1.bf16.msra.mxu0 %v288
    %375 = vmatprep.subr.bf16.mxu0 0
    %376 = vmatpush1.bf16.msra.mxu0 %v291
    %377 = vmatprep.subr.bf16.mxu0 0
    %378 = vmatpush1.bf16.msra.mxu0 %v294
    %379 = vmatprep.subr.bf16.mxu0 0
    %380 = vmatpush1.bf16.msra.mxu0 %v297
    %381 = vmatprep.subr.bf16.mxu0 0
    %382 = vmatpush1.bf16.msra.mxu0 0
    %383 = vmatprep.subr.bf16.mxu0 0
    %384 = vmatpush1.bf16.msra.mxu0 0
    %385 = vmatprep.subr.bf16.mxu0 0
    %386 = vmatpush1.bf16.msra.mxu0 0
    %387 = vmatprep.subr.bf16.mxu0 0
    %388 = vmatpush1.bf16.msra.mxu0 0
    %389 = vmatprep.subr.bf16.mxu0 0
    %390 = vmatpush1.bf16.msra.mxu0 0
    %391 = vmatprep.subr.bf16.mxu0 0
    %392 = vmatpush1.bf16.msra.mxu0 0
    %393 = vmatprep.subr.bf16.mxu0 0
    %394 = vmatpush1.bf16.msra.mxu0 0
    %395 = vmatprep.subr.bf16.mxu0 0
    %396 = vmatpush1.bf16.msra.mxu0 0
    %397 = vmatprep.mubr.bf16.mxu0 0
    %398 = vmatmul.mubr.bf16.gmra.mrb[0].mxu0 %v144
    %v399 = vpop.f32.mrb[0].mxu0
    %v400 = vadd.f32 %v190, %v399
    %v401 = vpop.f32.mrb[0].mxu0
    %v402 = vpop.f32.mrb[0].mxu0
    %v403 = vadd.f32 %v190, %v402
    %v404 = vpop.f32.mrb[0].mxu0
    %405 = vdwg.mxu0
    %v406 = vmul.f32 %v357, 0.17677669
    %v407 = vmul.f32 %v361, 0.17677669
    %v408 = vpack.c.bf16 %v407, %v406
    %v409 = vpack.c.bf16 %v363, %v359
    %v410 = vpack.c.bf16 %v403, %v400
    %vm411 = vcmask 261120
    %v413 = vsel %vm411, %v408, 0
    %v416 = vsel %vm411, %v409, 0
    %418 = vmatprep.subr.bf16.mxu0 0
    %419 = vmatpush1.bf16.xpose.msra.mxu0 %v416
    %420 = vmatprep.subr.bf16.mxu0 0
    %421 = vmatpush1.bf16.xpose.msra.mxu0 0
    %422 = vmatprep.subr.bf16.mxu0 0
    %423 = vmatpush1.bf16.xpose.msra.mxu0 0
    %424 = vmatprep.subr.bf16.mxu0 0
    %425 = vmatpush1.bf16.xpose.msra.mxu0 0
    %426 = vmatprep.subr.bf16.mxu0 0
    %427 = vmatpush1.bf16.xpose.msra.mxu0 0
    %428 = vmatprep.subr.bf16.mxu0 0
    %429 = vmatpush1.bf16.xpose.msra.mxu0 0
    %430 = vmatprep.subr.bf16.mxu0 0
    %431 = vmatpush1.bf16.xpose.msra.mxu0 0
    %432 = vmatprep.subr.bf16.mxu0 0
    %433 = vmatpush1.bf16.xpose.msra.mxu0 0
    %434 = vmatprep.subr.bf16.mxu0 0
    %435 = vmatpush1.bf16.xpose.msra.mxu0 0
    %436 = vmatprep.subr.bf16.mxu0 0
    %437 = vmatpush1.bf16.xpose.msra.mxu0 0
    %438 = vmatprep.subr.bf16.mxu0 0
    %439 = vmatpush1.bf16.xpose.msra.mxu0 0
    %440 = vmatprep.subr.bf16.mxu0 0
    %441 = vmatpush1.bf16.xpose.msra.mxu0 0
    %442 = vmatprep.subr.bf16.mxu0 0
    %443 = vmatpush1.bf16.xpose.msra.mxu0 0
    %444 = vmatprep.subr.bf16.mxu0 0
    %445 = vmatpush1.bf16.xpose.msra.mxu0 0
    %446 = vmatprep.subr.bf16.mxu0 0
    %447 = vmatpush1.bf16.xpose.msra.mxu0 0
    %448 = vmatprep.subr.bf16.mxu0 0
    %449 = vmatpush1.bf16.xpose.msra.mxu0 0
    %450 = vmatprep.mubr.bf16.mxu0 0
    %451 = vmatmul.mubr.bf16.gmra.mrb[0].mxu0 %v413
    %v452 = vpop.f32.mrb[0].mxu0
    %v453 = vadd.f32 0.0, %v452
    %v454 = vpop.f32.mrb[0].mxu0
    %v455 = vpop.f32.mrb[0].mxu0
    %v456 = vpop.f32.mrb[0].mxu0
    %457 = vdwg.mxu0
    %v458 = vsel %vm97, 16843009, 0
    %v459 = vunpack.c.0.s8 %v458
    %vm460 = vcmp.ne.s32.totalorder %v459, 0
    %v461 = vsel %vm460, %v453, 1e-09
    %vm462 = vcmask 64512
    %v463 = vsel %vm462, %v461, -inf
    %464 = vmax.xlane.f32.xlu0 %v463
    %v465 = vpop.xlane.xlu0 %464
    %v466 = vsub.f32 %v461, %v465
    %v467 = vmul.f32 %v466, 1.442695
    %v468 = vpow.pop %v467
    %v469 = vsel %vm462, %v468, 0.0
    %470 = vadd.xlane.f32.xlu0 %v469
    %v471 = vpop.xlane.xlu0 %470
    %v472 = vrcp.pop %v471
    %v473 = vmul.f32 %v468, %v472
    %v474 = vpack.c.bf16 %v473, %v473
    %v476 = vsel %vm462, %v474, 0
    %vm478 = vcmask 1043456
    %v480 = vsel %vm478, %v410, 0
    %482 = vmatprep.subr.bf16.mxu0 0
    %483 = vmatpush1.bf16.msra.mxu0 %v480
    %484 = vmatprep.subr.bf16.mxu0 0
    %485 = vmatpush1.bf16.msra.mxu0 0
    %486 = vmatprep.subr.bf16.mxu0 0
    %487 = vmatpush1.bf16.msra.mxu0 0
    %488 = vmatprep.subr.bf16.mxu0 0
    %489 = vmatpush1.bf16.msra.mxu0 0
    %490 = vmatprep.subr.bf16.mxu0 0
    %491 = vmatpush1.bf16.msra.mxu0 0
    %492 = vmatprep.subr.bf16.mxu0 0
    %493 = vmatpush1.bf16.msra.mxu0 0
    %494 = vmatprep.subr.bf16.mxu0 0
    %495 = vmatpush1.bf16.msra.mxu0 0
    %496 = vmatprep.subr.bf16.mxu0 0
    %497 = vmatpush1.bf16.msra.mxu0 0
    %498 = vmatprep.subr.bf16.mxu0 0
    %499 = vmatpush1.bf16.msra.mxu0 0
    %500 = vmatprep.subr.bf16.mxu0 0
    %501 = vmatpush1.bf16.msra.mxu0 0
    %502 = vmatprep.subr.bf16.mxu0 0
    %503 = vmatpush1.bf16.msra.mxu0 0
    %504 = vmatprep.subr.bf16.mxu0 0
    %505 = vmatpush1.bf16.msra.mxu0 0
    %506 = vmatprep.subr.bf16.mxu0 0
    %507 = vmatpush1.bf16.msra.mxu0 0
    %508 = vmatprep.subr.bf16.mxu0 0
    %509 = vmatpush1.bf16.msra.mxu0 0
    %510 = vmatprep.subr.bf16.mxu0 0
    %511 = vmatpush1.bf16.msra.mxu0 0
    %512 = vmatprep.subr.bf16.mxu0 0
    %513 = vmatpush1.bf16.msra.mxu0 0
    %514 = vmatprep.mubr.bf16.mxu0 0
    %515 = vmatmul.mubr.bf16.gmra.mrb[0].mxu0 %v476
    %v516 = vpop.f32.mrb[0].mxu0
    %v517 = vadd.f32 0.0, %v516
    %v518 = vpop.f32.mrb[0].mxu0
    %v519 = vpop.f32.mrb[0].mxu0
    %v520 = vpop.f32.mrb[0].mxu0
    %521 = vdwg.mxu0
    %522 = vst.msk [vmem:[#allocation2] sm:$0xff] %vm411, %v517
    %524 = vrot.lane.b32.xlu0 %v408, 96
    %v525 = vpop.permute.xlu0 %524
    %527 = vrot.lane.b32.xlu0 %v409, 96
    %v528 = vpop.permute.xlu0 %527
    %v530 = vsel %vm411, %v525, 0
    %v533 = vsel %vm411, %v528, 0
    %535 = vmatprep.subr.bf16.mxu0 0
    %536 = vmatpush1.bf16.xpose.msra.mxu0 %v533
    %537 = vmatprep.subr.bf16.mxu0 0
    %538 = vmatpush1.bf16.xpose.msra.mxu0 0
    %539 = vmatprep.subr.bf16.mxu0 0
    %540 = vmatpush1.bf16.xpose.msra.mxu0 0
    %541 = vmatprep.subr.bf16.mxu0 0
    %542 = vmatpush1.bf16.xpose.msra.mxu0 0
    %543 = vmatprep.subr.bf16.mxu0 0
    %544 = vmatpush1.bf16.xpose.msra.mxu0 0
    %545 = vmatprep.subr.bf16.mxu0 0
    %546 = vmatpush1.bf16.xpose.msra.mxu0 0
    %547 = vmatprep.subr.bf16.mxu0 0
    %548 = vmatpush1.bf16.xpose.msra.mxu0 0
    %549 = vmatprep.subr.bf16.mxu0 0
    %550 = vmatpush1.bf16.xpose.msra.mxu0 0
    %551 = vmatprep.subr.bf16.mxu0 0
    %552 = vmatpush1.bf16.xpose.msra.mxu0 0
    %553 = vmatprep.subr.bf16.mxu0 0
    %554 = vmatpush1.bf16.xpose.msra.mxu0 0
    %555 = vmatprep.subr.bf16.mxu0 0
    %556 = vmatpush1.bf16.xpose.msra.mxu0 0
    %557 = vmatprep.subr.bf16.mxu0 0
    %558 = vmatpush1.bf16.xpose.msra.mxu0 0
    %559 = vmatprep.subr.bf16.mxu0 0
    %560 = vmatpush1.bf16.xpose.msra.mxu0 0
    %561 = vmatprep.subr.bf16.mxu0 0
    %562 = vmatpush1.bf16.xpose.msra.mxu0 0
    %563 = vmatprep.subr.bf16.mxu0 0
    %564 = vmatpush1.bf16.xpose.msra.mxu0 0
    %565 = vmatprep.subr.bf16.mxu0 0
    %566 = vmatpush1.bf16.xpose.msra.mxu0 0
    %567 = vmatprep.mubr.bf16.mxu0 0
    %568 = vmatmul.mubr.bf16.gmra.mrb[0].mxu0 %v530
    %v569 = vpop.f32.mrb[0].mxu0
    %v570 = vadd.f32 0.0, %v569
    %v571 = vpop.f32.mrb[0].mxu0
    %v572 = vpop.f32.mrb[0].mxu0
    %v573 = vpop.f32.mrb[0].mxu0
    %574 = vdwg.mxu0
    %v575 = vsel %vm460, %v570, 1e-09
    %v576 = vsel %vm462, %v575, -inf
    %577 = vmax.xlane.f32.xlu0 %v576
    %v578 = vpop.xlane.xlu0 %577
    %v579 = vsub.f32 %v575, %v578
    %v580 = vmul.f32 %v579, 1.442695
    %v581 = vpow.pop %v580
    %v582 = vsel %vm462, %v581, 0.0
    %583 = vadd.xlane.f32.xlu0 %v582
    %v584 = vpop.xlane.xlu0 %583
    %v585 = vrcp.pop %v584
    %v586 = vmul.f32 %v581, %v585
    %v587 = vpack.c.bf16 %v586, %v586
    %589 = vrot.lane.b32.xlu0 %v410, 96
    %v590 = vpop.permute.xlu0 %589
    %v592 = vsel %vm462, %v587, 0
    %v595 = vsel %vm478, %v590, 0
    %597 = vmatprep.subr.bf16.mxu0 0
    %598 = vmatpush1.bf16.msra.mxu0 %v595
    %599 = vmatprep.subr.bf16.mxu0 0
    %600 = vmatpush1.bf16.msra.mxu0 0
    %601 = vmatprep.subr.bf16.mxu0 0
    %602 = vmatpush1.bf16.msra.mxu0 0
    %603 = vmatprep.subr.bf16.mxu0 0
    %604 = vmatpush1.bf16.msra.mxu0 0
    %605 = vmatprep.subr.bf16.mxu0 0
    %606 = vmatpush1.bf16.msra.mxu0 0
    %607 = vmatprep.subr.bf16.mxu0 0
    %608 = vmatpush1.bf16.msra.mxu0 0
    %609 = vmatprep.subr.bf16.mxu0 0
    %610 = vmatpush1.bf16.msra.mxu0 0
    %611 = vmatprep.subr.bf16.mxu0 0
    %612 = vmatpush1.bf16.msra.mxu0 0
    %613 = vmatprep.subr.bf16.mxu0 0
    %614 = vmatpush1.bf16.msra.mxu0 0
    %615 = vmatprep.subr.bf16.mxu0 0
    %616 = vmatpush1.bf16.msra.mxu0 0
    %617 = vmatprep.subr.bf16.mxu0 0
    %618 = vmatpush1.bf16.msra.mxu0 0
    %619 = vmatprep.subr.bf16.mxu0 0
    %620 = vmatpush1.bf16.msra.mxu0 0
    %621 = vmatprep.subr.bf16.mxu0 0
    %622 = vmatpush1.bf16.msra.mxu0 0
    %623 = vmatprep.subr.bf16.mxu0 0
    %624 = vmatpush1.bf16.msra.mxu0 0
    %625 = vmatprep.subr.bf16.mxu0 0
    %626 = vmatpush1.bf16.msra.mxu0 0
    %627 = vmatprep.subr.bf16.mxu0 0
    %628 = vmatpush1.bf16.msra.mxu0 0
    %629 = vmatprep.mubr.bf16.mxu0 0
    %630 = vmatmul.mubr.bf16.gmra.mrb[0].mxu0 %v592
    %v631 = vpop.f32.mrb[0].mxu0
    %v632 = vadd.f32 0.0, %v631
    %v633 = vpop.f32.mrb[0].mxu0
    %v634 = vpop.f32.mrb[0].mxu0
    %v635 = vpop.f32.mrb[0].mxu0
    %636 = vdwg.mxu0
    %638 = vrot.lane.b32.xlu0 %v632, 32
    %v639 = vpop.permute.xlu0 %638
    %vm641 = vcmask 523520
    %642 = vst.msk [vmem:[#allocation2] sm:$0xff] %vm641, %v639
    %643 = vrot.lane.b32.xlu0 %v408, 64
    %v644 = vpop.permute.xlu0 %643
    %645 = vrot.lane.b32.xlu0 %v409, 64
    %v646 = vpop.permute.xlu0 %645
    %v648 = vsel %vm411, %v644, 0
    %v651 = vsel %vm411, %v646, 0
    %653 = vmatprep.subr.bf16.mxu0 0
    %654 = vmatpush1.bf16.xpose.msra.mxu0 %v651
    %655 = vmatprep.subr.bf16.mxu0 0
    %656 = vmatpush1.bf16.xpose.msra.mxu0 0
    %657 = vmatprep.subr.bf16.mxu0 0
    %658 = vmatpush1.bf16.xpose.msra.mxu0 0
    %659 = vmatprep.subr.bf16.mxu0 0
    %660 = vmatpush1.bf16.xpose.msra.mxu0 0
    %661 = vmatprep.subr.bf16.mxu0 0
    %662 = vmatpush1.bf16.xpose.msra.mxu0 0
    %663 = vmatprep.subr.bf16.mxu0 0
    %664 = vmatpush1.bf16.xpose.msra.mxu0 0
    %665 = vmatprep.subr.bf16.mxu0 0
    %666 = vmatpush1.bf16.xpose.msra.mxu0 0
    %667 = vmatprep.subr.bf16.mxu0 0
    %668 = vmatpush1.bf16.xpose.msra.mxu0 0
    %669 = vmatprep.subr.bf16.mxu0 0
    %670 = vmatpush1.bf16.xpose.msra.mxu0 0
    %671 = vmatprep.subr.bf16.mxu0 0
    %672 = vmatpush1.bf16.xpose.msra.mxu0 0
    %673 = vmatprep.subr.bf16.mxu0 0
    %674 = vmatpush1.bf16.xpose.msra.mxu0 0
    %675 = vmatprep.subr.bf16.mxu0 0
    %676 = vmatpush1.bf16.xpose.msra.mxu0 0
    %677 = vmatprep.subr.bf16.mxu0 0
    %678 = vmatpush1.bf16.xpose.msra.mxu0 0
    %679 = vmatprep.subr.bf16.mxu0 0
    %680 = vmatpush1.bf16.xpose.msra.mxu0 0
    %681 = vmatprep.subr.bf16.mxu0 0
    %682 = vmatpush1.bf16.xpose.msra.mxu0 0
    %683 = vmatprep.subr.bf16.mxu0 0
    %684 = vmatpush1.bf16.xpose.msra.mxu0 0
    %685 = vmatprep.mubr.bf16.mxu0 0
    %686 = vmatmul.mubr.bf16.gmra.mrb[0].mxu0 %v648
    %v687 = vpop.f32.mrb[0].mxu0
    %v688 = vadd.f32 0.0, %v687
    %v689 = vpop.f32.mrb[0].mxu0
    %v690 = vpop.f32.mrb[0].mxu0
    %v691 = vpop.f32.mrb[0].mxu0
    %692 = vdwg.mxu0
    %v693 = vsel %vm460, %v688, 1e-09
    %v694 = vsel %vm462, %v693, -inf
    %695 = vmax.xlane.f32.xlu0 %v694
    %v696 = vpop.xlane.xlu0 %695
    %v697 = vsub.f32 %v693, %v696
    %v698 = vmul.f32 %v697, 1.442695
    %v699 = vpow.pop %v698
    %v700 = vsel %vm462, %v699, 0.0
    %701 = vadd.xlane.f32.xlu0 %v700
    %v702 = vpop.xlane.xlu0 %701
    %v703 = vrcp.pop %v702
    %v704 = vmul.f32 %v699, %v703
    %v705 = vpack.c.bf16 %v704, %v704
    %706 = vrot.lane.b32.xlu0 %v410, 64
    %v707 = vpop.permute.xlu0 %706
    %v709 = vsel %vm462, %v705, 0
    %v712 = vsel %vm478, %v707, 0
    %714 = vmatprep.subr.bf16.mxu0 0
    %715 = vmatpush1.bf16.msra.mxu0 %v712
    %716 = vmatprep.subr.bf16.mxu0 0
    %717 = vmatpush1.bf16.msra.mxu0 0
    %718 = vmatprep.subr.bf16.mxu0 0
    %719 = vmatpush1.bf16.msra.mxu0 0
    %720 = vmatprep.subr.bf16.mxu0 0
    %721 = vmatpush1.bf16.msra.mxu0 0
    %722 = vmatprep.subr.bf16.mxu0 0
    %723 = vmatpush1.bf16.msra.mxu0 0
    %724 = vmatprep.subr.bf16.mxu0 0
    %725 = vmatpush1.bf16.msra.mxu0 0
    %726 = vmatprep.subr.bf16.mxu0 0
    %727 = vmatpush1.bf16.msra.mxu0 0
    %728 = vmatprep.subr.bf16.mxu0 0
    %729 = vmatpush1.bf16.msra.mxu0 0
    %730 = vmatprep.subr.bf16.mxu0 0
    %731 = vmatpush1.bf16.msra.mxu0 0
    %732 = vmatprep.subr.bf16.mxu0 0
    %733 = vmatpush1.bf16.msra.mxu0 0
    %734 = vmatprep.subr.bf16.mxu0 0
    %735 = vmatpush1.bf16.msra.mxu0 0
    %736 = vmatprep.subr.bf16.mxu0 0
    %737 = vmatpush1.bf16.msra.mxu0 0
    %738 = vmatprep.subr.bf16.mxu0 0
    %739 = vmatpush1.bf16.msra.mxu0 0
    %740 = vmatprep.subr.bf16.mxu0 0
    %741 = vmatpush1.bf16.msra.mxu0 0
    %742 = vmatprep.subr.bf16.mxu0 0
    %743 = vmatpush1.bf16.msra.mxu0 0
    %744 = vmatprep.subr.bf16.mxu0 0
    %745 = vmatpush1.bf16.msra.mxu0 0
    %746 = vmatprep.mubr.bf16.mxu0 0
    %747 = vmatmul.mubr.bf16.gmra.mrb[0].mxu0 %v709
    %v748 = vpop.f32.mrb[0].mxu0
    %v749 = vadd.f32 0.0, %v748
    %v750 = vpop.f32.mrb[0].mxu0
    %v751 = vpop.f32.mrb[0].mxu0
    %v752 = vpop.f32.mrb[0].mxu0
    %753 = vdwg.mxu0
    %755 = vrot.lane.b32.xlu0 %v749, 64
    %v756 = vpop.permute.xlu0 %755
    %vm758 = vcmask 785920
    %759 = vst.msk [vmem:[#allocation2] sm:$0xff] %vm758, %v756
    %760 = vrot.lane.b32.xlu0 %v408, 32
    %v761 = vpop.permute.xlu0 %760
    %762 = vrot.lane.b32.xlu0 %v409, 32
    %v763 = vpop.permute.xlu0 %762
    %v765 = vsel %vm411, %v761, 0
    %v768 = vsel %vm411, %v763, 0
    %770 = vmatprep.subr.bf16.mxu0 0
    %771 = vmatpush1.bf16.xpose.msra.mxu0 %v768
    %772 = vmatprep.subr.bf16.mxu0 0
    %773 = vmatpush1.bf16.xpose.msra.mxu0 0
    %774 = vmatprep.subr.bf16.mxu0 0
    %775 = vmatpush1.bf16.xpose.msra.mxu0 0
    %776 = vmatprep.subr.bf16.mxu0 0
    %777 = vmatpush1.bf16.xpose.msra.mxu0 0
    %778 = vmatprep.subr.bf16.mxu0 0
    %779 = vmatpush1.bf16.xpose.msra.mxu0 0
    %780 = vmatprep.subr.bf16.mxu0 0
    %781 = vmatpush1.bf16.xpose.msra.mxu0 0
    %782 = vmatprep.subr.bf16.mxu0 0
    %783 = vmatpush1.bf16.xpose.msra.mxu0 0
    %784 = vmatprep.subr.bf16.mxu0 0
    %785 = vmatpush1.bf16.xpose.msra.mxu0 0
    %786 = vmatprep.subr.bf16.mxu0 0
    %787 = vmatpush1.bf16.xpose.msra.mxu0 0
    %788 = vmatprep.subr.bf16.mxu0 0
    %789 = vmatpush1.bf16.xpose.msra.mxu0 0
    %790 = vmatprep.subr.bf16.mxu0 0
    %791 = vmatpush1.bf16.xpose.msra.mxu0 0
    %792 = vmatprep.subr.bf16.mxu0 0
    %793 = vmatpush1.bf16.xpose.msra.mxu0 0
    %794 = vmatprep.subr.bf16.mxu0 0
    %795 = vmatpush1.bf16.xpose.msra.mxu0 0
    %796 = vmatprep.subr.bf16.mxu0 0
    %797 = vmatpush1.bf16.xpose.msra.mxu0 0
    %798 = vmatprep.subr.bf16.mxu0 0
    %799 = vmatpush1.bf16.xpose.msra.mxu0 0
    %800 = vmatprep.subr.bf16.mxu0 0
    %801 = vmatpush1.bf16.xpose.msra.mxu0 0
    %802 = vmatprep.mubr.bf16.mxu0 0
    %803 = vmatmul.mubr.bf16.gmra.mrb[0].mxu0 %v765
    %v804 = vpop.f32.mrb[0].mxu0
    %v805 = vadd.f32 0.0, %v804
    %v806 = vpop.f32.mrb[0].mxu0
    %v807 = vpop.f32.mrb[0].mxu0
    %v808 = vpop.f32.mrb[0].mxu0
    %809 = vdwg.mxu0
    %v810 = vsel %vm460, %v805, 1e-09
    %v811 = vsel %vm462, %v810, -inf
    %812 = vmax.xlane.f32.xlu0 %v811
    %v813 = vpop.xlane.xlu0 %812
    %v814 = vsub.f32 %v810, %v813
    %v815 = vmul.f32 %v814, 1.442695
    %v816 = vpow.pop %v815
    %v817 = vsel %vm462, %v816, 0.0
    %818 = vadd.xlane.f32.xlu0 %v817
    %v819 = vpop.xlane.xlu0 %818
    %v820 = vrcp.pop %v819
    %v821 = vmul.f32 %v816, %v820
    %v822 = vpack.c.bf16 %v821, %v821
    %823 = vrot.lane.b32.xlu0 %v410, 32
    %v824 = vpop.permute.xlu0 %823
    %v826 = vsel %vm462, %v822, 0
    %v829 = vsel %vm478, %v824, 0
    %831 = vmatprep.subr.bf16.mxu0 0
    %832 = vmatpush1.bf16.msra.mxu0 %v829
    %833 = vmatprep.subr.bf16.mxu0 0
    %834 = vmatpush1.bf16.msra.mxu0 0
    %835 = vmatprep.subr.bf16.mxu0 0
    %836 = vmatpush1.bf16.msra.mxu0 0
    %837 = vmatprep.subr.bf16.mxu0 0
    %838 = vmatpush1.bf16.msra.mxu0 0
    %839 = vmatprep.subr.bf16.mxu0 0
    %840 = vmatpush1.bf16.msra.mxu0 0
    %841 = vmatprep.subr.bf16.mxu0 0
    %842 = vmatpush1.bf16.msra.mxu0 0
    %843 = vmatprep.subr.bf16.mxu0 0
    %844 = vmatpush1.bf16.msra.mxu0 0
    %845 = vmatprep.subr.bf16.mxu0 0
    %846 = vmatpush1.bf16.msra.mxu0 0
    %847 = vmatprep.subr.bf16.mxu0 0
    %848 = vmatpush1.bf16.msra.mxu0 0
    %849 = vmatprep.subr.bf16.mxu0 0
    %850 = vmatpush1.bf16.msra.mxu0 0
    %851 = vmatprep.subr.bf16.mxu0 0
    %852 = vmatpush1.bf16.msra.mxu0 0
    %853 = vmatprep.subr.bf16.mxu0 0
    %854 = vmatpush1.bf16.msra.mxu0 0
    %855 = vmatprep.subr.bf16.mxu0 0
    %856 = vmatpush1.bf16.msra.mxu0 0
    %857 = vmatprep.subr.bf16.mxu0 0
    %858 = vmatpush1.bf16.msra.mxu0 0
    %859 = vmatprep.subr.bf16.mxu0 0
    %860 = vmatpush1.bf16.msra.mxu0 0
    %861 = vmatprep.subr.bf16.mxu0 0
    %862 = vmatpush1.bf16.msra.mxu0 0
    %863 = vmatprep.mubr.bf16.mxu0 0
    %864 = vmatmul.mubr.bf16.gmra.mrb[0].mxu0 %v826
    %v865 = vpop.f32.mrb[0].mxu0
    %v866 = vadd.f32 0.0, %v865
    %v867 = vpop.f32.mrb[0].mxu0
    %v868 = vpop.f32.mrb[0].mxu0
    %v869 = vpop.f32.mrb[0].mxu0
    %870 = vdwg.mxu0
    %872 = vrot.lane.b32.xlu0 %v866, 96
    %v873 = vpop.permute.xlu0 %872
    %vm875 = vcmask 1048320
    %876 = vst.msk [vmem:[#allocation2] sm:$0xff] %vm875, %v873
    %v877 = vrot.slane %v408, 4
    %v878 = vrot.slane %v409, 4
    %v880 = vsel %vm411, %v877, 0
    %v883 = vsel %vm411, %v878, 0
    %885 = vmatprep.subr.bf16.mxu0 0
    %886 = vmatpush1.bf16.xpose.msra.mxu0 %v883
    %887 = vmatprep.subr.bf16.mxu0 0
    %888 = vmatpush1.bf16.xpose.msra.mxu0 0
    %889 = vmatprep.subr.bf16.mxu0 0
    %890 = vmatpush1.bf16.xpose.msra.mxu0 0
    %891 = vmatprep.subr.bf16.mxu0 0
    %892 = vmatpush1.bf16.xpose.msra.mxu0 0
    %893 = vmatprep.subr.bf16.mxu0 0
    %894 = vmatpush1.bf16.xpose.msra.mxu0 0
    %895 = vmatprep.subr.bf16.mxu0 0
    %896 = vmatpush1.bf16.xpose.msra.mxu0 0
    %897 = vmatprep.subr.bf16.mxu0 0
    %898 = vmatpush1.bf16.xpose.msra.mxu0 0
    %899 = vmatprep.subr.bf16.mxu0 0
    %900 = vmatpush1.bf16.xpose.msra.mxu0 0
    %901 = vmatprep.subr.bf16.mxu0 0
    %902 = vmatpush1.bf16.xpose.msra.mxu0 0
    %903 = vmatprep.subr.bf16.mxu0 0
    %904 = vmatpush1.bf16.xpose.msra.mxu0 0
    %905 = vmatprep.subr.bf16.mxu0 0
    %906 = vmatpush1.bf16.xpose.msra.mxu0 0
    %907 = vmatprep.subr.bf16.mxu0 0
    %908 = vmatpush1.bf16.xpose.msra.mxu0 0
    %909 = vmatprep.subr.bf16.mxu0 0
    %910 = vmatpush1.bf16.xpose.msra.mxu0 0
    %911 = vmatprep.subr.bf16.mxu0 0
    %912 = vmatpush1.bf16.xpose.msra.mxu0 0
    %913 = vmatprep.subr.bf16.mxu0 0
    %914 = vmatpush1.bf16.xpose.msra.mxu0 0
    %915 = vmatprep.subr.bf16.mxu0 0
    %916 = vmatpush1.bf16.xpose.msra.mxu0 0
    %917 = vmatprep.mubr.bf16.mxu0 0
    %918 = vmatmul.mubr.bf16.gmra.mrb[0].mxu0 %v880
    %v919 = vpop.f32.mrb[0].mxu0
    %v920 = vadd.f32 0.0, %v919
    %v921 = vpop.f32.mrb[0].mxu0
    %v922 = vpop.f32.mrb[0].mxu0
    %v923 = vpop.f32.mrb[0].mxu0
    %924 = vdwg.mxu0
    %v925 = vsel %vm98, 16843009, 0
    %v926 = vunpack.c.0.s8 %v925
    %vm927 = vcmp.ne.s32.totalorder %v926, 0
    %v928 = vsel %vm927, %v920, 1e-09
    %v929 = vsel %vm462, %v928, -inf
    %930 = vmax.xlane.f32.xlu0 %v929
    %v931 = vpop.xlane.xlu0 %930
    %v932 = vsub.f32 %v928, %v931
    %v933 = vmul.f32 %v932, 1.442695
    %v934 = vpow.pop %v933
    %v935 = vsel %vm462, %v934, 0.0
    %936 = vadd.xlane.f32.xlu0 %v935
    %v937 = vpop.xlane.xlu0 %936
    %v938 = vrcp.pop %v937
    %v939 = vmul.f32 %v934, %v938
    %v940 = vpack.c.bf16 %v939, %v939
    %v941 = vrot.slane %v410, 4
    %v943 = vsel %vm462, %v940, 0
    %v946 = vsel %vm478, %v941, 0
    %948 = vmatprep.subr.bf16.mxu0 0
    %949 = vmatpush1.bf16.msra.mxu0 %v946
    %950 = vmatprep.subr.bf16.mxu0 0
    %951 = vmatpush1.bf16.msra.mxu0 0
    %952 = vmatprep.subr.bf16.mxu0 0
    %953 = vmatpush1.bf16.msra.mxu0 0
    %954 = vmatprep.subr.bf16.mxu0 0
    %955 = vmatpush1.bf16.msra.mxu0 0
    %956 = vmatprep.subr.bf16.mxu0 0
    %957 = vmatpush1.bf16.msra.mxu0 0
    %958 = vmatprep.subr.bf16.mxu0 0
    %959 = vmatpush1.bf16.msra.mxu0 0
    %960 = vmatprep.subr.bf16.mxu0 0
    %961 = vmatpush1.bf16.msra.mxu0 0
    %962 = vmatprep.subr.bf16.mxu0 0
    %963 = vmatpush1.bf16.msra.mxu0 0
    %964 = vmatprep.subr.bf16.mxu0 0
    %965 = vmatpush1.bf16.msra.mxu0 0
    %966 = vmatprep.subr.bf16.mxu0 0
    %967 = vmatpush1.bf16.msra.mxu0 0
    %968 = vmatprep.subr.bf16.mxu0 0
    %969 = vmatpush1.bf16.msra.mxu0 0
    %970 = vmatprep.subr.bf16.mxu0 0
    %971 = vmatpush1.bf16.msra.mxu0 0
    %972 = vmatprep.subr.bf16.mxu0 0
    %973 = vmatpush1.bf16.msra.mxu0 0
    %974 = vmatprep.subr.bf16.mxu0 0
    %975 = vmatpush1.bf16.msra.mxu0 0
    %976 = vmatprep.subr.bf16.mxu0 0
    %977 = vmatpush1.bf16.msra.mxu0 0
    %978 = vmatprep.subr.bf16.mxu0 0
    %979 = vmatpush1.bf16.msra.mxu0 0
    %980 = vmatprep.mubr.bf16.mxu0 0
    %981 = vmatmul.mubr.bf16.gmra.mrb[0].mxu0 %v943
    %v982 = vpop.f32.mrb[0].mxu0
    %v983 = vadd.f32 0.0, %v982
    %v984 = vpop.f32.mrb[0].mxu0
    %v985 = vpop.f32.mrb[0].mxu0
    %v986 = vpop.f32.mrb[0].mxu0
    %987 = vdwg.mxu0
    %988 = vst.msk [vmem:[#allocation2 + $0x8] sm:$0xff] %vm411, %v983
    %989 = vrot.lane.b32.xlu0 %v877, 96
    %v990 = vpop.permute.xlu0 %989
    %991 = vrot.lane.b32.xlu0 %v878, 96
    %v992 = vpop.permute.xlu0 %991
    %v994 = vsel %vm411, %v990, 0
    %v997 = vsel %vm411, %v992, 0
    %999 = vmatprep.subr.bf16.mxu0 0
    %1000 = vmatpush1.bf16.xpose.msra.mxu0 %v997
    %1001 = vmatprep.subr.bf16.mxu0 0
    %1002 = vmatpush1.bf16.xpose.msra.mxu0 0
    %1003 = vmatprep.subr.bf16.mxu0 0
    %1004 = vmatpush1.bf16.xpose.msra.mxu0 0
    %1005 = vmatprep.subr.bf16.mxu0 0
    %1006 = vmatpush1.bf16.xpose.msra.mxu0 0
    %1007 = vmatprep.subr.bf16.mxu0 0
    %1008 = vmatpush1.bf16.xpose.msra.mxu0 0
    %1009 = vmatprep.subr.bf16.mxu0 0
    %1010 = vmatpush1.bf16.xpose.msra.mxu0 0
    %1011 = vmatprep.subr.bf16.mxu0 0
    %1012 = vmatpush1.bf16.xpose.msra.mxu0 0
    %1013 = vmatprep.subr.bf16.mxu0 0
    %1014 = vmatpush1.bf16.xpose.msra.mxu0 0
    %1015 = vmatprep.subr.bf16.mxu0 0
    %1016 = vmatpush1.bf16.xpose.msra.mxu0 0
    %1017 = vmatprep.subr.bf16.mxu0 0
    %1018 = vmatpush1.bf16.xpose.msra.mxu0 0
    %1019 = vmatprep.subr.bf16.mxu0 0
    %1020 = vmatpush1.bf16.xpose.msra.mxu0 0
    %1021 = vmatprep.subr.bf16.mxu0 0
    %1022 = vmatpush1.bf16.xpose.msra.mxu0 0
    %1023 = vmatprep.subr.bf16.mxu0 0
    %1024 = vmatpush1.bf16.xpose.msra.mxu0 0
    %1025 = vmatprep.subr.bf16.mxu0 0
    %1026 = vmatpush1.bf16.xpose.msra.mxu0 0
    %1027 = vmatprep.subr.bf16.mxu0 0
    %1028 = vmatpush1.bf16.xpose.msra.mxu0 0
    %1029 = vmatprep.subr.bf16.mxu0 0
    %1030 = vmatpush1.bf16.xpose.msra.mxu0 0
    %1031 = vmatprep.mubr.bf16.mxu0 0
    %1032 = vmatmul.mubr.bf16.gmra.mrb[0].mxu0 %v994
    %v1033 = vpop.f32.mrb[0].mxu0
    %v1034 = vadd.f32 0.0, %v1033
    %v1035 = vpop.f32.mrb[0].mxu0
    %v1036 = vpop.f32.mrb[0].mxu0
    %v1037 = vpop.f32.mrb[0].mxu0
    %1038 = vdwg.mxu0
    %v1039 = vsel %vm927, %v1034, 1e-09
    %v1040 = vsel %vm462, %v1039, -inf
    %1041 = vmax.xlane.f32.xlu0 %v1040
    %v1042 = vpop.xlane.xlu0 %1041
    %v1043 = vsub.f32 %v1039, %v1042
    %v1044 = vmul.f32 %v1043, 1.442695
    %v1045 = vpow.pop %v1044
    %v1046 = vsel %vm462, %v1045, 0.0
    %1047 = vadd.xlane.f32.xlu0 %v1046
    %v1048 = vpop.xlane.xlu0 %1047
    %v1049 = vrcp.pop %v1048
    %v1050 = vmul.f32 %v1045, %v1049
    %v1051 = vpack.c.bf16 %v1050, %v1050
    %1052 = vrot.lane.b32.xlu0 %v941, 96
    %v1053 = vpop.permute.xlu0 %1052
    %v1055 = vsel %vm462, %v1051, 0
    %v1058 = vsel %vm478, %v1053, 0
    %1060 = vmatprep.subr.bf16.mxu0 0
    %1061 = vmatpush1.bf16.msra.mxu0 %v1058
    %1062 = vmatprep.subr.bf16.mxu0 0
    %1063 = vmatpush1.bf16.msra.mxu0 0
    %1064 = vmatprep.subr.bf16.mxu0 0
    %1065 = vmatpush1.bf16.msra.mxu0 0
    %1066 = vmatprep.subr.bf16.mxu0 0
    %1067 = vmatpush1.bf16.msra.mxu0 0
    %1068 = vmatprep.subr.bf16.mxu0 0
    %1069 = vmatpush1.bf16.msra.mxu0 0
    %1070 = vmatprep.subr.bf16.mxu0 0
    %1071 = vmatpush1.bf16.msra.mxu0 0
    %1072 = vmatprep.subr.bf16.mxu0 0
    %1073 = vmatpush1.bf16.msra.mxu0 0
    %1074 = vmatprep.subr.bf16.mxu0 0
    %1075 = vmatpush1.bf16.msra.mxu0 0
    %1076 = vmatprep.subr.bf16.mxu0 0
    %1077 = vmatpush1.bf16.msra.mxu0 0
    %1078 = vmatprep.subr.bf16.mxu0 0
    %1079 = vmatpush1.bf16.msra.mxu0 0
    %1080 = vmatprep.subr.bf16.mxu0 0
    %1081 = vmatpush1.bf16.msra.mxu0 0
    %1082 = vmatprep.subr.bf16.mxu0 0
    %1083 = vmatpush1.bf16.msra.mxu0 0
    %1084 = vmatprep.subr.bf16.mxu0 0
    %1085 = vmatpush1.bf16.msra.mxu0 0
    %1086 = vmatprep.subr.bf16.mxu0 0
    %1087 = vmatpush1.bf16.msra.mxu0 0
    %1088 = vmatprep.subr.bf16.mxu0 0
    %1089 = vmatpush1.bf16.msra.mxu0 0
    %1090 = vmatprep.subr.bf16.mxu0 0
    %1091 = vmatpush1.bf16.msra.mxu0 0
    %1092 = vmatprep.mubr.bf16.mxu0 0
    %1093 = vmatmul.mubr.bf16.gmra.mrb[0].mxu0 %v1055
    %v1094 = vpop.f32.mrb[0].mxu0
    %v1095 = vadd.f32 0.0, %v1094
    %v1096 = vpop.f32.mrb[0].mxu0
    %v1097 = vpop.f32.mrb[0].mxu0
    %v1098 = vpop.f32.mrb[0].mxu0
    %1099 = vdwg.mxu0
    %1101 = vrot.lane.b32.xlu0 %v1095, 32
    %v1102 = vpop.permute.xlu0 %1101
    %1104 = vst.msk [vmem:[#allocation2 + $0x8] sm:$0xff] %vm641, %v1102
    %1105 = vrot.lane.b32.xlu0 %v877, 64
    %v1106 = vpop.permute.xlu0 %1105
    %1107 = vrot.lane.b32.xlu0 %v878, 64
    %v1108 = vpop.permute.xlu0 %1107
    %v1110 = vsel %vm411, %v1106, 0
    %v1113 = vsel %vm411, %v1108, 0
    %1115 = vmatprep.subr.bf16.mxu0 0
    %1116 = vmatpush1.bf16.xpose.msra.mxu0 %v1113
    %1117 = vmatprep.subr.bf16.mxu0 0
    %1118 = vmatpush1.bf16.xpose.msra.mxu0 0
    %1119 = vmatprep.subr.bf16.mxu0 0
    %1120 = vmatpush1.bf16.xpose.msra.mxu0 0
    %1121 = vmatprep.subr.bf16.mxu0 0
    %1122 = vmatpush1.bf16.xpose.msra.mxu0 0
    %1123 = vmatprep.subr.bf16.mxu0 0
    %1124 = vmatpush1.bf16.xpose.msra.mxu0 0
    %1125 = vmatprep.subr.bf16.mxu0 0
    %1126 = vmatpush1.bf16.xpose.msra.mxu0 0
    %1127 = vmatprep.subr.bf16.mxu0 0
    %1128 = vmatpush1.bf16.xpose.msra.mxu0 0
    %1129 = vmatprep.subr.bf16.mxu0 0
    %1130 = vmatpush1.bf16.xpose.msra.mxu0 0
    %1131 = vmatprep.subr.bf16.mxu0 0
    %1132 = vmatpush1.bf16.xpose.msra.mxu0 0
    %1133 = vmatprep.subr.bf16.mxu0 0
    %1134 = vmatpush1.bf16.xpose.msra.mxu0 0
    %1135 = vmatprep.subr.bf16.mxu0 0
    %1136 = vmatpush1.bf16.xpose.msra.mxu0 0
    %1137 = vmatprep.subr.bf16.mxu0 0
    %1138 = vmatpush1.bf16.xpose.msra.mxu0 0
    %1139 = vmatprep.subr.bf16.mxu0 0
    %1140 = vmatpush1.bf16.xpose.msra.mxu0 0
    %1141 = vmatprep.subr.bf16.mxu0 0
    %1142 = vmatpush1.bf16.xpose.msra.mxu0 0
    %1143 = vmatprep.subr.bf16.mxu0 0
    %1144 = vmatpush1.bf16.xpose.msra.mxu0 0
    %1145 = vmatprep.subr.bf16.mxu0 0
    %1146 = vmatpush1.bf16.xpose.msra.mxu0 0
    %1147 = vmatprep.mubr.bf16.mxu0 0
    %1148 = vmatmul.mubr.bf16.gmra.mrb[0].mxu0 %v1110
    %v1149 = vpop.f32.mrb[0].mxu0
    %v1150 = vadd.f32 0.0, %v1149
    %v1151 = vpop.f32.mrb[0].mxu0
    %v1152 = vpop.f32.mrb[0].mxu0
    %v1153 = vpop.f32.mrb[0].mxu0
    %1154 = vdwg.mxu0
    %v1155 = vsel %vm927, %v1150, 1e-09
    %v1156 = vsel %vm462, %v1155, -inf
    %1157 = vmax.xlane.f32.xlu0 %v1156
    %v1158 = vpop.xlane.xlu0 %1157
    %v1159 = vsub.f32 %v1155, %v1158
    %v1160 = vmul.f32 %v1159, 1.442695
    %v1161 = vpow.pop %v1160
    %v1162 = vsel %vm462, %v1161, 0.0
    %1163 = vadd.xlane.f32.xlu0 %v1162
    %v1164 = vpop.xlane.xlu0 %1163
    %v1165 = vrcp.pop %v1164
    %v1166 = vmul.f32 %v1161, %v1165
    %v1167 = vpack.c.bf16 %v1166, %v1166
    %1168 = vrot.lane.b32.xlu0 %v941, 64
    %v1169 = vpop.permute.xlu0 %1168
    %v1171 = vsel %vm462, %v1167, 0
    %v1174 = vsel %vm478, %v1169, 0
    %1176 = vmatprep.subr.bf16.mxu0 0
    %1177 = vmatpush1.bf16.msra.mxu0 %v1174
    %1178 = vmatprep.subr.bf16.mxu0 0
    %1179 = vmatpush1.bf16.msra.mxu0 0
    %1180 = vmatprep.subr.bf16.mxu0 0
    %1181 = vmatpush1.bf16.msra.mxu0 0
    %1182 = vmatprep.subr.bf16.mxu0 0
    %1183 = vmatpush1.bf16.msra.mxu0 0
    %1184 = vmatprep.subr.bf16.mxu0 0
    %1185 = vmatpush1.bf16.msra.mxu0 0
    %1186 = vmatprep.subr.bf16.mxu0 0
    %1187 = vmatpush1.bf16.msra.mxu0 0
    %1188 = vmatprep.subr.bf16.mxu0 0
    %1189 = vmatpush1.bf16.msra.mxu0 0
    %1190 = vmatprep.subr.bf16.mxu0 0
    %1191 = vmatpush1.bf16.msra.mxu0 0
    %1192 = vmatprep.subr.bf16.mxu0 0
    %1193 = vmatpush1.bf16.msra.mxu0 0
    %1194 = vmatprep.subr.bf16.mxu0 0
    %1195 = vmatpush1.bf16.msra.mxu0 0
    %1196 = vmatprep.subr.bf16.mxu0 0
    %1197 = vmatpush1.bf16.msra.mxu0 0
    %1198 = vmatprep.subr.bf16.mxu0 0
    %1199 = vmatpush1.bf16.msra.mxu0 0
    %1200 = vmatprep.subr.bf16.mxu0 0
    %1201 = vmatpush1.bf16.msra.mxu0 0
    %1202 = vmatprep.subr.bf16.mxu0 0
    %1203 = vmatpush1.bf16.msra.mxu0 0
    %1204 = vmatprep.subr.bf16.mxu0 0
    %1205 = vmatpush1.bf16.msra.mxu0 0
    %1206 = vmatprep.subr.bf16.mxu0 0
    %1207 = vmatpush1.bf16.msra.mxu0 0
    %1208 = vmatprep.mubr.bf16.mxu0 0
    %1209 = vmatmul.mubr.bf16.gmra.mrb[0].mxu0 %v1171
    %v1210 = vpop.f32.mrb[0].mxu0
    %v1211 = vadd.f32 0.0, %v1210
    %v1212 = vpop.f32.mrb[0].mxu0
    %v1213 = vpop.f32.mrb[0].mxu0
    %v1214 = vpop.f32.mrb[0].mxu0
    %1215 = vdwg.mxu0
    %1217 = vrot.lane.b32.xlu0 %v1211, 64
    %v1218 = vpop.permute.xlu0 %1217
    %1220 = vst.msk [vmem:[#allocation2 + $0x8] sm:$0xff] %vm758, %v1218
    %1221 = vrot.lane.b32.xlu0 %v877, 32
    %v1222 = vpop.permute.xlu0 %1221
    %1223 = vrot.lane.b32.xlu0 %v878, 32
    %v1224 = vpop.permute.xlu0 %1223
    %v1226 = vsel %vm411, %v1222, 0
    %v1229 = vsel %vm411, %v1224, 0
    %1231 = vmatprep.subr.bf16.mxu0 0
    %1232 = vmatpush1.bf16.xpose.msra.mxu0 %v1229
    %1233 = vmatprep.subr.bf16.mxu0 0
    %1234 = vmatpush1.bf16.xpose.msra.mxu0 0
    %1235 = vmatprep.subr.bf16.mxu0 0
    %1236 = vmatpush1.bf16.xpose.msra.mxu0 0
    %1237 = vmatprep.subr.bf16.mxu0 0
    %1238 = vmatpush1.bf16.xpose.msra.mxu0 0
    %1239 = vmatprep.subr.bf16.mxu0 0
    %1240 = vmatpush1.bf16.xpose.msra.mxu0 0
    %1241 = vmatprep.subr.bf16.mxu0 0
    %1242 = vmatpush1.bf16.xpose.msra.mxu0 0
    %1243 = vmatprep.subr.bf16.mxu0 0
    %1244 = vmatpush1.bf16.xpose.msra.mxu0 0
    %1245 = vmatprep.subr.bf16.mxu0 0
    %1246 = vmatpush1.bf16.xpose.msra.mxu0 0
    %1247 = vmatprep.subr.bf16.mxu0 0
    %1248 = vmatpush1.bf16.xpose.msra.mxu0 0
    %1249 = vmatprep.subr.bf16.mxu0 0
    %1250 = vmatpush1.bf16.xpose.msra.mxu0 0
    %1251 = vmatprep.subr.bf16.mxu0 0
    %1252 = vmatpush1.bf16.xpose.msra.mxu0 0
    %1253 = vmatprep.subr.bf16.mxu0 0
    %1254 = vmatpush1.bf16.xpose.msra.mxu0 0
    %1255 = vmatprep.subr.bf16.mxu0 0
    %1256 = vmatpush1.bf16.xpose.msra.mxu0 0
    %1257 = vmatprep.subr.bf16.mxu0 0
    %1258 = vmatpush1.bf16.xpose.msra.mxu0 0
    %1259 = vmatprep.subr.bf16.mxu0 0
    %1260 = vmatpush1.bf16.xpose.msra.mxu0 0
    %1261 = vmatprep.subr.bf16.mxu0 0
    %1262 = vmatpush1.bf16.xpose.msra.mxu0 0
    %1263 = vmatprep.mubr.bf16.mxu0 0
    %1264 = vmatmul.mubr.bf16.gmra.mrb[0].mxu0 %v1226
    %v1265 = vpop.f32.mrb[0].mxu0
    %v1266 = vadd.f32 0.0, %v1265
    %v1267 = vpop.f32.mrb[0].mxu0
    %v1268 = vpop.f32.mrb[0].mxu0
    %v1269 = vpop.f32.mrb[0].mxu0
    %1270 = vdwg.mxu0
    %v1271 = vsel %vm927, %v1266, 1e-09
    %v1272 = vsel %vm462, %v1271, -inf
    %1273 = vmax.xlane.f32.xlu0 %v1272
    %v1274 = vpop.xlane.xlu0 %1273
    %v1275 = vsub.f32 %v1271, %v1274
    %v1276 = vmul.f32 %v1275, 1.442695
    %v1277 = vpow.pop %v1276
    %v1278 = vsel %vm462, %v1277, 0.0
    %1279 = vadd.xlane.f32.xlu0 %v1278
    %v1280 = vpop.xlane.xlu0 %1279
    %v1281 = vrcp.pop %v1280
    %v1282 = vmul.f32 %v1277, %v1281
    %v1283 = vpack.c.bf16 %v1282, %v1282
    %1284 = vrot.lane.b32.xlu0 %v941, 32
    %v1285 = vpop.permute.xlu0 %1284
    %v1287 = vsel %vm462, %v1283, 0
    %v1290 = vsel %vm478, %v1285, 0
    %1292 = vmatprep.subr.bf16.mxu0 0
    %1293 = vmatpush1.bf16.msra.mxu0 %v1290
    %1294 = vmatprep.subr.bf16.mxu0 0
    %1295 = vmatpush1.bf16.msra.mxu0 0
    %1296 = vmatprep.subr.bf16.mxu0 0
    %1297 = vmatpush1.bf16.msra.mxu0 0
    %1298 = vmatprep.subr.bf16.mxu0 0
    %1299 = vmatpush1.bf16.msra.mxu0 0
    %1300 = vmatprep.subr.bf16.mxu0 0
    %1301 = vmatpush1.bf16.msra.mxu0 0
    %1302 = vmatprep.subr.bf16.mxu0 0
    %1303 = vmatpush1.bf16.msra.mxu0 0
    %1304 = vmatprep.subr.bf16.mxu0 0
    %1305 = vmatpush1.bf16.msra.mxu0 0
    %1306 = vmatprep.subr.bf16.mxu0 0
    %1307 = vmatpush1.bf16.msra.mxu0 0
    %1308 = vmatprep.subr.bf16.mxu0 0
    %1309 = vmatpush1.bf16.msra.mxu0 0
    %1310 = vmatprep.subr.bf16.mxu0 0
    %1311 = vmatpush1.bf16.msra.mxu0 0
    %1312 = vmatprep.subr.bf16.mxu0 0
    %1313 = vmatpush1.bf16.msra.mxu0 0
    %1314 = vmatprep.subr.bf16.mxu0 0
    %1315 = vmatpush1.bf16.msra.mxu0 0
    %1316 = vmatprep.subr.bf16.mxu0 0
    %1317 = vmatpush1.bf16.msra.mxu0 0
    %1318 = vmatprep.subr.bf16.mxu0 0
    %1319 = vmatpush1.bf16.msra.mxu0 0
    %1320 = vmatprep.subr.bf16.mxu0 0
    %1321 = vmatpush1.bf16.msra.mxu0 0
    %1322 = vmatprep.subr.bf16.mxu0 0
    %1323 = vmatpush1.bf16.msra.mxu0 0
    %1324 = vmatprep.mubr.bf16.mxu0 0
    %1325 = vmatmul.mubr.bf16.gmra.mrb[0].mxu0 %v1287
    %v1326 = vpop.f32.mrb[0].mxu0
    %v1327 = vadd.f32 0.0, %v1326
    %v1328 = vpop.f32.mrb[0].mxu0
    %v1329 = vpop.f32.mrb[0].mxu0
    %v1330 = vpop.f32.mrb[0].mxu0
    %1331 = vdwg.mxu0
    %1333 = vrot.lane.b32.xlu0 %v1327, 96
    %v1334 = vpop.permute.xlu0 %1333
    %1336 = vst.msk [vmem:[#allocation2 + $0x8] sm:$0xff] %vm875, %v1334
    %v1337 = vld [vmem:[#allocation2] sm:$0xff]
    %v1338 = vld [vmem:[#allocation2 + $0x8] sm:$0xff]
    %v1339 = vpack.c.bf16 %v1338, %v1337
    %v1340 = vld [vmem:[%s8] sm:$0xf]
    %v1341 = vld [vmem:[%s8 + $0x4] sm:$0xf]
    %v1342 = vld [vmem:[%s8 + $0x8] sm:$0xf]
    %v1343 = vld [vmem:[%s8 + $0xc] sm:$0xf]
    %v1344 = vld [vmem:[%s8 + $0x10] sm:$0xf]
    %v1345 = vld [vmem:[%s8 + $0x14] sm:$0xf]
    %v1346 = vld [vmem:[%s8 + $0x18] sm:$0xf]
    %v1347 = vld [vmem:[%s8 + $0x1c] sm:$0xf]
    %v1348 = vld [vmem:[%s8 + $0x20] sm:$0xf]
    %v1349 = vld [vmem:[%s8 + $0x24] sm:$0xf]
    %v1350 = vld [vmem:[%s8 + $0x28] sm:$0xf]
    %v1351 = vld [vmem:[%s8 + $0x2c] sm:$0xf]
    %v1352 = vld [vmem:[%s8 + $0x30] sm:$0xf]
    %v1353 = vld [vmem:[%s8 + $0x34] sm:$0xf]
    %v1354 = vld [vmem:[%s8 + $0x38] sm:$0xf]
    %v1355 = vld [vmem:[%s8 + $0x3c] sm:$0xf]
    %v1372 = vunpack.c.l.b16 %v1340
    %v1373 = vunpack.c.l.b16 %v1341
    %v1374 = vunpack.c.l.b16 %v1342
    %v1375 = vunpack.c.l.b16 %v1343
    %v1376 = vunpack.c.l.b16 %v1344
    %v1377 = vunpack.c.l.b16 %v1345
    %v1378 = vunpack.c.l.b16 %v1346
    %v1379 = vunpack.c.l.b16 %v1347
    %v1380 = vunpack.c.l.b16 %v1348
    %v1381 = vunpack.c.l.b16 %v1349
    %v1382 = vunpack.c.l.b16 %v1350
    %v1383 = vunpack.c.l.b16 %v1351
    %v1384 = vunpack.c.l.b16 %v1352
    %v1385 = vunpack.c.l.b16 %v1353
    %v1386 = vunpack.c.l.b16 %v1354
    %v1387 = vunpack.c.l.b16 %v1355
    %v1388 = vpack.c.b16 %v1373, %v1372
    %v1389 = vpack.c.b16 %v1375, %v1374
    %v1390 = vpack.c.b16 %v1377, %v1376
    %v1391 = vpack.c.b16 %v1379, %v1378
    %v1392 = vpack.c.b16 %v1381, %v1380
    %v1393 = vpack.c.b16 %v1383, %v1382
    %v1394 = vpack.c.b16 %v1385, %v1384
    %v1395 = vpack.c.b16 %v1387, %v1386
    %1404 = vmatprep.subr.bf16.mxu0 0
    %1405 = vmatpush1.bf16.msra.mxu0 %v1388
    %1406 = vmatprep.subr.bf16.mxu0 0
    %1407 = vmatpush1.bf16.msra.mxu0 %v1389
    %1408 = vmatprep.subr.bf16.mxu0 0
    %1409 = vmatpush1.bf16.msra.mxu0 %v1390
    %1410 = vmatprep.subr.bf16.mxu0 0
    %1411 = vmatpush1.bf16.msra.mxu0 %v1391
    %1412 = vmatprep.subr.bf16.mxu0 0
    %1413 = vmatpush1.bf16.msra.mxu0 %v1392
    %1414 = vmatprep.subr.bf16.mxu0 0
    %1415 = vmatpush1.bf16.msra.mxu0 %v1393
    %1416 = vmatprep.subr.bf16.mxu0 0
    %1417 = vmatpush1.bf16.msra.mxu0 %v1394
    %1418 = vmatprep.subr.bf16.mxu0 0
    %1419 = vmatpush1.bf16.msra.mxu0 %v1395
    %1420 = vmatprep.subr.bf16.mxu0 0
    %1421 = vmatpush1.bf16.msra.mxu0 0
    %1422 = vmatprep.subr.bf16.mxu0 0
    %1423 = vmatpush1.bf16.msra.mxu0 0
    %1424 = vmatprep.subr.bf16.mxu0 0
    %1425 = vmatpush1.bf16.msra.mxu0 0
    %1426 = vmatprep.subr.bf16.mxu0 0
    %1427 = vmatpush1.bf16.msra.mxu0 0
    %1428 = vmatprep.subr.bf16.mxu0 0
    %1429 = vmatpush1.bf16.msra.mxu0 0
    %1430 = vmatprep.subr.bf16.mxu0 0
    %1431 = vmatpush1.bf16.msra.mxu0 0
    %1432 = vmatprep.subr.bf16.mxu0 0
    %1433 = vmatpush1.bf16.msra.mxu0 0
    %1434 = vmatprep.subr.bf16.mxu0 0
    %1435 = vmatpush1.bf16.msra.mxu0 0
    %1436 = vmatprep.mubr.bf16.mxu0 0
    %1437 = vmatmul.mubr.bf16.gmra.mrb[0].mxu0 %v1339
    %v1438 = vpop.f32.mrb[0].mxu0
    %v1439 = vadd.f32 0.0, %v1438
    %v1440 = vpop.f32.mrb[0].mxu0
    %v1441 = vpop.f32.mrb[0].mxu0
    %v1442 = vadd.f32 0.0, %v1441
    %v1443 = vpop.f32.mrb[0].mxu0
    %1444 = vdwg.mxu0
    %v1445 = vadd.f32 %v89, %v1439
    %v1446 = vadd.f32 %v90, %v1442
    %v1447 = vld [vmem:[%s9] sm:$0x1]
    %v1449 = vlaneseq
    %v1450 = vshrl.u32 %v1449, 7
    %v1451 = vsub.s32 0, %v1450
    %v1452 = vrot.slane %v1447, %v1451
    %v1454 = vadd.f32 %v1445, %v1452
    %v1455 = vadd.f32 %v1446, %v1452
    %v1456 = vld [vmem:[%s10] sm:$0x1]
    %v1457 = vld [vmem:[%s11] sm:$0x1]
    %1458 = vadd.xlane.f32.xlu0 %v1454
    %v1459 = vpop.xlane.xlu0 %1458
    %1460 = vadd.xlane.f32.xlu0 %v1455
    %v1461 = vpop.xlane.xlu0 %1460
    %v1462 = vmul.f32 %v1459, %v109
    %v1463 = vmul.f32 %v1461, %v109
    %v1464 = vsub.f32 %v1454, %v1462
    %v1465 = vsub.f32 %v1455, %v1463
    %v1466 = vmul.f32 %v1464, %v1464
    %v1467 = vmul.f32 %v1465, %v1465
    %1468 = vadd.xlane.f32.xlu0 %v1466
    %v1469 = vpop.xlane.xlu0 %1468
    %1470 = vadd.xlane.f32.xlu0 %v1467
    %v1471 = vpop.xlane.xlu0 %1470
    %v1472 = vmul.f32 %v1469, %v109
    %v1473 = vmul.f32 %v1471, %v109
    %v1474 = vadd.f32 %v1472, 1e-05
    %v1475 = vadd.f32 %v1473, 1e-05
    %v1476 = vrsqrt.pop %v1474
    %v1477 = vrsqrt.pop %v1475
    %v1478 = vmul.f32 %v1464, %v1476
    %v1479 = vmul.f32 %v1465, %v1477
    %v1481 = vlaneseq
    %v1482 = vshrl.u32 %v1481, 7
    %v1483 = vsub.s32 0, %v1482
    %v1484 = vrot.slane %v1456, %v1483
    %v1486 = vmul.f32 %v1478, %v1484
    %v1487 = vmul.f32 %v1479, %v1484
    %v1489 = vlaneseq
    %v1490 = vshrl.u32 %v1489, 7
    %v1491 = vsub.s32 0, %v1490
    %v1492 = vrot.slane %v1457, %v1491
    %v1494 = vadd.f32 %v1486, %v1492
    %v1495 = vadd.f32 %v1487, %v1492
    %v1496 = vpack.c.bf16 %v1495, %v1494
    %v1497 = vld [vmem:[%s12] sm:$0xf]
    %v1498 = vld [vmem:[%s12 + $0x4] sm:$0xf]
    %v1499 = vld [vmem:[%s12 + $0x8] sm:$0xf]
    %v1500 = vld [vmem:[%s12 + $0xc] sm:$0xf]
    %v1501 = vld [vmem:[%s12 + $0x10] sm:$0xf]
    %v1502 = vld [vmem:[%s12 + $0x14] sm:$0xf]
    %v1503 = vld [vmem:[%s12 + $0x18] sm:$0xf]
    %v1504 = vld [vmem:[%s12 + $0x1c] sm:$0xf]
    %v1505 = vld [vmem:[%s12 + $0x20] sm:$0xf]
    %v1506 = vld [vmem:[%s12 + $0x24] sm:$0xf]
    %v1507 = vld [vmem:[%s12 + $0x28] sm:$0xf]
    %v1508 = vld [vmem:[%s12 + $0x2c] sm:$0xf]
    %v1509 = vld [vmem:[%s12 + $0x30] sm:$0xf]
    %v1510 = vld [vmem:[%s12 + $0x34] sm:$0xf]
    %v1511 = vld [vmem:[%s12 + $0x38] sm:$0xf]
    %v1512 = vld [vmem:[%s12 + $0x3c] sm:$0xf]
    %v1513 = vld [vmem:[%s13] sm:$0x1]
    %v1515 = vlaneseq
    %v1516 = vshrl.u32 %v1515, 7
    %v1517 = vsub.s32 0, %v1516
    %v1518 = vrot.slane %v1513, %v1517
    %v1536 = vunpack.c.l.b16 %v1497
    %v1537 = vunpack.c.l.b16 %v1498
    %v1538 = vunpack.c.l.b16 %v1499
    %v1539 = vunpack.c.l.b16 %v1500
    %v1540 = vunpack.c.l.b16 %v1501
    %v1541 = vunpack.c.l.b16 %v1502
    %v1542 = vunpack.c.l.b16 %v1503
    %v1543 = vunpack.c.l.b16 %v1504
    %v1544 = vunpack.c.l.b16 %v1505
    %v1545 = vunpack.c.l.b16 %v1506
    %v1546 = vunpack.c.l.b16 %v1507
    %v1547 = vunpack.c.l.b16 %v1508
    %v1548 = vunpack.c.l.b16 %v1509
    %v1549 = vunpack.c.l.b16 %v1510
    %v1550 = vunpack.c.l.b16 %v1511
    %v1551 = vunpack.c.l.b16 %v1512
    %v1552 = vpack.c.b16 %v1537, %v1536
    %v1553 = vpack.c.b16 %v1539, %v1538
    %v1554 = vpack.c.b16 %v1541, %v1540
    %v1555 = vpack.c.b16 %v1543, %v1542
    %v1556 = vpack.c.b16 %v1545, %v1544
    %v1557 = vpack.c.b16 %v1547, %v1546
    %v1558 = vpack.c.b16 %v1549, %v1548
    %v1559 = vpack.c.b16 %v1551, %v1550
    %1568 = vmatprep.subr.bf16.mxu0 0
    %1569 = vmatpush1.bf16.msra.mxu0 %v1552
    %1570 = vmatprep.subr.bf16.mxu0 0
    %1571 = vmatpush1.bf16.msra.mxu0 %v1553
    %1572 = vmatprep.subr.bf16.mxu0 0
    %1573 = vmatpush1.bf16.msra.mxu0 %v1554
    %1574 = vmatprep.subr.bf16.mxu0 0
    %1575 = vmatpush1.bf16.msra.mxu0 %v1555
    %1576 = vmatprep.subr.bf16.mxu0 0
    %1577 = vmatpush1.bf16.msra.mxu0 %v1556
    %1578 = vmatprep.subr.bf16.mxu0 0
    %1579 = vmatpush1.bf16.msra.mxu0 %v1557
    %1580 = vmatprep.subr.bf16.mxu0 0
    %1581 = vmatpush1.bf16.msra.mxu0 %v1558
    %1582 = vmatprep.subr.bf16.mxu0 0
    %1583 = vmatpush1.bf16.msra.mxu0 %v1559
    %1584 = vmatprep.subr.bf16.mxu0 0
    %1585 = vmatpush1.bf16.msra.mxu0 0
    %1586 = vmatprep.subr.bf16.mxu0 0
    %1587 = vmatpush1.bf16.msra.mxu0 0
    %1588 = vmatprep.subr.bf16.mxu0 0
    %1589 = vmatpush1.bf16.msra.mxu0 0
    %1590 = vmatprep.subr.bf16.mxu0 0
    %1591 = vmatpush1.bf16.msra.mxu0 0
    %1592 = vmatprep.subr.bf16.mxu0 0
    %1593 = vmatpush1.bf16.msra.mxu0 0
    %1594 = vmatprep.subr.bf16.mxu0 0
    %1595 = vmatpush1.bf16.msra.mxu0 0
    %1596 = vmatprep.subr.bf16.mxu0 0
    %1597 = vmatpush1.bf16.msra.mxu0 0
    %1598 = vmatprep.subr.bf16.mxu0 0
    %1599 = vmatpush1.bf16.msra.mxu0 0
    %1600 = vmatprep.mubr.bf16.mxu0 0
    %1601 = vmatmul.mubr.bf16.gmra.mrb[0].mxu0 %v1496
    %v1602 = vpop.f32.mrb[0].mxu0
    %v1603 = vadd.f32 %v1518, %v1602
    %v1604 = vpop.f32.mrb[0].mxu0
    %v1605 = vpop.f32.mrb[0].mxu0
    %v1606 = vadd.f32 %v1518, %v1605
    %v1607 = vpop.f32.mrb[0].mxu0
    %1608 = vdwg.mxu0
    %v1609 = vmul.f32 %v1603, 0.17677669
    %v1610 = vmul.f32 %v1606, 0.17677669
    %v1611 = vld [vmem:[%s14] sm:$0xff]
    %v1612 = vld [vmem:[%s14 + $0x8] sm:$0xff]
    %v1613 = vld [vmem:[%s14 + $0x10] sm:$0xff]
    %v1614 = vld [vmem:[%s14 + $0x18] sm:$0xff]
    %v1615 = vld [vmem:[%s14 + $0x20] sm:$0xff]
    %v1616 = vld [vmem:[%s14 + $0x28] sm:$0xff]
    %v1617 = vld [vmem:[%s14 + $0x30] sm:$0xff]
    %v1618 = vld [vmem:[%s14 + $0x38] sm:$0xff]
    %v1619 = vld [vmem:[%s14 + $0x40] sm:$0xff]
    %v1620 = vld [vmem:[%s14 + $0x48] sm:$0xff]
    %v1621 = vld [vmem:[%s14 + $0x50] sm:$0xff]
    %v1622 = vld [vmem:[%s14 + $0x58] sm:$0xff]
    %v1623 = vld [vmem:[%s14 + $0x60] sm:$0xff]
    %v1624 = vld [vmem:[%s14 + $0x68] sm:$0xff]
    %v1625 = vld [vmem:[%s14 + $0x70] sm:$0xff]
    %v1626 = vld [vmem:[%s14 + $0x78] sm:$0xff]
    %v1627 = vld [vmem:[%s15] sm:$0x3]
    %v1629 = vlaneseq
    %v1630 = vshrl.u32 %v1629, 7
    %v1631 = vsub.s32 0, %v1630
    %v1632 = vrot.slane %v1627, %v1631
    %v1633 = vlaneseq
    %v1634 = vshrl.u32 %v1633, 7
    %v1635 = vsub.s32 1, %v1634
    %v1636 = vrot.slane %v1627, %v1635
    %v1643 = vunpack.c.l.b16 %v91
    %v1644 = vunpack.c.l.b16 %v92
    %v1645 = vunpack.c.l.b16 %v93
    %v1646 = vunpack.c.l.b16 %v94
    %v1647 = vpack.c.b16 %v1644, %v1643
    %v1648 = vpack.c.b16 %v1646, %v1645
    %v1667 = vunpack.c.l.b16 %v1611
    %v1668 = vunpack.c.h.b16 %v1611
    %v1669 = vunpack.c.l.b16 %v1612
    %v1670 = vunpack.c.h.b16 %v1612
    %v1671 = vunpack.c.l.b16 %v1613
    %v1672 = vunpack.c.h.b16 %v1613
    %v1673 = vunpack.c.l.b16 %v1614
    %v1674 = vunpack.c.h.b16 %v1614
    %v1675 = vunpack.c.l.b16 %v1615
    %v1676 = vunpack.c.h.b16 %v1615
    %v1677 = vunpack.c.l.b16 %v1616
    %v1678 = vunpack.c.h.b16 %v1616
    %v1679 = vunpack.c.l.b16 %v1617
    %v1680 = vunpack.c.h.b16 %v1617
    %v1681 = vunpack.c.l.b16 %v1618
    %v1682 = vunpack.c.h.b16 %v1618
    %v1683 = vunpack.c.l.b16 %v1619
    %v1684 = vunpack.c.h.b16 %v1619
    %v1685 = vunpack.c.l.b16 %v1620
    %v1686 = vunpack.c.h.b16 %v1620
    %v1687 = vunpack.c.l.b16 %v1621
    %v1688 = vunpack.c.h.b16 %v1621
    %v1689 = vunpack.c.l.b16 %v1622
    %v1690 = vunpack.c.h.b16 %v1622
    %v1691 = vunpack.c.l.b16 %v1623
    %v1692 = vunpack.c.h.b16 %v1623
    %v1693 = vunpack.c.l.b16 %v1624
    %v1694 = vunpack.c.h.b16 %v1624
    %v1695 = vunpack.c.l.b16 %v1625
    %v1696 = vunpack.c.h.b16 %v1625
    %v1697 = vunpack.c.l.b16 %v1626
    %v1698 = vunpack.c.h.b16 %v1626
    %v1699 = vpack.c.b16 %v1669, %v1667
    %v1700 = vpack.c.b16 %v1670, %v1668
    %v1701 = vpack.c.b16 %v1673, %v1671
    %v1702 = vpack.c.b16 %v1674, %v1672
    %v1703 = vpack.c.b16 %v1677, %v1675
    %v1704 = vpack.c.b16 %v1678, %v1676
    %v1705 = vpack.c.b16 %v1681, %v1679
    %v1706 = vpack.c.b16 %v1682, %v1680
    %v1707 = vpack.c.b16 %v1685, %v1683
    %v1708 = vpack.c.b16 %v1686, %v1684
    %v1709 = vpack.c.b16 %v1689, %v1687
    %v1710 = vpack.c.b16 %v1690, %v1688
    %v1711 = vpack.c.b16 %v1693, %v1691
    %v1712 = vpack.c.b16 %v1694, %v1692
    %v1713 = vpack.c.b16 %v1697, %v1695
    %v1714 = vpack.c.b16 %v1698, %v1696
    %1731 = vmatprep.subr.bf16.mxu0 %v1700
    %1732 = vmatpush1.bf16.msra.mxu0 %v1699
    %1733 = vmatprep.subr.bf16.mxu0 %v1702
    %1734 = vmatpush1.bf16.msra.mxu0 %v1701
    %1735 = vmatprep.subr.bf16.mxu0 %v1704
    %1736 = vmatpush1.bf16.msra.mxu0 %v1703
    %1737 = vmatprep.subr.bf16.mxu0 %v1706
    %1738 = vmatpush1.bf16.msra.mxu0 %v1705
    %1739 = vmatprep.subr.bf16.mxu0 %v1708
    %1740 = vmatpush1.bf16.msra.mxu0 %v1707
    %1741 = vmatprep.subr.bf16.mxu0 %v1710
    %1742 = vmatpush1.bf16.msra.mxu0 %v1709
    %1743 = vmatprep.subr.bf16.mxu0 %v1712
    %1744 = vmatpush1.bf16.msra.mxu0 %v1711
    %1745 = vmatprep.subr.bf16.mxu0 %v1714
    %1746 = vmatpush1.bf16.msra.mxu0 %v1713
    %1747 = vmatprep.subr.bf16.mxu0 0
    %1748 = vmatpush1.bf16.msra.mxu0 0
    %1749 = vmatprep.subr.bf16.mxu0 0
    %1750 = vmatpush1.bf16.msra.mxu0 0
    %1751 = vmatprep.subr.bf16.mxu0 0
    %1752 = vmatpush1.bf16.msra.mxu0 0
    %1753 = vmatprep.subr.bf16.mxu0 0
    %1754 = vmatpush1.bf16.msra.mxu0 0
    %1755 = vmatprep.subr.bf16.mxu0 0
    %1756 = vmatpush1.bf16.msra.mxu0 0
    %1757 = vmatprep.subr.bf16.mxu0 0
    %1758 = vmatpush1.bf16.msra.mxu0 0
    %1759 = vmatprep.subr.bf16.mxu0 0
    %1760 = vmatpush1.bf16.msra.mxu0 0
    %1761 = vmatprep.subr.bf16.mxu0 0
    %1762 = vmatpush1.bf16.msra.mxu0 0
    %1763 = vmatprep.mubr.bf16.mxu0 0
    %1764 = vmatmul.mubr.bf16.gmra.mrb[0].mxu0 %v1647
    %v1765 = vpop.f32.mrb[0].mxu0
    %v1766 = vadd.f32 %v1632, %v1765
    %v1767 = vpop.f32.mrb[0].mxu0
    %v1768 = vadd.f32 %v1636, %v1767
    %v1769 = vpop.f32.mrb[0].mxu0
    %v1770 = vadd.f32 %v1632, %v1769
    %v1771 = vpop.f32.mrb[0].mxu0
    %v1772 = vadd.f32 %v1636, %v1771
    %1773 = vmatprep.mubr.bf16.mxu0 0
    %1774 = vmatmul.mubr.bf16.gmra.mrb[0].mxu0 %v1648
    %v1775 = vpop.f32.mrb[0].mxu0
    %v1776 = vadd.f32 %v1632, %v1775
    %v1777 = vpop.f32.mrb[0].mxu0
    %v1778 = vadd.f32 %v1636, %v1777
    %v1779 = vpop.f32.mrb[0].mxu0
    %v1780 = vadd.f32 %v1632, %v1779
    %v1781 = vpop.f32.mrb[0].mxu0
    %v1782 = vadd.f32 %v1636, %v1781
    %1783 = vdwg.mxu0
    %v1784 = vpack.c.bf16 %v1610, %v1609
    %v1785 = vpack.c.bf16 %v1770, %v1766
    %v1786 = vpack.c.bf16 %v1780, %v1776
    %v1787 = vpack.c.bf16 %v1772, %v1768
    %v1788 = vpack.c.bf16 %v1782, %v1778
    %v1790 = vsel %vm411, %v1784, 0
    %v1793 = vsel %vm411, %v1785, 0
    %1795 = vmatprep.subr.bf16.mxu0 0
    %1796 = vmatpush1.bf16.xpose.msra.mxu0 %v1793
    %1797 = vmatprep.subr.bf16.mxu0 0
    %1798 = vmatpush1.bf16.xpose.msra.mxu0 0
    %1799 = vmatprep.subr.bf16.mxu0 0
    %1800 = vmatpush1.bf16.xpose.msra.mxu0 0
    %1801 = vmatprep.subr.bf16.mxu0 0
    %1802 = vmatpush1.bf16.xpose.msra.mxu0 0
    %1803 = vmatprep.subr.bf16.mxu0 0
    %1804 = vmatpush1.bf16.xpose.msra.mxu0 0
    %1805 = vmatprep.subr.bf16.mxu0 0
    %1806 = vmatpush1.bf16.xpose.msra.mxu0 0
    %1807 = vmatprep.subr.bf16.mxu0 0
    %1808 = vmatpush1.bf16.xpose.msra.mxu0 0
    %1809 = vmatprep.subr.bf16.mxu0 0
    %1810 = vmatpush1.bf16.xpose.msra.mxu0 0
    %1811 = vmatprep.subr.bf16.mxu0 0
    %1812 = vmatpush1.bf16.xpose.msra.mxu0 0
    %1813 = vmatprep.subr.bf16.mxu0 0
    %1814 = vmatpush1.bf16.xpose.msra.mxu0 0
    %1815 = vmatprep.subr.bf16.mxu0 0
    %1816 = vmatpush1.bf16.xpose.msra.mxu0 0
    %1817 = vmatprep.subr.bf16.mxu0 0
    %1818 = vmatpush1.bf16.xpose.msra.mxu0 0
    %1819 = vmatprep.subr.bf16.mxu0 0
    %1820 = vmatpush1.bf16.xpose.msra.mxu0 0
    %1821 = vmatprep.subr.bf16.mxu0 0
    %1822 = vmatpush1.bf16.xpose.msra.mxu0 0
    %1823 = vmatprep.subr.bf16.mxu0 0
    %1824 = vmatpush1.bf16.xpose.msra.mxu0 0
    %1825 = vmatprep.subr.bf16.mxu0 0
    %1826 = vmatpush1.bf16.xpose.msra.mxu0 0
    %1827 = vmatprep.mubr.bf16.mxu0 0
    %1828 = vmatmul.mubr.bf16.gmra.mrb[0].mxu0 %v1790
    %v1829 = vpop.f32.mrb[0].mxu0
    %v1830 = vadd.f32 0.0, %v1829
    %v1831 = vpop.f32.mrb[0].mxu0
    %v1832 = vpop.f32.mrb[0].mxu0
    %v1833 = vpop.f32.mrb[0].mxu0
    %1834 = vdwg.mxu0
    %v1835 = vsel %vm101, 16843009, 0
    %v1836 = vunpack.c.0.s8 %v1835
    %vm1837 = vcmp.ne.s32.totalorder %v1836, 0
    %v1838 = vsel %vm1837, %v1830, 1e-09
    %vm1839 = vcmask 130048
    %v1840 = vsel %vm1839, %v1838, -inf
    %1841 = vmax.xlane.f32.xlu0 %v1840
    %v1842 = vpop.xlane.xlu0 %1841
    %v1843 = vsub.f32 %v1838, %v1842
    %v1844 = vmul.f32 %v1843, 1.442695
    %v1845 = vpow.pop %v1844
    %v1846 = vsel %vm1839, %v1845, 0.0
    %1847 = vadd.xlane.f32.xlu0 %v1846
    %v1848 = vpop.xlane.xlu0 %1847
    %v1849 = vrcp.pop %v1848
    %v1850 = vmul.f32 %v1845, %v1849
    %v1851 = vpack.c.bf16 %v1850, %v1850
    %v1853 = vsel %vm1839, %v1851, 0
    %1855 = vmatprep.subr.bf16.mxu0 0
    %1856 = vmatpush1.bf16.msra.mxu0 %v1787
    %1857 = vmatprep.subr.bf16.mxu0 0
    %1858 = vmatpush1.bf16.msra.mxu0 0
    %1859 = vmatprep.subr.bf16.mxu0 0
    %1860 = vmatpush1.bf16.msra.mxu0 0
    %1861 = vmatprep.subr.bf16.mxu0 0
    %1862 = vmatpush1.bf16.msra.mxu0 0
    %1863 = vmatprep.subr.bf16.mxu0 0
    %1864 = vmatpush1.bf16.msra.mxu0 0
    %1865 = vmatprep.subr.bf16.mxu0 0
    %1866 = vmatpush1.bf16.msra.mxu0 0
    %1867 = vmatprep.subr.bf16.mxu0 0
    %1868 = vmatpush1.bf16.msra.mxu0 0
    %1869 = vmatprep.subr.bf16.mxu0 0
    %1870 = vmatpush1.bf16.msra.mxu0 0
    %1871 = vmatprep.subr.bf16.mxu0 0
    %1872 = vmatpush1.bf16.msra.mxu0 0
    %1873 = vmatprep.subr.bf16.mxu0 0
    %1874 = vmatpush1.bf16.msra.mxu0 0
    %1875 = vmatprep.subr.bf16.mxu0 0
    %1876 = vmatpush1.bf16.msra.mxu0 0
    %1877 = vmatprep.subr.bf16.mxu0 0
    %1878 = vmatpush1.bf16.msra.mxu0 0
    %1879 = vmatprep.subr.bf16.mxu0 0
    %1880 = vmatpush1.bf16.msra.mxu0 0
    %1881 = vmatprep.subr.bf16.mxu0 0
    %1882 = vmatpush1.bf16.msra.mxu0 0
    %1883 = vmatprep.subr.bf16.mxu0 0
    %1884 = vmatpush1.bf16.msra.mxu0 0
    %1885 = vmatprep.subr.bf16.mxu0 0
    %1886 = vmatpush1.bf16.msra.mxu0 0
    %1887 = vmatprep.mubr.bf16.mxu0 0
    %1888 = vmatmul.mubr.bf16.gmra.mrb[0].mxu0 %v1853
    %v1889 = vpop.f32.mrb[0].mxu0
    %v1890 = vadd.f32 0.0, %v1889
    %v1891 = vpop.f32.mrb[0].mxu0
    %v1892 = vpop.f32.mrb[0].mxu0
    %v1893 = vpop.f32.mrb[0].mxu0
    %1894 = vdwg.mxu0
    %1895 = vst.msk [vmem:[#allocation2] sm:$0xff] %vm411, %v1890
    %1897 = vrot.lane.b32.xlu0 %v1784, 96
    %v1898 = vpop.permute.xlu0 %1897
    %1900 = vrot.lane.b32.xlu0 %v1785, 96
    %v1901 = vpop.permute.xlu0 %1900
    %v1903 = vsel %vm411, %v1898, 0
    %v1906 = vsel %vm411, %v1901, 0
    %1908 = vmatprep.subr.bf16.mxu0 0
    %1909 = vmatpush1.bf16.xpose.msra.mxu0 %v1906
    %1910 = vmatprep.subr.bf16.mxu0 0
    %1911 = vmatpush1.bf16.xpose.msra.mxu0 0
    %1912 = vmatprep.subr.bf16.mxu0 0
    %1913 = vmatpush1.bf16.xpose.msra.mxu0 0
    %1914 = vmatprep.subr.bf16.mxu0 0
    %1915 = vmatpush1.bf16.xpose.msra.mxu0 0
    %1916 = vmatprep.subr.bf16.mxu0 0
    %1917 = vmatpush1.bf16.xpose.msra.mxu0 0
    %1918 = vmatprep.subr.bf16.mxu0 0
    %1919 = vmatpush1.bf16.xpose.msra.mxu0 0
    %1920 = vmatprep.subr.bf16.mxu0 0
    %1921 = vmatpush1.bf16.xpose.msra.mxu0 0
    %1922 = vmatprep.subr.bf16.mxu0 0
    %1923 = vmatpush1.bf16.xpose.msra.mxu0 0
    %1924 = vmatprep.subr.bf16.mxu0 0
    %1925 = vmatpush1.bf16.xpose.msra.mxu0 0
    %1926 = vmatprep.subr.bf16.mxu0 0
    %1927 = vmatpush1.bf16.xpose.msra.mxu0 0
    %1928 = vmatprep.subr.bf16.mxu0 0
    %1929 = vmatpush1.bf16.xpose.msra.mxu0 0
    %1930 = vmatprep.subr.bf16.mxu0 0
    %1931 = vmatpush1.bf16.xpose.msra.mxu0 0
    %1932 = vmatprep.subr.bf16.mxu0 0
    %1933 = vmatpush1.bf16.xpose.msra.mxu0 0
    %1934 = vmatprep.subr.bf16.mxu0 0
    %1935 = vmatpush1.bf16.xpose.msra.mxu0 0
    %1936 = vmatprep.subr.bf16.mxu0 0
    %1937 = vmatpush1.bf16.xpose.msra.mxu0 0
    %1938 = vmatprep.subr.bf16.mxu0 0
    %1939 = vmatpush1.bf16.xpose.msra.mxu0 0
    %1940 = vmatprep.mubr.bf16.mxu0 0
    %1941 = vmatmul.mubr.bf16.gmra.mrb[0].mxu0 %v1903
    %v1942 = vpop.f32.mrb[0].mxu0
    %v1943 = vadd.f32 0.0, %v1942
    %v1944 = vpop.f32.mrb[0].mxu0
    %v1945 = vpop.f32.mrb[0].mxu0
    %v1946 = vpop.f32.mrb[0].mxu0
    %1947 = vdwg.mxu0
    %v1948 = vsel %vm1837, %v1943, 1e-09
    %v1949 = vsel %vm1839, %v1948, -inf
    %1950 = vmax.xlane.f32.xlu0 %v1949
    %v1951 = vpop.xlane.xlu0 %1950
    %v1952 = vsub.f32 %v1948, %v1951
    %v1953 = vmul.f32 %v1952, 1.442695
    %v1954 = vpow.pop %v1953
    %v1955 = vsel %vm1839, %v1954, 0.0
    %1956 = vadd.xlane.f32.xlu0 %v1955
    %v1957 = vpop.xlane.xlu0 %1956
    %v1958 = vrcp.pop %v1957
    %v1959 = vmul.f32 %v1954, %v1958
    %v1960 = vpack.c.bf16 %v1959, %v1959
    %1962 = vrot.lane.b32.xlu0 %v1787, 96
    %v1963 = vpop.permute.xlu0 %1962
    %v1966 = vsel %vm1839, %v1960, 0
    %1968 = vmatprep.subr.bf16.mxu0 0
    %1969 = vmatpush1.bf16.msra.mxu0 %v1963
    %1970 = vmatprep.subr.bf16.mxu0 0
    %1971 = vmatpush1.bf16.msra.mxu0 0
    %1972 = vmatprep.subr.bf16.mxu0 0
    %1973 = vmatpush1.bf16.msra.mxu0 0
    %1974 = vmatprep.subr.bf16.mxu0 0
    %1975 = vmatpush1.bf16.msra.mxu0 0
    %1976 = vmatprep.subr.bf16.mxu0 0
    %1977 = vmatpush1.bf16.msra.mxu0 0
    %1978 = vmatprep.subr.bf16.mxu0 0
    %1979 = vmatpush1.bf16.msra.mxu0 0
    %1980 = vmatprep.subr.bf16.mxu0 0
    %1981 = vmatpush1.bf16.msra.mxu0 0
    %1982 = vmatprep.subr.bf16.mxu0 0
    %1983 = vmatpush1.bf16.msra.mxu0 0
    %1984 = vmatprep.subr.bf16.mxu0 0
    %1985 = vmatpush1.bf16.msra.mxu0 0
    %1986 = vmatprep.subr.bf16.mxu0 0
    %1987 = vmatpush1.bf16.msra.mxu0 0
    %1988 = vmatprep.subr.bf16.mxu0 0
    %1989 = vmatpush1.bf16.msra.mxu0 0
    %1990 = vmatprep.subr.bf16.mxu0 0
    %1991 = vmatpush1.bf16.msra.mxu0 0
    %1992 = vmatprep.subr.bf16.mxu0 0
    %1993 = vmatpush1.bf16.msra.mxu0 0
    %1994 = vmatprep.subr.bf16.mxu0 0
    %1995 = vmatpush1.bf16.msra.mxu0 0
    %1996 = vmatprep.subr.bf16.mxu0 0
    %1997 = vmatpush1.bf16.msra.mxu0 0
    %1998 = vmatprep.subr.bf16.mxu0 0
    %1999 = vmatpush1.bf16.msra.mxu0 0
    %2000 = vmatprep.mubr.bf16.mxu0 0
    %2001 = vmatmul.mubr.bf16.gmra.mrb[0].mxu0 %v1966
    %v2002 = vpop.f32.mrb[0].mxu0
    %v2003 = vadd.f32 0.0, %v2002
    %v2004 = vpop.f32.mrb[0].mxu0
    %v2005 = vpop.f32.mrb[0].mxu0
    %v2006 = vpop.f32.mrb[0].mxu0
    %2007 = vdwg.mxu0
    %2009 = vrot.lane.b32.xlu0 %v2003, 32
    %v2010 = vpop.permute.xlu0 %2009
    %2012 = vst.msk [vmem:[#allocation2] sm:$0xff] %vm641, %v2010
    %2013 = vrot.lane.b32.xlu0 %v1784, 64
    %v2014 = vpop.permute.xlu0 %2013
    %2015 = vrot.lane.b32.xlu0 %v1785, 64
    %v2016 = vpop.permute.xlu0 %2015
    %v2018 = vsel %vm411, %v2014, 0
    %v2021 = vsel %vm411, %v2016, 0
    %2023 = vmatprep.subr.bf16.mxu0 0
    %2024 = vmatpush1.bf16.xpose.msra.mxu0 %v2021
    %2025 = vmatprep.subr.bf16.mxu0 0
    %2026 = vmatpush1.bf16.xpose.msra.mxu0 0
    %2027 = vmatprep.subr.bf16.mxu0 0
    %2028 = vmatpush1.bf16.xpose.msra.mxu0 0
    %2029 = vmatprep.subr.bf16.mxu0 0
    %2030 = vmatpush1.bf16.xpose.msra.mxu0 0
    %2031 = vmatprep.subr.bf16.mxu0 0
    %2032 = vmatpush1.bf16.xpose.msra.mxu0 0
    %2033 = vmatprep.subr.bf16.mxu0 0
    %2034 = vmatpush1.bf16.xpose.msra.mxu0 0
    %2035 = vmatprep.subr.bf16.mxu0 0
    %2036 = vmatpush1.bf16.xpose.msra.mxu0 0
    %2037 = vmatprep.subr.bf16.mxu0 0
    %2038 = vmatpush1.bf16.xpose.msra.mxu0 0
    %2039 = vmatprep.subr.bf16.mxu0 0
    %2040 = vmatpush1.bf16.xpose.msra.mxu0 0
    %2041 = vmatprep.subr.bf16.mxu0 0
    %2042 = vmatpush1.bf16.xpose.msra.mxu0 0
    %2043 = vmatprep.subr.bf16.mxu0 0
    %2044 = vmatpush1.bf16.xpose.msra.mxu0 0
    %2045 = vmatprep.subr.bf16.mxu0 0
    %2046 = vmatpush1.bf16.xpose.msra.mxu0 0
    %2047 = vmatprep.subr.bf16.mxu0 0
    %2048 = vmatpush1.bf16.xpose.msra.mxu0 0
    %2049 = vmatprep.subr.bf16.mxu0 0
    %2050 = vmatpush1.bf16.xpose.msra.mxu0 0
    %2051 = vmatprep.subr.bf16.mxu0 0
    %2052 = vmatpush1.bf16.xpose.msra.mxu0 0
    %2053 = vmatprep.subr.bf16.mxu0 0
    %2054 = vmatpush1.bf16.xpose.msra.mxu0 0
    %2055 = vmatprep.mubr.bf16.mxu0 0
    %2056 = vmatmul.mubr.bf16.gmra.mrb[0].mxu0 %v2018
    %v2057 = vpop.f32.mrb[0].mxu0
    %v2058 = vadd.f32 0.0, %v2057
    %v2059 = vpop.f32.mrb[0].mxu0
    %v2060 = vpop.f32.mrb[0].mxu0
    %v2061 = vpop.f32.mrb[0].mxu0
    %2062 = vdwg.mxu0
    %v2063 = vsel %vm1837, %v2058, 1e-09
    %v2064 = vsel %vm1839, %v2063, -inf
    %2065 = vmax.xlane.f32.xlu0 %v2064
    %v2066 = vpop.xlane.xlu0 %2065
    %v2067 = vsub.f32 %v2063, %v2066
    %v2068 = vmul.f32 %v2067, 1.442695
    %v2069 = vpow.pop %v2068
    %v2070 = vsel %vm1839, %v2069, 0.0
    %2071 = vadd.xlane.f32.xlu0 %v2070
    %v2072 = vpop.xlane.xlu0 %2071
    %v2073 = vrcp.pop %v2072
    %v2074 = vmul.f32 %v2069, %v2073
    %v2075 = vpack.c.bf16 %v2074, %v2074
    %2076 = vrot.lane.b32.xlu0 %v1787, 64
    %v2077 = vpop.permute.xlu0 %2076
    %v2080 = vsel %vm1839, %v2075, 0
    %2082 = vmatprep.subr.bf16.mxu0 0
    %2083 = vmatpush1.bf16.msra.mxu0 %v2077
    %2084 = vmatprep.subr.bf16.mxu0 0
    %2085 = vmatpush1.bf16.msra.mxu0 0
    %2086 = vmatprep.subr.bf16.mxu0 0
    %2087 = vmatpush1.bf16.msra.mxu0 0
    %2088 = vmatprep.subr.bf16.mxu0 0
    %2089 = vmatpush1.bf16.msra.mxu0 0
    %2090 = vmatprep.subr.bf16.mxu0 0
    %2091 = vmatpush1.bf16.msra.mxu0 0
    %2092 = vmatprep.subr.bf16.mxu0 0
    %2093 = vmatpush1.bf16.msra.mxu0 0
    %2094 = vmatprep.subr.bf16.mxu0 0
    %2095 = vmatpush1.bf16.msra.mxu0 0
    %2096 = vmatprep.subr.bf16.mxu0 0
    %2097 = vmatpush1.bf16.msra.mxu0 0
    %2098 = vmatprep.subr.bf16.mxu0 0
    %2099 = vmatpush1.bf16.msra.mxu0 0
    %2100 = vmatprep.subr.bf16.mxu0 0
    %2101 = vmatpush1.bf16.msra.mxu0 0
    %2102 = vmatprep.subr.bf16.mxu0 0
    %2103 = vmatpush1.bf16.msra.mxu0 0
    %2104 = vmatprep.subr.bf16.mxu0 0
    %2105 = vmatpush1.bf16.msra.mxu0 0
    %2106 = vmatprep.subr.bf16.mxu0 0
    %2107 = vmatpush1.bf16.msra.mxu0 0
    %2108 = vmatprep.subr.bf16.mxu0 0
    %2109 = vmatpush1.bf16.msra.mxu0 0
    %2110 = vmatprep.subr.bf16.mxu0 0
    %2111 = vmatpush1.bf16.msra.mxu0 0
    %2112 = vmatprep.subr.bf16.mxu0 0
    %2113 = vmatpush1.bf16.msra.mxu0 0
    %2114 = vmatprep.mubr.bf16.mxu0 0
    %2115 = vmatmul.mubr.bf16.gmra.mrb[0].mxu0 %v2080
    %v2116 = vpop.f32.mrb[0].mxu0
    %v2117 = vadd.f32 0.0, %v2116
    %v2118 = vpop.f32.mrb[0].mxu0
    %v2119 = vpop.f32.mrb[0].mxu0
    %v2120 = vpop.f32.mrb[0].mxu0
    %2121 = vdwg.mxu0
    %2123 = vrot.lane.b32.xlu0 %v2117, 64
    %v2124 = vpop.permute.xlu0 %2123
    %2126 = vst.msk [vmem:[#allocation2] sm:$0xff] %vm758, %v2124
    %2127 = vrot.lane.b32.xlu0 %v1784, 32
    %v2128 = vpop.permute.xlu0 %2127
    %2129 = vrot.lane.b32.xlu0 %v1785, 32
    %v2130 = vpop.permute.xlu0 %2129
    %v2132 = vsel %vm411, %v2128, 0
    %v2135 = vsel %vm411, %v2130, 0
    %2137 = vmatprep.subr.bf16.mxu0 0
    %2138 = vmatpush1.bf16.xpose.msra.mxu0 %v2135
    %2139 = vmatprep.subr.bf16.mxu0 0
    %2140 = vmatpush1.bf16.xpose.msra.mxu0 0
    %2141 = vmatprep.subr.bf16.mxu0 0
    %2142 = vmatpush1.bf16.xpose.msra.mxu0 0
    %2143 = vmatprep.subr.bf16.mxu0 0
    %2144 = vmatpush1.bf16.xpose.msra.mxu0 0
    %2145 = vmatprep.subr.bf16.mxu0 0
    %2146 = vmatpush1.bf16.xpose.msra.mxu0 0
    %2147 = vmatprep.subr.bf16.mxu0 0
    %2148 = vmatpush1.bf16.xpose.msra.mxu0 0
    %2149 = vmatprep.subr.bf16.mxu0 0
    %2150 = vmatpush1.bf16.xpose.msra.mxu0 0
    %2151 = vmatprep.subr.bf16.mxu0 0
    %2152 = vmatpush1.bf16.xpose.msra.mxu0 0
    %2153 = vmatprep.subr.bf16.mxu0 0
    %2154 = vmatpush1.bf16.xpose.msra.mxu0 0
    %2155 = vmatprep.subr.bf16.mxu0 0
    %2156 = vmatpush1.bf16.xpose.msra.mxu0 0
    %2157 = vmatprep.subr.bf16.mxu0 0
    %2158 = vmatpush1.bf16.xpose.msra.mxu0 0
    %2159 = vmatprep.subr.bf16.mxu0 0
    %2160 = vmatpush1.bf16.xpose.msra.mxu0 0
    %2161 = vmatprep.subr.bf16.mxu0 0
    %2162 = vmatpush1.bf16.xpose.msra.mxu0 0
    %2163 = vmatprep.subr.bf16.mxu0 0
    %2164 = vmatpush1.bf16.xpose.msra.mxu0 0
    %2165 = vmatprep.subr.bf16.mxu0 0
    %2166 = vmatpush1.bf16.xpose.msra.mxu0 0
    %2167 = vmatprep.subr.bf16.mxu0 0
    %2168 = vmatpush1.bf16.xpose.msra.mxu0 0
    %2169 = vmatprep.mubr.bf16.mxu0 0
    %2170 = vmatmul.mubr.bf16.gmra.mrb[0].mxu0 %v2132
    %v2171 = vpop.f32.mrb[0].mxu0
    %v2172 = vadd.f32 0.0, %v2171
    %v2173 = vpop.f32.mrb[0].mxu0
    %v2174 = vpop.f32.mrb[0].mxu0
    %v2175 = vpop.f32.mrb[0].mxu0
    %2176 = vdwg.mxu0
    %v2177 = vsel %vm1837, %v2172, 1e-09
    %v2178 = vsel %vm1839, %v2177, -inf
    %2179 = vmax.xlane.f32.xlu0 %v2178
    %v2180 = vpop.xlane.xlu0 %2179
    %v2181 = vsub.f32 %v2177, %v2180
    %v2182 = vmul.f32 %v2181, 1.442695
    %v2183 = vpow.pop %v2182
    %v2184 = vsel %vm1839, %v2183, 0.0
    %2185 = vadd.xlane.f32.xlu0 %v2184
    %v2186 = vpop.xlane.xlu0 %2185
    %v2187 = vrcp.pop %v2186
    %v2188 = vmul.f32 %v2183, %v2187
    %v2189 = vpack.c.bf16 %v2188, %v2188
    %2190 = vrot.lane.b32.xlu0 %v1787, 32
    %v2191 = vpop.permute.xlu0 %2190
    %v2194 = vsel %vm1839, %v2189, 0
    %2196 = vmatprep.subr.bf16.mxu0 0
    %2197 = vmatpush1.bf16.msra.mxu0 %v2191
    %2198 = vmatprep.subr.bf16.mxu0 0
    %2199 = vmatpush1.bf16.msra.mxu0 0
    %2200 = vmatprep.subr.bf16.mxu0 0
    %2201 = vmatpush1.bf16.msra.mxu0 0
    %2202 = vmatprep.subr.bf16.mxu0 0
    %2203 = vmatpush1.bf16.msra.mxu0 0
    %2204 = vmatprep.subr.bf16.mxu0 0
    %2205 = vmatpush1.bf16.msra.mxu0 0
    %2206 = vmatprep.subr.bf16.mxu0 0
    %2207 = vmatpush1.bf16.msra.mxu0 0
    %2208 = vmatprep.subr.bf16.mxu0 0
    %2209 = vmatpush1.bf16.msra.mxu0 0
    %2210 = vmatprep.subr.bf16.mxu0 0
    %2211 = vmatpush1.bf16.msra.mxu0 0
    %2212 = vmatprep.subr.bf16.mxu0 0
    %2213 = vmatpush1.bf16.msra.mxu0 0
    %2214 = vmatprep.subr.bf16.mxu0 0
    %2215 = vmatpush1.bf16.msra.mxu0 0
    %2216 = vmatprep.subr.bf16.mxu0 0
    %2217 = vmatpush1.bf16.msra.mxu0 0
    %2218 = vmatprep.subr.bf16.mxu0 0
    %2219 = vmatpush1.bf16.msra.mxu0 0
    %2220 = vmatprep.subr.bf16.mxu0 0
    %2221 = vmatpush1.bf16.msra.mxu0 0
    %2222 = vmatprep.subr.bf16.mxu0 0
    %2223 = vmatpush1.bf16.msra.mxu0 0
    %2224 = vmatprep.subr.bf16.mxu0 0
    %2225 = vmatpush1.bf16.msra.mxu0 0
    %2226 = vmatprep.subr.bf16.mxu0 0
    %2227 = vmatpush1.bf16.msra.mxu0 0
    %2228 = vmatprep.mubr.bf16.mxu0 0
    %2229 = vmatmul.mubr.bf16.gmra.mrb[0].mxu0 %v2194
    %v2230 = vpop.f32.mrb[0].mxu0
    %v2231 = vadd.f32 0.0, %v2230
    %v2232 = vpop.f32.mrb[0].mxu0
    %v2233 = vpop.f32.mrb[0].mxu0
    %v2234 = vpop.f32.mrb[0].mxu0
    %2235 = vdwg.mxu0
    %2237 = vrot.lane.b32.xlu0 %v2231, 96
    %v2238 = vpop.permute.xlu0 %2237
    %2240 = vst.msk [vmem:[#allocation2] sm:$0xff] %vm875, %v2238
    %v2241 = vrot.slane %v1784, 4
    %v2243 = vsel %vm411, %v2241, 0
    %v2246 = vsel %vm411, %v1786, 0
    %2248 = vmatprep.subr.bf16.mxu0 0
    %2249 = vmatpush1.bf16.xpose.msra.mxu0 %v2246
    %2250 = vmatprep.subr.bf16.mxu0 0
    %2251 = vmatpush1.bf16.xpose.msra.mxu0 0
    %2252 = vmatprep.subr.bf16.mxu0 0
    %2253 = vmatpush1.bf16.xpose.msra.mxu0 0
    %2254 = vmatprep.subr.bf16.mxu0 0
    %2255 = vmatpush1.bf16.xpose.msra.mxu0 0
    %2256 = vmatprep.subr.bf16.mxu0 0
    %2257 = vmatpush1.bf16.xpose.msra.mxu0 0
    %2258 = vmatprep.subr.bf16.mxu0 0
    %2259 = vmatpush1.bf16.xpose.msra.mxu0 0
    %2260 = vmatprep.subr.bf16.mxu0 0
    %2261 = vmatpush1.bf16.xpose.msra.mxu0 0
    %2262 = vmatprep.subr.bf16.mxu0 0
    %2263 = vmatpush1.bf16.xpose.msra.mxu0 0
    %2264 = vmatprep.subr.bf16.mxu0 0
    %2265 = vmatpush1.bf16.xpose.msra.mxu0 0
    %2266 = vmatprep.subr.bf16.mxu0 0
    %2267 = vmatpush1.bf16.xpose.msra.mxu0 0
    %2268 = vmatprep.subr.bf16.mxu0 0
    %2269 = vmatpush1.bf16.xpose.msra.mxu0 0
    %2270 = vmatprep.subr.bf16.mxu0 0
    %2271 = vmatpush1.bf16.xpose.msra.mxu0 0
    %2272 = vmatprep.subr.bf16.mxu0 0
    %2273 = vmatpush1.bf16.xpose.msra.mxu0 0
    %2274 = vmatprep.subr.bf16.mxu0 0
    %2275 = vmatpush1.bf16.xpose.msra.mxu0 0
    %2276 = vmatprep.subr.bf16.mxu0 0
    %2277 = vmatpush1.bf16.xpose.msra.mxu0 0
    %2278 = vmatprep.subr.bf16.mxu0 0
    %2279 = vmatpush1.bf16.xpose.msra.mxu0 0
    %2280 = vmatprep.mubr.bf16.mxu0 0
    %2281 = vmatmul.mubr.bf16.gmra.mrb[0].mxu0 %v2243
    %v2282 = vpop.f32.mrb[0].mxu0
    %v2283 = vadd.f32 0.0, %v2282
    %v2284 = vpop.f32.mrb[0].mxu0
    %v2285 = vpop.f32.mrb[0].mxu0
    %v2286 = vpop.f32.mrb[0].mxu0
    %2287 = vdwg.mxu0
    %v2288 = vsel %vm102, 16843009, 0
    %v2289 = vunpack.c.0.s8 %v2288
    %vm2290 = vcmp.ne.s32.totalorder %v2289, 0
    %v2291 = vsel %vm2290, %v2283, 1e-09
    %v2292 = vsel %vm1839, %v2291, -inf
    %2293 = vmax.xlane.f32.xlu0 %v2292
    %v2294 = vpop.xlane.xlu0 %2293
    %v2295 = vsub.f32 %v2291, %v2294
    %v2296 = vmul.f32 %v2295, 1.442695
    %v2297 = vpow.pop %v2296
    %v2298 = vsel %vm1839, %v2297, 0.0
    %2299 = vadd.xlane.f32.xlu0 %v2298
    %v2300 = vpop.xlane.xlu0 %2299
    %v2301 = vrcp.pop %v2300
    %v2302 = vmul.f32 %v2297, %v2301
    %v2303 = vpack.c.bf16 %v2302, %v2302
    %v2305 = vsel %vm1839, %v2303, 0
    %2307 = vmatprep.subr.bf16.mxu0 0
    %2308 = vmatpush1.bf16.msra.mxu0 %v1788
    %2309 = vmatprep.subr.bf16.mxu0 0
    %2310 = vmatpush1.bf16.msra.mxu0 0
    %2311 = vmatprep.subr.bf16.mxu0 0
    %2312 = vmatpush1.bf16.msra.mxu0 0
    %2313 = vmatprep.subr.bf16.mxu0 0
    %2314 = vmatpush1.bf16.msra.mxu0 0
    %2315 = vmatprep.subr.bf16.mxu0 0
    %2316 = vmatpush1.bf16.msra.mxu0 0
    %2317 = vmatprep.subr.bf16.mxu0 0
    %2318 = vmatpush1.bf16.msra.mxu0 0
    %2319 = vmatprep.subr.bf16.mxu0 0
    %2320 = vmatpush1.bf16.msra.mxu0 0
    %2321 = vmatprep.subr.bf16.mxu0 0
    %2322 = vmatpush1.bf16.msra.mxu0 0
    %2323 = vmatprep.subr.bf16.mxu0 0
    %2324 = vmatpush1.bf16.msra.mxu0 0
    %2325 = vmatprep.subr.bf16.mxu0 0
    %2326 = vmatpush1.bf16.msra.mxu0 0
    %2327 = vmatprep.subr.bf16.mxu0 0
    %2328 = vmatpush1.bf16.msra.mxu0 0
    %2329 = vmatprep.subr.bf16.mxu0 0
    %2330 = vmatpush1.bf16.msra.mxu0 0
    %2331 = vmatprep.subr.bf16.mxu0 0
    %2332 = vmatpush1.bf16.msra.mxu0 0
    %2333 = vmatprep.subr.bf16.mxu0 0
    %2334 = vmatpush1.bf16.msra.mxu0 0
    %2335 = vmatprep.subr.bf16.mxu0 0
    %2336 = vmatpush1.bf16.msra.mxu0 0
    %2337 = vmatprep.subr.bf16.mxu0 0
    %2338 = vmatpush1.bf16.msra.mxu0 0
    %2339 = vmatprep.mubr.bf16.mxu0 0
    %2340 = vmatmul.mubr.bf16.gmra.mrb[0].mxu0 %v2305
    %v2341 = vpop.f32.mrb[0].mxu0
    %v2342 = vadd.f32 0.0, %v2341
    %v2343 = vpop.f32.mrb[0].mxu0
    %v2344 = vpop.f32.mrb[0].mxu0
    %v2345 = vpop.f32.mrb[0].mxu0
    %2346 = vdwg.mxu0
    %2347 = vst.msk [vmem:[#allocation2 + $0x8] sm:$0xff] %vm411, %v2342
    %2348 = vrot.lane.b32.xlu0 %v2241, 96
    %v2349 = vpop.permute.xlu0 %2348
    %2351 = vrot.lane.b32.xlu0 %v1786, 96
    %v2352 = vpop.permute.xlu0 %2351
    %v2354 = vsel %vm411, %v2349, 0
    %v2357 = vsel %vm411, %v2352, 0
    %2359 = vmatprep.subr.bf16.mxu0 0
    %2360 = vmatpush1.bf16.xpose.msra.mxu0 %v2357
    %2361 = vmatprep.subr.bf16.mxu0 0
    %2362 = vmatpush1.bf16.xpose.msra.mxu0 0
    %2363 = vmatprep.subr.bf16.mxu0 0
    %2364 = vmatpush1.bf16.xpose.msra.mxu0 0
    %2365 = vmatprep.subr.bf16.mxu0 0
    %2366 = vmatpush1.bf16.xpose.msra.mxu0 0
    %2367 = vmatprep.subr.bf16.mxu0 0
    %2368 = vmatpush1.bf16.xpose.msra.mxu0 0
    %2369 = vmatprep.subr.bf16.mxu0 0
    %2370 = vmatpush1.bf16.xpose.msra.mxu0 0
    %2371 = vmatprep.subr.bf16.mxu0 0
    %2372 = vmatpush1.bf16.xpose.msra.mxu0 0
    %2373 = vmatprep.subr.bf16.mxu0 0
    %2374 = vmatpush1.bf16.xpose.msra.mxu0 0
    %2375 = vmatprep.subr.bf16.mxu0 0
    %2376 = vmatpush1.bf16.xpose.msra.mxu0 0
    %2377 = vmatprep.subr.bf16.mxu0 0
    %2378 = vmatpush1.bf16.xpose.msra.mxu0 0
    %2379 = vmatprep.subr.bf16.mxu0 0
    %2380 = vmatpush1.bf16.xpose.msra.mxu0 0
    %2381 = vmatprep.subr.bf16.mxu0 0
    %2382 = vmatpush1.bf16.xpose.msra.mxu0 0
    %2383 = vmatprep.subr.bf16.mxu0 0
    %2384 = vmatpush1.bf16.xpose.msra.mxu0 0
    %2385 = vmatprep.subr.bf16.mxu0 0
    %2386 = vmatpush1.bf16.xpose.msra.mxu0 0
    %2387 = vmatprep.subr.bf16.mxu0 0
    %2388 = vmatpush1.bf16.xpose.msra.mxu0 0
    %2389 = vmatprep.subr.bf16.mxu0 0
    %2390 = vmatpush1.bf16.xpose.msra.mxu0 0
    %2391 = vmatprep.mubr.bf16.mxu0 0
    %2392 = vmatmul.mubr.bf16.gmra.mrb[0].mxu0 %v2354
    %v2393 = vpop.f32.mrb[0].mxu0
    %v2394 = vadd.f32 0.0, %v2393
    %v2395 = vpop.f32.mrb[0].mxu0
    %v2396 = vpop.f32.mrb[0].mxu0
    %v2397 = vpop.f32.mrb[0].mxu0
    %2398 = vdwg.mxu0
    %v2399 = vsel %vm2290, %v2394, 1e-09
    %v2400 = vsel %vm1839, %v2399, -inf
    %2401 = vmax.xlane.f32.xlu0 %v2400
    %v2402 = vpop.xlane.xlu0 %2401
    %v2403 = vsub.f32 %v2399, %v2402
    %v2404 = vmul.f32 %v2403, 1.442695
    %v2405 = vpow.pop %v2404
    %v2406 = vsel %vm1839, %v2405, 0.0
    %2407 = vadd.xlane.f32.xlu0 %v2406
    %v2408 = vpop.xlane.xlu0 %2407
    %v2409 = vrcp.pop %v2408
    %v2410 = vmul.f32 %v2405, %v2409
    %v2411 = vpack.c.bf16 %v2410, %v2410
    %2413 = vrot.lane.b32.xlu0 %v1788, 96
    %v2414 = vpop.permute.xlu0 %2413
    %v2417 = vsel %vm1839, %v2411, 0
    %2419 = vmatprep.subr.bf16.mxu0 0
    %2420 = vmatpush1.bf16.msra.mxu0 %v2414
    %2421 = vmatprep.subr.bf16.mxu0 0
    %2422 = vmatpush1.bf16.msra.mxu0 0
    %2423 = vmatprep.subr.bf16.mxu0 0
    %2424 = vmatpush1.bf16.msra.mxu0 0
    %2425 = vmatprep.subr.bf16.mxu0 0
    %2426 = vmatpush1.bf16.msra.mxu0 0
    %2427 = vmatprep.subr.bf16.mxu0 0
    %2428 = vmatpush1.bf16.msra.mxu0 0
    %2429 = vmatprep.subr.bf16.mxu0 0
    %2430 = vmatpush1.bf16.msra.mxu0 0
    %2431 = vmatprep.subr.bf16.mxu0 0
    %2432 = vmatpush1.bf16.msra.mxu0 0
    %2433 = vmatprep.subr.bf16.mxu0 0
    %2434 = vmatpush1.bf16.msra.mxu0 0
    %2435 = vmatprep.subr.bf16.mxu0 0
    %2436 = vmatpush1.bf16.msra.mxu0 0
    %2437 = vmatprep.subr.bf16.mxu0 0
    %2438 = vmatpush1.bf16.msra.mxu0 0
    %2439 = vmatprep.subr.bf16.mxu0 0
    %2440 = vmatpush1.bf16.msra.mxu0 0
    %2441 = vmatprep.subr.bf16.mxu0 0
    %2442 = vmatpush1.bf16.msra.mxu0 0
    %2443 = vmatprep.subr.bf16.mxu0 0
    %2444 = vmatpush1.bf16.msra.mxu0 0
    %2445 = vmatprep.subr.bf16.mxu0 0
    %2446 = vmatpush1.bf16.msra.mxu0 0
    %2447 = vmatprep.subr.bf16.mxu0 0
    %2448 = vmatpush1.bf16.msra.mxu0 0
    %2449 = vmatprep.subr.bf16.mxu0 0
    %2450 = vmatpush1.bf16.msra.mxu0 0
    %2451 = vmatprep.mubr.bf16.mxu0 0
    %2452 = vmatmul.mubr.bf16.gmra.mrb[0].mxu0 %v2417
    %v2453 = vpop.f32.mrb[0].mxu0
    %v2454 = vadd.f32 0.0, %v2453
    %v2455 = vpop.f32.mrb[0].mxu0
    %v2456 = vpop.f32.mrb[0].mxu0
    %v2457 = vpop.f32.mrb[0].mxu0
    %2458 = vdwg.mxu0
    %2460 = vrot.lane.b32.xlu0 %v2454, 32
    %v2461 = vpop.permute.xlu0 %2460
    %2463 = vst.msk [vmem:[#allocation2 + $0x8] sm:$0xff] %vm641, %v2461
    %2464 = vrot.lane.b32.xlu0 %v2241, 64
    %v2465 = vpop.permute.xlu0 %2464
    %2466 = vrot.lane.b32.xlu0 %v1786, 64
    %v2467 = vpop.permute.xlu0 %2466
    %v2469 = vsel %vm411, %v2465, 0
    %v2472 = vsel %vm411, %v2467, 0
    %2474 = vmatprep.subr.bf16.mxu0 0
    %2475 = vmatpush1.bf16.xpose.msra.mxu0 %v2472
    %2476 = vmatprep.subr.bf16.mxu0 0
    %2477 = vmatpush1.bf16.xpose.msra.mxu0 0
    %2478 = vmatprep.subr.bf16.mxu0 0
    %2479 = vmatpush1.bf16.xpose.msra.mxu0 0
    %2480 = vmatprep.subr.bf16.mxu0 0
    %2481 = vmatpush1.bf16.xpose.msra.mxu0 0
    %2482 = vmatprep.subr.bf16.mxu0 0
    %2483 = vmatpush1.bf16.xpose.msra.mxu0 0
    %2484 = vmatprep.subr.bf16.mxu0 0
    %2485 = vmatpush1.bf16.xpose.msra.mxu0 0
    %2486 = vmatprep.subr.bf16.mxu0 0
    %2487 = vmatpush1.bf16.xpose.msra.mxu0 0
    %2488 = vmatprep.subr.bf16.mxu0 0
    %2489 = vmatpush1.bf16.xpose.msra.mxu0 0
    %2490 = vmatprep.subr.bf16.mxu0 0
    %2491 = vmatpush1.bf16.xpose.msra.mxu0 0
    %2492 = vmatprep.subr.bf16.mxu0 0
    %2493 = vmatpush1.bf16.xpose.msra.mxu0 0
    %2494 = vmatprep.subr.bf16.mxu0 0
    %2495 = vmatpush1.bf16.xpose.msra.mxu0 0
    %2496 = vmatprep.subr.bf16.mxu0 0
    %2497 = vmatpush1.bf16.xpose.msra.mxu0 0
    %2498 = vmatprep.subr.bf16.mxu0 0
    %2499 = vmatpush1.bf16.xpose.msra.mxu0 0
    %2500 = vmatprep.subr.bf16.mxu0 0
    %2501 = vmatpush1.bf16.xpose.msra.mxu0 0
    %2502 = vmatprep.subr.bf16.mxu0 0
    %2503 = vmatpush1.bf16.xpose.msra.mxu0 0
    %2504 = vmatprep.subr.bf16.mxu0 0
    %2505 = vmatpush1.bf16.xpose.msra.mxu0 0
    %2506 = vmatprep.mubr.bf16.mxu0 0
    %2507 = vmatmul.mubr.bf16.gmra.mrb[0].mxu0 %v2469
    %v2508 = vpop.f32.mrb[0].mxu0
    %v2509 = vadd.f32 0.0, %v2508
    %v2510 = vpop.f32.mrb[0].mxu0
    %v2511 = vpop.f32.mrb[0].mxu0
    %v2512 = vpop.f32.mrb[0].mxu0
    %2513 = vdwg.mxu0
    %v2514 = vsel %vm2290, %v2509, 1e-09
    %v2515 = vsel %vm1839, %v2514, -inf
    %2516 = vmax.xlane.f32.xlu0 %v2515
    %v2517 = vpop.xlane.xlu0 %2516
    %v2518 = vsub.f32 %v2514, %v2517
    %v2519 = vmul.f32 %v2518, 1.442695
    %v2520 = vpow.pop %v2519
    %v2521 = vsel %vm1839, %v2520, 0.0
    %2522 = vadd.xlane.f32.xlu0 %v2521
    %v2523 = vpop.xlane.xlu0 %2522
    %v2524 = vrcp.pop %v2523
    %v2525 = vmul.f32 %v2520, %v2524
    %v2526 = vpack.c.bf16 %v2525, %v2525
    %2527 = vrot.lane.b32.xlu0 %v1788, 64
    %v2528 = vpop.permute.xlu0 %2527
    %v2531 = vsel %vm1839, %v2526, 0
    %2533 = vmatprep.subr.bf16.mxu0 0
    %2534 = vmatpush1.bf16.msra.mxu0 %v2528
    %2535 = vmatprep.subr.bf16.mxu0 0
    %2536 = vmatpush1.bf16.msra.mxu0 0
    %2537 = vmatprep.subr.bf16.mxu0 0
    %2538 = vmatpush1.bf16.msra.mxu0 0
    %2539 = vmatprep.subr.bf16.mxu0 0
    %2540 = vmatpush1.bf16.msra.mxu0 0
    %2541 = vmatprep.subr.bf16.mxu0 0
    %2542 = vmatpush1.bf16.msra.mxu0 0
    %2543 = vmatprep.subr.bf16.mxu0 0
    %2544 = vmatpush1.bf16.msra.mxu0 0
    %2545 = vmatprep.subr.bf16.mxu0 0
    %2546 = vmatpush1.bf16.msra.mxu0 0
    %2547 = vmatprep.subr.bf16.mxu0 0
    %2548 = vmatpush1.bf16.msra.mxu0 0
    %2549 = vmatprep.subr.bf16.mxu0 0
    %2550 = vmatpush1.bf16.msra.mxu0 0
    %2551 = vmatprep.subr.bf16.mxu0 0
    %2552 = vmatpush1.bf16.msra.mxu0 0
    %2553 = vmatprep.subr.bf16.mxu0 0
    %2554 = vmatpush1.bf16.msra.mxu0 0
    %2555 = vmatprep.subr.bf16.mxu0 0
    %2556 = vmatpush1.bf16.msra.mxu0 0
    %2557 = vmatprep.subr.bf16.mxu0 0
    %2558 = vmatpush1.bf16.msra.mxu0 0
    %2559 = vmatprep.subr.bf16.mxu0 0
    %2560 = vmatpush1.bf16.msra.mxu0 0
    %2561 = vmatprep.subr.bf16.mxu0 0
    %2562 = vmatpush1.bf16.msra.mxu0 0
    %2563 = vmatprep.subr.bf16.mxu0 0
    %2564 = vmatpush1.bf16.msra.mxu0 0
    %2565 = vmatprep.mubr.bf16.mxu0 0
    %2566 = vmatmul.mubr.bf16.gmra.mrb[0].mxu0 %v2531
    %v2567 = vpop.f32.mrb[0].mxu0
    %v2568 = vadd.f32 0.0, %v2567
    %v2569 = vpop.f32.mrb[0].mxu0
    %v2570 = vpop.f32.mrb[0].mxu0
    %v2571 = vpop.f32.mrb[0].mxu0
    %2572 = vdwg.mxu0
    %2574 = vrot.lane.b32.xlu0 %v2568, 64
    %v2575 = vpop.permute.xlu0 %2574
    %2577 = vst.msk [vmem:[#allocation2 + $0x8] sm:$0xff] %vm758, %v2575
    %2578 = vrot.lane.b32.xlu0 %v2241, 32
    %v2579 = vpop.permute.xlu0 %2578
    %2580 = vrot.lane.b32.xlu0 %v1786, 32
    %v2581 = vpop.permute.xlu0 %2580
    %v2583 = vsel %vm411, %v2579, 0
    %v2586 = vsel %vm411, %v2581, 0
    %2588 = vmatprep.subr.bf16.mxu0 0
    %2589 = vmatpush1.bf16.xpose.msra.mxu0 %v2586
    %2590 = vmatprep.subr.bf16.mxu0 0
    %2591 = vmatpush1.bf16.xpose.msra.mxu0 0
    %2592 = vmatprep.subr.bf16.mxu0 0
    %2593 = vmatpush1.bf16.xpose.msra.mxu0 0
    %2594 = vmatprep.subr.bf16.mxu0 0
    %2595 = vmatpush1.bf16.xpose.msra.mxu0 0
    %2596 = vmatprep.subr.bf16.mxu0 0
    %2597 = vmatpush1.bf16.xpose.msra.mxu0 0
    %2598 = vmatprep.subr.bf16.mxu0 0
    %2599 = vmatpush1.bf16.xpose.msra.mxu0 0
    %2600 = vmatprep.subr.bf16.mxu0 0
    %2601 = vmatpush1.bf16.xpose.msra.mxu0 0
    %2602 = vmatprep.subr.bf16.mxu0 0
    %2603 = vmatpush1.bf16.xpose.msra.mxu0 0
    %2604 = vmatprep.subr.bf16.mxu0 0
    %2605 = vmatpush1.bf16.xpose.msra.mxu0 0
    %2606 = vmatprep.subr.bf16.mxu0 0
    %2607 = vmatpush1.bf16.xpose.msra.mxu0 0
    %2608 = vmatprep.subr.bf16.mxu0 0
    %2609 = vmatpush1.bf16.xpose.msra.mxu0 0
    %2610 = vmatprep.subr.bf16.mxu0 0
    %2611 = vmatpush1.bf16.xpose.msra.mxu0 0
    %2612 = vmatprep.subr.bf16.mxu0 0
    %2613 = vmatpush1.bf16.xpose.msra.mxu0 0
    %2614 = vmatprep.subr.bf16.mxu0 0
    %2615 = vmatpush1.bf16.xpose.msra.mxu0 0
    %2616 = vmatprep.subr.bf16.mxu0 0
    %2617 = vmatpush1.bf16.xpose.msra.mxu0 0
    %2618 = vmatprep.subr.bf16.mxu0 0
    %2619 = vmatpush1.bf16.xpose.msra.mxu0 0
    %2620 = vmatprep.mubr.bf16.mxu0 0
    %2621 = vmatmul.mubr.bf16.gmra.mrb[0].mxu0 %v2583
    %v2622 = vpop.f32.mrb[0].mxu0
    %v2623 = vadd.f32 0.0, %v2622
    %v2624 = vpop.f32.mrb[0].mxu0
    %v2625 = vpop.f32.mrb[0].mxu0
    %v2626 = vpop.f32.mrb[0].mxu0
    %2627 = vdwg.mxu0
    %v2628 = vsel %vm2290, %v2623, 1e-09
    %v2629 = vsel %vm1839, %v2628, -inf
    %2630 = vmax.xlane.f32.xlu0 %v2629
    %v2631 = vpop.xlane.xlu0 %2630
    %v2632 = vsub.f32 %v2628, %v2631
    %v2633 = vmul.f32 %v2632, 1.442695
    %v2634 = vpow.pop %v2633
    %v2635 = vsel %vm1839, %v2634, 0.0
    %2636 = vadd.xlane.f32.xlu0 %v2635
    %v2637 = vpop.xlane.xlu0 %2636
    %v2638 = vrcp.pop %v2637
    %v2639 = vmul.f32 %v2634, %v2638
    %v2640 = vpack.c.bf16 %v2639, %v2639
    %2641 = vrot.lane.b32.xlu0 %v1788, 32
    %v2642 = vpop.permute.xlu0 %2641
    %v2645 = vsel %vm1839, %v2640, 0
    %2647 = vmatprep.subr.bf16.mxu0 0
    %2648 = vmatpush1.bf16.msra.mxu0 %v2642
    %2649 = vmatprep.subr.bf16.mxu0 0
    %2650 = vmatpush1.bf16.msra.mxu0 0
    %2651 = vmatprep.subr.bf16.mxu0 0
    %2652 = vmatpush1.bf16.msra.mxu0 0
    %2653 = vmatprep.subr.bf16.mxu0 0
    %2654 = vmatpush1.bf16.msra.mxu0 0
    %2655 = vmatprep.subr.bf16.mxu0 0
    %2656 = vmatpush1.bf16.msra.mxu0 0
    %2657 = vmatprep.subr.bf16.mxu0 0
    %2658 = vmatpush1.bf16.msra.mxu0 0
    %2659 = vmatprep.subr.bf16.mxu0 0
    %2660 = vmatpush1.bf16.msra.mxu0 0
    %2661 = vmatprep.subr.bf16.mxu0 0
    %2662 = vmatpush1.bf16.msra.mxu0 0
    %2663 = vmatprep.subr.bf16.mxu0 0
    %2664 = vmatpush1.bf16.msra.mxu0 0
    %2665 = vmatprep.subr.bf16.mxu0 0
    %2666 = vmatpush1.bf16.msra.mxu0 0
    %2667 = vmatprep.subr.bf16.mxu0 0
    %2668 = vmatpush1.bf16.msra.mxu0 0
    %2669 = vmatprep.subr.bf16.mxu0 0
    %2670 = vmatpush1.bf16.msra.mxu0 0
    %2671 = vmatprep.subr.bf16.mxu0 0
    %2672 = vmatpush1.bf16.msra.mxu0 0
    %2673 = vmatprep.subr.bf16.mxu0 0
    %2674 = vmatpush1.bf16.msra.mxu0 0
    %2675 = vmatprep.subr.bf16.mxu0 0
    %2676 = vmatpush1.bf16.msra.mxu0 0
    %2677 = vmatprep.subr.bf16.mxu0 0
    %2678 = vmatpush1.bf16.msra.mxu0 0
    %2679 = vmatprep.mubr.bf16.mxu0 0
    %2680 = vmatmul.mubr.bf16.gmra.mrb[0].mxu0 %v2645
    %v2681 = vpop.f32.mrb[0].mxu0
    %v2682 = vadd.f32 0.0, %v2681
    %v2683 = vpop.f32.mrb[0].mxu0
    %v2684 = vpop.f32.mrb[0].mxu0
    %v2685 = vpop.f32.mrb[0].mxu0
    %2686 = vdwg.mxu0
    %2688 = vrot.lane.b32.xlu0 %v2682, 96
    %v2689 = vpop.permute.xlu0 %2688
    %2691 = vst.msk [vmem:[#allocation2 + $0x8] sm:$0xff] %vm875, %v2689
    %v2692 = vld [vmem:[#allocation2] sm:$0xff]
    %v2693 = vld [vmem:[#allocation2 + $0x8] sm:$0xff]
    %v2694 = vpack.c.bf16 %v2693, %v2692
    %v2695 = vld [vmem:[%s16] sm:$0xf]
    %v2696 = vld [vmem:[%s16 + $0x4] sm:$0xf]
    %v2697 = vld [vmem:[%s16 + $0x8] sm:$0xf]
    %v2698 = vld [vmem:[%s16 + $0xc] sm:$0xf]
    %v2699 = vld [vmem:[%s16 + $0x10] sm:$0xf]
    %v2700 = vld [vmem:[%s16 + $0x14] sm:$0xf]
    %v2701 = vld [vmem:[%s16 + $0x18] sm:$0xf]
    %v2702 = vld [vmem:[%s16 + $0x1c] sm:$0xf]
    %v2703 = vld [vmem:[%s16 + $0x20] sm:$0xf]
    %v2704 = vld [vmem:[%s16 + $0x24] sm:$0xf]
    %v2705 = vld [vmem:[%s16 + $0x28] sm:$0xf]
    %v2706 = vld [vmem:[%s16 + $0x2c] sm:$0xf]
    %v2707 = vld [vmem:[%s16 + $0x30] sm:$0xf]
    %v2708 = vld [vmem:[%s16 + $0x34] sm:$0xf]
    %v2709 = vld [vmem:[%s16 + $0x38] sm:$0xf]
    %v2710 = vld [vmem:[%s16 + $0x3c] sm:$0xf]
    %v2727 = vunpack.c.l.b16 %v2695
    %v2728 = vunpack.c.l.b16 %v2696
    %v2729 = vunpack.c.l.b16 %v2697
    %v2730 = vunpack.c.l.b16 %v2698
    %v2731 = vunpack.c.l.b16 %v2699
    %v2732 = vunpack.c.l.b16 %v2700
    %v2733 = vunpack.c.l.b16 %v2701
    %v2734 = vunpack.c.l.b16 %v2702
    %v2735 = vunpack.c.l.b16 %v2703
    %v2736 = vunpack.c.l.b16 %v2704
    %v2737 = vunpack.c.l.b16 %v2705
    %v2738 = vunpack.c.l.b16 %v2706
    %v2739 = vunpack.c.l.b16 %v2707
    %v2740 = vunpack.c.l.b16 %v2708
    %v2741 = vunpack.c.l.b16 %v2709
    %v2742 = vunpack.c.l.b16 %v2710
    %v2743 = vpack.c.b16 %v2728, %v2727
    %v2744 = vpack.c.b16 %v2730, %v2729
    %v2745 = vpack.c.b16 %v2732, %v2731
    %v2746 = vpack.c.b16 %v2734, %v2733
    %v2747 = vpack.c.b16 %v2736, %v2735
    %v2748 = vpack.c.b16 %v2738, %v2737
    %v2749 = vpack.c.b16 %v2740, %v2739
    %v2750 = vpack.c.b16 %v2742, %v2741
    %2759 = vmatprep.subr.bf16.mxu0 0
    %2760 = vmatpush1.bf16.msra.mxu0 %v2743
    %2761 = vmatprep.subr.bf16.mxu0 0
    %2762 = vmatpush1.bf16.msra.mxu0 %v2744
    %2763 = vmatprep.subr.bf16.mxu0 0
    %2764 = vmatpush1.bf16.msra.mxu0 %v2745
    %2765 = vmatprep.subr.bf16.mxu0 0
    %2766 = vmatpush1.bf16.msra.mxu0 %v2746
    %2767 = vmatprep.subr.bf16.mxu0 0
    %2768 = vmatpush1.bf16.msra.mxu0 %v2747
    %2769 = vmatprep.subr.bf16.mxu0 0
    %2770 = vmatpush1.bf16.msra.mxu0 %v2748
    %2771 = vmatprep.subr.bf16.mxu0 0
    %2772 = vmatpush1.bf16.msra.mxu0 %v2749
    %2773 = vmatprep.subr.bf16.mxu0 0
    %2774 = vmatpush1.bf16.msra.mxu0 %v2750
    %2775 = vmatprep.subr.bf16.mxu0 0
    %2776 = vmatpush1.bf16.msra.mxu0 0
    %2777 = vmatprep.subr.bf16.mxu0 0
    %2778 = vmatpush1.bf16.msra.mxu0 0
    %2779 = vmatprep.subr.bf16.mxu0 0
    %2780 = vmatpush1.bf16.msra.mxu0 0
    %2781 = vmatprep.subr.bf16.mxu0 0
    %2782 = vmatpush1.bf16.msra.mxu0 0
    %2783 = vmatprep.subr.bf16.mxu0 0
    %2784 = vmatpush1.bf16.msra.mxu0 0
    %2785 = vmatprep.subr.bf16.mxu0 0
    %2786 = vmatpush1.bf16.msra.mxu0 0
    %2787 = vmatprep.subr.bf16.mxu0 0
    %2788 = vmatpush1.bf16.msra.mxu0 0
    %2789 = vmatprep.subr.bf16.mxu0 0
    %2790 = vmatpush1.bf16.msra.mxu0 0
    %2791 = vmatprep.mubr.bf16.mxu0 0
    %2792 = vmatmul.mubr.bf16.gmra.mrb[0].mxu0 %v2694
    %v2793 = vpop.f32.mrb[0].mxu0
    %v2794 = vadd.f32 0.0, %v2793
    %v2795 = vpop.f32.mrb[0].mxu0
    %v2796 = vpop.f32.mrb[0].mxu0
    %v2797 = vadd.f32 0.0, %v2796
    %v2798 = vpop.f32.mrb[0].mxu0
    %2799 = vdwg.mxu0
    %v2800 = vadd.f32 %v1454, %v2794
    %v2801 = vadd.f32 %v1455, %v2797
    %v2802 = vld [vmem:[%s17] sm:$0x1]
    %v2804 = vlaneseq
    %v2805 = vshrl.u32 %v2804, 7
    %v2806 = vsub.s32 0, %v2805
    %v2807 = vrot.slane %v2802, %v2806
    %v2809 = vadd.f32 %v2800, %v2807
    %v2810 = vadd.f32 %v2801, %v2807
    %v2811 = vld [vmem:[%s18] sm:$0x1]
    %v2812 = vld [vmem:[%s19] sm:$0x1]
    %2813 = vadd.xlane.f32.xlu0 %v2809
    %v2814 = vpop.xlane.xlu0 %2813
    %2815 = vadd.xlane.f32.xlu0 %v2810
    %v2816 = vpop.xlane.xlu0 %2815
    %v2817 = vmul.f32 %v2814, %v109
    %v2818 = vmul.f32 %v2816, %v109
    %v2819 = vsub.f32 %v2809, %v2817
    %v2820 = vsub.f32 %v2810, %v2818
    %v2821 = vmul.f32 %v2819, %v2819
    %v2822 = vmul.f32 %v2820, %v2820
    %2823 = vadd.xlane.f32.xlu0 %v2821
    %v2824 = vpop.xlane.xlu0 %2823
    %2825 = vadd.xlane.f32.xlu0 %v2822
    %v2826 = vpop.xlane.xlu0 %2825
    %v2827 = vmul.f32 %v2824, %v109
    %v2828 = vmul.f32 %v2826, %v109
    %v2829 = vadd.f32 %v2827, 1e-05
    %v2830 = vadd.f32 %v2828, 1e-05
    %v2831 = vrsqrt.pop %v2829
    %v2832 = vrsqrt.pop %v2830
    %v2833 = vmul.f32 %v2819, %v2831
    %v2834 = vmul.f32 %v2820, %v2832
    %v2836 = vlaneseq
    %v2837 = vshrl.u32 %v2836, 7
    %v2838 = vsub.s32 0, %v2837
    %v2839 = vrot.slane %v2811, %v2838
    %v2841 = vmul.f32 %v2833, %v2839
    %v2842 = vmul.f32 %v2834, %v2839
    %v2844 = vlaneseq
    %v2845 = vshrl.u32 %v2844, 7
    %v2846 = vsub.s32 0, %v2845
    %v2847 = vrot.slane %v2812, %v2846
    %v2849 = vadd.f32 %v2841, %v2847
    %v2850 = vadd.f32 %v2842, %v2847
    %v2851 = vpack.c.bf16 %v2850, %v2849
    %v2852 = vld [vmem:[%s20] sm:$0xff]
    %v2853 = vld [vmem:[%s20 + $0x8] sm:$0xff]
    %v2854 = vld [vmem:[%s20 + $0x10] sm:$0xff]
    %v2855 = vld [vmem:[%s20 + $0x18] sm:$0xff]
    %v2856 = vld [vmem:[%s20 + $0x20] sm:$0xff]
    %v2857 = vld [vmem:[%s20 + $0x28] sm:$0xff]
    %v2858 = vld [vmem:[%s20 + $0x30] sm:$0xff]
    %v2859 = vld [vmem:[%s20 + $0x38] sm:$0xff]
    %v2860 = vld [vmem:[%s20 + $0x40] sm:$0xff]
    %v2861 = vld [vmem:[%s20 + $0x48] sm:$0xff]
    %v2862 = vld [vmem:[%s20 + $0x50] sm:$0xff]
    %v2863 = vld [vmem:[%s20 + $0x58] sm:$0xff]
    %v2864 = vld [vmem:[%s20 + $0x60] sm:$0xff]
    %v2865 = vld [vmem:[%s20 + $0x68] sm:$0xff]
    %v2866 = vld [vmem:[%s20 + $0x70] sm:$0xff]
    %v2867 = vld [vmem:[%s20 + $0x78] sm:$0xff]
    %v2868 = vld [vmem:[%s21] sm:$0x3]
    %v2870 = vlaneseq
    %v2871 = vshrl.u32 %v2870, 7
    %v2872 = vsub.s32 0, %v2871
    %v2873 = vrot.slane %v2868, %v2872
    %v2874 = vlaneseq
    %v2875 = vshrl.u32 %v2874, 7
    %v2876 = vsub.s32 1, %v2875
    %v2877 = vrot.slane %v2868, %v2876
    %v2896 = vunpack.c.l.b16 %v2852
    %v2897 = vunpack.c.h.b16 %v2852
    %v2898 = vunpack.c.l.b16 %v2853
    %v2899 = vunpack.c.h.b16 %v2853
    %v2900 = vunpack.c.l.b16 %v2854
    %v2901 = vunpack.c.h.b16 %v2854
    %v2902 = vunpack.c.l.b16 %v2855
    %v2903 = vunpack.c.h.b16 %v2855
    %v2904 = vunpack.c.l.b16 %v2856
    %v2905 = vunpack.c.h.b16 %v2856
    %v2906 = vunpack.c.l.b16 %v2857
    %v2907 = vunpack.c.h.b16 %v2857
    %v2908 = vunpack.c.l.b16 %v2858
    %v2909 = vunpack.c.h.b16 %v2858
    %v2910 = vunpack.c.l.b16 %v2859
    %v2911 = vunpack.c.h.b16 %v2859
    %v2912 = vunpack.c.l.b16 %v2860
    %v2913 = vunpack.c.h.b16 %v2860
    %v2914 = vunpack.c.l.b16 %v2861
    %v2915 = vunpack.c.h.b16 %v2861
    %v2916 = vunpack.c.l.b16 %v2862
    %v2917 = vunpack.c.h.b16 %v2862
    %v2918 = vunpack.c.l.b16 %v2863
    %v2919 = vunpack.c.h.b16 %v2863
    %v2920 = vunpack.c.l.b16 %v2864
    %v2921 = vunpack.c.h.b16 %v2864
    %v2922 = vunpack.c.l.b16 %v2865
    %v2923 = vunpack.c.h.b16 %v2865
    %v2924 = vunpack.c.l.b16 %v2866
    %v2925 = vunpack.c.h.b16 %v2866
    %v2926 = vunpack.c.l.b16 %v2867
    %v2927 = vunpack.c.h.b16 %v2867
    %v2928 = vpack.c.b16 %v2898, %v2896
    %v2929 = vpack.c.b16 %v2899, %v2897
    %v2930 = vpack.c.b16 %v2902, %v2900
    %v2931 = vpack.c.b16 %v2903, %v2901
    %v2932 = vpack.c.b16 %v2906, %v2904
    %v2933 = vpack.c.b16 %v2907, %v2905
    %v2934 = vpack.c.b16 %v2910, %v2908
    %v2935 = vpack.c.b16 %v2911, %v2909
    %v2936 = vpack.c.b16 %v2914, %v2912
    %v2937 = vpack.c.b16 %v2915, %v2913
    %v2938 = vpack.c.b16 %v2918, %v2916
    %v2939 = vpack.c.b16 %v2919, %v2917
    %v2940 = vpack.c.b16 %v2922, %v2920
    %v2941 = vpack.c.b16 %v2923, %v2921
    %v2942 = vpack.c.b16 %v2926, %v2924
    %v2943 = vpack.c.b16 %v2927, %v2925
    %2960 = vmatprep.subr.bf16.mxu0 %v2929
    %2961 = vmatpush1.bf16.msra.mxu0 %v2928
    %2962 = vmatprep.subr.bf16.mxu0 %v2931
    %2963 = vmatpush1.bf16.msra.mxu0 %v2930
    %2964 = vmatprep.subr.bf16.mxu0 %v2933
    %2965 = vmatpush1.bf16.msra.mxu0 %v2932
    %2966 = vmatprep.subr.bf16.mxu0 %v2935
    %2967 = vmatpush1.bf16.msra.mxu0 %v2934
    %2968 = vmatprep.subr.bf16.mxu0 %v2937
    %2969 = vmatpush1.bf16.msra.mxu0 %v2936
    %2970 = vmatprep.subr.bf16.mxu0 %v2939
    %2971 = vmatpush1.bf16.msra.mxu0 %v2938
    %2972 = vmatprep.subr.bf16.mxu0 %v2941
    %2973 = vmatpush1.bf16.msra.mxu0 %v2940
    %2974 = vmatprep.subr.bf16.mxu0 %v2943
    %2975 = vmatpush1.bf16.msra.mxu0 %v2942
    %2976 = vmatprep.subr.bf16.mxu0 0
    %2977 = vmatpush1.bf16.msra.mxu0 0
    %2978 = vmatprep.subr.bf16.mxu0 0
    %2979 = vmatpush1.bf16.msra.mxu0 0
    %2980 = vmatprep.subr.bf16.mxu0 0
    %2981 = vmatpush1.bf16.msra.mxu0 0
    %2982 = vmatprep.subr.bf16.mxu0 0
    %2983 = vmatpush1.bf16.msra.mxu0 0
    %2984 = vmatprep.subr.bf16.mxu0 0
    %2985 = vmatpush1.bf16.msra.mxu0 0
    %2986 = vmatprep.subr.bf16.mxu0 0
    %2987 = vmatpush1.bf16.msra.mxu0 0
    %2988 = vmatprep.subr.bf16.mxu0 0
    %2989 = vmatpush1.bf16.msra.mxu0 0
    %2990 = vmatprep.subr.bf16.mxu0 0
    %2991 = vmatpush1.bf16.msra.mxu0 0
    %2992 = vmatprep.mubr.bf16.mxu0 0
    %2993 = vmatmul.mubr.bf16.gmra.mrb[0].mxu0 %v2851
    %v2994 = vpop.f32.mrb[0].mxu0
    %v2995 = vadd.f32 %v2873, %v2994
    %v2996 = vpop.f32.mrb[0].mxu0
    %v2997 = vadd.f32 %v2877, %v2996
    %v2998 = vpop.f32.mrb[0].mxu0
    %v2999 = vadd.f32 %v2873, %v2998
    %v3000 = vpop.f32.mrb[0].mxu0
    %v3001 = vadd.f32 %v2877, %v3000
    %3002 = vdwg.mxu0
    %v3003 = vmax.f32 %v2995, 0.0
    %v3004 = vmax.f32 %v2997, 0.0
    %v3005 = vmax.f32 %v2999, 0.0
    %v3006 = vmax.f32 %v3001, 0.0
    %v3007 = vpack.c.bf16 %v3005, %v3003
    %v3008 = vpack.c.bf16 %v3006, %v3004
    %v3009 = vld [vmem:[%s22] sm:$0xf]
    %v3010 = vld [vmem:[%s22 + $0x4] sm:$0xf]
    %v3011 = vld [vmem:[%s22 + $0x8] sm:$0xf]
    %v3012 = vld [vmem:[%s22 + $0xc] sm:$0xf]
    %v3013 = vld [vmem:[%s22 + $0x10] sm:$0xf]
    %v3014 = vld [vmem:[%s22 + $0x14] sm:$0xf]
    %v3015 = vld [vmem:[%s22 + $0x18] sm:$0xf]
    %v3016 = vld [vmem:[%s22 + $0x1c] sm:$0xf]
    %v3017 = vld [vmem:[%s22 + $0x20] sm:$0xf]
    %v3018 = vld [vmem:[%s22 + $0x24] sm:$0xf]
    %v3019 = vld [vmem:[%s22 + $0x28] sm:$0xf]
    %v3020 = vld [vmem:[%s22 + $0x2c] sm:$0xf]
    %v3021 = vld [vmem:[%s22 + $0x30] sm:$0xf]
    %v3022 = vld [vmem:[%s22 + $0x34] sm:$0xf]
    %v3023 = vld [vmem:[%s22 + $0x38] sm:$0xf]
    %v3024 = vld [vmem:[%s22 + $0x3c] sm:$0xf]
    %v3025 = vld [vmem:[%s22 + $0x40] sm:$0xf]
    %v3026 = vld [vmem:[%s22 + $0x44] sm:$0xf]
    %v3027 = vld [vmem:[%s22 + $0x48] sm:$0xf]
    %v3028 = vld [vmem:[%s22 + $0x4c] sm:$0xf]
    %v3029 = vld [vmem:[%s22 + $0x50] sm:$0xf]
    %v3030 = vld [vmem:[%s22 + $0x54] sm:$0xf]
    %v3031 = vld [vmem:[%s22 + $0x58] sm:$0xf]
    %v3032 = vld [vmem:[%s22 + $0x5c] sm:$0xf]
    %v3033 = vld [vmem:[%s22 + $0x60] sm:$0xf]
    %v3034 = vld [vmem:[%s22 + $0x64] sm:$0xf]
    %v3035 = vld [vmem:[%s22 + $0x68] sm:$0xf]
    %v3036 = vld [vmem:[%s22 + $0x6c] sm:$0xf]
    %v3037 = vld [vmem:[%s22 + $0x70] sm:$0xf]
    %v3038 = vld [vmem:[%s22 + $0x74] sm:$0xf]
    %v3039 = vld [vmem:[%s22 + $0x78] sm:$0xf]
    %v3040 = vld [vmem:[%s22 + $0x7c] sm:$0xf]
    %v3073 = vunpack.c.l.b16 %v3009
    %v3074 = vunpack.c.l.b16 %v3010
    %v3075 = vunpack.c.l.b16 %v3011
    %v3076 = vunpack.c.l.b16 %v3012
    %v3077 = vunpack.c.l.b16 %v3013
    %v3078 = vunpack.c.l.b16 %v3014
    %v3079 = vunpack.c.l.b16 %v3015
    %v3080 = vunpack.c.l.b16 %v3016
    %v3081 = vunpack.c.l.b16 %v3017
    %v3082 = vunpack.c.l.b16 %v3018
    %v3083 = vunpack.c.l.b16 %v3019
    %v3084 = vunpack.c.l.b16 %v3020
    %v3085 = vunpack.c.l.b16 %v3021
    %v3086 = vunpack.c.l.b16 %v3022
    %v3087 = vunpack.c.l.b16 %v3023
    %v3088 = vunpack.c.l.b16 %v3024
    %v3089 = vunpack.c.l.b16 %v3025
    %v3090 = vunpack.c.l.b16 %v3026
    %v3091 = vunpack.c.l.b16 %v3027
    %v3092 = vunpack.c.l.b16 %v3028
    %v3093 = vunpack.c.l.b16 %v3029
    %v3094 = vunpack.c.l.b16 %v3030
    %v3095 = vunpack.c.l.b16 %v3031
    %v3096 = vunpack.c.l.b16 %v3032
    %v3097 = vunpack.c.l.b16 %v3033
    %v3098 = vunpack.c.l.b16 %v3034
    %v3099 = vunpack.c.l.b16 %v3035
    %v3100 = vunpack.c.l.b16 %v3036
    %v3101 = vunpack.c.l.b16 %v3037
    %v3102 = vunpack.c.l.b16 %v3038
    %v3103 = vunpack.c.l.b16 %v3039
    %v3104 = vunpack.c.l.b16 %v3040
    %v3105 = vpack.c.b16 %v3074, %v3073
    %v3106 = vpack.c.b16 %v3076, %v3075
    %v3107 = vpack.c.b16 %v3078, %v3077
    %v3108 = vpack.c.b16 %v3080, %v3079
    %v3109 = vpack.c.b16 %v3082, %v3081
    %v3110 = vpack.c.b16 %v3084, %v3083
    %v3111 = vpack.c.b16 %v3086, %v3085
    %v3112 = vpack.c.b16 %v3088, %v3087
    %v3113 = vpack.c.b16 %v3090, %v3089
    %v3114 = vpack.c.b16 %v3092, %v3091
    %v3115 = vpack.c.b16 %v3094, %v3093
    %v3116 = vpack.c.b16 %v3096, %v3095
    %v3117 = vpack.c.b16 %v3098, %v3097
    %v3118 = vpack.c.b16 %v3100, %v3099
    %v3119 = vpack.c.b16 %v3102, %v3101
    %v3120 = vpack.c.b16 %v3104, %v3103
    %3137 = vmatprep.subr.bf16.mxu0 0
    %3138 = vmatpush1.bf16.msra.mxu0 %v3105
    %3139 = vmatprep.subr.bf16.mxu0 0
    %3140 = vmatpush1.bf16.msra.mxu0 %v3106
    %3141 = vmatprep.subr.bf16.mxu0 0
    %3142 = vmatpush1.bf16.msra.mxu0 %v3107
    %3143 = vmatprep.subr.bf16.mxu0 0
    %3144 = vmatpush1.bf16.msra.mxu0 %v3108
    %3145 = vmatprep.subr.bf16.mxu0 0
    %3146 = vmatpush1.bf16.msra.mxu0 %v3109
    %3147 = vmatprep.subr.bf16.mxu0 0
    %3148 = vmatpush1.bf16.msra.mxu0 %v3110
    %3149 = vmatprep.subr.bf16.mxu0 0
    %3150 = vmatpush1.bf16.msra.mxu0 %v3111
    %3151 = vmatprep.subr.bf16.mxu0 0
    %3152 = vmatpush1.bf16.msra.mxu0 %v3112
    %3153 = vmatprep.subr.bf16.mxu0 0
    %3154 = vmatpush1.bf16.msra.mxu0 %v3113
    %3155 = vmatprep.subr.bf16.mxu0 0
    %3156 = vmatpush1.bf16.msra.mxu0 %v3114
    %3157 = vmatprep.subr.bf16.mxu0 0
    %3158 = vmatpush1.bf16.msra.mxu0 %v3115
    %3159 = vmatprep.subr.bf16.mxu0 0
    %3160 = vmatpush1.bf16.msra.mxu0 %v3116
    %3161 = vmatprep.subr.bf16.mxu0 0
    %3162 = vmatpush1.bf16.msra.mxu0 %v3117
    %3163 = vmatprep.subr.bf16.mxu0 0
    %3164 = vmatpush1.bf16.msra.mxu0 %v3118
    %3165 = vmatprep.subr.bf16.mxu0 0
    %3166 = vmatpush1.bf16.msra.mxu0 %v3119
    %3167 = vmatprep.subr.bf16.mxu0 0
    %3168 = vmatpush1.bf16.msra.mxu0 %v3120
    %3169 = vmatprep.mubr.bf16.mxu0 %v3008
    %3170 = vmatmul.mubr.bf16.gmra.mrb[0].mxu0 %v3007
    %v3171 = vpop.f32.mrb[0].mxu0
    %v3172 = vadd.f32 0.0, %v3171
    %v3173 = vpop.f32.mrb[0].mxu0
    %v3174 = vpop.f32.mrb[0].mxu0
    %v3175 = vadd.f32 0.0, %v3174
    %v3176 = vpop.f32.mrb[0].mxu0
    %3177 = vdwg.mxu0
    %v3178 = vadd.f32 %v2809, %v3172
    %v3179 = vadd.f32 %v2810, %v3175
    %v3180 = vld [vmem:[%s23] sm:$0x1]
    %v3182 = vlaneseq
    %v3183 = vshrl.u32 %v3182, 7
    %v3184 = vsub.s32 0, %v3183
    %v3185 = vrot.slane %v3180, %v3184
    %v3187 = vadd.f32 %v3178, %v3185
    %v3188 = vadd.f32 %v3179, %v3185
    %v3189 = vld [vmem:[%s24] sm:$0x1]
    %v3190 = vld [vmem:[%s25] sm:$0x1]
    %3191 = vadd.xlane.f32.xlu0 %v3187
    %v3192 = vpop.xlane.xlu0 %3191
    %3193 = vadd.xlane.f32.xlu0 %v3188
    %v3194 = vpop.xlane.xlu0 %3193
    %v3195 = vmul.f32 %v3192, %v109
    %v3196 = vmul.f32 %v3194, %v109
    %v3197 = vsub.f32 %v3187, %v3195
    %v3198 = vsub.f32 %v3188, %v3196
    %v3199 = vmul.f32 %v3197, %v3197
    %v3200 = vmul.f32 %v3198, %v3198
    %3201 = vadd.xlane.f32.xlu0 %v3199
    %v3202 = vpop.xlane.xlu0 %3201
    %3203 = vadd.xlane.f32.xlu0 %v3200
    %v3204 = vpop.xlane.xlu0 %3203
    %v3205 = vmul.f32 %v3202, %v109
    %v3206 = vmul.f32 %v3204, %v109
    %v3207 = vadd.f32 %v3205, 1e-05
    %v3208 = vadd.f32 %v3206, 1e-05
    %v3209 = vrsqrt.pop %v3207
    %v3210 = vrsqrt.pop %v3208
    %v3211 = vmul.f32 %v3197, %v3209
    %v3212 = vmul.f32 %v3198, %v3210
    %v3214 = vlaneseq
    %v3215 = vshrl.u32 %v3214, 7
    %v3216 = vsub.s32 0, %v3215
    %v3217 = vrot.slane %v3189, %v3216
    %v3219 = vmul.f32 %v3211, %v3217
    %v3220 = vmul.f32 %v3212, %v3217
    %v3222 = vlaneseq
    %v3223 = vshrl.u32 %v3222, 7
    %v3224 = vsub.s32 0, %v3223
    %v3225 = vrot.slane %v3190, %v3224
    %v3227 = vadd.f32 %v3219, %v3225
    %v3228 = vadd.f32 %v3220, %v3225
    %3229 = vst [vmem:[#allocation3] sm:$0xff] %v3227
    %3230 = vst [vmem:[#allocation3 + $0x8] sm:$0xff] %v3228
    // Predicated region
    $region106: #{decoder_forward.3} parent=1 // pred_check
      _
    $region107: #{decoder_forward.3} parent=1 // pred_check_branch
      %3232 = sbr.rel (0) target = $region109
    $region108: #{decoder_forward.3} parent=1 // pred_region
      %s3234 = ssub.s32 256, 256
      %3235 = vsyncadd [#allocation4], %s3234
      %s3236 = sshll.u32 [#allocation3], 4
      %s3237 = int_to_ptr.vmem [resolvable:$true] %s3236
      %3242 = dma.vmem_to_hbm [thread:$0]  %s3237, 256, %s26, [#allocation4], 128, 128, 8
    $region109: #{decoder_forward.3} parent=1 // pred_fallthru
      _
    // Predicated region
    $region110: #{decoder_forward.3} parent=1 // pred_check
      _
    $region111: #{decoder_forward.3} parent=1 // pred_check_branch
      %3244 = sbr.rel (0) target = $region113
    $region112: #{decoder_forward.3} parent=1 // pred_region
      %3245 = dma.done [#allocation4], 256
    $region113: #{decoder_forward.3} parent=1 // pred_fallthru
      _
    %3246 = vsyncpa [#allocation4], 1

// kernel: decoder_forward.2
$region0: #{decoder_forward.2}
  #allocation0 [shape = 'u32[]', space=smem, size = 0x4, offset = 0x4, fixed_abs, tag = 'smem constant byte address 0x4 - core index']
  #allocation1 [shape = 'u32[144,128]{1,0:T(1,128)}', space=vmem, size = 0x12000, scoped, tag = 'internal scratch']
  #allocation2 [shape = 'f32[16,128]{1,0:T(8,128)}', space=vmem, size = 0x2000, scoped, tag = 'scratch operand']
  %s0 = inlined_call_operand.vmem [shape: bf16[2,8,128], index: 0, kind: input, shape index: {}]
  %s1 = inlined_call_operand.vmem [shape: bf16[2,16,128], index: 1, kind: input, shape index: {}]
  %s2 = inlined_call_operand.vmem [shape: s8[2,8,8], index: 2, kind: input, shape index: {}]
  %s3 = inlined_call_operand.vmem [shape: s8[2,8,16], index: 3, kind: input, shape index: {}]
  %s4 = inlined_call_operand.hbm [shape: f32[1,128], index: 4, kind: input, shape index: {}]
  %s5 = inlined_call_operand.hbm [shape: f32[1,128], index: 5, kind: input, shape index: {}]
  %s6 = inlined_call_operand.hbm [shape: bf16[128,384], index: 6, kind: input, shape index: {}]
  %s7 = inlined_call_operand.hbm [shape: f32[1,384], index: 7, kind: input, shape index: {}]
  %s8 = inlined_call_operand.hbm [shape: bf16[128,128], index: 8, kind: input, shape index: {}]
  %s9 = inlined_call_operand.hbm [shape: f32[1,128], index: 9, kind: input, shape index: {}]
  %s10 = inlined_call_operand.hbm [shape: f32[1,128], index: 10, kind: input, shape index: {}]
  %s11 = inlined_call_operand.hbm [shape: f32[1,128], index: 11, kind: input, shape index: {}]
  %s12 = inlined_call_operand.hbm [shape: bf16[128,128], index: 12, kind: input, shape index: {}]
  %s13 = inlined_call_operand.hbm [shape: f32[1,128], index: 13, kind: input, shape index: {}]
  %s14 = inlined_call_operand.hbm [shape: bf16[128,256], index: 14, kind: input, shape index: {}]
  %s15 = inlined_call_operand.hbm [shape: f32[1,256], index: 15, kind: input, shape index: {}]
  %s16 = inlined_call_operand.hbm [shape: bf16[128,128], index: 16, kind: input, shape index: {}]
  %s17 = inlined_call_operand.hbm [shape: f32[1,128], index: 17, kind: input, shape index: {}]
  %s18 = inlined_call_operand.hbm [shape: f32[1,128], index: 18, kind: input, shape index: {}]
  %s19 = inlined_call_operand.hbm [shape: f32[1,128], index: 19, kind: input, shape index: {}]
  %s20 = inlined_call_operand.vmem [shape: bf16[128,256], index: 20, kind: input, shape index: {}]
  %s21 = inlined_call_operand.hbm [shape: f32[1,256], index: 21, kind: input, shape index: {}]
  %s22 = inlined_call_operand.hbm [shape: bf16[256,128], index: 22, kind: input, shape index: {}]
  %s23 = inlined_call_operand.hbm [shape: f32[1,128], index: 23, kind: input, shape index: {}]
  %s24 = inlined_call_operand.vmem [shape: f32[1,128], index: 24, kind: input, shape index: {}]
  %s25 = inlined_call_operand.vmem [shape: f32[1,128], index: 25, kind: input, shape index: {}]
  %s26 = inlined_call_operand.vmem [shape: bf16[2,8,128], index: 26, kind: output, shape index: {}]
  %s27 = sld [smem:[#allocation0]]
  $region190: #{decoder_forward.2} parent=0
    _
  %s29 = ssub.s32 1, %s27
  %s30 = scalar_select 0, %s29, %s27
  $region1: #{decoder_forward.2} parent=0
    #allocation3 [shape = 'u8[512]{0}', space=vmem, size = 0x400, scoped, tag = 'input window, operand 4, single buffered']
    #allocation4 [shape = 's32[1]{0}', space=sflag, size = 0x4, scoped, tag = 'scoped memory for decoder_forward.2']
    #allocation5 [shape = 'u8[512]{0}', space=vmem, size = 0x400, scoped, tag = 'input window, operand 5, single buffered']
    #allocation6 [shape = 's32[1]{0}', space=sflag, size = 0x4, scoped, tag = 'scoped memory for decoder_forward.2']
    #allocation7 [shape = 'u8[98304]{0}', space=vmem, size = 0x18000, scoped, tag = 'input window, operand 6, single buffered']
    #allocation8 [shape = 'u8[1536]{0}', space=vmem, size = 0x800, scoped, tag = 'input window, operand 7, single buffered']
    #allocation9 [shape = 's32[1]{0}', space=sflag, size = 0x4, scoped, tag = 'scoped memory for decoder_forward.2']
    #allocation10 [shape = 'u8[32768]{0}', space=vmem, size = 0x8000, scoped, tag = 'input window, operand 8, single buffered']
    #allocation11 [shape = 'u8[512]{0}', space=vmem, size = 0x400, scoped, tag = 'input window, operand 9, single buffered']
    #allocation12 [shape = 's32[1]{0}', space=sflag, size = 0x4, scoped, tag = 'scoped memory for decoder_forward.2']
    #allocation13 [shape = 'u8[512]{0}', space=vmem, size = 0x400, scoped, tag = 'input window, operand 10, single buffered']
    #allocation14 [shape = 'u8[512]{0}', space=vmem, size = 0x400, scoped, tag = 'input window, operand 11, single buffered']
    #allocation15 [shape = 's32[1]{0}', space=sflag, size = 0x4, scoped, tag = 'scoped memory for decoder_forward.2']
    #allocation16 [shape = 'u8[32768]{0}', space=vmem, size = 0x8000, scoped, tag = 'input window, operand 12, single buffered']
    #allocation17 [shape = 'u8[512]{0}', space=vmem, size = 0x400, scoped, tag = 'input window, operand 13, single buffered']
    #allocation18 [shape = 's32[1]{0}', space=sflag, size = 0x4, scoped, tag = 'scoped memory for decoder_forward.2']
    #allocation19 [shape = 'u8[65536]{0}', space=vmem, size = 0x10000, scoped, tag = 'input window, operand 14, single buffered']
    #allocation20 [shape = 'u8[1024]{0}', space=vmem, size = 0x400, scoped, tag = 'input window, operand 15, single buffered']
    #allocation21 [shape = 's32[1]{0}', space=sflag, size = 0x4, scoped, tag = 'scoped memory for decoder_forward.2']
    #allocation22 [shape = 'u8[32768]{0}', space=vmem, size = 0x8000, scoped, tag = 'input window, operand 16, single buffered']
    #allocation23 [shape = 'u8[512]{0}', space=vmem, size = 0x400, scoped, tag = 'input window, operand 17, single buffered']
    #allocation24 [shape = 's32[1]{0}', space=sflag, size = 0x4, scoped, tag = 'scoped memory for decoder_forward.2']
    #allocation25 [shape = 'u8[512]{0}', space=vmem, size = 0x400, scoped, tag = 'input window, operand 18, single buffered']
    #allocation26 [shape = 'u8[512]{0}', space=vmem, size = 0x400, scoped, tag = 'input window, operand 19, single buffered']
    #allocation27 [shape = 's32[1]{0}', space=sflag, size = 0x4, scoped, tag = 'scoped memory for decoder_forward.2']
    #allocation28 [shape = 'u8[1024]{0}', space=vmem, size = 0x400, scoped, tag = 'input window, operand 21, single buffered']
    #allocation29 [shape = 'u8[65536]{0}', space=vmem, size = 0x10000, scoped, tag = 'input window, operand 22, single buffered']
    #allocation30 [shape = 's32[1]{0}', space=sflag, size = 0x4, scoped, tag = 'scoped memory for decoder_forward.2']
    #allocation31 [shape = 'u8[512]{0}', space=vmem, size = 0x400, scoped, tag = 'input window, operand 23, single buffered']
    %31 = vsyncpa [#allocation4], 0
    %32 = vsyncpa [#allocation6], 0
    %33 = vsyncpa [#allocation9], 0
    %34 = vsyncpa [#allocation12], 0
    %35 = vsyncpa [#allocation15], 0
    %36 = vsyncpa [#allocation18], 0
    %37 = vsyncpa [#allocation21], 0
    %38 = vsyncpa [#allocation24], 0
    %39 = vsyncpa [#allocation27], 0
    %40 = vsyncpa [#allocation30], 0
    // Predicated region
    $region2: #{decoder_forward.2} parent=1 // pred_check
      _
    $region3: #{decoder_forward.2} parent=1 // pred_check_branch
      %42 = sbr.rel (0) target = $region5
    $region4: #{decoder_forward.2} parent=1 // pred_region
      _
    $region5: #{decoder_forward.2} parent=1 // pred_fallthru
      _
    // Predicated region
    $region6: #{decoder_forward.2} parent=1 // pred_check
      _
    $region7: #{decoder_forward.2} parent=1 // pred_check_branch
      %44 = sbr.rel (0) target = $region9
    $region8: #{decoder_forward.2} parent=1 // pred_region
      _
    $region9: #{decoder_forward.2} parent=1 // pred_fallthru
      _
    // Predicated region
    $region10: #{decoder_forward.2} parent=1 // pred_check
      _
    $region11: #{decoder_forward.2} parent=1 // pred_check_branch
      %46 = sbr.rel (0) target = $region13
    $region12: #{decoder_forward.2} parent=1 // pred_region
      _
    $region13: #{decoder_forward.2} parent=1 // pred_fallthru
      _
    // Predicated region
    $region14: #{decoder_forward.2} parent=1 // pred_check
      _
    $region15: #{decoder_forward.2} parent=1 // pred_check_branch
      %48 = sbr.rel (0) target = $region17
    $region16: #{decoder_forward.2} parent=1 // pred_region
      _
    $region17: #{decoder_forward.2} parent=1 // pred_fallthru
      _
    // Predicated region
    $region18: #{decoder_forward.2} parent=1 // pred_check
      _
    $region19: #{decoder_forward.2} parent=1 // pred_check_branch
      %50 = sbr.rel (0) target = $region21
    $region20: #{decoder_forward.2} parent=1 // pred_region
      %s52 = ssub.s32 16, 16
      %53 = vsyncadd [#allocation4], %s52
      %s55 = sshll.u32 [#allocation3], 4
      %s56 = int_to_ptr.vmem [resolvable:$true] %s55
      %58 = dma.hbm_to_vmem [thread:$0]  %s4, 16, %s56, [#allocation4]
    $region21: #{decoder_forward.2} parent=1 // pred_fallthru
      _
    // Predicated region
    $region22: #{decoder_forward.2} parent=1 // pred_check
      _
    $region23: #{decoder_forward.2} parent=1 // pred_check_branch
      %60 = sbr.rel (0) target = $region25
    $region24: #{decoder_forward.2} parent=1 // pred_region
      %s62 = ssub.s32 16, 16
      %63 = vsyncadd [#allocation6], %s62
      %s65 = sshll.u32 [#allocation5], 4
      %s66 = int_to_ptr.vmem [resolvable:$true] %s65
      %68 = dma.hbm_to_vmem [thread:$0]  %s5, 16, %s66, [#allocation6]
    $region25: #{decoder_forward.2} parent=1 // pred_fallthru
      _
    // Predicated region
    $region26: #{decoder_forward.2} parent=1 // pred_check
      _
    $region27: #{decoder_forward.2} parent=1 // pred_check_branch
      %70 = sbr.rel (0) target = $region29
    $region28: #{decoder_forward.2} parent=1 // pred_region
      %s72 = ssub.s32 3072, 3072
      %73 = vsyncadd [#allocation6], %s72
      %s74 = sshll.u32 [#allocation7], 4
      %s75 = int_to_ptr.vmem [resolvable:$true] %s74
      %80 = dma.hbm_to_vmem [thread:$0]  %s6, 3072, %s75, [#allocation6], 192, 192, 12
    $region29: #{decoder_forward.2} parent=1 // pred_fallthru
      _
    // Predicated region
    $region30: #{decoder_forward.2} parent=1 // pred_check
      _
    $region31: #{decoder_forward.2} parent=1 // pred_check_branch
      %82 = sbr.rel (0) target = $region33
    $region32: #{decoder_forward.2} parent=1 // pred_region
      %s84 = ssub.s32 48, 48
      %85 = vsyncadd [#allocation9], %s84
      %s87 = sshll.u32 [#allocation8], 4
      %s88 = int_to_ptr.vmem [resolvable:$true] %s87
      %90 = dma.hbm_to_vmem [thread:$0]  %s7, 48, %s88, [#allocation9]
    $region33: #{decoder_forward.2} parent=1 // pred_fallthru
      _
    // Predicated region
    $region34: #{decoder_forward.2} parent=1 // pred_check
      _
    $region35: #{decoder_forward.2} parent=1 // pred_check_branch
      %92 = sbr.rel (0) target = $region37
    $region36: #{decoder_forward.2} parent=1 // pred_region
      %s94 = ssub.s32 1024, 1024
      %95 = vsyncadd [#allocation9], %s94
      %s96 = sshll.u32 [#allocation10], 4
      %s97 = int_to_ptr.vmem [resolvable:$true] %s96
      %102 = dma.hbm_to_vmem [thread:$0]  %s8, 1024, %s97, [#allocation9], 64, 64, 4
    $region37: #{decoder_forward.2} parent=1 // pred_fallthru
      _
    // Predicated region
    $region38: #{decoder_forward.2} parent=1 // pred_check
      _
    $region39: #{decoder_forward.2} parent=1 // pred_check_branch
      %104 = sbr.rel (0) target = $region41
    $region40: #{decoder_forward.2} parent=1 // pred_region
      %s106 = ssub.s32 16, 16
      %107 = vsyncadd [#allocation12], %s106
      %s109 = sshll.u32 [#allocation11], 4
      %s110 = int_to_ptr.vmem [resolvable:$true] %s109
      %112 = dma.hbm_to_vmem [thread:$0]  %s9, 16, %s110, [#allocation12]
    $region41: #{decoder_forward.2} parent=1 // pred_fallthru
      _
    // Predicated region
    $region42: #{decoder_forward.2} parent=1 // pred_check
      _
    $region43: #{decoder_forward.2} parent=1 // pred_check_branch
      %114 = sbr.rel (0) target = $region45
    $region44: #{decoder_forward.2} parent=1 // pred_region
      %s116 = ssub.s32 16, 16
      %117 = vsyncadd [#allocation12], %s116
      %s119 = sshll.u32 [#allocation13], 4
      %s120 = int_to_ptr.vmem [resolvable:$true] %s119
      %122 = dma.hbm_to_vmem [thread:$0]  %s10, 16, %s120, [#allocation12]
    $region45: #{decoder_forward.2} parent=1 // pred_fallthru
      _
    // Predicated region
    $region46: #{decoder_forward.2} parent=1 // pred_check
      _
    $region47: #{decoder_forward.2} parent=1 // pred_check_branch
      %124 = sbr.rel (0) target = $region49
    $region48: #{decoder_forward.2} parent=1 // pred_region
      %s126 = ssub.s32 16, 16
      %127 = vsyncadd [#allocation15], %s126
      %s129 = sshll.u32 [#allocation14], 4
      %s130 = int_to_ptr.vmem [resolvable:$true] %s129
      %132 = dma.hbm_to_vmem [thread:$0]  %s11, 16, %s130, [#allocation15]
    $region49: #{decoder_forward.2} parent=1 // pred_fallthru
      _
    // Predicated region
    $region50: #{decoder_forward.2} parent=1 // pred_check
      _
    $region51: #{decoder_forward.2} parent=1 // pred_check_branch
      %134 = sbr.rel (0) target = $region53
    $region52: #{decoder_forward.2} parent=1 // pred_region
      %s136 = ssub.s32 1024, 1024
      %137 = vsyncadd [#allocation15], %s136
      %s138 = sshll.u32 [#allocation16], 4
      %s139 = int_to_ptr.vmem [resolvable:$true] %s138
      %144 = dma.hbm_to_vmem [thread:$0]  %s12, 1024, %s139, [#allocation15], 64, 64, 4
    $region53: #{decoder_forward.2} parent=1 // pred_fallthru
      _
    // Predicated region
    $region54: #{decoder_forward.2} parent=1 // pred_check
      _
    $region55: #{decoder_forward.2} parent=1 // pred_check_branch
      %146 = sbr.rel (0) target = $region57
    $region56: #{decoder_forward.2} parent=1 // pred_region
      %s148 = ssub.s32 16, 16
      %149 = vsyncadd [#allocation18], %s148
      %s151 = sshll.u32 [#allocation17], 4
      %s152 = int_to_ptr.vmem [resolvable:$true] %s151
      %154 = dma.hbm_to_vmem [thread:$0]  %s13, 16, %s152, [#allocation18]
    $region57: #{decoder_forward.2} parent=1 // pred_fallthru
      _
    // Predicated region
    $region58: #{decoder_forward.2} parent=1 // pred_check
      _
    $region59: #{decoder_forward.2} parent=1 // pred_check_branch
      %156 = sbr.rel (0) target = $region61
    $region60: #{decoder_forward.2} parent=1 // pred_region
      %s158 = ssub.s32 2048, 2048
      %159 = vsyncadd [#allocation18], %s158
      %s160 = sshll.u32 [#allocation19], 4
      %s161 = int_to_ptr.vmem [resolvable:$true] %s160
      %166 = dma.hbm_to_vmem [thread:$0]  %s14, 2048, %s161, [#allocation18], 128, 128, 8
    $region61: #{decoder_forward.2} parent=1 // pred_fallthru
      _
    // Predicated region
    $region62: #{decoder_forward.2} parent=1 // pred_check
      _
    $region63: #{decoder_forward.2} parent=1 // pred_check_branch
      %168 = sbr.rel (0) target = $region65
    $region64: #{decoder_forward.2} parent=1 // pred_region
      %s170 = ssub.s32 32, 32
      %171 = vsyncadd [#allocation21], %s170
      %s173 = sshll.u32 [#allocation20], 4
      %s174 = int_to_ptr.vmem [resolvable:$true] %s173
      %176 = dma.hbm_to_vmem [thread:$0]  %s15, 32, %s174, [#allocation21]
    $region65: #{decoder_forward.2} parent=1 // pred_fallthru
      _
    // Predicated region
    $region66: #{decoder_forward.2} parent=1 // pred_check
      _
    $region67: #{decoder_forward.2} parent=1 // pred_check_branch
      %178 = sbr.rel (0) target = $region69
    $region68: #{decoder_forward.2} parent=1 // pred_region
      %s180 = ssub.s32 1024, 1024
      %181 = vsyncadd [#allocation21], %s180
      %s182 = sshll.u32 [#allocation22], 4
      %s183 = int_to_ptr.vmem [resolvable:$true] %s182
      %188 = dma.hbm_to_vmem [thread:$0]  %s16, 1024, %s183, [#allocation21], 64, 64, 4
    $region69: #{decoder_forward.2} parent=1 // pred_fallthru
      _
    // Predicated region
    $region70: #{decoder_forward.2} parent=1 // pred_check
      _
    $region71: #{decoder_forward.2} parent=1 // pred_check_branch
      %190 = sbr.rel (0) target = $region73
    $region72: #{decoder_forward.2} parent=1 // pred_region
      %s192 = ssub.s32 16, 16
      %193 = vsyncadd [#allocation24], %s192
      %s195 = sshll.u32 [#allocation23], 4
      %s196 = int_to_ptr.vmem [resolvable:$true] %s195
      %198 = dma.hbm_to_vmem [thread:$0]  %s17, 16, %s196, [#allocation24]
    $region73: #{decoder_forward.2} parent=1 // pred_fallthru
      _
    // Predicated region
    $region74: #{decoder_forward.2} parent=1 // pred_check
      _
    $region75: #{decoder_forward.2} parent=1 // pred_check_branch
      %200 = sbr.rel (0) target = $region77
    $region76: #{decoder_forward.2} parent=1 // pred_region
      %s202 = ssub.s32 16, 16
      %203 = vsyncadd [#allocation24], %s202
      %s205 = sshll.u32 [#allocation25], 4
      %s206 = int_to_ptr.vmem [resolvable:$true] %s205
      %208 = dma.hbm_to_vmem [thread:$0]  %s18, 16, %s206, [#allocation24]
    $region77: #{decoder_forward.2} parent=1 // pred_fallthru
      _
    // Predicated region
    $region78: #{decoder_forward.2} parent=1 // pred_check
      _
    $region79: #{decoder_forward.2} parent=1 // pred_check_branch
      %210 = sbr.rel (0) target = $region81
    $region80: #{decoder_forward.2} parent=1 // pred_region
      %s212 = ssub.s32 16, 16
      %213 = vsyncadd [#allocation27], %s212
      %s215 = sshll.u32 [#allocation26], 4
      %s216 = int_to_ptr.vmem [resolvable:$true] %s215
      %218 = dma.hbm_to_vmem [thread:$0]  %s19, 16, %s216, [#allocation27]
    $region81: #{decoder_forward.2} parent=1 // pred_fallthru
      _
    // Predicated region
    $region82: #{decoder_forward.2} parent=1 // pred_check
      _
    $region83: #{decoder_forward.2} parent=1 // pred_check_branch
      %220 = sbr.rel (0) target = $region85
    $region84: #{decoder_forward.2} parent=1 // pred_region
      _
    $region85: #{decoder_forward.2} parent=1 // pred_fallthru
      _
    // Predicated region
    $region86: #{decoder_forward.2} parent=1 // pred_check
      _
    $region87: #{decoder_forward.2} parent=1 // pred_check_branch
      %222 = sbr.rel (0) target = $region89
    $region88: #{decoder_forward.2} parent=1 // pred_region
      %s224 = ssub.s32 32, 32
      %225 = vsyncadd [#allocation27], %s224
      %s227 = sshll.u32 [#allocation28], 4
      %s228 = int_to_ptr.vmem [resolvable:$true] %s227
      %230 = dma.hbm_to_vmem [thread:$0]  %s21, 32, %s228, [#allocation27]
    $region89: #{decoder_forward.2} parent=1 // pred_fallthru
      _
    // Predicated region
    $region90: #{decoder_forward.2} parent=1 // pred_check
      _
    $region91: #{decoder_forward.2} parent=1 // pred_check_branch
      %232 = sbr.rel (0) target = $region93
    $region92: #{decoder_forward.2} parent=1 // pred_region
      %s234 = ssub.s32 2048, 2048
      %235 = vsyncadd [#allocation30], %s234
      %s236 = sshll.u32 [#allocation29], 4
      %s237 = int_to_ptr.vmem [resolvable:$true] %s236
      %242 = dma.hbm_to_vmem [thread:$0]  %s22, 2048, %s237, [#allocation30], 64, 64, 4
    $region93: #{decoder_forward.2} parent=1 // pred_fallthru
      _
    // Predicated region
    $region94: #{decoder_forward.2} parent=1 // pred_check
      _
    $region95: #{decoder_forward.2} parent=1 // pred_check_branch
      %244 = sbr.rel (0) target = $region97
    $region96: #{decoder_forward.2} parent=1 // pred_region
      %s246 = ssub.s32 16, 16
      %247 = vsyncadd [#allocation30], %s246
      %s249 = sshll.u32 [#allocation31], 4
      %s250 = int_to_ptr.vmem [resolvable:$true] %s249
      %252 = dma.hbm_to_vmem [thread:$0]  %s23, 16, %s250, [#allocation30]
    $region97: #{decoder_forward.2} parent=1 // pred_fallthru
      _
    // Predicated region
    $region98: #{decoder_forward.2} parent=1 // pred_check
      _
    $region99: #{decoder_forward.2} parent=1 // pred_check_branch
      %254 = sbr.rel (0) target = $region101
    $region100: #{decoder_forward.2} parent=1 // pred_region
      _
    $region101: #{decoder_forward.2} parent=1 // pred_fallthru
      _
    // Predicated region
    $region102: #{decoder_forward.2} parent=1 // pred_check
      _
    $region103: #{decoder_forward.2} parent=1 // pred_check_branch
      %256 = sbr.rel (0) target = $region105
    $region104: #{decoder_forward.2} parent=1 // pred_region
      _
    $region105: #{decoder_forward.2} parent=1 // pred_fallthru
      _
    // Predicated region
    $region106: #{decoder_forward.2} parent=1 // pred_check
      _
    $region107: #{decoder_forward.2} parent=1 // pred_check_branch
      %258 = sbr.rel (0) target = $region109
    $region108: #{decoder_forward.2} parent=1 // pred_region
      %259 = dma.done [#allocation4], 16
    $region109: #{decoder_forward.2} parent=1 // pred_fallthru
      _
    // Predicated region
    $region110: #{decoder_forward.2} parent=1 // pred_check
      _
    $region111: #{decoder_forward.2} parent=1 // pred_check_branch
      %261 = sbr.rel (0) target = $region113
    $region112: #{decoder_forward.2} parent=1 // pred_region
      %262 = dma.done [#allocation6], 16
    $region113: #{decoder_forward.2} parent=1 // pred_fallthru
      _
    // Predicated region
    $region114: #{decoder_forward.2} parent=1 // pred_check
      _
    $region115: #{decoder_forward.2} parent=1 // pred_check_branch
      %264 = sbr.rel (0) target = $region117
    $region116: #{decoder_forward.2} parent=1 // pred_region
      %265 = dma.done [#allocation6], 3072
    $region117: #{decoder_forward.2} parent=1 // pred_fallthru
      _
    // Predicated region
    $region118: #{decoder_forward.2} parent=1 // pred_check
      _
    $region119: #{decoder_forward.2} parent=1 // pred_check_branch
      %267 = sbr.rel (0) target = $region121
    $region120: #{decoder_forward.2} parent=1 // pred_region
      %268 = dma.done [#allocation9], 48
    $region121: #{decoder_forward.2} parent=1 // pred_fallthru
      _
    // Predicated region
    $region122: #{decoder_forward.2} parent=1 // pred_check
      _
    $region123: #{decoder_forward.2} parent=1 // pred_check_branch
      %270 = sbr.rel (0) target = $region125
    $region124: #{decoder_forward.2} parent=1 // pred_region
      %271 = dma.done [#allocation9], 1024
    $region125: #{decoder_forward.2} parent=1 // pred_fallthru
      _
    // Predicated region
    $region126: #{decoder_forward.2} parent=1 // pred_check
      _
    $region127: #{decoder_forward.2} parent=1 // pred_check_branch
      %273 = sbr.rel (0) target = $region129
    $region128: #{decoder_forward.2} parent=1 // pred_region
      %274 = dma.done [#allocation12], 16
    $region129: #{decoder_forward.2} parent=1 // pred_fallthru
      _
    // Predicated region
    $region130: #{decoder_forward.2} parent=1 // pred_check
      _
    $region131: #{decoder_forward.2} parent=1 // pred_check_branch
      %276 = sbr.rel (0) target = $region133
    $region132: #{decoder_forward.2} parent=1 // pred_region
      %277 = dma.done [#allocation12], 16
    $region133: #{decoder_forward.2} parent=1 // pred_fallthru
      _
    // Predicated region
    $region134: #{decoder_forward.2} parent=1 // pred_check
      _
    $region135: #{decoder_forward.2} parent=1 // pred_check_branch
      %279 = sbr.rel (0) target = $region137
    $region136: #{decoder_forward.2} parent=1 // pred_region
      %280 = dma.done [#allocation15], 16
    $region137: #{decoder_forward.2} parent=1 // pred_fallthru
      _
    // Predicated region
    $region138: #{decoder_forward.2} parent=1 // pred_check
      _
    $region139: #{decoder_forward.2} parent=1 // pred_check_branch
      %282 = sbr.rel (0) target = $region141
    $region140: #{decoder_forward.2} parent=1 // pred_region
      %283 = dma.done [#allocation15], 1024
    $region141: #{decoder_forward.2} parent=1 // pred_fallthru
      _
    // Predicated region
    $region142: #{decoder_forward.2} parent=1 // pred_check
      _
    $region143: #{decoder_forward.2} parent=1 // pred_check_branch
      %285 = sbr.rel (0) target = $region145
    $region144: #{decoder_forward.2} parent=1 // pred_region
      %286 = dma.done [#allocation18], 16
    $region145: #{decoder_forward.2} parent=1 // pred_fallthru
      _
    // Predicated region
    $region146: #{decoder_forward.2} parent=1 // pred_check
      _
    $region147: #{decoder_forward.2} parent=1 // pred_check_branch
      %288 = sbr.rel (0) target = $region149
    $region148: #{decoder_forward.2} parent=1 // pred_region
      %289 = dma.done [#allocation18], 2048
    $region149: #{decoder_forward.2} parent=1 // pred_fallthru
      _
    // Predicated region
    $region150: #{decoder_forward.2} parent=1 // pred_check
      _
    $region151: #{decoder_forward.2} parent=1 // pred_check_branch
      %291 = sbr.rel (0) target = $region153
    $region152: #{decoder_forward.2} parent=1 // pred_region
      %292 = dma.done [#allocation21], 32
    $region153: #{decoder_forward.2} parent=1 // pred_fallthru
      _
    // Predicated region
    $region154: #{decoder_forward.2} parent=1 // pred_check
      _
    $region155: #{decoder_forward.2} parent=1 // pred_check_branch
      %294 = sbr.rel (0) target = $region157
    $region156: #{decoder_forward.2} parent=1 // pred_region
      %295 = dma.done [#allocation21], 1024
    $region157: #{decoder_forward.2} parent=1 // pred_fallthru
      _
    // Predicated region
    $region158: #{decoder_forward.2} parent=1 // pred_check
      _
    $region159: #{decoder_forward.2} parent=1 // pred_check_branch
      %297 = sbr.rel (0) target = $region161
    $region160: #{decoder_forward.2} parent=1 // pred_region
      %298 = dma.done [#allocation24], 16
    $region161: #{decoder_forward.2} parent=1 // pred_fallthru
      _
    // Predicated region
    $region162: #{decoder_forward.2} parent=1 // pred_check
      _
    $region163: #{decoder_forward.2} parent=1 // pred_check_branch
      %300 = sbr.rel (0) target = $region165
    $region164: #{decoder_forward.2} parent=1 // pred_region
      %301 = dma.done [#allocation24], 16
    $region165: #{decoder_forward.2} parent=1 // pred_fallthru
      _
    // Predicated region
    $region166: #{decoder_forward.2} parent=1 // pred_check
      _
    $region167: #{decoder_forward.2} parent=1 // pred_check_branch
      %303 = sbr.rel (0) target = $region169
    $region168: #{decoder_forward.2} parent=1 // pred_region
      %304 = dma.done [#allocation27], 16
    $region169: #{decoder_forward.2} parent=1 // pred_fallthru
      _
    // Predicated region
    $region170: #{decoder_forward.2} parent=1 // pred_check
      _
    $region171: #{decoder_forward.2} parent=1 // pred_check_branch
      %306 = sbr.rel (0) target = $region173
    $region172: #{decoder_forward.2} parent=1 // pred_region
      %307 = dma.done [#allocation27], 32
    $region173: #{decoder_forward.2} parent=1 // pred_fallthru
      _
    // Predicated region
    $region174: #{decoder_forward.2} parent=1 // pred_check
      _
    $region175: #{decoder_forward.2} parent=1 // pred_check_branch
      %309 = sbr.rel (0) target = $region177
    $region176: #{decoder_forward.2} parent=1 // pred_region
      %310 = dma.done [#allocation30], 2048
    $region177: #{decoder_forward.2} parent=1 // pred_fallthru
      _
    // Predicated region
    $region178: #{decoder_forward.2} parent=1 // pred_check
      _
    $region179: #{decoder_forward.2} parent=1 // pred_check_branch
      %312 = sbr.rel (0) target = $region181
    $region180: #{decoder_forward.2} parent=1 // pred_region
      %313 = dma.done [#allocation30], 16
    $region181: #{decoder_forward.2} parent=1 // pred_fallthru
      _
    %v317 = vld [vmem:[%s0] sm:$0xf]
    %v318 = vld [vmem:[%s0 + $0x4] sm:$0xf]
    %v319 = vunpack.c.l.bf16 %v317
    %v320 = vunpack.c.l.bf16 %v318
    %v321 = vld [vmem:[%s1] sm:$0xf]
    %v322 = vld [vmem:[%s1 + $0x4] sm:$0xf]
    %v323 = vld [vmem:[%s1 + $0x8] sm:$0xf]
    %v324 = vld [vmem:[%s1 + $0xc] sm:$0xf]
    %v325 = vld [vmem:[%s2] sm:$0x3]
    %v326 = vld [vmem:[%s2 + $0x2] sm:$0x3]
    %vm327 = vnez %v325
    %vm328 = vnez %v326
    %v329 = vld [vmem:[%s3] sm:$0x3]
    %v330 = vld [vmem:[%s3 + $0x2] sm:$0x3]
    %vm331 = vnez %v329
    %vm332 = vnez %v330
    %v333 = vld [vmem:[#allocation3] sm:$0x1]
    %v334 = vld [vmem:[#allocation5] sm:$0x1]
    %335 = vadd.xlane.f32.xlu0 %v319
    %v336 = vpop.xlane.xlu0 %335
    %337 = vadd.xlane.f32.xlu0 %v320
    %v338 = vpop.xlane.xlu0 %337
    %v339 = vrcp.pop 128.0
    %v340 = vmul.f32 %v336, %v339
    %v341 = vmul.f32 %v338, %v339
    %v342 = vsub.f32 %v319, %v340
    %v343 = vsub.f32 %v320, %v341
    %v344 = vmul.f32 %v342, %v342
    %v345 = vmul.f32 %v343, %v343
    %346 = vadd.xlane.f32.xlu0 %v344
    %v347 = vpop.xlane.xlu0 %346
    %348 = vadd.xlane.f32.xlu0 %v345
    %v349 = vpop.xlane.xlu0 %348
    %v350 = vmul.f32 %v347, %v339
    %v351 = vmul.f32 %v349, %v339
    %v352 = vadd.f32 %v350, 1e-05
    %v353 = vadd.f32 %v351, 1e-05
    %v354 = vrsqrt.pop %v352
    %v355 = vrsqrt.pop %v353
    %v356 = vmul.f32 %v342, %v354
    %v357 = vmul.f32 %v343, %v355
    %v359 = vlaneseq
    %v360 = vshrl.u32 %v359, 7
    %v361 = vsub.s32 0, %v360
    %v362 = vrot.slane %v333, %v361
    %v364 = vmul.f32 %v356, %v362
    %v365 = vmul.f32 %v357, %v362
    %v367 = vlaneseq
    %v368 = vshrl.u32 %v367, 7
    %v369 = vsub.s32 0, %v368
    %v370 = vrot.slane %v334, %v369
    %v372 = vadd.f32 %v364, %v370
    %v373 = vadd.f32 %v365, %v370
    %v374 = vpack.c.bf16 %v373, %v372
    %v375 = vld [vmem:[#allocation7] sm:$0xff]
    %v376 = vld [vmem:[#allocation7 + $0x8] sm:$0xf]
    %v377 = vld [vmem:[#allocation7 + $0xc] sm:$0xff]
    %v378 = vld [vmem:[#allocation7 + $0x14] sm:$0xf]
    %v379 = vld [vmem:[#allocation7 + $0x18] sm:$0xff]
    %v380 = vld [vmem:[#allocation7 + $0x20] sm:$0xf]
    %v381 = vld [vmem:[#allocation7 + $0x24] sm:$0xff]
    %v382 = vld [vmem:[#allocation7 + $0x2c] sm:$0xf]
    %v383 = vld [vmem:[#allocation7 + $0x30] sm:$0xff]
    %v384 = vld [vmem:[#allocation7 + $0x38] sm:$0xf]
    %v385 = vld [vmem:[#allocation7 + $0x3c] sm:$0xff]
    %v386 = vld [vmem:[#allocation7 + $0x44] sm:$0xf]
    %v387 = vld [vmem:[#allocation7 + $0x48] sm:$0xff]
    %v388 = vld [vmem:[#allocation7 + $0x50] sm:$0xf]
    %v389 = vld [vmem:[#allocation7 + $0x54] sm:$0xff]
    %v390 = vld [vmem:[#allocation7 + $0x5c] sm:$0xf]
    %v391 = vld [vmem:[#allocation7 + $0x60] sm:$0xff]
    %v392 = vld [vmem:[#allocation7 + $0x68] sm:$0xf]
    %v393 = vld [vmem:[#allocation7 + $0x6c] sm:$0xff]
    %v394 = vld [vmem:[#allocation7 + $0x74] sm:$0xf]
    %v395 = vld [vmem:[#allocation7 + $0x78] sm:$0xff]
    %v396 = vld [vmem:[#allocation7 + $0x80] sm:$0xf]
    %v397 = vld [vmem:[#allocation7 + $0x84] sm:$0xff]
    %v398 = vld [vmem:[#allocation7 + $0x8c] sm:$0xf]
    %v399 = vld [vmem:[#allocation7 + $0x90] sm:$0xff]
    %v400 = vld [vmem:[#allocation7 + $0x98] sm:$0xf]
    %v401 = vld [vmem:[#allocation7 + $0x9c] sm:$0xff]
    %v402 = vld [vmem:[#allocation7 + $0xa4] sm:$0xf]
    %v403 = vld [vmem:[#allocation7 + $0xa8] sm:$0xff]
    %v404 = vld [vmem:[#allocation7 + $0xb0] sm:$0xf]
    %v405 = vld [vmem:[#allocation7 + $0xb4] sm:$0xff]
    %v406 = vld [vmem:[#allocation7 + $0xbc] sm:$0xf]
    %v407 = vld [vmem:[#allocation8] sm:$0x7]
    %v409 = vlaneseq
    %v410 = vshrl.u32 %v409, 7
    %v411 = vsub.s32 0, %v410
    %v412 = vrot.slane %v407, %v411
    %v413 = vlaneseq
    %v414 = vshrl.u32 %v413, 7
    %v415 = vsub.s32 1, %v414
    %v416 = vrot.slane %v407, %v415
    %v417 = vlaneseq
    %v418 = vshrl.u32 %v417, 7
    %v419 = vsub.s32 2, %v418
    %v420 = vrot.slane %v407, %v419
    %v456 = vunpack.c.l.b16 %v375
    %v457 = vunpack.c.h.b16 %v375
    %v458 = vunpack.c.l.b16 %v376
    %v459 = vunpack.c.l.b16 %v377
    %v460 = vunpack.c.h.b16 %v377
    %v461 = vunpack.c.l.b16 %v378
    %v462 = vunpack.c.l.b16 %v379
    %v463 = vunpack.c.h.b16 %v379
    %v464 = vunpack.c.l.b16 %v380
    %v465 = vunpack.c.l.b16 %v381
    %v466 = vunpack.c.h.b16 %v381
    %v467 = vunpack.c.l.b16 %v382
    %v468 = vunpack.c.l.b16 %v383
    %v469 = vunpack.c.h.b16 %v383
    %v470 = vunpack.c.l.b16 %v384
    %v471 = vunpack.c.l.b16 %v385
    %v472 = vunpack.c.h.b16 %v385
    %v473 = vunpack.c.l.b16 %v386
    %v474 = vunpack.c.l.b16 %v387
    %v475 = vunpack.c.h.b16 %v387
    %v476 = vunpack.c.l.b16 %v388
    %v477 = vunpack.c.l.b16 %v389
    %v478 = vunpack.c.h.b16 %v389
    %v479 = vunpack.c.l.b16 %v390
    %v480 = vunpack.c.l.b16 %v391
    %v481 = vunpack.c.h.b16 %v391
    %v482 = vunpack.c.l.b16 %v392
    %v483 = vunpack.c.l.b16 %v393
    %v484 = vunpack.c.h.b16 %v393
    %v485 = vunpack.c.l.b16 %v394
    %v486 = vunpack.c.l.b16 %v395
    %v487 = vunpack.c.h.b16 %v395
    %v488 = vunpack.c.l.b16 %v396
    %v489 = vunpack.c.l.b16 %v397
    %v490 = vunpack.c.h.b16 %v397
    %v491 = vunpack.c.l.b16 %v398
    %v492 = vunpack.c.l.b16 %v399
    %v493 = vunpack.c.h.b16 %v399
    %v494 = vunpack.c.l.b16 %v400
    %v495 = vunpack.c.l.b16 %v401
    %v496 = vunpack.c.h.b16 %v401
    %v497 = vunpack.c.l.b16 %v402
    %v498 = vunpack.c.l.b16 %v403
    %v499 = vunpack.c.h.b16 %v403
    %v500 = vunpack.c.l.b16 %v404
    %v501 = vunpack.c.l.b16 %v405
    %v502 = vunpack.c.h.b16 %v405
    %v503 = vunpack.c.l.b16 %v406
    %v504 = vpack.c.b16 %v459, %v456
    %v505 = vpack.c.b16 %v460, %v457
    %v506 = vpack.c.b16 %v461, %v458
    %v507 = vpack.c.b16 %v465, %v462
    %v508 = vpack.c.b16 %v466, %v463
    %v509 = vpack.c.b16 %v467, %v464
    %v510 = vpack.c.b16 %v471, %v468
    %v511 = vpack.c.b16 %v472, %v469
    %v512 = vpack.c.b16 %v473, %v470
    %v513 = vpack.c.b16 %v477, %v474
    %v514 = vpack.c.b16 %v478, %v475
    %v515 = vpack.c.b16 %v479, %v476
    %v516 = vpack.c.b16 %v483, %v480
    %v517 = vpack.c.b16 %v484, %v481
    %v518 = vpack.c.b16 %v485, %v482
    %v519 = vpack.c.b16 %v489, %v486
    %v520 = vpack.c.b16 %v490, %v487
    %v521 = vpack.c.b16 %v491, %v488
    %v522 = vpack.c.b16 %v495, %v492
    %v523 = vpack.c.b16 %v496, %v493
    %v524 = vpack.c.b16 %v497, %v494
    %v525 = vpack.c.b16 %v501, %v498
    %v526 = vpack.c.b16 %v502, %v499
    %v527 = vpack.c.b16 %v503, %v500
    %552 = vmatprep.subr.bf16.mxu0 %v505
    %553 = vmatpush1.bf16.msra.mxu0 %v504
    %554 = vmatprep.subr.bf16.mxu0 %v508
    %555 = vmatpush1.bf16.msra.mxu0 %v507
    %556 = vmatprep.subr.bf16.mxu0 %v511
    %557 = vmatpush1.bf16.msra.mxu0 %v510
    %558 = vmatprep.subr.bf16.mxu0 %v514
    %559 = vmatpush1.bf16.msra.mxu0 %v513
    %560 = vmatprep.subr.bf16.mxu0 %v517
    %561 = vmatpush1.bf16.msra.mxu0 %v516
    %562 = vmatprep.subr.bf16.mxu0 %v520
    %563 = vmatpush1.bf16.msra.mxu0 %v519
    %564 = vmatprep.subr.bf16.mxu0 %v523
    %565 = vmatpush1.bf16.msra.mxu0 %v522
    %566 = vmatprep.subr.bf16.mxu0 %v526
    %567 = vmatpush1.bf16.msra.mxu0 %v525
    %568 = vmatprep.subr.bf16.mxu0 0
    %569 = vmatpush1.bf16.msra.mxu0 0
    %570 = vmatprep.subr.bf16.mxu0 0
    %571 = vmatpush1.bf16.msra.mxu0 0
    %572 = vmatprep.subr.bf16.mxu0 0
    %573 = vmatpush1.bf16.msra.mxu0 0
    %574 = vmatprep.subr.bf16.mxu0 0
    %575 = vmatpush1.bf16.msra.mxu0 0
    %576 = vmatprep.subr.bf16.mxu0 0
    %577 = vmatpush1.bf16.msra.mxu0 0
    %578 = vmatprep.subr.bf16.mxu0 0
    %579 = vmatpush1.bf16.msra.mxu0 0
    %580 = vmatprep.subr.bf16.mxu0 0
    %581 = vmatpush1.bf16.msra.mxu0 0
    %582 = vmatprep.subr.bf16.mxu0 0
    %583 = vmatpush1.bf16.msra.mxu0 0
    %584 = vmatprep.mubr.bf16.mxu0 0
    %585 = vmatmul.mubr.bf16.gmra.mrb[0].mxu0 %v374
    %v586 = vpop.f32.mrb[0].mxu0
    %v587 = vadd.f32 %v412, %v586
    %v588 = vpop.f32.mrb[0].mxu0
    %v589 = vadd.f32 %v416, %v588
    %v590 = vpop.f32.mrb[0].mxu0
    %v591 = vadd.f32 %v412, %v590
    %v592 = vpop.f32.mrb[0].mxu0
    %v593 = vadd.f32 %v416, %v592
    %594 = vdwg.mxu0
    %595 = vmatprep.subr.bf16.mxu0 0
    %596 = vmatpush1.bf16.msra.mxu0 %v506
    %597 = vmatprep.subr.bf16.mxu0 0
    %598 = vmatpush1.bf16.msra.mxu0 %v509
    %599 = vmatprep.subr.bf16.mxu0 0
    %600 = vmatpush1.bf16.msra.mxu0 %v512
    %601 = vmatprep.subr.bf16.mxu0 0
    %602 = vmatpush1.bf16.msra.mxu0 %v515
    %603 = vmatprep.subr.bf16.mxu0 0
    %604 = vmatpush1.bf16.msra.mxu0 %v518
    %605 = vmatprep.subr.bf16.mxu0 0
    %606 = vmatpush1.bf16.msra.mxu0 %v521
    %607 = vmatprep.subr.bf16.mxu0 0
    %608 = vmatpush1.bf16.msra.mxu0 %v524
    %609 = vmatprep.subr.bf16.mxu0 0
    %610 = vmatpush1.bf16.msra.mxu0 %v527
    %611 = vmatprep.subr.bf16.mxu0 0
    %612 = vmatpush1.bf16.msra.mxu0 0
    %613 = vmatprep.subr.bf16.mxu0 0
    %614 = vmatpush1.bf16.msra.mxu0 0
    %615 = vmatprep.subr.bf16.mxu0 0
    %616 = vmatpush1.bf16.msra.mxu0 0
    %617 = vmatprep.subr.bf16.mxu0 0
    %618 = vmatpush1.bf16.msra.mxu0 0
    %619 = vmatprep.subr.bf16.mxu0 0
    %620 = vmatpush1.bf16.msra.mxu0 0
    %621 = vmatprep.subr.bf16.mxu0 0
    %622 = vmatpush1.bf16.msra.mxu0 0
    %623 = vmatprep.subr.bf16.mxu0 0
    %624 = vmatpush1.bf16.msra.mxu0 0
    %625 = vmatprep.subr.bf16.mxu0 0
    %626 = vmatpush1.bf16.msra.mxu0 0
    %627 = vmatprep.mubr.bf16.mxu0 0
    %628 = vmatmul.mubr.bf16.gmra.mrb[0].mxu0 %v374
    %v629 = vpop.f32.mrb[0].mxu0
    %v630 = vadd.f32 %v420, %v629
    %v631 = vpop.f32.mrb[0].mxu0
    %v632 = vpop.f32.mrb[0].mxu0
    %v633 = vadd.f32 %v420, %v632
    %v634 = vpop.f32.mrb[0].mxu0
    %635 = vdwg.mxu0
    %v636 = vmul.f32 %v587, 0.17677669
    %v637 = vmul.f32 %v591, 0.17677669
    %v638 = vpack.c.bf16 %v637, %v636
    %v639 = vpack.c.bf16 %v593, %v589
    %v640 = vpack.c.bf16 %v633, %v630
    %vm641 = vcmask 261120
    %v643 = vsel %vm641, %v638, 0
    %v646 = vsel %vm641, %v639, 0
    %648 = vmatprep.subr.bf16.mxu0 0
    %649 = vmatpush1.bf16.xpose.msra.mxu0 %v646
    %650 = vmatprep.subr.bf16.mxu0 0
    %651 = vmatpush1.bf16.xpose.msra.mxu0 0
    %652 = vmatprep.subr.bf16.mxu0 0
    %653 = vmatpush1.bf16.xpose.msra.mxu0 0
    %654 = vmatprep.subr.bf16.mxu0 0
    %655 = vmatpush1.bf16.xpose.msra.mxu0 0
    %656 = vmatprep.subr.bf16.mxu0 0
    %657 = vmatpush1.bf16.xpose.msra.mxu0 0
    %658 = vmatprep.subr.bf16.mxu0 0
    %659 = vmatpush1.bf16.xpose.msra.mxu0 0
    %660 = vmatprep.subr.bf16.mxu0 0
    %661 = vmatpush1.bf16.xpose.msra.mxu0 0
    %662 = vmatprep.subr.bf16.mxu0 0
    %663 = vmatpush1.bf16.xpose.msra.mxu0 0
    %664 = vmatprep.subr.bf16.mxu0 0
    %665 = vmatpush1.bf16.xpose.msra.mxu0 0
    %666 = vmatprep.subr.bf16.mxu0 0
    %667 = vmatpush1.bf16.xpose.msra.mxu0 0
    %668 = vmatprep.subr.bf16.mxu0 0
    %669 = vmatpush1.bf16.xpose.msra.mxu0 0
    %670 = vmatprep.subr.bf16.mxu0 0
    %671 = vmatpush1.bf16.xpose.msra.mxu0 0
    %672 = vmatprep.subr.bf16.mxu0 0
    %673 = vmatpush1.bf16.xpose.msra.mxu0 0
    %674 = vmatprep.subr.bf16.mxu0 0
    %675 = vmatpush1.bf16.xpose.msra.mxu0 0
    %676 = vmatprep.subr.bf16.mxu0 0
    %677 = vmatpush1.bf16.xpose.msra.mxu0 0
    %678 = vmatprep.subr.bf16.mxu0 0
    %679 = vmatpush1.bf16.xpose.msra.mxu0 0
    %680 = vmatprep.mubr.bf16.mxu0 0
    %681 = vmatmul.mubr.bf16.gmra.mrb[0].mxu0 %v643
    %v682 = vpop.f32.mrb[0].mxu0
    %v683 = vadd.f32 0.0, %v682
    %v684 = vpop.f32.mrb[0].mxu0
    %v685 = vpop.f32.mrb[0].mxu0
    %v686 = vpop.f32.mrb[0].mxu0
    %687 = vdwg.mxu0
    %v688 = vsel %vm327, 16843009, 0
    %v689 = vunpack.c.0.s8 %v688
    %vm690 = vcmp.ne.s32.totalorder %v689, 0
    %v691 = vsel %vm690, %v683, 1e-09
    %vm692 = vcmask 64512
    %v693 = vsel %vm692, %v691, -inf
    %694 = vmax.xlane.f32.xlu0 %v693
    %v695 = vpop.xlane.xlu0 %694
    %v696 = vsub.f32 %v691, %v695
    %v697 = vmul.f32 %v696, 1.442695
    %v698 = vpow.pop %v697
    %v699 = vsel %vm692, %v698, 0.0
    %700 = vadd.xlane.f32.xlu0 %v699
    %v701 = vpop.xlane.xlu0 %700
    %v702 = vrcp.pop %v701
    %v703 = vmul.f32 %v698, %v702
    %v704 = vpack.c.bf16 %v703, %v703
    %v706 = vsel %vm692, %v704, 0
    %vm708 = vcmask 1043456
    %v710 = vsel %vm708, %v640, 0
    %712 = vmatprep.subr.bf16.mxu0 0
    %713 = vmatpush1.bf16.msra.mxu0 %v710
    %714 = vmatprep.subr.bf16.mxu0 0
    %715 = vmatpush1.bf16.msra.mxu0 0
    %716 = vmatprep.subr.bf16.mxu0 0
    %717 = vmatpush1.bf16.msra.mxu0 0
    %718 = vmatprep.subr.bf16.mxu0 0
    %719 = vmatpush1.bf16.msra.mxu0 0
    %720 = vmatprep.subr.bf16.mxu0 0
    %721 = vmatpush1.bf16.msra.mxu0 0
    %722 = vmatprep.subr.bf16.mxu0 0
    %723 = vmatpush1.bf16.msra.mxu0 0
    %724 = vmatprep.subr.bf16.mxu0 0
    %725 = vmatpush1.bf16.msra.mxu0 0
    %726 = vmatprep.subr.bf16.mxu0 0
    %727 = vmatpush1.bf16.msra.mxu0 0
    %728 = vmatprep.subr.bf16.mxu0 0
    %729 = vmatpush1.bf16.msra.mxu0 0
    %730 = vmatprep.subr.bf16.mxu0 0
    %731 = vmatpush1.bf16.msra.mxu0 0
    %732 = vmatprep.subr.bf16.mxu0 0
    %733 = vmatpush1.bf16.msra.mxu0 0
    %734 = vmatprep.subr.bf16.mxu0 0
    %735 = vmatpush1.bf16.msra.mxu0 0
    %736 = vmatprep.subr.bf16.mxu0 0
    %737 = vmatpush1.bf16.msra.mxu0 0
    %738 = vmatprep.subr.bf16.mxu0 0
    %739 = vmatpush1.bf16.msra.mxu0 0
    %740 = vmatprep.subr.bf16.mxu0 0
    %741 = vmatpush1.bf16.msra.mxu0 0
    %742 = vmatprep.subr.bf16.mxu0 0
    %743 = vmatpush1.bf16.msra.mxu0 0
    %744 = vmatprep.mubr.bf16.mxu0 0
    %745 = vmatmul.mubr.bf16.gmra.mrb[0].mxu0 %v706
    %v746 = vpop.f32.mrb[0].mxu0
    %v747 = vadd.f32 0.0, %v746
    %v748 = vpop.f32.mrb[0].mxu0
    %v749 = vpop.f32.mrb[0].mxu0
    %v750 = vpop.f32.mrb[0].mxu0
    %751 = vdwg.mxu0
    %752 = vst.msk [vmem:[#allocation2] sm:$0xff] %vm641, %v747
    %754 = vrot.lane.b32.xlu0 %v638, 96
    %v755 = vpop.permute.xlu0 %754
    %757 = vrot.lane.b32.xlu0 %v639, 96
    %v758 = vpop.permute.xlu0 %757
    %v760 = vsel %vm641, %v755, 0
    %v763 = vsel %vm641, %v758, 0
    %765 = vmatprep.subr.bf16.mxu0 0
    %766 = vmatpush1.bf16.xpose.msra.mxu0 %v763
    %767 = vmatprep.subr.bf16.mxu0 0
    %768 = vmatpush1.bf16.xpose.msra.mxu0 0
    %769 = vmatprep.subr.bf16.mxu0 0
    %770 = vmatpush1.bf16.xpose.msra.mxu0 0
    %771 = vmatprep.subr.bf16.mxu0 0
    %772 = vmatpush1.bf16.xpose.msra.mxu0 0
    %773 = vmatprep.subr.bf16.mxu0 0
    %774 = vmatpush1.bf16.xpose.msra.mxu0 0
    %775 = vmatprep.subr.bf16.mxu0 0
    %776 = vmatpush1.bf16.xpose.msra.mxu0 0
    %777 = vmatprep.subr.bf16.mxu0 0
    %778 = vmatpush1.bf16.xpose.msra.mxu0 0
    %779 = vmatprep.subr.bf16.mxu0 0
    %780 = vmatpush1.bf16.xpose.msra.mxu0 0
    %781 = vmatprep.subr.bf16.mxu0 0
    %782 = vmatpush1.bf16.xpose.msra.mxu0 0
    %783 = vmatprep.subr.bf16.mxu0 0
    %784 = vmatpush1.bf16.xpose.msra.mxu0 0
    %785 = vmatprep.subr.bf16.mxu0 0
    %786 = vmatpush1.bf16.xpose.msra.mxu0 0
    %787 = vmatprep.subr.bf16.mxu0 0
    %788 = vmatpush1.bf16.xpose.msra.mxu0 0
    %789 = vmatprep.subr.bf16.mxu0 0
    %790 = vmatpush1.bf16.xpose.msra.mxu0 0
    %791 = vmatprep.subr.bf16.mxu0 0
    %792 = vmatpush1.bf16.xpose.msra.mxu0 0
    %793 = vmatprep.subr.bf16.mxu0 0
    %794 = vmatpush1.bf16.xpose.msra.mxu0 0
    %795 = vmatprep.subr.bf16.mxu0 0
    %796 = vmatpush1.bf16.xpose.msra.mxu0 0
    %797 = vmatprep.mubr.bf16.mxu0 0
    %798 = vmatmul.mubr.bf16.gmra.mrb[0].mxu0 %v760
    %v799 = vpop.f32.mrb[0].mxu0
    %v800 = vadd.f32 0.0, %v799
    %v801 = vpop.f32.mrb[0].mxu0
    %v802 = vpop.f32.mrb[0].mxu0
    %v803 = vpop.f32.mrb[0].mxu0
    %804 = vdwg.mxu0
    %v805 = vsel %vm690, %v800, 1e-09
    %v806 = vsel %vm692, %v805, -inf
    %807 = vmax.xlane.f32.xlu0 %v806
    %v808 = vpop.xlane.xlu0 %807
    %v809 = vsub.f32 %v805, %v808
    %v810 = vmul.f32 %v809, 1.442695
    %v811 = vpow.pop %v810
    %v812 = vsel %vm692, %v811, 0.0
    %813 = vadd.xlane.f32.xlu0 %v812
    %v814 = vpop.xlane.xlu0 %813
    %v815 = vrcp.pop %v814
    %v816 = vmul.f32 %v811, %v815
    %v817 = vpack.c.bf16 %v816, %v816
    %819 = vrot.lane.b32.xlu0 %v640, 96
    %v820 = vpop.permute.xlu0 %819
    %v822 = vsel %vm692, %v817, 0
    %v825 = vsel %vm708, %v820, 0
    %827 = vmatprep.subr.bf16.mxu0 0
    %828 = vmatpush1.bf16.msra.mxu0 %v825
    %829 = vmatprep.subr.bf16.mxu0 0
    %830 = vmatpush1.bf16.msra.mxu0 0
    %831 = vmatprep.subr.bf16.mxu0 0
    %832 = vmatpush1.bf16.msra.mxu0 0
    %833 = vmatprep.subr.bf16.mxu0 0
    %834 = vmatpush1.bf16.msra.mxu0 0
    %835 = vmatprep.subr.bf16.mxu0 0
    %836 = vmatpush1.bf16.msra.mxu0 0
    %837 = vmatprep.subr.bf16.mxu0 0
    %838 = vmatpush1.bf16.msra.mxu0 0
    %839 = vmatprep.subr.bf16.mxu0 0
    %840 = vmatpush1.bf16.msra.mxu0 0
    %841 = vmatprep.subr.bf16.mxu0 0
    %842 = vmatpush1.bf16.msra.mxu0 0
    %843 = vmatprep.subr.bf16.mxu0 0
    %844 = vmatpush1.bf16.msra.mxu0 0
    %845 = vmatprep.subr.bf16.mxu0 0
    %846 = vmatpush1.bf16.msra.mxu0 0
    %847 = vmatprep.subr.bf16.mxu0 0
    %848 = vmatpush1.bf16.msra.mxu0 0
    %849 = vmatprep.subr.bf16.mxu0 0
    %850 = vmatpush1.bf16.msra.mxu0 0
    %851 = vmatprep.subr.bf16.mxu0 0
    %852 = vmatpush1.bf16.msra.mxu0 0
    %853 = vmatprep.subr.bf16.mxu0 0
    %854 = vmatpush1.bf16.msra.mxu0 0
    %855 = vmatprep.subr.bf16.mxu0 0
    %856 = vmatpush1.bf16.msra.mxu0 0
    %857 = vmatprep.subr.bf16.mxu0 0
    %858 = vmatpush1.bf16.msra.mxu0 0
    %859 = vmatprep.mubr.bf16.mxu0 0
    %860 = vmatmul.mubr.bf16.gmra.mrb[0].mxu0 %v822
    %v861 = vpop.f32.mrb[0].mxu0
    %v862 = vadd.f32 0.0, %v861
    %v863 = vpop.f32.mrb[0].mxu0
    %v864 = vpop.f32.mrb[0].mxu0
    %v865 = vpop.f32.mrb[0].mxu0
    %866 = vdwg.mxu0
    %868 = vrot.lane.b32.xlu0 %v862, 32
    %v869 = vpop.permute.xlu0 %868
    %vm871 = vcmask 523520
    %872 = vst.msk [vmem:[#allocation2] sm:$0xff] %vm871, %v869
    %873 = vrot.lane.b32.xlu0 %v638, 64
    %v874 = vpop.permute.xlu0 %873
    %875 = vrot.lane.b32.xlu0 %v639, 64
    %v876 = vpop.permute.xlu0 %875
    %v878 = vsel %vm641, %v874, 0
    %v881 = vsel %vm641, %v876, 0
    %883 = vmatprep.subr.bf16.mxu0 0
    %884 = vmatpush1.bf16.xpose.msra.mxu0 %v881
    %885 = vmatprep.subr.bf16.mxu0 0
    %886 = vmatpush1.bf16.xpose.msra.mxu0 0
    %887 = vmatprep.subr.bf16.mxu0 0
    %888 = vmatpush1.bf16.xpose.msra.mxu0 0
    %889 = vmatprep.subr.bf16.mxu0 0
    %890 = vmatpush1.bf16.xpose.msra.mxu0 0
    %891 = vmatprep.subr.bf16.mxu0 0
    %892 = vmatpush1.bf16.xpose.msra.mxu0 0
    %893 = vmatprep.subr.bf16.mxu0 0
    %894 = vmatpush1.bf16.xpose.msra.mxu0 0
    %895 = vmatprep.subr.bf16.mxu0 0
    %896 = vmatpush1.bf16.xpose.msra.mxu0 0
    %897 = vmatprep.subr.bf16.mxu0 0
    %898 = vmatpush1.bf16.xpose.msra.mxu0 0
    %899 = vmatprep.subr.bf16.mxu0 0
    %900 = vmatpush1.bf16.xpose.msra.mxu0 0
    %901 = vmatprep.subr.bf16.mxu0 0
    %902 = vmatpush1.bf16.xpose.msra.mxu0 0
    %903 = vmatprep.subr.bf16.mxu0 0
    %904 = vmatpush1.bf16.xpose.msra.mxu0 0
    %905 = vmatprep.subr.bf16.mxu0 0
    %906 = vmatpush1.bf16.xpose.msra.mxu0 0
    %907 = vmatprep.subr.bf16.mxu0 0
    %908 = vmatpush1.bf16.xpose.msra.mxu0 0
    %909 = vmatprep.subr.bf16.mxu0 0
    %910 = vmatpush1.bf16.xpose.msra.mxu0 0
    %911 = vmatprep.subr.bf16.mxu0 0
    %912 = vmatpush1.bf16.xpose.msra.mxu0 0
    %913 = vmatprep.subr.bf16.mxu0 0
    %914 = vmatpush1.bf16.xpose.msra.mxu0 0
    %915 = vmatprep.mubr.bf16.mxu0 0
    %916 = vmatmul.mubr.bf16.gmra.mrb[0].mxu0 %v878
    %v917 = vpop.f32.mrb[0].mxu0
    %v918 = vadd.f32 0.0, %v917
    %v919 = vpop.f32.mrb[0].mxu0
    %v920 = vpop.f32.mrb[0].mxu0
    %v921 = vpop.f32.mrb[0].mxu0
    %922 = vdwg.mxu0
    %v923 = vsel %vm690, %v918, 1e-09
    %v924 = vsel %vm692, %v923, -inf
    %925 = vmax.xlane.f32.xlu0 %v924
    %v926 = vpop.xlane.xlu0 %925
    %v927 = vsub.f32 %v923, %v926
    %v928 = vmul.f32 %v927, 1.442695
    %v929 = vpow.pop %v928
    %v930 = vsel %vm692, %v929, 0.0
    %931 = vadd.xlane.f32.xlu0 %v930
    %v932 = vpop.xlane.xlu0 %931
    %v933 = vrcp.pop %v932
    %v934 = vmul.f32 %v929, %v933
    %v935 = vpack.c.bf16 %v934, %v934
    %936 = vrot.lane.b32.xlu0 %v640, 64
    %v937 = vpop.permute.xlu0 %936
    %v939 = vsel %vm692, %v935, 0
    %v942 = vsel %vm708, %v937, 0
    %944 = vmatprep.subr.bf16.mxu0 0
    %945 = vmatpush1.bf16.msra.mxu0 %v942
    %946 = vmatprep.subr.bf16.mxu0 0
    %947 = vmatpush1.bf16.msra.mxu0 0
    %948 = vmatprep.subr.bf16.mxu0 0
    %949 = vmatpush1.bf16.msra.mxu0 0
    %950 = vmatprep.subr.bf16.mxu0 0
    %951 = vmatpush1.bf16.msra.mxu0 0
    %952 = vmatprep.subr.bf16.mxu0 0
    %953 = vmatpush1.bf16.msra.mxu0 0
    %954 = vmatprep.subr.bf16.mxu0 0
    %955 = vmatpush1.bf16.msra.mxu0 0
    %956 = vmatprep.subr.bf16.mxu0 0
    %957 = vmatpush1.bf16.msra.mxu0 0
    %958 = vmatprep.subr.bf16.mxu0 0
    %959 = vmatpush1.bf16.msra.mxu0 0
    %960 = vmatprep.subr.bf16.mxu0 0
    %961 = vmatpush1.bf16.msra.mxu0 0
    %962 = vmatprep.subr.bf16.mxu0 0
    %963 = vmatpush1.bf16.msra.mxu0 0
    %964 = vmatprep.subr.bf16.mxu0 0
    %965 = vmatpush1.bf16.msra.mxu0 0
    %966 = vmatprep.subr.bf16.mxu0 0
    %967 = vmatpush1.bf16.msra.mxu0 0
    %968 = vmatprep.subr.bf16.mxu0 0
    %969 = vmatpush1.bf16.msra.mxu0 0
    %970 = vmatprep.subr.bf16.mxu0 0
    %971 = vmatpush1.bf16.msra.mxu0 0
    %972 = vmatprep.subr.bf16.mxu0 0
    %973 = vmatpush1.bf16.msra.mxu0 0
    %974 = vmatprep.subr.bf16.mxu0 0
    %975 = vmatpush1.bf16.msra.mxu0 0
    %976 = vmatprep.mubr.bf16.mxu0 0
    %977 = vmatmul.mubr.bf16.gmra.mrb[0].mxu0 %v939
    %v978 = vpop.f32.mrb[0].mxu0
    %v979 = vadd.f32 0.0, %v978
    %v980 = vpop.f32.mrb[0].mxu0
    %v981 = vpop.f32.mrb[0].mxu0
    %v982 = vpop.f32.mrb[0].mxu0
    %983 = vdwg.mxu0
    %985 = vrot.lane.b32.xlu0 %v979, 64
    %v986 = vpop.permute.xlu0 %985
    %vm988 = vcmask 785920
    %989 = vst.msk [vmem:[#allocation2] sm:$0xff] %vm988, %v986
    %990 = vrot.lane.b32.xlu0 %v638, 32
    %v991 = vpop.permute.xlu0 %990
    %992 = vrot.lane.b32.xlu0 %v639, 32
    %v993 = vpop.permute.xlu0 %992
    %v995 = vsel %vm641, %v991, 0
    %v998 = vsel %vm641, %v993, 0
    %1000 = vmatprep.subr.bf16.mxu0 0
    %1001 = vmatpush1.bf16.xpose.msra.mxu0 %v998
    %1002 = vmatprep.subr.bf16.mxu0 0
    %1003 = vmatpush1.bf16.xpose.msra.mxu0 0
    %1004 = vmatprep.subr.bf16.mxu0 0
    %1005 = vmatpush1.bf16.xpose.msra.mxu0 0
    %1006 = vmatprep.subr.bf16.mxu0 0
    %1007 = vmatpush1.bf16.xpose.msra.mxu0 0
    %1008 = vmatprep.subr.bf16.mxu0 0
    %1009 = vmatpush1.bf16.xpose.msra.mxu0 0
    %1010 = vmatprep.subr.bf16.mxu0 0
    %1011 = vmatpush1.bf16.xpose.msra.mxu0 0
    %1012 = vmatprep.subr.bf16.mxu0 0
    %1013 = vmatpush1.bf16.xpose.msra.mxu0 0
    %1014 = vmatprep.subr.bf16.mxu0 0
    %1015 = vmatpush1.bf16.xpose.msra.mxu0 0
    %1016 = vmatprep.subr.bf16.mxu0 0
    %1017 = vmatpush1.bf16.xpose.msra.mxu0 0
    %1018 = vmatprep.subr.bf16.mxu0 0
    %1019 = vmatpush1.bf16.xpose.msra.mxu0 0
    %1020 = vmatprep.subr.bf16.mxu0 0
    %1021 = vmatpush1.bf16.xpose.msra.mxu0 0
    %1022 = vmatprep.subr.bf16.mxu0 0
    %1023 = vmatpush1.bf16.xpose.msra.mxu0 0
    %1024 = vmatprep.subr.bf16.mxu0 0
    %1025 = vmatpush1.bf16.xpose.msra.mxu0 0
    %1026 = vmatprep.subr.bf16.mxu0 0
    %1027 = vmatpush1.bf16.xpose.msra.mxu0 0
    %1028 = vmatprep.subr.bf16.mxu0 0
    %1029 = vmatpush1.bf16.xpose.msra.mxu0 0
    %1030 = vmatprep.subr.bf16.mxu0 0
    %1031 = vmatpush1.bf16.xpose.msra.mxu0 0
    %1032 = vmatprep.mubr.bf16.mxu0 0
    %1033 = vmatmul.mubr.bf16.gmra.mrb[0].mxu0 %v995
    %v1034 = vpop.f32.mrb[0].mxu0
    %v1035 = vadd.f32 0.0, %v1034
    %v1036 = vpop.f32.mrb[0].mxu0
    %v1037 = vpop.f32.mrb[0].mxu0
    %v1038 = vpop.f32.mrb[0].mxu0
    %1039 = vdwg.mxu0
    %v1040 = vsel %vm690, %v1035, 1e-09
    %v1041 = vsel %vm692, %v1040, -inf
    %1042 = vmax.xlane.f32.xlu0 %v1041
    %v1043 = vpop.xlane.xlu0 %1042
    %v1044 = vsub.f32 %v1040, %v1043
    %v1045 = vmul.f32 %v1044, 1.442695
    %v1046 = vpow.pop %v1045
    %v1047 = vsel %vm692, %v1046, 0.0
    %1048 = vadd.xlane.f32.xlu0 %v1047
    %v1049 = vpop.xlane.xlu0 %1048
    %v1050 = vrcp.pop %v1049
    %v1051 = vmul.f32 %v1046, %v1050
    %v1052 = vpack.c.bf16 %v1051, %v1051
    %1053 = vrot.lane.b32.xlu0 %v640, 32
    %v1054 = vpop.permute.xlu0 %1053
    %v1056 = vsel %vm692, %v1052, 0
    %v1059 = vsel %vm708, %v1054, 0
    %1061 = vmatprep.subr.bf16.mxu0 0
    %1062 = vmatpush1.bf16.msra.mxu0 %v1059
    %1063 = vmatprep.subr.bf16.mxu0 0
    %1064 = vmatpush1.bf16.msra.mxu0 0
    %1065 = vmatprep.subr.bf16.mxu0 0
    %1066 = vmatpush1.bf16.msra.mxu0 0
    %1067 = vmatprep.subr.bf16.mxu0 0
    %1068 = vmatpush1.bf16.msra.mxu0 0
    %1069 = vmatprep.subr.bf16.mxu0 0
    %1070 = vmatpush1.bf16.msra.mxu0 0
    %1071 = vmatprep.subr.bf16.mxu0 0
    %1072 = vmatpush1.bf16.msra.mxu0 0
    %1073 = vmatprep.subr.bf16.mxu0 0
    %1074 = vmatpush1.bf16.msra.mxu0 0
    %1075 = vmatprep.subr.bf16.mxu0 0
    %1076 = vmatpush1.bf16.msra.mxu0 0
    %1077 = vmatprep.subr.bf16.mxu0 0
    %1078 = vmatpush1.bf16.msra.mxu0 0
    %1079 = vmatprep.subr.bf16.mxu0 0
    %1080 = vmatpush1.bf16.msra.mxu0 0
    %1081 = vmatprep.subr.bf16.mxu0 0
    %1082 = vmatpush1.bf16.msra.mxu0 0
    %1083 = vmatprep.subr.bf16.mxu0 0
    %1084 = vmatpush1.bf16.msra.mxu0 0
    %1085 = vmatprep.subr.bf16.mxu0 0
    %1086 = vmatpush1.bf16.msra.mxu0 0
    %1087 = vmatprep.subr.bf16.mxu0 0
    %1088 = vmatpush1.bf16.msra.mxu0 0
    %1089 = vmatprep.subr.bf16.mxu0 0
    %1090 = vmatpush1.bf16.msra.mxu0 0
    %1091 = vmatprep.subr.bf16.mxu0 0
    %1092 = vmatpush1.bf16.msra.mxu0 0
    %1093 = vmatprep.mubr.bf16.mxu0 0
    %1094 = vmatmul.mubr.bf16.gmra.mrb[0].mxu0 %v1056
    %v1095 = vpop.f32.mrb[0].mxu0
    %v1096 = vadd.f32 0.0, %v1095
    %v1097 = vpop.f32.mrb[0].mxu0
    %v1098 = vpop.f32.mrb[0].mxu0
    %v1099 = vpop.f32.mrb[0].mxu0
    %1100 = vdwg.mxu0
    %1102 = vrot.lane.b32.xlu0 %v1096, 96
    %v1103 = vpop.permute.xlu0 %1102
    %vm1105 = vcmask 1048320
    %1106 = vst.msk [vmem:[#allocation2] sm:$0xff] %vm1105, %v1103
    %v1107 = vrot.slane %v638, 4
    %v1108 = vrot.slane %v639, 4
    %v1110 = vsel %vm641, %v1107, 0
    %v1113 = vsel %vm641, %v1108, 0
    %1115 = vmatprep.subr.bf16.mxu0 0
    %1116 = vmatpush1.bf16.xpose.msra.mxu0 %v1113
    %1117 = vmatprep.subr.bf16.mxu0 0
    %1118 = vmatpush1.bf16.xpose.msra.mxu0 0
    %1119 = vmatprep.subr.bf16.mxu0 0
    %1120 = vmatpush1.bf16.xpose.msra.mxu0 0
    %1121 = vmatprep.subr.bf16.mxu0 0
    %1122 = vmatpush1.bf16.xpose.msra.mxu0 0
    %1123 = vmatprep.subr.bf16.mxu0 0
    %1124 = vmatpush1.bf16.xpose.msra.mxu0 0
    %1125 = vmatprep.subr.bf16.mxu0 0
    %1126 = vmatpush1.bf16.xpose.msra.mxu0 0
    %1127 = vmatprep.subr.bf16.mxu0 0
    %1128 = vmatpush1.bf16.xpose.msra.mxu0 0
    %1129 = vmatprep.subr.bf16.mxu0 0
    %1130 = vmatpush1.bf16.xpose.msra.mxu0 0
    %1131 = vmatprep.subr.bf16.mxu0 0
    %1132 = vmatpush1.bf16.xpose.msra.mxu0 0
    %1133 = vmatprep.subr.bf16.mxu0 0
    %1134 = vmatpush1.bf16.xpose.msra.mxu0 0
    %1135 = vmatprep.subr.bf16.mxu0 0
    %1136 = vmatpush1.bf16.xpose.msra.mxu0 0
    %1137 = vmatprep.subr.bf16.mxu0 0
    %1138 = vmatpush1.bf16.xpose.msra.mxu0 0
    %1139 = vmatprep.subr.bf16.mxu0 0
    %1140 = vmatpush1.bf16.xpose.msra.mxu0 0
    %1141 = vmatprep.subr.bf16.mxu0 0
    %1142 = vmatpush1.bf16.xpose.msra.mxu0 0
    %1143 = vmatprep.subr.bf16.mxu0 0
    %1144 = vmatpush1.bf16.xpose.msra.mxu0 0
    %1145 = vmatprep.subr.bf16.mxu0 0
    %1146 = vmatpush1.bf16.xpose.msra.mxu0 0
    %1147 = vmatprep.mubr.bf16.mxu0 0
    %1148 = vmatmul.mubr.bf16.gmra.mrb[0].mxu0 %v1110
    %v1149 = vpop.f32.mrb[0].mxu0
    %v1150 = vadd.f32 0.0, %v1149
    %v1151 = vpop.f32.mrb[0].mxu0
    %v1152 = vpop.f32.mrb[0].mxu0
    %v1153 = vpop.f32.mrb[0].mxu0
    %1154 = vdwg.mxu0
    %v1155 = vsel %vm328, 16843009, 0
    %v1156 = vunpack.c.0.s8 %v1155
    %vm1157 = vcmp.ne.s32.totalorder %v1156, 0
    %v1158 = vsel %vm1157, %v1150, 1e-09
    %v1159 = vsel %vm692, %v1158, -inf
    %1160 = vmax.xlane.f32.xlu0 %v1159
    %v1161 = vpop.xlane.xlu0 %1160
    %v1162 = vsub.f32 %v1158, %v1161
    %v1163 = vmul.f32 %v1162, 1.442695
    %v1164 = vpow.pop %v1163
    %v1165 = vsel %vm692, %v1164, 0.0
    %1166 = vadd.xlane.f32.xlu0 %v1165
    %v1167 = vpop.xlane.xlu0 %1166
    %v1168 = vrcp.pop %v1167
    %v1169 = vmul.f32 %v1164, %v1168
    %v1170 = vpack.c.bf16 %v1169, %v1169
    %v1171 = vrot.slane %v640, 4
    %v1173 = vsel %vm692, %v1170, 0
    %v1176 = vsel %vm708, %v1171, 0
    %1178 = vmatprep.subr.bf16.mxu0 0
    %1179 = vmatpush1.bf16.msra.mxu0 %v1176
    %1180 = vmatprep.subr.bf16.mxu0 0
    %1181 = vmatpush1.bf16.msra.mxu0 0
    %1182 = vmatprep.subr.bf16.mxu0 0
    %1183 = vmatpush1.bf16.msra.mxu0 0
    %1184 = vmatprep.subr.bf16.mxu0 0
    %1185 = vmatpush1.bf16.msra.mxu0 0
    %1186 = vmatprep.subr.bf16.mxu0 0
    %1187 = vmatpush1.bf16.msra.mxu0 0
    %1188 = vmatprep.subr.bf16.mxu0 0
    %1189 = vmatpush1.bf16.msra.mxu0 0
    %1190 = vmatprep.subr.bf16.mxu0 0
    %1191 = vmatpush1.bf16.msra.mxu0 0
    %1192 = vmatprep.subr.bf16.mxu0 0
    %1193 = vmatpush1.bf16.msra.mxu0 0
    %1194 = vmatprep.subr.bf16.mxu0 0
    %1195 = vmatpush1.bf16.msra.mxu0 0
    %1196 = vmatprep.subr.bf16.mxu0 0
    %1197 = vmatpush1.bf16.msra.mxu0 0
    %1198 = vmatprep.subr.bf16.mxu0 0
    %1199 = vmatpush1.bf16.msra.mxu0 0
    %1200 = vmatprep.subr.bf16.mxu0 0
    %1201 = vmatpush1.bf16.msra.mxu0 0
    %1202 = vmatprep.subr.bf16.mxu0 0
    %1203 = vmatpush1.bf16.msra.mxu0 0
    %1204 = vmatprep.subr.bf16.mxu0 0
    %1205 = vmatpush1.bf16.msra.mxu0 0
    %1206 = vmatprep.subr.bf16.mxu0 0
    %1207 = vmatpush1.bf16.msra.mxu0 0
    %1208 = vmatprep.subr.bf16.mxu0 0
    %1209 = vmatpush1.bf16.msra.mxu0 0
    %1210 = vmatprep.mubr.bf16.mxu0 0
    %1211 = vmatmul.mubr.bf16.gmra.mrb[0].mxu0 %v1173
    %v1212 = vpop.f32.mrb[0].mxu0
    %v1213 = vadd.f32 0.0, %v1212
    %v1214 = vpop.f32.mrb[0].mxu0
    %v1215 = vpop.f32.mrb[0].mxu0
    %v1216 = vpop.f32.mrb[0].mxu0
    %1217 = vdwg.mxu0
    %1218 = vst.msk [vmem:[#allocation2 + $0x8] sm:$0xff] %vm641, %v1213
    %1219 = vrot.lane.b32.xlu0 %v1107, 96
    %v1220 = vpop.permute.xlu0 %1219
    %1221 = vrot.lane.b32.xlu0 %v1108, 96
    %v1222 = vpop.permute.xlu0 %1221
    %v1224 = vsel %vm641, %v1220, 0
    %v1227 = vsel %vm641, %v1222, 0
    %1229 = vmatprep.subr.bf16.mxu0 0
    %1230 = vmatpush1.bf16.xpose.msra.mxu0 %v1227
    %1231 = vmatprep.subr.bf16.mxu0 0
    %1232 = vmatpush1.bf16.xpose.msra.mxu0 0
    %1233 = vmatprep.subr.bf16.mxu0 0
    %1234 = vmatpush1.bf16.xpose.msra.mxu0 0
    %1235 = vmatprep.subr.bf16.mxu0 0
    %1236 = vmatpush1.bf16.xpose.msra.mxu0 0
    %1237 = vmatprep.subr.bf16.mxu0 0
    %1238 = vmatpush1.bf16.xpose.msra.mxu0 0
    %1239 = vmatprep.subr.bf16.mxu0 0
    %1240 = vmatpush1.bf16.xpose.msra.mxu0 0
    %1241 = vmatprep.subr.bf16.mxu0 0
    %1242 = vmatpush1.bf16.xpose.msra.mxu0 0
    %1243 = vmatprep.subr.bf16.mxu0 0
    %1244 = vmatpush1.bf16.xpose.msra.mxu0 0
    %1245 = vmatprep.subr.bf16.mxu0 0
    %1246 = vmatpush1.bf16.xpose.msra.mxu0 0
    %1247 = vmatprep.subr.bf16.mxu0 0
    %1248 = vmatpush1.bf16.xpose.msra.mxu0 0
    %1249 = vmatprep.subr.bf16.mxu0 0
    %1250 = vmatpush1.bf16.xpose.msra.mxu0 0
    %1251 = vmatprep.subr.bf16.mxu0 0
    %1252 = vmatpush1.bf16.xpose.msra.mxu0 0
    %1253 = vmatprep.subr.bf16.mxu0 0
    %1254 = vmatpush1.bf16.xpose.msra.mxu0 0
    %1255 = vmatprep.subr.bf16.mxu0 0
    %1256 = vmatpush1.bf16.xpose.msra.mxu0 0
    %1257 = vmatprep.subr.bf16.mxu0 0
    %1258 = vmatpush1.bf16.xpose.msra.mxu0 0
    %1259 = vmatprep.subr.bf16.mxu0 0
    %1260 = vmatpush1.bf16.xpose.msra.mxu0 0
    %1261 = vmatprep.mubr.bf16.mxu0 0
    %1262 = vmatmul.mubr.bf16.gmra.mrb[0].mxu0 %v1224
    %v1263 = vpop.f32.mrb[0].mxu0
    %v1264 = vadd.f32 0.0, %v1263
    %v1265 = vpop.f32.mrb[0].mxu0
    %v1266 = vpop.f32.mrb[0].mxu0
    %v1267 = vpop.f32.mrb[0].mxu0
    %1268 = vdwg.mxu0
    %v1269 = vsel %vm1157, %v1264, 1e-09
    %v1270 = vsel %vm692, %v1269, -inf
    %1271 = vmax.xlane.f32.xlu0 %v1270
    %v1272 = vpop.xlane.xlu0 %1271
    %v1273 = vsub.f32 %v1269, %v1272
    %v1274 = vmul.f32 %v1273, 1.442695
    %v1275 = vpow.pop %v1274
    %v1276 = vsel %vm692, %v1275, 0.0
    %1277 = vadd.xlane.f32.xlu0 %v1276
    %v1278 = vpop.xlane.xlu0 %1277
    %v1279 = vrcp.pop %v1278
    %v1280 = vmul.f32 %v1275, %v1279
    %v1281 = vpack.c.bf16 %v1280, %v1280
    %1282 = vrot.lane.b32.xlu0 %v1171, 96
    %v1283 = vpop.permute.xlu0 %1282
    %v1285 = vsel %vm692, %v1281, 0
    %v1288 = vsel %vm708, %v1283, 0
    %1290 = vmatprep.subr.bf16.mxu0 0
    %1291 = vmatpush1.bf16.msra.mxu0 %v1288
    %1292 = vmatprep.subr.bf16.mxu0 0
    %1293 = vmatpush1.bf16.msra.mxu0 0
    %1294 = vmatprep.subr.bf16.mxu0 0
    %1295 = vmatpush1.bf16.msra.mxu0 0
    %1296 = vmatprep.subr.bf16.mxu0 0
    %1297 = vmatpush1.bf16.msra.mxu0 0
    %1298 = vmatprep.subr.bf16.mxu0 0
    %1299 = vmatpush1.bf16.msra.mxu0 0
    %1300 = vmatprep.subr.bf16.mxu0 0
    %1301 = vmatpush1.bf16.msra.mxu0 0
    %1302 = vmatprep.subr.bf16.mxu0 0
    %1303 = vmatpush1.bf16.msra.mxu0 0
    %1304 = vmatprep.subr.bf16.mxu0 0
    %1305 = vmatpush1.bf16.msra.mxu0 0
    %1306 = vmatprep.subr.bf16.mxu0 0
    %1307 = vmatpush1.bf16.msra.mxu0 0
    %1308 = vmatprep.subr.bf16.mxu0 0
    %1309 = vmatpush1.bf16.msra.mxu0 0
    %1310 = vmatprep.subr.bf16.mxu0 0
    %1311 = vmatpush1.bf16.msra.mxu0 0
    %1312 = vmatprep.subr.bf16.mxu0 0
    %1313 = vmatpush1.bf16.msra.mxu0 0
    %1314 = vmatprep.subr.bf16.mxu0 0
    %1315 = vmatpush1.bf16.msra.mxu0 0
    %1316 = vmatprep.subr.bf16.mxu0 0
    %1317 = vmatpush1.bf16.msra.mxu0 0
    %1318 = vmatprep.subr.bf16.mxu0 0
    %1319 = vmatpush1.bf16.msra.mxu0 0
    %1320 = vmatprep.subr.bf16.mxu0 0
    %1321 = vmatpush1.bf16.msra.mxu0 0
    %1322 = vmatprep.mubr.bf16.mxu0 0
    %1323 = vmatmul.mubr.bf16.gmra.mrb[0].mxu0 %v1285
    %v1324 = vpop.f32.mrb[0].mxu0
    %v1325 = vadd.f32 0.0, %v1324
    %v1326 = vpop.f32.mrb[0].mxu0
    %v1327 = vpop.f32.mrb[0].mxu0
    %v1328 = vpop.f32.mrb[0].mxu0
    %1329 = vdwg.mxu0
    %1331 = vrot.lane.b32.xlu0 %v1325, 32
    %v1332 = vpop.permute.xlu0 %1331
    %1334 = vst.msk [vmem:[#allocation2 + $0x8] sm:$0xff] %vm871, %v1332
    %1335 = vrot.lane.b32.xlu0 %v1107, 64
    %v1336 = vpop.permute.xlu0 %1335
    %1337 = vrot.lane.b32.xlu0 %v1108, 64
    %v1338 = vpop.permute.xlu0 %1337
    %v1340 = vsel %vm641, %v1336, 0
    %v1343 = vsel %vm641, %v1338, 0
    %1345 = vmatprep.subr.bf16.mxu0 0
    %1346 = vmatpush1.bf16.xpose.msra.mxu0 %v1343
    %1347 = vmatprep.subr.bf16.mxu0 0
    %1348 = vmatpush1.bf16.xpose.msra.mxu0 0
    %1349 = vmatprep.subr.bf16.mxu0 0
    %1350 = vmatpush1.bf16.xpose.msra.mxu0 0
    %1351 = vmatprep.subr.bf16.mxu0 0
    %1352 = vmatpush1.bf16.xpose.msra.mxu0 0
    %1353 = vmatprep.subr.bf16.mxu0 0
    %1354 = vmatpush1.bf16.xpose.msra.mxu0 0
    %1355 = vmatprep.subr.bf16.mxu0 0
    %1356 = vmatpush1.bf16.xpose.msra.mxu0 0
    %1357 = vmatprep.subr.bf16.mxu0 0
    %1358 = vmatpush1.bf16.xpose.msra.mxu0 0
    %1359 = vmatprep.subr.bf16.mxu0 0
    %1360 = vmatpush1.bf16.xpose.msra.mxu0 0
    %1361 = vmatprep.subr.bf16.mxu0 0
    %1362 = vmatpush1.bf16.xpose.msra.mxu0 0
    %1363 = vmatprep.subr.bf16.mxu0 0
    %1364 = vmatpush1.bf16.xpose.msra.mxu0 0
    %1365 = vmatprep.subr.bf16.mxu0 0
    %1366 = vmatpush1.bf16.xpose.msra.mxu0 0
    %1367 = vmatprep.subr.bf16.mxu0 0
    %1368 = vmatpush1.bf16.xpose.msra.mxu0 0
    %1369 = vmatprep.subr.bf16.mxu0 0
    %1370 = vmatpush1.bf16.xpose.msra.mxu0 0
    %1371 = vmatprep.subr.bf16.mxu0 0
    %1372 = vmatpush1.bf16.xpose.msra.mxu0 0
    %1373 = vmatprep.subr.bf16.mxu0 0
    %1374 = vmatpush1.bf16.xpose.msra.mxu0 0
    %1375 = vmatprep.subr.bf16.mxu0 0
    %1376 = vmatpush1.bf16.xpose.msra.mxu0 0
    %1377 = vmatprep.mubr.bf16.mxu0 0
    %1378 = vmatmul.mubr.bf16.gmra.mrb[0].mxu0 %v1340
    %v1379 = vpop.f32.mrb[0].mxu0
    %v1380 = vadd.f32 0.0, %v1379
    %v1381 = vpop.f32.mrb[0].mxu0
    %v1382 = vpop.f32.mrb[0].mxu0
    %v1383 = vpop.f32.mrb[0].mxu0
    %1384 = vdwg.mxu0
    %v1385 = vsel %vm1157, %v1380, 1e-09
    %v1386 = vsel %vm692, %v1385, -inf
    %1387 = vmax.xlane.f32.xlu0 %v1386
    %v1388 = vpop.xlane.xlu0 %1387
    %v1389 = vsub.f32 %v1385, %v1388
    %v1390 = vmul.f32 %v1389, 1.442695
    %v1391 = vpow.pop %v1390
    %v1392 = vsel %vm692, %v1391, 0.0
    %1393 = vadd.xlane.f32.xlu0 %v1392
    %v1394 = vpop.xlane.xlu0 %1393
    %v1395 = vrcp.pop %v1394
    %v1396 = vmul.f32 %v1391, %v1395
    %v1397 = vpack.c.bf16 %v1396, %v1396
    %1398 = vrot.lane.b32.xlu0 %v1171, 64
    %v1399 = vpop.permute.xlu0 %1398
    %v1401 = vsel %vm692, %v1397, 0
    %v1404 = vsel %vm708, %v1399, 0
    %1406 = vmatprep.subr.bf16.mxu0 0
    %1407 = vmatpush1.bf16.msra.mxu0 %v1404
    %1408 = vmatprep.subr.bf16.mxu0 0
    %1409 = vmatpush1.bf16.msra.mxu0 0
    %1410 = vmatprep.subr.bf16.mxu0 0
    %1411 = vmatpush1.bf16.msra.mxu0 0
    %1412 = vmatprep.subr.bf16.mxu0 0
    %1413 = vmatpush1.bf16.msra.mxu0 0
    %1414 = vmatprep.subr.bf16.mxu0 0
    %1415 = vmatpush1.bf16.msra.mxu0 0
    %1416 = vmatprep.subr.bf16.mxu0 0
    %1417 = vmatpush1.bf16.msra.mxu0 0
    %1418 = vmatprep.subr.bf16.mxu0 0
    %1419 = vmatpush1.bf16.msra.mxu0 0
    %1420 = vmatprep.subr.bf16.mxu0 0
    %1421 = vmatpush1.bf16.msra.mxu0 0
    %1422 = vmatprep.subr.bf16.mxu0 0
    %1423 = vmatpush1.bf16.msra.mxu0 0
    %1424 = vmatprep.subr.bf16.mxu0 0
    %1425 = vmatpush1.bf16.msra.mxu0 0
    %1426 = vmatprep.subr.bf16.mxu0 0
    %1427 = vmatpush1.bf16.msra.mxu0 0
    %1428 = vmatprep.subr.bf16.mxu0 0
    %1429 = vmatpush1.bf16.msra.mxu0 0
    %1430 = vmatprep.subr.bf16.mxu0 0
    %1431 = vmatpush1.bf16.msra.mxu0 0
    %1432 = vmatprep.subr.bf16.mxu0 0
    %1433 = vmatpush1.bf16.msra.mxu0 0
    %1434 = vmatprep.subr.bf16.mxu0 0
    %1435 = vmatpush1.bf16.msra.mxu0 0
    %1436 = vmatprep.subr.bf16.mxu0 0
    %1437 = vmatpush1.bf16.msra.mxu0 0
    %1438 = vmatprep.mubr.bf16.mxu0 0
    %1439 = vmatmul.mubr.bf16.gmra.mrb[0].mxu0 %v1401
    %v1440 = vpop.f32.mrb[0].mxu0
    %v1441 = vadd.f32 0.0, %v1440
    %v1442 = vpop.f32.mrb[0].mxu0
    %v1443 = vpop.f32.mrb[0].mxu0
    %v1444 = vpop.f32.mrb[0].mxu0
    %1445 = vdwg.mxu0
    %1447 = vrot.lane.b32.xlu0 %v1441, 64
    %v1448 = vpop.permute.xlu0 %1447
    %1450 = vst.msk [vmem:[#allocation2 + $0x8] sm:$0xff] %vm988, %v1448
    %1451 = vrot.lane.b32.xlu0 %v1107, 32
    %v1452 = vpop.permute.xlu0 %1451
    %1453 = vrot.lane.b32.xlu0 %v1108, 32
    %v1454 = vpop.permute.xlu0 %1453
    %v1456 = vsel %vm641, %v1452, 0
    %v1459 = vsel %vm641, %v1454, 0
    %1461 = vmatprep.subr.bf16.mxu0 0
    %1462 = vmatpush1.bf16.xpose.msra.mxu0 %v1459
    %1463 = vmatprep.subr.bf16.mxu0 0
    %1464 = vmatpush1.bf16.xpose.msra.mxu0 0
    %1465 = vmatprep.subr.bf16.mxu0 0
    %1466 = vmatpush1.bf16.xpose.msra.mxu0 0
    %1467 = vmatprep.subr.bf16.mxu0 0
    %1468 = vmatpush1.bf16.xpose.msra.mxu0 0
    %1469 = vmatprep.subr.bf16.mxu0 0
    %1470 = vmatpush1.bf16.xpose.msra.mxu0 0
    %1471 = vmatprep.subr.bf16.mxu0 0
    %1472 = vmatpush1.bf16.xpose.msra.mxu0 0
    %1473 = vmatprep.subr.bf16.mxu0 0
    %1474 = vmatpush1.bf16.xpose.msra.mxu0 0
    %1475 = vmatprep.subr.bf16.mxu0 0
    %1476 = vmatpush1.bf16.xpose.msra.mxu0 0
    %1477 = vmatprep.subr.bf16.mxu0 0
    %1478 = vmatpush1.bf16.xpose.msra.mxu0 0
    %1479 = vmatprep.subr.bf16.mxu0 0
    %1480 = vmatpush1.bf16.xpose.msra.mxu0 0
    %1481 = vmatprep.subr.bf16.mxu0 0
    %1482 = vmatpush1.bf16.xpose.msra.mxu0 0
    %1483 = vmatprep.subr.bf16.mxu0 0
    %1484 = vmatpush1.bf16.xpose.msra.mxu0 0
    %1485 = vmatprep.subr.bf16.mxu0 0
    %1486 = vmatpush1.bf16.xpose.msra.mxu0 0
    %1487 = vmatprep.subr.bf16.mxu0 0
    %1488 = vmatpush1.bf16.xpose.msra.mxu0 0
    %1489 = vmatprep.subr.bf16.mxu0 0
    %1490 = vmatpush1.bf16.xpose.msra.mxu0 0
    %1491 = vmatprep.subr.bf16.mxu0 0
    %1492 = vmatpush1.bf16.xpose.msra.mxu0 0
    %1493 = vmatprep.mubr.bf16.mxu0 0
    %1494 = vmatmul.mubr.bf16.gmra.mrb[0].mxu0 %v1456
    %v1495 = vpop.f32.mrb[0].mxu0
    %v1496 = vadd.f32 0.0, %v1495
    %v1497 = vpop.f32.mrb[0].mxu0
    %v1498 = vpop.f32.mrb[0].mxu0
    %v1499 = vpop.f32.mrb[0].mxu0
    %1500 = vdwg.mxu0
    %v1501 = vsel %vm1157, %v1496, 1e-09
    %v1502 = vsel %vm692, %v1501, -inf
    %1503 = vmax.xlane.f32.xlu0 %v1502
    %v1504 = vpop.xlane.xlu0 %1503
    %v1505 = vsub.f32 %v1501, %v1504
    %v1506 = vmul.f32 %v1505, 1.442695
    %v1507 = vpow.pop %v1506
    %v1508 = vsel %vm692, %v1507, 0.0
    %1509 = vadd.xlane.f32.xlu0 %v1508
    %v1510 = vpop.xlane.xlu0 %1509
    %v1511 = vrcp.pop %v1510
    %v1512 = vmul.f32 %v1507, %v1511
    %v1513 = vpack.c.bf16 %v1512, %v1512
    %1514 = vrot.lane.b32.xlu0 %v1171, 32
    %v1515 = vpop.permute.xlu0 %1514
    %v1517 = vsel %vm692, %v1513, 0
    %v1520 = vsel %vm708, %v1515, 0
    %1522 = vmatprep.subr.bf16.mxu0 0
    %1523 = vmatpush1.bf16.msra.mxu0 %v1520
    %1524 = vmatprep.subr.bf16.mxu0 0
    %1525 = vmatpush1.bf16.msra.mxu0 0
    %1526 = vmatprep.subr.bf16.mxu0 0
    %1527 = vmatpush1.bf16.msra.mxu0 0
    %1528 = vmatprep.subr.bf16.mxu0 0
    %1529 = vmatpush1.bf16.msra.mxu0 0
    %1530 = vmatprep.subr.bf16.mxu0 0
    %1531 = vmatpush1.bf16.msra.mxu0 0
    %1532 = vmatprep.subr.bf16.mxu0 0
    %1533 = vmatpush1.bf16.msra.mxu0 0
    %1534 = vmatprep.subr.bf16.mxu0 0
    %1535 = vmatpush1.bf16.msra.mxu0 0
    %1536 = vmatprep.subr.bf16.mxu0 0
    %1537 = vmatpush1.bf16.msra.mxu0 0
    %1538 = vmatprep.subr.bf16.mxu0 0
    %1539 = vmatpush1.bf16.msra.mxu0 0
    %1540 = vmatprep.subr.bf16.mxu0 0
    %1541 = vmatpush1.bf16.msra.mxu0 0
    %1542 = vmatprep.subr.bf16.mxu0 0
    %1543 = vmatpush1.bf16.msra.mxu0 0
    %1544 = vmatprep.subr.bf16.mxu0 0
    %1545 = vmatpush1.bf16.msra.mxu0 0
    %1546 = vmatprep.subr.bf16.mxu0 0
    %1547 = vmatpush1.bf16.msra.mxu0 0
    %1548 = vmatprep.subr.bf16.mxu0 0
    %1549 = vmatpush1.bf16.msra.mxu0 0
    %1550 = vmatprep.subr.bf16.mxu0 0
    %1551 = vmatpush1.bf16.msra.mxu0 0
    %1552 = vmatprep.subr.bf16.mxu0 0
    %1553 = vmatpush1.bf16.msra.mxu0 0
    %1554 = vmatprep.mubr.bf16.mxu0 0
    %1555 = vmatmul.mubr.bf16.gmra.mrb[0].mxu0 %v1517
    %v1556 = vpop.f32.mrb[0].mxu0
    %v1557 = vadd.f32 0.0, %v1556
    %v1558 = vpop.f32.mrb[0].mxu0
    %v1559 = vpop.f32.mrb[0].mxu0
    %v1560 = vpop.f32.mrb[0].mxu0
    %1561 = vdwg.mxu0
    %1563 = vrot.lane.b32.xlu0 %v1557, 96
    %v1564 = vpop.permute.xlu0 %1563
    %1566 = vst.msk [vmem:[#allocation2 + $0x8] sm:$0xff] %vm1105, %v1564
    %v1567 = vld [vmem:[#allocation2] sm:$0xff]
    %v1568 = vld [vmem:[#allocation2 + $0x8] sm:$0xff]
    %v1569 = vpack.c.bf16 %v1568, %v1567
    %v1570 = vld [vmem:[#allocation10] sm:$0xf]
    %v1571 = vld [vmem:[#allocation10 + $0x4] sm:$0xf]
    %v1572 = vld [vmem:[#allocation10 + $0x8] sm:$0xf]
    %v1573 = vld [vmem:[#allocation10 + $0xc] sm:$0xf]
    %v1574 = vld [vmem:[#allocation10 + $0x10] sm:$0xf]
    %v1575 = vld [vmem:[#allocation10 + $0x14] sm:$0xf]
    %v1576 = vld [vmem:[#allocation10 + $0x18] sm:$0xf]
    %v1577 = vld [vmem:[#allocation10 + $0x1c] sm:$0xf]
    %v1578 = vld [vmem:[#allocation10 + $0x20] sm:$0xf]
    %v1579 = vld [vmem:[#allocation10 + $0x24] sm:$0xf]
    %v1580 = vld [vmem:[#allocation10 + $0x28] sm:$0xf]
    %v1581 = vld [vmem:[#allocation10 + $0x2c] sm:$0xf]
    %v1582 = vld [vmem:[#allocation10 + $0x30] sm:$0xf]
    %v1583 = vld [vmem:[#allocation10 + $0x34] sm:$0xf]
    %v1584 = vld [vmem:[#allocation10 + $0x38] sm:$0xf]
    %v1585 = vld [vmem:[#allocation10 + $0x3c] sm:$0xf]
    %v1602 = vunpack.c.l.b16 %v1570
    %v1603 = vunpack.c.l.b16 %v1571
    %v1604 = vunpack.c.l.b16 %v1572
    %v1605 = vunpack.c.l.b16 %v1573
    %v1606 = vunpack.c.l.b16 %v1574
    %v1607 = vunpack.c.l.b16 %v1575
    %v1608 = vunpack.c.l.b16 %v1576
    %v1609 = vunpack.c.l.b16 %v1577
    %v1610 = vunpack.c.l.b16 %v1578
    %v1611 = vunpack.c.l.b16 %v1579
    %v1612 = vunpack.c.l.b16 %v1580
    %v1613 = vunpack.c.l.b16 %v1581
    %v1614 = vunpack.c.l.b16 %v1582
    %v1615 = vunpack.c.l.b16 %v1583
    %v1616 = vunpack.c.l.b16 %v1584
    %v1617 = vunpack.c.l.b16 %v1585
    %v1618 = vpack.c.b16 %v1603, %v1602
    %v1619 = vpack.c.b16 %v1605, %v1604
    %v1620 = vpack.c.b16 %v1607, %v1606
    %v1621 = vpack.c.b16 %v1609, %v1608
    %v1622 = vpack.c.b16 %v1611, %v1610
    %v1623 = vpack.c.b16 %v1613, %v1612
    %v1624 = vpack.c.b16 %v1615, %v1614
    %v1625 = vpack.c.b16 %v1617, %v1616
    %1634 = vmatprep.subr.bf16.mxu0 0
    %1635 = vmatpush1.bf16.msra.mxu0 %v1618
    %1636 = vmatprep.subr.bf16.mxu0 0
    %1637 = vmatpush1.bf16.msra.mxu0 %v1619
    %1638 = vmatprep.subr.bf16.mxu0 0
    %1639 = vmatpush1.bf16.msra.mxu0 %v1620
    %1640 = vmatprep.subr.bf16.mxu0 0
    %1641 = vmatpush1.bf16.msra.mxu0 %v1621
    %1642 = vmatprep.subr.bf16.mxu0 0
    %1643 = vmatpush1.bf16.msra.mxu0 %v1622
    %1644 = vmatprep.subr.bf16.mxu0 0
    %1645 = vmatpush1.bf16.msra.mxu0 %v1623
    %1646 = vmatprep.subr.bf16.mxu0 0
    %1647 = vmatpush1.bf16.msra.mxu0 %v1624
    %1648 = vmatprep.subr.bf16.mxu0 0
    %1649 = vmatpush1.bf16.msra.mxu0 %v1625
    %1650 = vmatprep.subr.bf16.mxu0 0
    %1651 = vmatpush1.bf16.msra.mxu0 0
    %1652 = vmatprep.subr.bf16.mxu0 0
    %1653 = vmatpush1.bf16.msra.mxu0 0
    %1654 = vmatprep.subr.bf16.mxu0 0
    %1655 = vmatpush1.bf16.msra.mxu0 0
    %1656 = vmatprep.subr.bf16.mxu0 0
    %1657 = vmatpush1.bf16.msra.mxu0 0
    %1658 = vmatprep.subr.bf16.mxu0 0
    %1659 = vmatpush1.bf16.msra.mxu0 0
    %1660 = vmatprep.subr.bf16.mxu0 0
    %1661 = vmatpush1.bf16.msra.mxu0 0
    %1662 = vmatprep.subr.bf16.mxu0 0
    %1663 = vmatpush1.bf16.msra.mxu0 0
    %1664 = vmatprep.subr.bf16.mxu0 0
    %1665 = vmatpush1.bf16.msra.mxu0 0
    %1666 = vmatprep.mubr.bf16.mxu0 0
    %1667 = vmatmul.mubr.bf16.gmra.mrb[0].mxu0 %v1569
    %v1668 = vpop.f32.mrb[0].mxu0
    %v1669 = vadd.f32 0.0, %v1668
    %v1670 = vpop.f32.mrb[0].mxu0
    %v1671 = vpop.f32.mrb[0].mxu0
    %v1672 = vadd.f32 0.0, %v1671
    %v1673 = vpop.f32.mrb[0].mxu0
    %1674 = vdwg.mxu0
    %v1675 = vadd.f32 %v319, %v1669
    %v1676 = vadd.f32 %v320, %v1672
    %v1677 = vld [vmem:[#allocation11] sm:$0x1]
    %v1679 = vlaneseq
    %v1680 = vshrl.u32 %v1679, 7
    %v1681 = vsub.s32 0, %v1680
    %v1682 = vrot.slane %v1677, %v1681
    %v1684 = vadd.f32 %v1675, %v1682
    %v1685 = vadd.f32 %v1676, %v1682
    %v1686 = vld [vmem:[#allocation13] sm:$0x1]
    %v1687 = vld [vmem:[#allocation14] sm:$0x1]
    %1688 = vadd.xlane.f32.xlu0 %v1684
    %v1689 = vpop.xlane.xlu0 %1688
    %1690 = vadd.xlane.f32.xlu0 %v1685
    %v1691 = vpop.xlane.xlu0 %1690
    %v1692 = vmul.f32 %v1689, %v339
    %v1693 = vmul.f32 %v1691, %v339
    %v1694 = vsub.f32 %v1684, %v1692
    %v1695 = vsub.f32 %v1685, %v1693
    %v1696 = vmul.f32 %v1694, %v1694
    %v1697 = vmul.f32 %v1695, %v1695
    %1698 = vadd.xlane.f32.xlu0 %v1696
    %v1699 = vpop.xlane.xlu0 %1698
    %1700 = vadd.xlane.f32.xlu0 %v1697
    %v1701 = vpop.xlane.xlu0 %1700
    %v1702 = vmul.f32 %v1699, %v339
    %v1703 = vmul.f32 %v1701, %v339
    %v1704 = vadd.f32 %v1702, 1e-05
    %v1705 = vadd.f32 %v1703, 1e-05
    %v1706 = vrsqrt.pop %v1704
    %v1707 = vrsqrt.pop %v1705
    %v1708 = vmul.f32 %v1694, %v1706
    %v1709 = vmul.f32 %v1695, %v1707
    %v1711 = vlaneseq
    %v1712 = vshrl.u32 %v1711, 7
    %v1713 = vsub.s32 0, %v1712
    %v1714 = vrot.slane %v1686, %v1713
    %v1716 = vmul.f32 %v1708, %v1714
    %v1717 = vmul.f32 %v1709, %v1714
    %v1719 = vlaneseq
    %v1720 = vshrl.u32 %v1719, 7
    %v1721 = vsub.s32 0, %v1720
    %v1722 = vrot.slane %v1687, %v1721
    %v1724 = vadd.f32 %v1716, %v1722
    %v1725 = vadd.f32 %v1717, %v1722
    %v1726 = vpack.c.bf16 %v1725, %v1724
    %v1727 = vld [vmem:[#allocation16] sm:$0xf]
    %v1728 = vld [vmem:[#allocation16 + $0x4] sm:$0xf]
    %v1729 = vld [vmem:[#allocation16 + $0x8] sm:$0xf]
    %v1730 = vld [vmem:[#allocation16 + $0xc] sm:$0xf]
    %v1731 = vld [vmem:[#allocation16 + $0x10] sm:$0xf]
    %v1732 = vld [vmem:[#allocation16 + $0x14] sm:$0xf]
    %v1733 = vld [vmem:[#allocation16 + $0x18] sm:$0xf]
    %v1734 = vld [vmem:[#allocation16 + $0x1c] sm:$0xf]
    %v1735 = vld [vmem:[#allocation16 + $0x20] sm:$0xf]
    %v1736 = vld [vmem:[#allocation16 + $0x24] sm:$0xf]
    %v1737 = vld [vmem:[#allocation16 + $0x28] sm:$0xf]
    %v1738 = vld [vmem:[#allocation16 + $0x2c] sm:$0xf]
    %v1739 = vld [vmem:[#allocation16 + $0x30] sm:$0xf]
    %v1740 = vld [vmem:[#allocation16 + $0x34] sm:$0xf]
    %v1741 = vld [vmem:[#allocation16 + $0x38] sm:$0xf]
    %v1742 = vld [vmem:[#allocation16 + $0x3c] sm:$0xf]
    %v1743 = vld [vmem:[#allocation17] sm:$0x1]
    %v1745 = vlaneseq
    %v1746 = vshrl.u32 %v1745, 7
    %v1747 = vsub.s32 0, %v1746
    %v1748 = vrot.slane %v1743, %v1747
    %v1766 = vunpack.c.l.b16 %v1727
    %v1767 = vunpack.c.l.b16 %v1728
    %v1768 = vunpack.c.l.b16 %v1729
    %v1769 = vunpack.c.l.b16 %v1730
    %v1770 = vunpack.c.l.b16 %v1731
    %v1771 = vunpack.c.l.b16 %v1732
    %v1772 = vunpack.c.l.b16 %v1733
    %v1773 = vunpack.c.l.b16 %v1734
    %v1774 = vunpack.c.l.b16 %v1735
    %v1775 = vunpack.c.l.b16 %v1736
    %v1776 = vunpack.c.l.b16 %v1737
    %v1777 = vunpack.c.l.b16 %v1738
    %v1778 = vunpack.c.l.b16 %v1739
    %v1779 = vunpack.c.l.b16 %v1740
    %v1780 = vunpack.c.l.b16 %v1741
    %v1781 = vunpack.c.l.b16 %v1742
    %v1782 = vpack.c.b16 %v1767, %v1766
    %v1783 = vpack.c.b16 %v1769, %v1768
    %v1784 = vpack.c.b16 %v1771, %v1770
    %v1785 = vpack.c.b16 %v1773, %v1772
    %v1786 = vpack.c.b16 %v1775, %v1774
    %v1787 = vpack.c.b16 %v1777, %v1776
    %v1788 = vpack.c.b16 %v1779, %v1778
    %v1789 = vpack.c.b16 %v1781, %v1780
    %1798 = vmatprep.subr.bf16.mxu0 0
    %1799 = vmatpush1.bf16.msra.mxu0 %v1782
    %1800 = vmatprep.subr.bf16.mxu0 0
    %1801 = vmatpush1.bf16.msra.mxu0 %v1783
    %1802 = vmatprep.subr.bf16.mxu0 0
    %1803 = vmatpush1.bf16.msra.mxu0 %v1784
    %1804 = vmatprep.subr.bf16.mxu0 0
    %1805 = vmatpush1.bf16.msra.mxu0 %v1785
    %1806 = vmatprep.subr.bf16.mxu0 0
    %1807 = vmatpush1.bf16.msra.mxu0 %v1786
    %1808 = vmatprep.subr.bf16.mxu0 0
    %1809 = vmatpush1.bf16.msra.mxu0 %v1787
    %1810 = vmatprep.subr.bf16.mxu0 0
    %1811 = vmatpush1.bf16.msra.mxu0 %v1788
    %1812 = vmatprep.subr.bf16.mxu0 0
    %1813 = vmatpush1.bf16.msra.mxu0 %v1789
    %1814 = vmatprep.subr.bf16.mxu0 0
    %1815 = vmatpush1.bf16.msra.mxu0 0
    %1816 = vmatprep.subr.bf16.mxu0 0
    %1817 = vmatpush1.bf16.msra.mxu0 0
    %1818 = vmatprep.subr.bf16.mxu0 0
    %1819 = vmatpush1.bf16.msra.mxu0 0
    %1820 = vmatprep.subr.bf16.mxu0 0
    %1821 = vmatpush1.bf16.msra.mxu0 0
    %1822 = vmatprep.subr.bf16.mxu0 0
    %1823 = vmatpush1.bf16.msra.mxu0 0
    %1824 = vmatprep.subr.bf16.mxu0 0
    %1825 = vmatpush1.bf16.msra.mxu0 0
    %1826 = vmatprep.subr.bf16.mxu0 0
    %1827 = vmatpush1.bf16.msra.mxu0 0
    %1828 = vmatprep.subr.bf16.mxu0 0
    %1829 = vmatpush1.bf16.msra.mxu0 0
    %1830 = vmatprep.mubr.bf16.mxu0 0
    %1831 = vmatmul.mubr.bf16.gmra.mrb[0].mxu0 %v1726
    %v1832 = vpop.f32.mrb[0].mxu0
    %v1833 = vadd.f32 %v1748, %v1832
    %v1834 = vpop.f32.mrb[0].mxu0
    %v1835 = vpop.f32.mrb[0].mxu0
    %v1836 = vadd.f32 %v1748, %v1835
    %v1837 = vpop.f32.mrb[0].mxu0
    %1838 = vdwg.mxu0
    %v1839 = vmul.f32 %v1833, 0.17677669
    %v1840 = vmul.f32 %v1836, 0.17677669
    %v1841 = vld [vmem:[#allocation19] sm:$0xff]
    %v1842 = vld [vmem:[#allocation19 + $0x8] sm:$0xff]
    %v1843 = vld [vmem:[#allocation19 + $0x10] sm:$0xff]
    %v1844 = vld [vmem:[#allocation19 + $0x18] sm:$0xff]
    %v1845 = vld [vmem:[#allocation19 + $0x20] sm:$0xff]
    %v1846 = vld [vmem:[#allocation19 + $0x28] sm:$0xff]
    %v1847 = vld [vmem:[#allocation19 + $0x30] sm:$0xff]
    %v1848 = vld [vmem:[#allocation19 + $0x38] sm:$0xff]
    %v1849 = vld [vmem:[#allocation19 + $0x40] sm:$0xff]
    %v1850 = vld [vmem:[#allocation19 + $0x48] sm:$0xff]
    %v1851 = vld [vmem:[#allocation19 + $0x50] sm:$0xff]
    %v1852 = vld [vmem:[#allocation19 + $0x58] sm:$0xff]
    %v1853 = vld [vmem:[#allocation19 + $0x60] sm:$0xff]
    %v1854 = vld [vmem:[#allocation19 + $0x68] sm:$0xff]
    %v1855 = vld [vmem:[#allocation19 + $0x70] sm:$0xff]
    %v1856 = vld [vmem:[#allocation19 + $0x78] sm:$0xff]
    %v1857 = vld [vmem:[#allocation20] sm:$0x3]
    %v1859 = vlaneseq
    %v1860 = vshrl.u32 %v1859, 7
    %v1861 = vsub.s32 0, %v1860
    %v1862 = vrot.slane %v1857, %v1861
    %v1863 = vlaneseq
    %v1864 = vshrl.u32 %v1863, 7
    %v1865 = vsub.s32 1, %v1864
    %v1866 = vrot.slane %v1857, %v1865
    %v1873 = vunpack.c.l.b16 %v321
    %v1874 = vunpack.c.l.b16 %v322
    %v1875 = vunpack.c.l.b16 %v323
    %v1876 = vunpack.c.l.b16 %v324
    %v1877 = vpack.c.b16 %v1874, %v1873
    %v1878 = vpack.c.b16 %v1876, %v1875
    %v1897 = vunpack.c.l.b16 %v1841
    %v1898 = vunpack.c.h.b16 %v1841
    %v1899 = vunpack.c.l.b16 %v1842
    %v1900 = vunpack.c.h.b16 %v1842
    %v1901 = vunpack.c.l.b16 %v1843
    %v1902 = vunpack.c.h.b16 %v1843
    %v1903 = vunpack.c.l.b16 %v1844
    %v1904 = vunpack.c.h.b16 %v1844
    %v1905 = vunpack.c.l.b16 %v1845
    %v1906 = vunpack.c.h.b16 %v1845
    %v1907 = vunpack.c.l.b16 %v1846
    %v1908 = vunpack.c.h.b16 %v1846
    %v1909 = vunpack.c.l.b16 %v1847
    %v1910 = vunpack.c.h.b16 %v1847
    %v1911 = vunpack.c.l.b16 %v1848
    %v1912 = vunpack.c.h.b16 %v1848
    %v1913 = vunpack.c.l.b16 %v1849
    %v1914 = vunpack.c.h.b16 %v1849
    %v1915 = vunpack.c.l.b16 %v1850
    %v1916 = vunpack.c.h.b16 %v1850
    %v1917 = vunpack.c.l.b16 %v1851
    %v1918 = vunpack.c.h.b16 %v1851
    %v1919 = vunpack.c.l.b16 %v1852
    %v1920 = vunpack.c.h.b16 %v1852
    %v1921 = vunpack.c.l.b16 %v1853
    %v1922 = vunpack.c.h.b16 %v1853
    %v1923 = vunpack.c.l.b16 %v1854
    %v1924 = vunpack.c.h.b16 %v1854
    %v1925 = vunpack.c.l.b16 %v1855
    %v1926 = vunpack.c.h.b16 %v1855
    %v1927 = vunpack.c.l.b16 %v1856
    %v1928 = vunpack.c.h.b16 %v1856
    %v1929 = vpack.c.b16 %v1899, %v1897
    %v1930 = vpack.c.b16 %v1900, %v1898
    %v1931 = vpack.c.b16 %v1903, %v1901
    %v1932 = vpack.c.b16 %v1904, %v1902
    %v1933 = vpack.c.b16 %v1907, %v1905
    %v1934 = vpack.c.b16 %v1908, %v1906
    %v1935 = vpack.c.b16 %v1911, %v1909
    %v1936 = vpack.c.b16 %v1912, %v1910
    %v1937 = vpack.c.b16 %v1915, %v1913
    %v1938 = vpack.c.b16 %v1916, %v1914
    %v1939 = vpack.c.b16 %v1919, %v1917
    %v1940 = vpack.c.b16 %v1920, %v1918
    %v1941 = vpack.c.b16 %v1923, %v1921
    %v1942 = vpack.c.b16 %v1924, %v1922
    %v1943 = vpack.c.b16 %v1927, %v1925
    %v1944 = vpack.c.b16 %v1928, %v1926
    %1961 = vmatprep.subr.bf16.mxu0 %v1930
    %1962 = vmatpush1.bf16.msra.mxu0 %v1929
    %1963 = vmatprep.subr.bf16.mxu0 %v1932
    %1964 = vmatpush1.bf16.msra.mxu0 %v1931
    %1965 = vmatprep.subr.bf16.mxu0 %v1934
    %1966 = vmatpush1.bf16.msra.mxu0 %v1933
    %1967 = vmatprep.subr.bf16.mxu0 %v1936
    %1968 = vmatpush1.bf16.msra.mxu0 %v1935
    %1969 = vmatprep.subr.bf16.mxu0 %v1938
    %1970 = vmatpush1.bf16.msra.mxu0 %v1937
    %1971 = vmatprep.subr.bf16.mxu0 %v1940
    %1972 = vmatpush1.bf16.msra.mxu0 %v1939
    %1973 = vmatprep.subr.bf16.mxu0 %v1942
    %1974 = vmatpush1.bf16.msra.mxu0 %v1941
    %1975 = vmatprep.subr.bf16.mxu0 %v1944
    %1976 = vmatpush1.bf16.msra.mxu0 %v1943
    %1977 = vmatprep.subr.bf16.mxu0 0
    %1978 = vmatpush1.bf16.msra.mxu0 0
    %1979 = vmatprep.subr.bf16.mxu0 0
    %1980 = vmatpush1.bf16.msra.mxu0 0
    %1981 = vmatprep.subr.bf16.mxu0 0
    %1982 = vmatpush1.bf16.msra.mxu0 0
    %1983 = vmatprep.subr.bf16.mxu0 0
    %1984 = vmatpush1.bf16.msra.mxu0 0
    %1985 = vmatprep.subr.bf16.mxu0 0
    %1986 = vmatpush1.bf16.msra.mxu0 0
    %1987 = vmatprep.subr.bf16.mxu0 0
    %1988 = vmatpush1.bf16.msra.mxu0 0
    %1989 = vmatprep.subr.bf16.mxu0 0
    %1990 = vmatpush1.bf16.msra.mxu0 0
    %1991 = vmatprep.subr.bf16.mxu0 0
    %1992 = vmatpush1.bf16.msra.mxu0 0
    %1993 = vmatprep.mubr.bf16.mxu0 0
    %1994 = vmatmul.mubr.bf16.gmra.mrb[0].mxu0 %v1877
    %v1995 = vpop.f32.mrb[0].mxu0
    %v1996 = vadd.f32 %v1862, %v1995
    %v1997 = vpop.f32.mrb[0].mxu0
    %v1998 = vadd.f32 %v1866, %v1997
    %v1999 = vpop.f32.mrb[0].mxu0
    %v2000 = vadd.f32 %v1862, %v1999
    %v2001 = vpop.f32.mrb[0].mxu0
    %v2002 = vadd.f32 %v1866, %v2001
    %2003 = vmatprep.mubr.bf16.mxu0 0
    %2004 = vmatmul.mubr.bf16.gmra.mrb[0].mxu0 %v1878
    %v2005 = vpop.f32.mrb[0].mxu0
    %v2006 = vadd.f32 %v1862, %v2005
    %v2007 = vpop.f32.mrb[0].mxu0
    %v2008 = vadd.f32 %v1866, %v2007
    %v2009 = vpop.f32.mrb[0].mxu0
    %v2010 = vadd.f32 %v1862, %v2009
    %v2011 = vpop.f32.mrb[0].mxu0
    %v2012 = vadd.f32 %v1866, %v2011
    %2013 = vdwg.mxu0
    %v2014 = vpack.c.bf16 %v1840, %v1839
    %v2015 = vpack.c.bf16 %v2000, %v1996
    %v2016 = vpack.c.bf16 %v2010, %v2006
    %v2017 = vpack.c.bf16 %v2002, %v1998
    %v2018 = vpack.c.bf16 %v2012, %v2008
    %v2020 = vsel %vm641, %v2014, 0
    %v2023 = vsel %vm641, %v2015, 0
    %2025 = vmatprep.subr.bf16.mxu0 0
    %2026 = vmatpush1.bf16.xpose.msra.mxu0 %v2023
    %2027 = vmatprep.subr.bf16.mxu0 0
    %2028 = vmatpush1.bf16.xpose.msra.mxu0 0
    %2029 = vmatprep.subr.bf16.mxu0 0
    %2030 = vmatpush1.bf16.xpose.msra.mxu0 0
    %2031 = vmatprep.subr.bf16.mxu0 0
    %2032 = vmatpush1.bf16.xpose.msra.mxu0 0
    %2033 = vmatprep.subr.bf16.mxu0 0
    %2034 = vmatpush1.bf16.xpose.msra.mxu0 0
    %2035 = vmatprep.subr.bf16.mxu0 0
    %2036 = vmatpush1.bf16.xpose.msra.mxu0 0
    %2037 = vmatprep.subr.bf16.mxu0 0
    %2038 = vmatpush1.bf16.xpose.msra.mxu0 0
    %2039 = vmatprep.subr.bf16.mxu0 0
    %2040 = vmatpush1.bf16.xpose.msra.mxu0 0
    %2041 = vmatprep.subr.bf16.mxu0 0
    %2042 = vmatpush1.bf16.xpose.msra.mxu0 0
    %2043 = vmatprep.subr.bf16.mxu0 0
    %2044 = vmatpush1.bf16.xpose.msra.mxu0 0
    %2045 = vmatprep.subr.bf16.mxu0 0
    %2046 = vmatpush1.bf16.xpose.msra.mxu0 0
    %2047 = vmatprep.subr.bf16.mxu0 0
    %2048 = vmatpush1.bf16.xpose.msra.mxu0 0
    %2049 = vmatprep.subr.bf16.mxu0 0
    %2050 = vmatpush1.bf16.xpose.msra.mxu0 0
    %2051 = vmatprep.subr.bf16.mxu0 0
    %2052 = vmatpush1.bf16.xpose.msra.mxu0 0
    %2053 = vmatprep.subr.bf16.mxu0 0
    %2054 = vmatpush1.bf16.xpose.msra.mxu0 0
    %2055 = vmatprep.subr.bf16.mxu0 0
    %2056 = vmatpush1.bf16.xpose.msra.mxu0 0
    %2057 = vmatprep.mubr.bf16.mxu0 0
    %2058 = vmatmul.mubr.bf16.gmra.mrb[0].mxu0 %v2020
    %v2059 = vpop.f32.mrb[0].mxu0
    %v2060 = vadd.f32 0.0, %v2059
    %v2061 = vpop.f32.mrb[0].mxu0
    %v2062 = vpop.f32.mrb[0].mxu0
    %v2063 = vpop.f32.mrb[0].mxu0
    %2064 = vdwg.mxu0
    %v2065 = vsel %vm331, 16843009, 0
    %v2066 = vunpack.c.0.s8 %v2065
    %vm2067 = vcmp.ne.s32.totalorder %v2066, 0
    %v2068 = vsel %vm2067, %v2060, 1e-09
    %vm2069 = vcmask 130048
    %v2070 = vsel %vm2069, %v2068, -inf
    %2071 = vmax.xlane.f32.xlu0 %v2070
    %v2072 = vpop.xlane.xlu0 %2071
    %v2073 = vsub.f32 %v2068, %v2072
    %v2074 = vmul.f32 %v2073, 1.442695
    %v2075 = vpow.pop %v2074
    %v2076 = vsel %vm2069, %v2075, 0.0
    %2077 = vadd.xlane.f32.xlu0 %v2076
    %v2078 = vpop.xlane.xlu0 %2077
    %v2079 = vrcp.pop %v2078
    %v2080 = vmul.f32 %v2075, %v2079
    %v2081 = vpack.c.bf16 %v2080, %v2080
    %v2083 = vsel %vm2069, %v2081, 0
    %2085 = vmatprep.subr.bf16.mxu0 0
    %2086 = vmatpush1.bf16.msra.mxu0 %v2017
    %2087 = vmatprep.subr.bf16.mxu0 0
    %2088 = vmatpush1.bf16.msra.mxu0 0
    %2089 = vmatprep.subr.bf16.mxu0 0
    %2090 = vmatpush1.bf16.msra.mxu0 0
    %2091 = vmatprep.subr.bf16.mxu0 0
    %2092 = vmatpush1.bf16.msra.mxu0 0
    %2093 = vmatprep.subr.bf16.mxu0 0
    %2094 = vmatpush1.bf16.msra.mxu0 0
    %2095 = vmatprep.subr.bf16.mxu0 0
    %2096 = vmatpush1.bf16.msra.mxu0 0
    %2097 = vmatprep.subr.bf16.mxu0 0
    %2098 = vmatpush1.bf16.msra.mxu0 0
    %2099 = vmatprep.subr.bf16.mxu0 0
    %2100 = vmatpush1.bf16.msra.mxu0 0
    %2101 = vmatprep.subr.bf16.mxu0 0
    %2102 = vmatpush1.bf16.msra.mxu0 0
    %2103 = vmatprep.subr.bf16.mxu0 0
    %2104 = vmatpush1.bf16.msra.mxu0 0
    %2105 = vmatprep.subr.bf16.mxu0 0
    %2106 = vmatpush1.bf16.msra.mxu0 0
    %2107 = vmatprep.subr.bf16.mxu0 0
    %2108 = vmatpush1.bf16.msra.mxu0 0
    %2109 = vmatprep.subr.bf16.mxu0 0
    %2110 = vmatpush1.bf16.msra.mxu0 0
    %2111 = vmatprep.subr.bf16.mxu0 0
    %2112 = vmatpush1.bf16.msra.mxu0 0
    %2113 = vmatprep.subr.bf16.mxu0 0
    %2114 = vmatpush1.bf16.msra.mxu0 0
    %2115 = vmatprep.subr.bf16.mxu0 0
    %2116 = vmatpush1.bf16.msra.mxu0 0
    %2117 = vmatprep.mubr.bf16.mxu0 0
    %2118 = vmatmul.mubr.bf16.gmra.mrb[0].mxu0 %v2083
    %v2119 = vpop.f32.mrb[0].mxu0
    %v2120 = vadd.f32 0.0, %v2119
    %v2121 = vpop.f32.mrb[0].mxu0
    %v2122 = vpop.f32.mrb[0].mxu0
    %v2123 = vpop.f32.mrb[0].mxu0
    %2124 = vdwg.mxu0
    %2125 = vst.msk [vmem:[#allocation2] sm:$0xff] %vm641, %v2120
    %2127 = vrot.lane.b32.xlu0 %v2014, 96
    %v2128 = vpop.permute.xlu0 %2127
    %2130 = vrot.lane.b32.xlu0 %v2015, 96
    %v2131 = vpop.permute.xlu0 %2130
    %v2133 = vsel %vm641, %v2128, 0
    %v2136 = vsel %vm641, %v2131, 0
    %2138 = vmatprep.subr.bf16.mxu0 0
    %2139 = vmatpush1.bf16.xpose.msra.mxu0 %v2136
    %2140 = vmatprep.subr.bf16.mxu0 0
    %2141 = vmatpush1.bf16.xpose.msra.mxu0 0
    %2142 = vmatprep.subr.bf16.mxu0 0
    %2143 = vmatpush1.bf16.xpose.msra.mxu0 0
    %2144 = vmatprep.subr.bf16.mxu0 0
    %2145 = vmatpush1.bf16.xpose.msra.mxu0 0
    %2146 = vmatprep.subr.bf16.mxu0 0
    %2147 = vmatpush1.bf16.xpose.msra.mxu0 0
    %2148 = vmatprep.subr.bf16.mxu0 0
    %2149 = vmatpush1.bf16.xpose.msra.mxu0 0
    %2150 = vmatprep.subr.bf16.mxu0 0
    %2151 = vmatpush1.bf16.xpose.msra.mxu0 0
    %2152 = vmatprep.subr.bf16.mxu0 0
    %2153 = vmatpush1.bf16.xpose.msra.mxu0 0
    %2154 = vmatprep.subr.bf16.mxu0 0
    %2155 = vmatpush1.bf16.xpose.msra.mxu0 0
    %2156 = vmatprep.subr.bf16.mxu0 0
    %2157 = vmatpush1.bf16.xpose.msra.mxu0 0
    %2158 = vmatprep.subr.bf16.mxu0 0
    %2159 = vmatpush1.bf16.xpose.msra.mxu0 0
    %2160 = vmatprep.subr.bf16.mxu0 0
    %2161 = vmatpush1.bf16.xpose.msra.mxu0 0
    %2162 = vmatprep.subr.bf16.mxu0 0
    %2163 = vmatpush1.bf16.xpose.msra.mxu0 0
    %2164 = vmatprep.subr.bf16.mxu0 0
    %2165 = vmatpush1.bf16.xpose.msra.mxu0 0
    %2166 = vmatprep.subr.bf16.mxu0 0
    %2167 = vmatpush1.bf16.xpose.msra.mxu0 0
    %2168 = vmatprep.subr.bf16.mxu0 0
    %2169 = vmatpush1.bf16.xpose.msra.mxu0 0
    %2170 = vmatprep.mubr.bf16.mxu0 0
    %2171 = vmatmul.mubr.bf16.gmra.mrb[0].mxu0 %v2133
    %v2172 = vpop.f32.mrb[0].mxu0
    %v2173 = vadd.f32 0.0, %v2172
    %v2174 = vpop.f32.mrb[0].mxu0
    %v2175 = vpop.f32.mrb[0].mxu0
    %v2176 = vpop.f32.mrb[0].mxu0
    %2177 = vdwg.mxu0
    %v2178 = vsel %vm2067, %v2173, 1e-09
    %v2179 = vsel %vm2069, %v2178, -inf
    %2180 = vmax.xlane.f32.xlu0 %v2179
    %v2181 = vpop.xlane.xlu0 %2180
    %v2182 = vsub.f32 %v2178, %v2181
    %v2183 = vmul.f32 %v2182, 1.442695
    %v2184 = vpow.pop %v2183
    %v2185 = vsel %vm2069, %v2184, 0.0
    %2186 = vadd.xlane.f32.xlu0 %v2185
    %v2187 = vpop.xlane.xlu0 %2186
    %v2188 = vrcp.pop %v2187
    %v2189 = vmul.f32 %v2184, %v2188
    %v2190 = vpack.c.bf16 %v2189, %v2189
    %2192 = vrot.lane.b32.xlu0 %v2017, 96
    %v2193 = vpop.permute.xlu0 %2192
    %v2196 = vsel %vm2069, %v2190, 0
    %2198 = vmatprep.subr.bf16.mxu0 0
    %2199 = vmatpush1.bf16.msra.mxu0 %v2193
    %2200 = vmatprep.subr.bf16.mxu0 0
    %2201 = vmatpush1.bf16.msra.mxu0 0
    %2202 = vmatprep.subr.bf16.mxu0 0
    %2203 = vmatpush1.bf16.msra.mxu0 0
    %2204 = vmatprep.subr.bf16.mxu0 0
    %2205 = vmatpush1.bf16.msra.mxu0 0
    %2206 = vmatprep.subr.bf16.mxu0 0
    %2207 = vmatpush1.bf16.msra.mxu0 0
    %2208 = vmatprep.subr.bf16.mxu0 0
    %2209 = vmatpush1.bf16.msra.mxu0 0
    %2210 = vmatprep.subr.bf16.mxu0 0
    %2211 = vmatpush1.bf16.msra.mxu0 0
    %2212 = vmatprep.subr.bf16.mxu0 0
    %2213 = vmatpush1.bf16.msra.mxu0 0
    %2214 = vmatprep.subr.bf16.mxu0 0
    %2215 = vmatpush1.bf16.msra.mxu0 0
    %2216 = vmatprep.subr.bf16.mxu0 0
    %2217 = vmatpush1.bf16.msra.mxu0 0
    %2218 = vmatprep.subr.bf16.mxu0 0
    %2219 = vmatpush1.bf16.msra.mxu0 0
    %2220 = vmatprep.subr.bf16.mxu0 0
    %2221 = vmatpush1.bf16.msra.mxu0 0
    %2222 = vmatprep.subr.bf16.mxu0 0
    %2223 = vmatpush1.bf16.msra.mxu0 0
    %2224 = vmatprep.subr.bf16.mxu0 0
    %2225 = vmatpush1.bf16.msra.mxu0 0
    %2226 = vmatprep.subr.bf16.mxu0 0
    %2227 = vmatpush1.bf16.msra.mxu0 0
    %2228 = vmatprep.subr.bf16.mxu0 0
    %2229 = vmatpush1.bf16.msra.mxu0 0
    %2230 = vmatprep.mubr.bf16.mxu0 0
    %2231 = vmatmul.mubr.bf16.gmra.mrb[0].mxu0 %v2196
    %v2232 = vpop.f32.mrb[0].mxu0
    %v2233 = vadd.f32 0.0, %v2232
    %v2234 = vpop.f32.mrb[0].mxu0
    %v2235 = vpop.f32.mrb[0].mxu0
    %v2236 = vpop.f32.mrb[0].mxu0
    %2237 = vdwg.mxu0
    %2239 = vrot.lane.b32.xlu0 %v2233, 32
    %v2240 = vpop.permute.xlu0 %2239
    %2242 = vst.msk [vmem:[#allocation2] sm:$0xff] %vm871, %v2240
    %2243 = vrot.lane.b32.xlu0 %v2014, 64
    %v2244 = vpop.permute.xlu0 %2243
    %2245 = vrot.lane.b32.xlu0 %v2015, 64
    %v2246 = vpop.permute.xlu0 %2245
    %v2248 = vsel %vm641, %v2244, 0
    %v2251 = vsel %vm641, %v2246, 0
    %2253 = vmatprep.subr.bf16.mxu0 0
    %2254 = vmatpush1.bf16.xpose.msra.mxu0 %v2251
    %2255 = vmatprep.subr.bf16.mxu0 0
    %2256 = vmatpush1.bf16.xpose.msra.mxu0 0
    %2257 = vmatprep.subr.bf16.mxu0 0
    %2258 = vmatpush1.bf16.xpose.msra.mxu0 0
    %2259 = vmatprep.subr.bf16.mxu0 0
    %2260 = vmatpush1.bf16.xpose.msra.mxu0 0
    %2261 = vmatprep.subr.bf16.mxu0 0
    %2262 = vmatpush1.bf16.xpose.msra.mxu0 0
    %2263 = vmatprep.subr.bf16.mxu0 0
    %2264 = vmatpush1.bf16.xpose.msra.mxu0 0
    %2265 = vmatprep.subr.bf16.mxu0 0
    %2266 = vmatpush1.bf16.xpose.msra.mxu0 0
    %2267 = vmatprep.subr.bf16.mxu0 0
    %2268 = vmatpush1.bf16.xpose.msra.mxu0 0
    %2269 = vmatprep.subr.bf16.mxu0 0
    %2270 = vmatpush1.bf16.xpose.msra.mxu0 0
    %2271 = vmatprep.subr.bf16.mxu0 0
    %2272 = vmatpush1.bf16.xpose.msra.mxu0 0
    %2273 = vmatprep.subr.bf16.mxu0 0
    %2274 = vmatpush1.bf16.xpose.msra.mxu0 0
    %2275 = vmatprep.subr.bf16.mxu0 0
    %2276 = vmatpush1.bf16.xpose.msra.mxu0 0
    %2277 = vmatprep.subr.bf16.mxu0 0
    %2278 = vmatpush1.bf16.xpose.msra.mxu0 0
    %2279 = vmatprep.subr.bf16.mxu0 0
    %2280 = vmatpush1.bf16.xpose.msra.mxu0 0
    %2281 = vmatprep.subr.bf16.mxu0 0
    %2282 = vmatpush1.bf16.xpose.msra.mxu0 0
    %2283 = vmatprep.subr.bf16.mxu0 0
    %2284 = vmatpush1.bf16.xpose.msra.mxu0 0
    %2285 = vmatprep.mubr.bf16.mxu0 0
    %2286 = vmatmul.mubr.bf16.gmra.mrb[0].mxu0 %v2248
    %v2287 = vpop.f32.mrb[0].mxu0
    %v2288 = vadd.f32 0.0, %v2287
    %v2289 = vpop.f32.mrb[0].mxu0
    %v2290 = vpop.f32.mrb[0].mxu0
    %v2291 = vpop.f32.mrb[0].mxu0
    %2292 = vdwg.mxu0
    %v2293 = vsel %vm2067, %v2288, 1e-09
    %v2294 = vsel %vm2069, %v2293, -inf
    %2295 = vmax.xlane.f32.xlu0 %v2294
    %v2296 = vpop.xlane.xlu0 %2295
    %v2297 = vsub.f32 %v2293, %v2296
    %v2298 = vmul.f32 %v2297, 1.442695
    %v2299 = vpow.pop %v2298
    %v2300 = vsel %vm2069, %v2299, 0.0
    %2301 = vadd.xlane.f32.xlu0 %v2300
    %v2302 = vpop.xlane.xlu0 %2301
    %v2303 = vrcp.pop %v2302
    %v2304 = vmul.f32 %v2299, %v2303
    %v2305 = vpack.c.bf16 %v2304, %v2304
    %2306 = vrot.lane.b32.xlu0 %v2017, 64
    %v2307 = vpop.permute.xlu0 %2306
    %v2310 = vsel %vm2069, %v2305, 0
    %2312 = vmatprep.subr.bf16.mxu0 0
    %2313 = vmatpush1.bf16.msra.mxu0 %v2307
    %2314 = vmatprep.subr.bf16.mxu0 0
    %2315 = vmatpush1.bf16.msra.mxu0 0
    %2316 = vmatprep.subr.bf16.mxu0 0
    %2317 = vmatpush1.bf16.msra.mxu0 0
    %2318 = vmatprep.subr.bf16.mxu0 0
    %2319 = vmatpush1.bf16.msra.mxu0 0
    %2320 = vmatprep.subr.bf16.mxu0 0
    %2321 = vmatpush1.bf16.msra.mxu0 0
    %2322 = vmatprep.subr.bf16.mxu0 0
    %2323 = vmatpush1.bf16.msra.mxu0 0
    %2324 = vmatprep.subr.bf16.mxu0 0
    %2325 = vmatpush1.bf16.msra.mxu0 0
    %2326 = vmatprep.subr.bf16.mxu0 0
    %2327 = vmatpush1.bf16.msra.mxu0 0
    %2328 = vmatprep.subr.bf16.mxu0 0
    %2329 = vmatpush1.bf16.msra.mxu0 0
    %2330 = vmatprep.subr.bf16.mxu0 0
    %2331 = vmatpush1.bf16.msra.mxu0 0
    %2332 = vmatprep.subr.bf16.mxu0 0
    %2333 = vmatpush1.bf16.msra.mxu0 0
    %2334 = vmatprep.subr.bf16.mxu0 0
    %2335 = vmatpush1.bf16.msra.mxu0 0
    %2336 = vmatprep.subr.bf16.mxu0 0
    %2337 = vmatpush1.bf16.msra.mxu0 0
    %2338 = vmatprep.subr.bf16.mxu0 0
    %2339 = vmatpush1.bf16.msra.mxu0 0
    %2340 = vmatprep.subr.bf16.mxu0 0
    %2341 = vmatpush1.bf16.msra.mxu0 0
    %2342 = vmatprep.subr.bf16.mxu0 0
    %2343 = vmatpush1.bf16.msra.mxu0 0
    %2344 = vmatprep.mubr.bf16.mxu0 0
    %2345 = vmatmul.mubr.bf16.gmra.mrb[0].mxu0 %v2310
    %v2346 = vpop.f32.mrb[0].mxu0
    %v2347 = vadd.f32 0.0, %v2346
    %v2348 = vpop.f32.mrb[0].mxu0
    %v2349 = vpop.f32.mrb[0].mxu0
    %v2350 = vpop.f32.mrb[0].mxu0
    %2351 = vdwg.mxu0
    %2353 = vrot.lane.b32.xlu0 %v2347, 64
    %v2354 = vpop.permute.xlu0 %2353
    %2356 = vst.msk [vmem:[#allocation2] sm:$0xff] %vm988, %v2354
    %2357 = vrot.lane.b32.xlu0 %v2014, 32
    %v2358 = vpop.permute.xlu0 %2357
    %2359 = vrot.lane.b32.xlu0 %v2015, 32
    %v2360 = vpop.permute.xlu0 %2359
    %v2362 = vsel %vm641, %v2358, 0
    %v2365 = vsel %vm641, %v2360, 0
    %2367 = vmatprep.subr.bf16.mxu0 0
    %2368 = vmatpush1.bf16.xpose.msra.mxu0 %v2365
    %2369 = vmatprep.subr.bf16.mxu0 0
    %2370 = vmatpush1.bf16.xpose.msra.mxu0 0
    %2371 = vmatprep.subr.bf16.mxu0 0
    %2372 = vmatpush1.bf16.xpose.msra.mxu0 0
    %2373 = vmatprep.subr.bf16.mxu0 0
    %2374 = vmatpush1.bf16.xpose.msra.mxu0 0
    %2375 = vmatprep.subr.bf16.mxu0 0
    %2376 = vmatpush1.bf16.xpose.msra.mxu0 0
    %2377 = vmatprep.subr.bf16.mxu0 0
    %2378 = vmatpush1.bf16.xpose.msra.mxu0 0
    %2379 = vmatprep.subr.bf16.mxu0 0
    %2380 = vmatpush1.bf16.xpose.msra.mxu0 0
    %2381 = vmatprep.subr.bf16.mxu0 0
    %2382 = vmatpush1.bf16.xpose.msra.mxu0 0
    %2383 = vmatprep.subr.bf16.mxu0 0
    %2384 = vmatpush1.bf16.xpose.msra.mxu0 0
    %2385 = vmatprep.subr.bf16.mxu0 0
    %2386 = vmatpush1.bf16.xpose.msra.mxu0 0
    %2387 = vmatprep.subr.bf16.mxu0 0
    %2388 = vmatpush1.bf16.xpose.msra.mxu0 0
    %2389 = vmatprep.subr.bf16.mxu0 0
    %2390 = vmatpush1.bf16.xpose.msra.mxu0 0
    %2391 = vmatprep.subr.bf16.mxu0 0
    %2392 = vmatpush1.bf16.xpose.msra.mxu0 0
    %2393 = vmatprep.subr.bf16.mxu0 0
    %2394 = vmatpush1.bf16.xpose.msra.mxu0 0
    %2395 = vmatprep.subr.bf16.mxu0 0
    %2396 = vmatpush1.bf16.xpose.msra.mxu0 0
    %2397 = vmatprep.subr.bf16.mxu0 0
    %2398 = vmatpush1.bf16.xpose.msra.mxu0 0
    %2399 = vmatprep.mubr.bf16.mxu0 0
    %2400 = vmatmul.mubr.bf16.gmra.mrb[0].mxu0 %v2362
    %v2401 = vpop.f32.mrb[0].mxu0
    %v2402 = vadd.f32 0.0, %v2401
    %v2403 = vpop.f32.mrb[0].mxu0
    %v2404 = vpop.f32.mrb[0].mxu0
    %v2405 = vpop.f32.mrb[0].mxu0
    %2406 = vdwg.mxu0
    %v2407 = vsel %vm2067, %v2402, 1e-09
    %v2408 = vsel %vm2069, %v2407, -inf
    %2409 = vmax.xlane.f32.xlu0 %v2408
    %v2410 = vpop.xlane.xlu0 %2409
    %v2411 = vsub.f32 %v2407, %v2410
    %v2412 = vmul.f32 %v2411, 1.442695
    %v2413 = vpow.pop %v2412
    %v2414 = vsel %vm2069, %v2413, 0.0
    %2415 = vadd.xlane.f32.xlu0 %v2414
    %v2416 = vpop.xlane.xlu0 %2415
    %v2417 = vrcp.pop %v2416
    %v2418 = vmul.f32 %v2413, %v2417
    %v2419 = vpack.c.bf16 %v2418, %v2418
    %2420 = vrot.lane.b32.xlu0 %v2017, 32
    %v2421 = vpop.permute.xlu0 %2420
    %v2424 = vsel %vm2069, %v2419, 0
    %2426 = vmatprep.subr.bf16.mxu0 0
    %2427 = vmatpush1.bf16.msra.mxu0 %v2421
    %2428 = vmatprep.subr.bf16.mxu0 0
    %2429 = vmatpush1.bf16.msra.mxu0 0
    %2430 = vmatprep.subr.bf16.mxu0 0
    %2431 = vmatpush1.bf16.msra.mxu0 0
    %2432 = vmatprep.subr.bf16.mxu0 0
    %2433 = vmatpush1.bf16.msra.mxu0 0
    %2434 = vmatprep.subr.bf16.mxu0 0
    %2435 = vmatpush1.bf16.msra.mxu0 0
    %2436 = vmatprep.subr.bf16.mxu0 0
    %2437 = vmatpush1.bf16.msra.mxu0 0
    %2438 = vmatprep.subr.bf16.mxu0 0
    %2439 = vmatpush1.bf16.msra.mxu0 0
    %2440 = vmatprep.subr.bf16.mxu0 0
    %2441 = vmatpush1.bf16.msra.mxu0 0
    %2442 = vmatprep.subr.bf16.mxu0 0
    %2443 = vmatpush1.bf16.msra.mxu0 0
    %2444 = vmatprep.subr.bf16.mxu0 0
    %2445 = vmatpush1.bf16.msra.mxu0 0
    %2446 = vmatprep.subr.bf16.mxu0 0
    %2447 = vmatpush1.bf16.msra.mxu0 0
    %2448 = vmatprep.subr.bf16.mxu0 0
    %2449 = vmatpush1.bf16.msra.mxu0 0
    %2450 = vmatprep.subr.bf16.mxu0 0
    %2451 = vmatpush1.bf16.msra.mxu0 0
    %2452 = vmatprep.subr.bf16.mxu0 0
    %2453 = vmatpush1.bf16.msra.mxu0 0
    %2454 = vmatprep.subr.bf16.mxu0 0
    %2455 = vmatpush1.bf16.msra.mxu0 0
    %2456 = vmatprep.subr.bf16.mxu0 0
    %2457 = vmatpush1.bf16.msra.mxu0 0
    %2458 = vmatprep.mubr.bf16.mxu0 0
    %2459 = vmatmul.mubr.bf16.gmra.mrb[0].mxu0 %v2424
    %v2460 = vpop.f32.mrb[0].mxu0
    %v2461 = vadd.f32 0.0, %v2460
    %v2462 = vpop.f32.mrb[0].mxu0
    %v2463 = vpop.f32.mrb[0].mxu0
    %v2464 = vpop.f32.mrb[0].mxu0
    %2465 = vdwg.mxu0
    %2467 = vrot.lane.b32.xlu0 %v2461, 96
    %v2468 = vpop.permute.xlu0 %2467
    %2470 = vst.msk [vmem:[#allocation2] sm:$0xff] %vm1105, %v2468
    %v2471 = vrot.slane %v2014, 4
    %v2473 = vsel %vm641, %v2471, 0
    %v2476 = vsel %vm641, %v2016, 0
    %2478 = vmatprep.subr.bf16.mxu0 0
    %2479 = vmatpush1.bf16.xpose.msra.mxu0 %v2476
    %2480 = vmatprep.subr.bf16.mxu0 0
    %2481 = vmatpush1.bf16.xpose.msra.mxu0 0
    %2482 = vmatprep.subr.bf16.mxu0 0
    %2483 = vmatpush1.bf16.xpose.msra.mxu0 0
    %2484 = vmatprep.subr.bf16.mxu0 0
    %2485 = vmatpush1.bf16.xpose.msra.mxu0 0
    %2486 = vmatprep.subr.bf16.mxu0 0
    %2487 = vmatpush1.bf16.xpose.msra.mxu0 0
    %2488 = vmatprep.subr.bf16.mxu0 0
    %2489 = vmatpush1.bf16.xpose.msra.mxu0 0
    %2490 = vmatprep.subr.bf16.mxu0 0
    %2491 = vmatpush1.bf16.xpose.msra.mxu0 0
    %2492 = vmatprep.subr.bf16.mxu0 0
    %2493 = vmatpush1.bf16.xpose.msra.mxu0 0
    %2494 = vmatprep.subr.bf16.mxu0 0
    %2495 = vmatpush1.bf16.xpose.msra.mxu0 0
    %2496 = vmatprep.subr.bf16.mxu0 0
    %2497 = vmatpush1.bf16.xpose.msra.mxu0 0
    %2498 = vmatprep.subr.bf16.mxu0 0
    %2499 = vmatpush1.bf16.xpose.msra.mxu0 0
    %2500 = vmatprep.subr.bf16.mxu0 0
    %2501 = vmatpush1.bf16.xpose.msra.mxu0 0
    %2502 = vmatprep.subr.bf16.mxu0 0
    %2503 = vmatpush1.bf16.xpose.msra.mxu0 0
    %2504 = vmatprep.subr.bf16.mxu0 0
    %2505 = vmatpush1.bf16.xpose.msra.mxu0 0
    %2506 = vmatprep.subr.bf16.mxu0 0
    %2507 = vmatpush1.bf16.xpose.msra.mxu0 0
    %2508 = vmatprep.subr.bf16.mxu0 0
    %2509 = vmatpush1.bf16.xpose.msra.mxu0 0
    %2510 = vmatprep.mubr.bf16.mxu0 0
    %2511 = vmatmul.mubr.bf16.gmra.mrb[0].mxu0 %v2473
    %v2512 = vpop.f32.mrb[0].mxu0
    %v2513 = vadd.f32 0.0, %v2512
    %v2514 = vpop.f32.mrb[0].mxu0
    %v2515 = vpop.f32.mrb[0].mxu0
    %v2516 = vpop.f32.mrb[0].mxu0
    %2517 = vdwg.mxu0
    %v2518 = vsel %vm332, 16843009, 0
    %v2519 = vunpack.c.0.s8 %v2518
    %vm2520 = vcmp.ne.s32.totalorder %v2519, 0
    %v2521 = vsel %vm2520, %v2513, 1e-09
    %v2522 = vsel %vm2069, %v2521, -inf
    %2523 = vmax.xlane.f32.xlu0 %v2522
    %v2524 = vpop.xlane.xlu0 %2523
    %v2525 = vsub.f32 %v2521, %v2524
    %v2526 = vmul.f32 %v2525, 1.442695
    %v2527 = vpow.pop %v2526
    %v2528 = vsel %vm2069, %v2527, 0.0
    %2529 = vadd.xlane.f32.xlu0 %v2528
    %v2530 = vpop.xlane.xlu0 %2529
    %v2531 = vrcp.pop %v2530
    %v2532 = vmul.f32 %v2527, %v2531
    %v2533 = vpack.c.bf16 %v2532, %v2532
    %v2535 = vsel %vm2069, %v2533, 0
    %2537 = vmatprep.subr.bf16.mxu0 0
    %2538 = vmatpush1.bf16.msra.mxu0 %v2018
    %2539 = vmatprep.subr.bf16.mxu0 0
    %2540 = vmatpush1.bf16.msra.mxu0 0
    %2541 = vmatprep.subr.bf16.mxu0 0
    %2542 = vmatpush1.bf16.msra.mxu0 0
    %2543 = vmatprep.subr.bf16.mxu0 0
    %2544 = vmatpush1.bf16.msra.mxu0 0
    %2545 = vmatprep.subr.bf16.mxu0 0
    %2546 = vmatpush1.bf16.msra.mxu0 0
    %2547 = vmatprep.subr.bf16.mxu0 0
    %2548 = vmatpush1.bf16.msra.mxu0 0
    %2549 = vmatprep.subr.bf16.mxu0 0
    %2550 = vmatpush1.bf16.msra.mxu0 0
    %2551 = vmatprep.subr.bf16.mxu0 0
    %2552 = vmatpush1.bf16.msra.mxu0 0
    %2553 = vmatprep.subr.bf16.mxu0 0
    %2554 = vmatpush1.bf16.msra.mxu0 0
    %2555 = vmatprep.subr.bf16.mxu0 0
    %2556 = vmatpush1.bf16.msra.mxu0 0
    %2557 = vmatprep.subr.bf16.mxu0 0
    %2558 = vmatpush1.bf16.msra.mxu0 0
    %2559 = vmatprep.subr.bf16.mxu0 0
    %2560 = vmatpush1.bf16.msra.mxu0 0
    %2561 = vmatprep.subr.bf16.mxu0 0
    %2562 = vmatpush1.bf16.msra.mxu0 0
    %2563 = vmatprep.subr.bf16.mxu0 0
    %2564 = vmatpush1.bf16.msra.mxu0 0
    %2565 = vmatprep.subr.bf16.mxu0 0
    %2566 = vmatpush1.bf16.msra.mxu0 0
    %2567 = vmatprep.subr.bf16.mxu0 0
    %2568 = vmatpush1.bf16.msra.mxu0 0
    %2569 = vmatprep.mubr.bf16.mxu0 0
    %2570 = vmatmul.mubr.bf16.gmra.mrb[0].mxu0 %v2535
    %v2571 = vpop.f32.mrb[0].mxu0
    %v2572 = vadd.f32 0.0, %v2571
    %v2573 = vpop.f32.mrb[0].mxu0
    %v2574 = vpop.f32.mrb[0].mxu0
    %v2575 = vpop.f32.mrb[0].mxu0
    %2576 = vdwg.mxu0
    %2577 = vst.msk [vmem:[#allocation2 + $0x8] sm:$0xff] %vm641, %v2572
    %2578 = vrot.lane.b32.xlu0 %v2471, 96
    %v2579 = vpop.permute.xlu0 %2578
    %2581 = vrot.lane.b32.xlu0 %v2016, 96
    %v2582 = vpop.permute.xlu0 %2581
    %v2584 = vsel %vm641, %v2579, 0
    %v2587 = vsel %vm641, %v2582, 0
    %2589 = vmatprep.subr.bf16.mxu0 0
    %2590 = vmatpush1.bf16.xpose.msra.mxu0 %v2587
    %2591 = vmatprep.subr.bf16.mxu0 0
    %2592 = vmatpush1.bf16.xpose.msra.mxu0 0
    %2593 = vmatprep.subr.bf16.mxu0 0
    %2594 = vmatpush1.bf16.xpose.msra.mxu0 0
    %2595 = vmatprep.subr.bf16.mxu0 0
    %2596 = vmatpush1.bf16.xpose.msra.mxu0 0
    %2597 = vmatprep.subr.bf16.mxu0 0
    %2598 = vmatpush1.bf16.xpose.msra.mxu0 0
    %2599 = vmatprep.subr.bf16.mxu0 0
    %2600 = vmatpush1.bf16.xpose.msra.mxu0 0
    %2601 = vmatprep.subr.bf16.mxu0 0
    %2602 = vmatpush1.bf16.xpose.msra.mxu0 0
    %2603 = vmatprep.subr.bf16.mxu0 0
    %2604 = vmatpush1.bf16.xpose.msra.mxu0 0
    %2605 = vmatprep.subr.bf16.mxu0 0
    %2606 = vmatpush1.bf16.xpose.msra.mxu0 0
    %2607 = vmatprep.subr.bf16.mxu0 0
    %2608 = vmatpush1.bf16.xpose.msra.mxu0 0
    %2609 = vmatprep.subr.bf16.mxu0 0
    %2610 = vmatpush1.bf16.xpose.msra.mxu0 0
    %2611 = vmatprep.subr.bf16.mxu0 0
    %2612 = vmatpush1.bf16.xpose.msra.mxu0 0
    %2613 = vmatprep.subr.bf16.mxu0 0
    %2614 = vmatpush1.bf16.xpose.msra.mxu0 0
    %2615 = vmatprep.subr.bf16.mxu0 0
    %2616 = vmatpush1.bf16.xpose.msra.mxu0 0
    %2617 = vmatprep.subr.bf16.mxu0 0
    %2618 = vmatpush1.bf16.xpose.msra.mxu0 0
    %2619 = vmatprep.subr.bf16.mxu0 0
    %2620 = vmatpush1.bf16.xpose.msra.mxu0 0
    %2621 = vmatprep.mubr.bf16.mxu0 0
    %2622 = vmatmul.mubr.bf16.gmra.mrb[0].mxu0 %v2584
    %v2623 = vpop.f32.mrb[0].mxu0
    %v2624 = vadd.f32 0.0, %v2623
    %v2625 = vpop.f32.mrb[0].mxu0
    %v2626 = vpop.f32.mrb[0].mxu0
    %v2627 = vpop.f32.mrb[0].mxu0
    %2628 = vdwg.mxu0
    %v2629 = vsel %vm2520, %v2624, 1e-09
    %v2630 = vsel %vm2069, %v2629, -inf
    %2631 = vmax.xlane.f32.xlu0 %v2630
    %v2632 = vpop.xlane.xlu0 %2631
    %v2633 = vsub.f32 %v2629, %v2632
    %v2634 = vmul.f32 %v2633, 1.442695
    %v2635 = vpow.pop %v2634
    %v2636 = vsel %vm2069, %v2635, 0.0
    %2637 = vadd.xlane.f32.xlu0 %v2636
    %v2638 = vpop.xlane.xlu0 %2637
    %v2639 = vrcp.pop %v2638
    %v2640 = vmul.f32 %v2635, %v2639
    %v2641 = vpack.c.bf16 %v2640, %v2640
    %2643 = vrot.lane.b32.xlu0 %v2018, 96
    %v2644 = vpop.permute.xlu0 %2643
    %v2647 = vsel %vm2069, %v2641, 0
    %2649 = vmatprep.subr.bf16.mxu0 0
    %2650 = vmatpush1.bf16.msra.mxu0 %v2644
    %2651 = vmatprep.subr.bf16.mxu0 0
    %2652 = vmatpush1.bf16.msra.mxu0 0
    %2653 = vmatprep.subr.bf16.mxu0 0
    %2654 = vmatpush1.bf16.msra.mxu0 0
    %2655 = vmatprep.subr.bf16.mxu0 0
    %2656 = vmatpush1.bf16.msra.mxu0 0
    %2657 = vmatprep.subr.bf16.mxu0 0
    %2658 = vmatpush1.bf16.msra.mxu0 0
    %2659 = vmatprep.subr.bf16.mxu0 0
    %2660 = vmatpush1.bf16.msra.mxu0 0
    %2661 = vmatprep.subr.bf16.mxu0 0
    %2662 = vmatpush1.bf16.msra.mxu0 0
    %2663 = vmatprep.subr.bf16.mxu0 0
    %2664 = vmatpush1.bf16.msra.mxu0 0
    %2665 = vmatprep.subr.bf16.mxu0 0
    %2666 = vmatpush1.bf16.msra.mxu0 0
    %2667 = vmatprep.subr.bf16.mxu0 0
    %2668 = vmatpush1.bf16.msra.mxu0 0
    %2669 = vmatprep.subr.bf16.mxu0 0
    %2670 = vmatpush1.bf16.msra.mxu0 0
    %2671 = vmatprep.subr.bf16.mxu0 0
    %2672 = vmatpush1.bf16.msra.mxu0 0
    %2673 = vmatprep.subr.bf16.mxu0 0
    %2674 = vmatpush1.bf16.msra.mxu0 0
    %2675 = vmatprep.subr.bf16.mxu0 0
    %2676 = vmatpush1.bf16.msra.mxu0 0
    %2677 = vmatprep.subr.bf16.mxu0 0
    %2678 = vmatpush1.bf16.msra.mxu0 0
    %2679 = vmatprep.subr.bf16.mxu0 0
    %2680 = vmatpush1.bf16.msra.mxu0 0
    %2681 = vmatprep.mubr.bf16.mxu0 0
    %2682 = vmatmul.mubr.bf16.gmra.mrb[0].mxu0 %v2647
    %v2683 = vpop.f32.mrb[0].mxu0
    %v2684 = vadd.f32 0.0, %v2683
    %v2685 = vpop.f32.mrb[0].mxu0
    %v2686 = vpop.f32.mrb[0].mxu0
    %v2687 = vpop.f32.mrb[0].mxu0
    %2688 = vdwg.mxu0
    %2690 = vrot.lane.b32.xlu0 %v2684, 32
    %v2691 = vpop.permute.xlu0 %2690
    %2693 = vst.msk [vmem:[#allocation2 + $0x8] sm:$0xff] %vm871, %v2691
    %2694 = vrot.lane.b32.xlu0 %v2471, 64
    %v2695 = vpop.permute.xlu0 %2694
    %2696 = vrot.lane.b32.xlu0 %v2016, 64
    %v2697 = vpop.permute.xlu0 %2696
    %v2699 = vsel %vm641, %v2695, 0
    %v2702 = vsel %vm641, %v2697, 0
    %2704 = vmatprep.subr.bf16.mxu0 0
    %2705 = vmatpush1.bf16.xpose.msra.mxu0 %v2702
    %2706 = vmatprep.subr.bf16.mxu0 0
    %2707 = vmatpush1.bf16.xpose.msra.mxu0 0
    %2708 = vmatprep.subr.bf16.mxu0 0
    %2709 = vmatpush1.bf16.xpose.msra.mxu0 0
    %2710 = vmatprep.subr.bf16.mxu0 0
    %2711 = vmatpush1.bf16.xpose.msra.mxu0 0
    %2712 = vmatprep.subr.bf16.mxu0 0
    %2713 = vmatpush1.bf16.xpose.msra.mxu0 0
    %2714 = vmatprep.subr.bf16.mxu0 0
    %2715 = vmatpush1.bf16.xpose.msra.mxu0 0
    %2716 = vmatprep.subr.bf16.mxu0 0
    %2717 = vmatpush1.bf16.xpose.msra.mxu0 0
    %2718 = vmatprep.subr.bf16.mxu0 0
    %2719 = vmatpush1.bf16.xpose.msra.mxu0 0
    %2720 = vmatprep.subr.bf16.mxu0 0
    %2721 = vmatpush1.bf16.xpose.msra.mxu0 0
    %2722 = vmatprep.subr.bf16.mxu0 0
    %2723 = vmatpush1.bf16.xpose.msra.mxu0 0
    %2724 = vmatprep.subr.bf16.mxu0 0
    %2725 = vmatpush1.bf16.xpose.msra.mxu0 0
    %2726 = vmatprep.subr.bf16.mxu0 0
    %2727 = vmatpush1.bf16.xpose.msra.mxu0 0
    %2728 = vmatprep.subr.bf16.mxu0 0
    %2729 = vmatpush1.bf16.xpose.msra.mxu0 0
    %2730 = vmatprep.subr.bf16.mxu0 0
    %2731 = vmatpush1.bf16.xpose.msra.mxu0 0
    %2732 = vmatprep.subr.bf16.mxu0 0
    %2733 = vmatpush1.bf16.xpose.msra.mxu0 0
    %2734 = vmatprep.subr.bf16.mxu0 0
    %2735 = vmatpush1.bf16.xpose.msra.mxu0 0
    %2736 = vmatprep.mubr.bf16.mxu0 0
    %2737 = vmatmul.mubr.bf16.gmra.mrb[0].mxu0 %v2699
    %v2738 = vpop.f32.mrb[0].mxu0
    %v2739 = vadd.f32 0.0, %v2738
    %v2740 = vpop.f32.mrb[0].mxu0
    %v2741 = vpop.f32.mrb[0].mxu0
    %v2742 = vpop.f32.mrb[0].mxu0
    %2743 = vdwg.mxu0
    %v2744 = vsel %vm2520, %v2739, 1e-09
    %v2745 = vsel %vm2069, %v2744, -inf
    %2746 = vmax.xlane.f32.xlu0 %v2745
    %v2747 = vpop.xlane.xlu0 %2746
    %v2748 = vsub.f32 %v2744, %v2747
    %v2749 = vmul.f32 %v2748, 1.442695
    %v2750 = vpow.pop %v2749
    %v2751 = vsel %vm2069, %v2750, 0.0
    %2752 = vadd.xlane.f32.xlu0 %v2751
    %v2753 = vpop.xlane.xlu0 %2752
    %v2754 = vrcp.pop %v2753
    %v2755 = vmul.f32 %v2750, %v2754
    %v2756 = vpack.c.bf16 %v2755, %v2755
    %2757 = vrot.lane.b32.xlu0 %v2018, 64
    %v2758 = vpop.permute.xlu0 %2757
    %v2761 = vsel %vm2069, %v2756, 0
    %2763 = vmatprep.subr.bf16.mxu0 0
    %2764 = vmatpush1.bf16.msra.mxu0 %v2758
    %2765 = vmatprep.subr.bf16.mxu0 0
    %2766 = vmatpush1.bf16.msra.mxu0 0
    %2767 = vmatprep.subr.bf16.mxu0 0
    %2768 = vmatpush1.bf16.msra.mxu0 0
    %2769 = vmatprep.subr.bf16.mxu0 0
    %2770 = vmatpush1.bf16.msra.mxu0 0
    %2771 = vmatprep.subr.bf16.mxu0 0
    %2772 = vmatpush1.bf16.msra.mxu0 0
    %2773 = vmatprep.subr.bf16.mxu0 0
    %2774 = vmatpush1.bf16.msra.mxu0 0
    %2775 = vmatprep.subr.bf16.mxu0 0
    %2776 = vmatpush1.bf16.msra.mxu0 0
    %2777 = vmatprep.subr.bf16.mxu0 0
    %2778 = vmatpush1.bf16.msra.mxu0 0
    %2779 = vmatprep.subr.bf16.mxu0 0
    %2780 = vmatpush1.bf16.msra.mxu0 0
    %2781 = vmatprep.subr.bf16.mxu0 0
    %2782 = vmatpush1.bf16.msra.mxu0 0
    %2783 = vmatprep.subr.bf16.mxu0 0
    %2784 = vmatpush1.bf16.msra.mxu0 0
    %2785 = vmatprep.subr.bf16.mxu0 0
    %2786 = vmatpush1.bf16.msra.mxu0 0
    %2787 = vmatprep.subr.bf16.mxu0 0
    %2788 = vmatpush1.bf16.msra.mxu0 0
    %2789 = vmatprep.subr.bf16.mxu0 0
    %2790 = vmatpush1.bf16.msra.mxu0 0
    %2791 = vmatprep.subr.bf16.mxu0 0
    %2792 = vmatpush1.bf16.msra.mxu0 0
    %2793 = vmatprep.subr.bf16.mxu0 0
    %2794 = vmatpush1.bf16.msra.mxu0 0
    %2795 = vmatprep.mubr.bf16.mxu0 0
    %2796 = vmatmul.mubr.bf16.gmra.mrb[0].mxu0 %v2761
    %v2797 = vpop.f32.mrb[0].mxu0
    %v2798 = vadd.f32 0.0, %v2797
    %v2799 = vpop.f32.mrb[0].mxu0
    %v2800 = vpop.f32.mrb[0].mxu0
    %v2801 = vpop.f32.mrb[0].mxu0
    %2802 = vdwg.mxu0
    %2804 = vrot.lane.b32.xlu0 %v2798, 64
    %v2805 = vpop.permute.xlu0 %2804
    %2807 = vst.msk [vmem:[#allocation2 + $0x8] sm:$0xff] %vm988, %v2805
    %2808 = vrot.lane.b32.xlu0 %v2471, 32
    %v2809 = vpop.permute.xlu0 %2808
    %2810 = vrot.lane.b32.xlu0 %v2016, 32
    %v2811 = vpop.permute.xlu0 %2810
    %v2813 = vsel %vm641, %v2809, 0
    %v2816 = vsel %vm641, %v2811, 0
    %2818 = vmatprep.subr.bf16.mxu0 0
    %2819 = vmatpush1.bf16.xpose.msra.mxu0 %v2816
    %2820 = vmatprep.subr.bf16.mxu0 0
    %2821 = vmatpush1.bf16.xpose.msra.mxu0 0
    %2822 = vmatprep.subr.bf16.mxu0 0
    %2823 = vmatpush1.bf16.xpose.msra.mxu0 0
    %2824 = vmatprep.subr.bf16.mxu0 0
    %2825 = vmatpush1.bf16.xpose.msra.mxu0 0
    %2826 = vmatprep.subr.bf16.mxu0 0
    %2827 = vmatpush1.bf16.xpose.msra.mxu0 0
    %2828 = vmatprep.subr.bf16.mxu0 0
    %2829 = vmatpush1.bf16.xpose.msra.mxu0 0
    %2830 = vmatprep.subr.bf16.mxu0 0
    %2831 = vmatpush1.bf16.xpose.msra.mxu0 0
    %2832 = vmatprep.subr.bf16.mxu0 0
    %2833 = vmatpush1.bf16.xpose.msra.mxu0 0
    %2834 = vmatprep.subr.bf16.mxu0 0
    %2835 = vmatpush1.bf16.xpose.msra.mxu0 0
    %2836 = vmatprep.subr.bf16.mxu0 0
    %2837 = vmatpush1.bf16.xpose.msra.mxu0 0
    %2838 = vmatprep.subr.bf16.mxu0 0
    %2839 = vmatpush1.bf16.xpose.msra.mxu0 0
    %2840 = vmatprep.subr.bf16.mxu0 0
    %2841 = vmatpush1.bf16.xpose.msra.mxu0 0
    %2842 = vmatprep.subr.bf16.mxu0 0
    %2843 = vmatpush1.bf16.xpose.msra.mxu0 0
    %2844 = vmatprep.subr.bf16.mxu0 0
    %2845 = vmatpush1.bf16.xpose.msra.mxu0 0
    %2846 = vmatprep.subr.bf16.mxu0 0
    %2847 = vmatpush1.bf16.xpose.msra.mxu0 0
    %2848 = vmatprep.subr.bf16.mxu0 0
    %2849 = vmatpush1.bf16.xpose.msra.mxu0 0
    %2850 = vmatprep.mubr.bf16.mxu0 0
    %2851 = vmatmul.mubr.bf16.gmra.mrb[0].mxu0 %v2813
    %v2852 = vpop.f32.mrb[0].mxu0
    %v2853 = vadd.f32 0.0, %v2852
    %v2854 = vpop.f32.mrb[0].mxu0
    %v2855 = vpop.f32.mrb[0].mxu0
    %v2856 = vpop.f32.mrb[0].mxu0
    %2857 = vdwg.mxu0
    %v2858 = vsel %vm2520, %v2853, 1e-09
    %v2859 = vsel %vm2069, %v2858, -inf
    %2860 = vmax.xlane.f32.xlu0 %v2859
    %v2861 = vpop.xlane.xlu0 %2860
    %v2862 = vsub.f32 %v2858, %v2861
    %v2863 = vmul.f32 %v2862, 1.442695
    %v2864 = vpow.pop %v2863
    %v2865 = vsel %vm2069, %v2864, 0.0
    %2866 = vadd.xlane.f32.xlu0 %v2865
    %v2867 = vpop.xlane.xlu0 %2866
    %v2868 = vrcp.pop %v2867
    %v2869 = vmul.f32 %v2864, %v2868
    %v2870 = vpack.c.bf16 %v2869, %v2869
    %2871 = vrot.lane.b32.xlu0 %v2018, 32
    %v2872 = vpop.permute.xlu0 %2871
    %v2875 = vsel %vm2069, %v2870, 0
    %2877 = vmatprep.subr.bf16.mxu0 0
    %2878 = vmatpush1.bf16.msra.mxu0 %v2872
    %2879 = vmatprep.subr.bf16.mxu0 0
    %2880 = vmatpush1.bf16.msra.mxu0 0
    %2881 = vmatprep.subr.bf16.mxu0 0
    %2882 = vmatpush1.bf16.msra.mxu0 0
    %2883 = vmatprep.subr.bf16.mxu0 0
    %2884 = vmatpush1.bf16.msra.mxu0 0
    %2885 = vmatprep.subr.bf16.mxu0 0
    %2886 = vmatpush1.bf16.msra.mxu0 0
    %2887 = vmatprep.subr.bf16.mxu0 0
    %2888 = vmatpush1.bf16.msra.mxu0 0
    %2889 = vmatprep.subr.bf16.mxu0 0
    %2890 = vmatpush1.bf16.msra.mxu0 0
    %2891 = vmatprep.subr.bf16.mxu0 0
    %2892 = vmatpush1.bf16.msra.mxu0 0
    %2893 = vmatprep.subr.bf16.mxu0 0
    %2894 = vmatpush1.bf16.msra.mxu0 0
    %2895 = vmatprep.subr.bf16.mxu0 0
    %2896 = vmatpush1.bf16.msra.mxu0 0
    %2897 = vmatprep.subr.bf16.mxu0 0
    %2898 = vmatpush1.bf16.msra.mxu0 0
    %2899 = vmatprep.subr.bf16.mxu0 0
    %2900 = vmatpush1.bf16.msra.mxu0 0
    %2901 = vmatprep.subr.bf16.mxu0 0
    %2902 = vmatpush1.bf16.msra.mxu0 0
    %2903 = vmatprep.subr.bf16.mxu0 0
    %2904 = vmatpush1.bf16.msra.mxu0 0
    %2905 = vmatprep.subr.bf16.mxu0 0
    %2906 = vmatpush1.bf16.msra.mxu0 0
    %2907 = vmatprep.subr.bf16.mxu0 0
    %2908 = vmatpush1.bf16.msra.mxu0 0
    %2909 = vmatprep.mubr.bf16.mxu0 0
    %2910 = vmatmul.mubr.bf16.gmra.mrb[0].mxu0 %v2875
    %v2911 = vpop.f32.mrb[0].mxu0
    %v2912 = vadd.f32 0.0, %v2911
    %v2913 = vpop.f32.mrb[0].mxu0
    %v2914 = vpop.f32.mrb[0].mxu0
    %v2915 = vpop.f32.mrb[0].mxu0
    %2916 = vdwg.mxu0
    %2918 = vrot.lane.b32.xlu0 %v2912, 96
    %v2919 = vpop.permute.xlu0 %2918
    %2921 = vst.msk [vmem:[#allocation2 + $0x8] sm:$0xff] %vm1105, %v2919
    %v2922 = vld [vmem:[#allocation2] sm:$0xff]
    %v2923 = vld [vmem:[#allocation2 + $0x8] sm:$0xff]
    %v2924 = vpack.c.bf16 %v2923, %v2922
    %v2925 = vld [vmem:[#allocation22] sm:$0xf]
    %v2926 = vld [vmem:[#allocation22 + $0x4] sm:$0xf]
    %v2927 = vld [vmem:[#allocation22 + $0x8] sm:$0xf]
    %v2928 = vld [vmem:[#allocation22 + $0xc] sm:$0xf]
    %v2929 = vld [vmem:[#allocation22 + $0x10] sm:$0xf]
    %v2930 = vld [vmem:[#allocation22 + $0x14] sm:$0xf]
    %v2931 = vld [vmem:[#allocation22 + $0x18] sm:$0xf]
    %v2932 = vld [vmem:[#allocation22 + $0x1c] sm:$0xf]
    %v2933 = vld [vmem:[#allocation22 + $0x20] sm:$0xf]
    %v2934 = vld [vmem:[#allocation22 + $0x24] sm:$0xf]
    %v2935 = vld [vmem:[#allocation22 + $0x28] sm:$0xf]
    %v2936 = vld [vmem:[#allocation22 + $0x2c] sm:$0xf]
    %v2937 = vld [vmem:[#allocation22 + $0x30] sm:$0xf]
    %v2938 = vld [vmem:[#allocation22 + $0x34] sm:$0xf]
    %v2939 = vld [vmem:[#allocation22 + $0x38] sm:$0xf]
    %v2940 = vld [vmem:[#allocation22 + $0x3c] sm:$0xf]
    %v2957 = vunpack.c.l.b16 %v2925
    %v2958 = vunpack.c.l.b16 %v2926
    %v2959 = vunpack.c.l.b16 %v2927
    %v2960 = vunpack.c.l.b16 %v2928
    %v2961 = vunpack.c.l.b16 %v2929
    %v2962 = vunpack.c.l.b16 %v2930
    %v2963 = vunpack.c.l.b16 %v2931
    %v2964 = vunpack.c.l.b16 %v2932
    %v2965 = vunpack.c.l.b16 %v2933
    %v2966 = vunpack.c.l.b16 %v2934
    %v2967 = vunpack.c.l.b16 %v2935
    %v2968 = vunpack.c.l.b16 %v2936
    %v2969 = vunpack.c.l.b16 %v2937
    %v2970 = vunpack.c.l.b16 %v2938
    %v2971 = vunpack.c.l.b16 %v2939
    %v2972 = vunpack.c.l.b16 %v2940
    %v2973 = vpack.c.b16 %v2958, %v2957
    %v2974 = vpack.c.b16 %v2960, %v2959
    %v2975 = vpack.c.b16 %v2962, %v2961
    %v2976 = vpack.c.b16 %v2964, %v2963
    %v2977 = vpack.c.b16 %v2966, %v2965
    %v2978 = vpack.c.b16 %v2968, %v2967
    %v2979 = vpack.c.b16 %v2970, %v2969
    %v2980 = vpack.c.b16 %v2972, %v2971
    %2989 = vmatprep.subr.bf16.mxu0 0
    %2990 = vmatpush1.bf16.msra.mxu0 %v2973
    %2991 = vmatprep.subr.bf16.mxu0 0
    %2992 = vmatpush1.bf16.msra.mxu0 %v2974
    %2993 = vmatprep.subr.bf16.mxu0 0
    %2994 = vmatpush1.bf16.msra.mxu0 %v2975
    %2995 = vmatprep.subr.bf16.mxu0 0
    %2996 = vmatpush1.bf16.msra.mxu0 %v2976
    %2997 = vmatprep.subr.bf16.mxu0 0
    %2998 = vmatpush1.bf16.msra.mxu0 %v2977
    %2999 = vmatprep.subr.bf16.mxu0 0
    %3000 = vmatpush1.bf16.msra.mxu0 %v2978
    %3001 = vmatprep.subr.bf16.mxu0 0
    %3002 = vmatpush1.bf16.msra.mxu0 %v2979
    %3003 = vmatprep.subr.bf16.mxu0 0
    %3004 = vmatpush1.bf16.msra.mxu0 %v2980
    %3005 = vmatprep.subr.bf16.mxu0 0
    %3006 = vmatpush1.bf16.msra.mxu0 0
    %3007 = vmatprep.subr.bf16.mxu0 0
    %3008 = vmatpush1.bf16.msra.mxu0 0
    %3009 = vmatprep.subr.bf16.mxu0 0
    %3010 = vmatpush1.bf16.msra.mxu0 0
    %3011 = vmatprep.subr.bf16.mxu0 0
    %3012 = vmatpush1.bf16.msra.mxu0 0
    %3013 = vmatprep.subr.bf16.mxu0 0
    %3014 = vmatpush1.bf16.msra.mxu0 0
    %3015 = vmatprep.subr.bf16.mxu0 0
    %3016 = vmatpush1.bf16.msra.mxu0 0
    %3017 = vmatprep.subr.bf16.mxu0 0
    %3018 = vmatpush1.bf16.msra.mxu0 0
    %3019 = vmatprep.subr.bf16.mxu0 0
    %3020 = vmatpush1.bf16.msra.mxu0 0
    %3021 = vmatprep.mubr.bf16.mxu0 0
    %3022 = vmatmul.mubr.bf16.gmra.mrb[0].mxu0 %v2924
    %v3023 = vpop.f32.mrb[0].mxu0
    %v3024 = vadd.f32 0.0, %v3023
    %v3025 = vpop.f32.mrb[0].mxu0
    %v3026 = vpop.f32.mrb[0].mxu0
    %v3027 = vadd.f32 0.0, %v3026
    %v3028 = vpop.f32.mrb[0].mxu0
    %3029 = vdwg.mxu0
    %v3030 = vadd.f32 %v1684, %v3024
    %v3031 = vadd.f32 %v1685, %v3027
    %v3032 = vld [vmem:[#allocation23] sm:$0x1]
    %v3034 = vlaneseq
    %v3035 = vshrl.u32 %v3034, 7
    %v3036 = vsub.s32 0, %v3035
    %v3037 = vrot.slane %v3032, %v3036
    %v3039 = vadd.f32 %v3030, %v3037
    %v3040 = vadd.f32 %v3031, %v3037
    %v3041 = vld [vmem:[#allocation25] sm:$0x1]
    %v3042 = vld [vmem:[#allocation26] sm:$0x1]
    %3043 = vadd.xlane.f32.xlu0 %v3039
    %v3044 = vpop.xlane.xlu0 %3043
    %3045 = vadd.xlane.f32.xlu0 %v3040
    %v3046 = vpop.xlane.xlu0 %3045
    %v3047 = vmul.f32 %v3044, %v339
    %v3048 = vmul.f32 %v3046, %v339
    %v3049 = vsub.f32 %v3039, %v3047
    %v3050 = vsub.f32 %v3040, %v3048
    %v3051 = vmul.f32 %v3049, %v3049
    %v3052 = vmul.f32 %v3050, %v3050
    %3053 = vadd.xlane.f32.xlu0 %v3051
    %v3054 = vpop.xlane.xlu0 %3053
    %3055 = vadd.xlane.f32.xlu0 %v3052
    %v3056 = vpop.xlane.xlu0 %3055
    %v3057 = vmul.f32 %v3054, %v339
    %v3058 = vmul.f32 %v3056, %v339
    %v3059 = vadd.f32 %v3057, 1e-05
    %v3060 = vadd.f32 %v3058, 1e-05
    %v3061 = vrsqrt.pop %v3059
    %v3062 = vrsqrt.pop %v3060
    %v3063 = vmul.f32 %v3049, %v3061
    %v3064 = vmul.f32 %v3050, %v3062
    %v3066 = vlaneseq
    %v3067 = vshrl.u32 %v3066, 7
    %v3068 = vsub.s32 0, %v3067
    %v3069 = vrot.slane %v3041, %v3068
    %v3071 = vmul.f32 %v3063, %v3069
    %v3072 = vmul.f32 %v3064, %v3069
    %v3074 = vlaneseq
    %v3075 = vshrl.u32 %v3074, 7
    %v3076 = vsub.s32 0, %v3075
    %v3077 = vrot.slane %v3042, %v3076
    %v3079 = vadd.f32 %v3071, %v3077
    %v3080 = vadd.f32 %v3072, %v3077
    %v3081 = vpack.c.bf16 %v3080, %v3079
    %v3082 = vld [vmem:[%s20] sm:$0xff]
    %v3083 = vld [vmem:[%s20 + $0x8] sm:$0xff]
    %v3084 = vld [vmem:[%s20 + $0x10] sm:$0xff]
    %v3085 = vld [vmem:[%s20 + $0x18] sm:$0xff]
    %v3086 = vld [vmem:[%s20 + $0x20] sm:$0xff]
    %v3087 = vld [vmem:[%s20 + $0x28] sm:$0xff]
    %v3088 = vld [vmem:[%s20 + $0x30] sm:$0xff]
    %v3089 = vld [vmem:[%s20 + $0x38] sm:$0xff]
    %v3090 = vld [vmem:[%s20 + $0x40] sm:$0xff]
    %v3091 = vld [vmem:[%s20 + $0x48] sm:$0xff]
    %v3092 = vld [vmem:[%s20 + $0x50] sm:$0xff]
    %v3093 = vld [vmem:[%s20 + $0x58] sm:$0xff]
    %v3094 = vld [vmem:[%s20 + $0x60] sm:$0xff]
    %v3095 = vld [vmem:[%s20 + $0x68] sm:$0xff]
    %v3096 = vld [vmem:[%s20 + $0x70] sm:$0xff]
    %v3097 = vld [vmem:[%s20 + $0x78] sm:$0xff]
    %v3098 = vld [vmem:[#allocation28] sm:$0x3]
    %v3100 = vlaneseq
    %v3101 = vshrl.u32 %v3100, 7
    %v3102 = vsub.s32 0, %v3101
    %v3103 = vrot.slane %v3098, %v3102
    %v3104 = vlaneseq
    %v3105 = vshrl.u32 %v3104, 7
    %v3106 = vsub.s32 1, %v3105
    %v3107 = vrot.slane %v3098, %v3106
    %v3126 = vunpack.c.l.b16 %v3082
    %v3127 = vunpack.c.h.b16 %v3082
    %v3128 = vunpack.c.l.b16 %v3083
    %v3129 = vunpack.c.h.b16 %v3083
    %v3130 = vunpack.c.l.b16 %v3084
    %v3131 = vunpack.c.h.b16 %v3084
    %v3132 = vunpack.c.l.b16 %v3085
    %v3133 = vunpack.c.h.b16 %v3085
    %v3134 = vunpack.c.l.b16 %v3086
    %v3135 = vunpack.c.h.b16 %v3086
    %v3136 = vunpack.c.l.b16 %v3087
    %v3137 = vunpack.c.h.b16 %v3087
    %v3138 = vunpack.c.l.b16 %v3088
    %v3139 = vunpack.c.h.b16 %v3088
    %v3140 = vunpack.c.l.b16 %v3089
    %v3141 = vunpack.c.h.b16 %v3089
    %v3142 = vunpack.c.l.b16 %v3090
    %v3143 = vunpack.c.h.b16 %v3090
    %v3144 = vunpack.c.l.b16 %v3091
    %v3145 = vunpack.c.h.b16 %v3091
    %v3146 = vunpack.c.l.b16 %v3092
    %v3147 = vunpack.c.h.b16 %v3092
    %v3148 = vunpack.c.l.b16 %v3093
    %v3149 = vunpack.c.h.b16 %v3093
    %v3150 = vunpack.c.l.b16 %v3094
    %v3151 = vunpack.c.h.b16 %v3094
    %v3152 = vunpack.c.l.b16 %v3095
    %v3153 = vunpack.c.h.b16 %v3095
    %v3154 = vunpack.c.l.b16 %v3096
    %v3155 = vunpack.c.h.b16 %v3096
    %v3156 = vunpack.c.l.b16 %v3097
    %v3157 = vunpack.c.h.b16 %v3097
    %v3158 = vpack.c.b16 %v3128, %v3126
    %v3159 = vpack.c.b16 %v3129, %v3127
    %v3160 = vpack.c.b16 %v3132, %v3130
    %v3161 = vpack.c.b16 %v3133, %v3131
    %v3162 = vpack.c.b16 %v3136, %v3134
    %v3163 = vpack.c.b16 %v3137, %v3135
    %v3164 = vpack.c.b16 %v3140, %v3138
    %v3165 = vpack.c.b16 %v3141, %v3139
    %v3166 = vpack.c.b16 %v3144, %v3142
    %v3167 = vpack.c.b16 %v3145, %v3143
    %v3168 = vpack.c.b16 %v3148, %v3146
    %v3169 = vpack.c.b16 %v3149, %v3147
    %v3170 = vpack.c.b16 %v3152, %v3150
    %v3171 = vpack.c.b16 %v3153, %v3151
    %v3172 = vpack.c.b16 %v3156, %v3154
    %v3173 = vpack.c.b16 %v3157, %v3155
    %3190 = vmatprep.subr.bf16.mxu0 %v3159
    %3191 = vmatpush1.bf16.msra.mxu0 %v3158
    %3192 = vmatprep.subr.bf16.mxu0 %v3161
    %3193 = vmatpush1.bf16.msra.mxu0 %v3160
    %3194 = vmatprep.subr.bf16.mxu0 %v3163
    %3195 = vmatpush1.bf16.msra.mxu0 %v3162
    %3196 = vmatprep.subr.bf16.mxu0 %v3165
    %3197 = vmatpush1.bf16.msra.mxu0 %v3164
    %3198 = vmatprep.subr.bf16.mxu0 %v3167
    %3199 = vmatpush1.bf16.msra.mxu0 %v3166
    %3200 = vmatprep.subr.bf16.mxu0 %v3169
    %3201 = vmatpush1.bf16.msra.mxu0 %v3168
    %3202 = vmatprep.subr.bf16.mxu0 %v3171
    %3203 = vmatpush1.bf16.msra.mxu0 %v3170
    %3204 = vmatprep.subr.bf16.mxu0 %v3173
    %3205 = vmatpush1.bf16.msra.mxu0 %v3172
    %3206 = vmatprep.subr.bf16.mxu0 0
    %3207 = vmatpush1.bf16.msra.mxu0 0
    %3208 = vmatprep.subr.bf16.mxu0 0
    %3209 = vmatpush1.bf16.msra.mxu0 0
    %3210 = vmatprep.subr.bf16.mxu0 0
    %3211 = vmatpush1.bf16.msra.mxu0 0
    %3212 = vmatprep.subr.bf16.mxu0 0
    %3213 = vmatpush1.bf16.msra.mxu0 0
    %3214 = vmatprep.subr.bf16.mxu0 0
    %3215 = vmatpush1.bf16.msra.mxu0 0
    %3216 = vmatprep.subr.bf16.mxu0 0
    %3217 = vmatpush1.bf16.msra.mxu0 0
    %3218 = vmatprep.subr.bf16.mxu0 0
    %3219 = vmatpush1.bf16.msra.mxu0 0
    %3220 = vmatprep.subr.bf16.mxu0 0
    %3221 = vmatpush1.bf16.msra.mxu0 0
    %3222 = vmatprep.mubr.bf16.mxu0 0
    %3223 = vmatmul.mubr.bf16.gmra.mrb[0].mxu0 %v3081
    %v3224 = vpop.f32.mrb[0].mxu0
    %v3225 = vadd.f32 %v3103, %v3224
    %v3226 = vpop.f32.mrb[0].mxu0
    %v3227 = vadd.f32 %v3107, %v3226
    %v3228 = vpop.f32.mrb[0].mxu0
    %v3229 = vadd.f32 %v3103, %v3228
    %v3230 = vpop.f32.mrb[0].mxu0
    %v3231 = vadd.f32 %v3107, %v3230
    %3232 = vdwg.mxu0
    %v3233 = vmax.f32 %v3225, 0.0
    %v3234 = vmax.f32 %v3227, 0.0
    %v3235 = vmax.f32 %v3229, 0.0
    %v3236 = vmax.f32 %v3231, 0.0
    %v3237 = vpack.c.bf16 %v3235, %v3233
    %v3238 = vpack.c.bf16 %v3236, %v3234
    %v3239 = vld [vmem:[#allocation29] sm:$0xf]
    %v3240 = vld [vmem:[#allocation29 + $0x4] sm:$0xf]
    %v3241 = vld [vmem:[#allocation29 + $0x8] sm:$0xf]
    %v3242 = vld [vmem:[#allocation29 + $0xc] sm:$0xf]
    %v3243 = vld [vmem:[#allocation29 + $0x10] sm:$0xf]
    %v3244 = vld [vmem:[#allocation29 + $0x14] sm:$0xf]
    %v3245 = vld [vmem:[#allocation29 + $0x18] sm:$0xf]
    %v3246 = vld [vmem:[#allocation29 + $0x1c] sm:$0xf]
    %v3247 = vld [vmem:[#allocation29 + $0x20] sm:$0xf]
    %v3248 = vld [vmem:[#allocation29 + $0x24] sm:$0xf]
    %v3249 = vld [vmem:[#allocation29 + $0x28] sm:$0xf]
    %v3250 = vld [vmem:[#allocation29 + $0x2c] sm:$0xf]
    %v3251 = vld [vmem:[#allocation29 + $0x30] sm:$0xf]
    %v3252 = vld [vmem:[#allocation29 + $0x34] sm:$0xf]
    %v3253 = vld [vmem:[#allocation29 + $0x38] sm:$0xf]
    %v3254 = vld [vmem:[#allocation29 + $0x3c] sm:$0xf]
    %v3255 = vld [vmem:[#allocation29 + $0x40] sm:$0xf]
    %v3256 = vld [vmem:[#allocation29 + $0x44] sm:$0xf]
    %v3257 = vld [vmem:[#allocation29 + $0x48] sm:$0xf]
    %v3258 = vld [vmem:[#allocation29 + $0x4c] sm:$0xf]
    %v3259 = vld [vmem:[#allocation29 + $0x50] sm:$0xf]
    %v3260 = vld [vmem:[#allocation29 + $0x54] sm:$0xf]
    %v3261 = vld [vmem:[#allocation29 + $0x58] sm:$0xf]
    %v3262 = vld [vmem:[#allocation29 + $0x5c] sm:$0xf]
    %v3263 = vld [vmem:[#allocation29 + $0x60] sm:$0xf]
    %v3264 = vld [vmem:[#allocation29 + $0x64] sm:$0xf]
    %v3265 = vld [vmem:[#allocation29 + $0x68] sm:$0xf]
    %v3266 = vld [vmem:[#allocation29 + $0x6c] sm:$0xf]
    %v3267 = vld [vmem:[#allocation29 + $0x70] sm:$0xf]
    %v3268 = vld [vmem:[#allocation29 + $0x74] sm:$0xf]
    %v3269 = vld [vmem:[#allocation29 + $0x78] sm:$0xf]
    %v3270 = vld [vmem:[#allocation29 + $0x7c] sm:$0xf]
    %v3303 = vunpack.c.l.b16 %v3239
    %v3304 = vunpack.c.l.b16 %v3240
    %v3305 = vunpack.c.l.b16 %v3241
    %v3306 = vunpack.c.l.b16 %v3242
    %v3307 = vunpack.c.l.b16 %v3243
    %v3308 = vunpack.c.l.b16 %v3244
    %v3309 = vunpack.c.l.b16 %v3245
    %v3310 = vunpack.c.l.b16 %v3246
    %v3311 = vunpack.c.l.b16 %v3247
    %v3312 = vunpack.c.l.b16 %v3248
    %v3313 = vunpack.c.l.b16 %v3249
    %v3314 = vunpack.c.l.b16 %v3250
    %v3315 = vunpack.c.l.b16 %v3251
    %v3316 = vunpack.c.l.b16 %v3252
    %v3317 = vunpack.c.l.b16 %v3253
    %v3318 = vunpack.c.l.b16 %v3254
    %v3319 = vunpack.c.l.b16 %v3255
    %v3320 = vunpack.c.l.b16 %v3256
    %v3321 = vunpack.c.l.b16 %v3257
    %v3322 = vunpack.c.l.b16 %v3258
    %v3323 = vunpack.c.l.b16 %v3259
    %v3324 = vunpack.c.l.b16 %v3260
    %v3325 = vunpack.c.l.b16 %v3261
    %v3326 = vunpack.c.l.b16 %v3262
    %v3327 = vunpack.c.l.b16 %v3263
    %v3328 = vunpack.c.l.b16 %v3264
    %v3329 = vunpack.c.l.b16 %v3265
    %v3330 = vunpack.c.l.b16 %v3266
    %v3331 = vunpack.c.l.b16 %v3267
    %v3332 = vunpack.c.l.b16 %v3268
    %v3333 = vunpack.c.l.b16 %v3269
    %v3334 = vunpack.c.l.b16 %v3270
    %v3335 = vpack.c.b16 %v3304, %v3303
    %v3336 = vpack.c.b16 %v3306, %v3305
    %v3337 = vpack.c.b16 %v3308, %v3307
    %v3338 = vpack.c.b16 %v3310, %v3309
    %v3339 = vpack.c.b16 %v3312, %v3311
    %v3340 = vpack.c.b16 %v3314, %v3313
    %v3341 = vpack.c.b16 %v3316, %v3315
    %v3342 = vpack.c.b16 %v3318, %v3317
    %v3343 = vpack.c.b16 %v3320, %v3319
    %v3344 = vpack.c.b16 %v3322, %v3321
    %v3345 = vpack.c.b16 %v3324, %v3323
    %v3346 = vpack.c.b16 %v3326, %v3325
    %v3347 = vpack.c.b16 %v3328, %v3327
    %v3348 = vpack.c.b16 %v3330, %v3329
    %v3349 = vpack.c.b16 %v3332, %v3331
    %v3350 = vpack.c.b16 %v3334, %v3333
    %3367 = vmatprep.subr.bf16.mxu0 0
    %3368 = vmatpush1.bf16.msra.mxu0 %v3335
    %3369 = vmatprep.subr.bf16.mxu0 0
    %3370 = vmatpush1.bf16.msra.mxu0 %v3336
    %3371 = vmatprep.subr.bf16.mxu0 0
    %3372 = vmatpush1.bf16.msra.mxu0 %v3337
    %3373 = vmatprep.subr.bf16.mxu0 0
    %3374 = vmatpush1.bf16.msra.mxu0 %v3338
    %3375 = vmatprep.subr.bf16.mxu0 0
    %3376 = vmatpush1.bf16.msra.mxu0 %v3339
    %3377 = vmatprep.subr.bf16.mxu0 0
    %3378 = vmatpush1.bf16.msra.mxu0 %v3340
    %3379 = vmatprep.subr.bf16.mxu0 0
    %3380 = vmatpush1.bf16.msra.mxu0 %v3341
    %3381 = vmatprep.subr.bf16.mxu0 0
    %3382 = vmatpush1.bf16.msra.mxu0 %v3342
    %3383 = vmatprep.subr.bf16.mxu0 0
    %3384 = vmatpush1.bf16.msra.mxu0 %v3343
    %3385 = vmatprep.subr.bf16.mxu0 0
    %3386 = vmatpush1.bf16.msra.mxu0 %v3344
    %3387 = vmatprep.subr.bf16.mxu0 0
    %3388 = vmatpush1.bf16.msra.mxu0 %v3345
    %3389 = vmatprep.subr.bf16.mxu0 0
    %3390 = vmatpush1.bf16.msra.mxu0 %v3346
    %3391 = vmatprep.subr.bf16.mxu0 0
    %3392 = vmatpush1.bf16.msra.mxu0 %v3347
    %3393 = vmatprep.subr.bf16.mxu0 0
    %3394 = vmatpush1.bf16.msra.mxu0 %v3348
    %3395 = vmatprep.subr.bf16.mxu0 0
    %3396 = vmatpush1.bf16.msra.mxu0 %v3349
    %3397 = vmatprep.subr.bf16.mxu0 0
    %3398 = vmatpush1.bf16.msra.mxu0 %v3350
    %3399 = vmatprep.mubr.bf16.mxu0 %v3238
    %3400 = vmatmul.mubr.bf16.gmra.mrb[0].mxu0 %v3237
    %v3401 = vpop.f32.mrb[0].mxu0
    %v3402 = vadd.f32 0.0, %v3401
    %v3403 = vpop.f32.mrb[0].mxu0
    %v3404 = vpop.f32.mrb[0].mxu0
    %v3405 = vadd.f32 0.0, %v3404
    %v3406 = vpop.f32.mrb[0].mxu0
    %3407 = vdwg.mxu0
    %v3408 = vadd.f32 %v3039, %v3402
    %v3409 = vadd.f32 %v3040, %v3405
    %v3410 = vld [vmem:[#allocation31] sm:$0x1]
    %v3412 = vlaneseq
    %v3413 = vshrl.u32 %v3412, 7
    %v3414 = vsub.s32 0, %v3413
    %v3415 = vrot.slane %v3410, %v3414
    %v3417 = vadd.f32 %v3408, %v3415
    %v3418 = vadd.f32 %v3409, %v3415
    %v3419 = vpack.c.bf16 %v3417, %v3417
    %v3420 = vpack.c.bf16 %v3418, %v3418
    %3421 = vst [vmem:[%s26] sm:$0xf] %v3419
    %3422 = vst [vmem:[%s26 + $0x4] sm:$0xf] %v3420
    // Predicated region
    $region182: #{decoder_forward.2} parent=1 // pred_check
      _
    $region183: #{decoder_forward.2} parent=1 // pred_check_branch
      %3424 = sbr.rel (0) target = $region185
    $region184: #{decoder_forward.2} parent=1 // pred_region
      _
    $region185: #{decoder_forward.2} parent=1 // pred_fallthru
      _
    // Predicated region
    $region186: #{decoder_forward.2} parent=1 // pred_check
      _
    $region187: #{decoder_forward.2} parent=1 // pred_check_branch
      %3426 = sbr.rel (0) target = $region189
    $region188: #{decoder_forward.2} parent=1 // pred_region
      _
    $region189: #{decoder_forward.2} parent=1 // pred_fallthru
      _
    %3427 = vsyncpa [#allocation4], 1
    %3428 = vsyncpa [#allocation6], 1
    %3429 = vsyncpa [#allocation9], 1
    %3430 = vsyncpa [#allocation12], 1
    %3431 = vsyncpa [#allocation15], 1
    %3432 = vsyncpa [#allocation18], 1
    %3433 = vsyncpa [#allocation21], 1
    %3434 = vsyncpa [#allocation24], 1
    %3435 = vsyncpa [#allocation27], 1
    %3436 = vsyncpa [#allocation30], 1

</llo_original>
